<compile_context>
chip_gen: v7x
topology: tpu7x:2x2x1
jax: 0.10.0
libtpu: 0.0.40
codegen_flags: <defaults>
</compile_context>

<pallas_src>
import jax
import jax.numpy as jnp
from jax import lax
from jax.experimental import pallas as pl
from jax.experimental.pallas import tpu as pltpu

KH = KW = 3
PAD = 1
C_PAD = 8          # input channels zero-padded to one full sublane group
LANE = 128


def _round_up(x, m):
    return (x + m - 1) // m * m


def _make_kernel(wp, tm_out, cout):
    """Build the fused conv+clamp kernel for one (batch, row-tile) grid step.

    win_ref : (C_PAD, wlen)    padded-input window, flat index = h*wp + w
    w_ref   : (9, cout, C_PAD) per-tap weight slices, tap k = kh*3 + kw
    b_ref   : (cout, 1)        bias
    o_ref   : (cout, tm_out)   lane-dense output slab (junk cols sliced off outside)
    """
    def kernel(win_ref, w_ref, b_ref, o_ref):
        # init VMEM accumulator (= output block) with the bias
        o_ref[...] = jnp.broadcast_to(b_ref[...], (cout, tm_out))
        # 9 statically shifted slices of the flat window: shift = kh*wp + kw
        for k in range(KH * KW):
            kh, kw = divmod(k, KW)
            s = kh * wp + kw
            tap = win_ref[:, s:s + tm_out]                      # (C_PAD, tm_out)
            o_ref[...] += jnp.dot(w_ref[k], tap,
                                  preferred_element_type=jnp.float32)
        # torch.min(v, 0.5) then torch.max(v, 0.3)
        o_ref[...] = jnp.maximum(jnp.minimum(o_ref[...], 0.5), 0.3)
    return kernel


def model_forward(x, weight, bias, *, tile_rows=32):
    # x: (N, Cin, H, W) f32 ; weight: (Cout, Cin, 3, 3) ; bias: (Cout,)
    N, Cin, H, W = x.shape
    Cout = weight.shape[0]
    Hp, Wp = H + 2 * PAD, W + 2 * PAD

    th = min(tile_rows, H)                     # image rows per grid step
    n_tiles = pl.cdiv(H, th)
    tm_out = _round_up(th * Wp, LANE)          # lane-dense output tile width
    wlen = _round_up(tm_out + 2 * Wp + 2, LANE)  # tile + halo (covers tap (2,2))

    # ---- cheap JAX-side prep: pad, flatten rows, cut overlapping windows ----
    xp = jnp.pad(x, ((0, 0), (0, C_PAD - Cin), (PAD, PAD), (PAD, PAD)))
    xf = xp.reshape(N, C_PAD, Hp * Wp).astype(jnp.float32)
    need = (n_tiles - 1) * th * Wp + wlen
    xf = jnp.pad(xf, ((0, 0), (0, 0), (0, max(0, need - Hp * Wp))))
    wins = jnp.stack(
        [xf[:, :, t * th * Wp: t * th * Wp + wlen] for t in range(n_tiles)],
        axis=1)                                                  # (N, n_tiles, 8, wlen)

    # per-tap weight slices: w9[k, o, c] = weight[o, c, kh, kw], k = kh*3+kw
    w9 = jnp.transpose(weight, (2, 3, 0, 1)).reshape(KH * KW, Cout, Cin)
    w9 = jnp.pad(w9, ((0, 0), (0, 0), (0, C_PAD - Cin))).astype(jnp.float32)
    b2d = bias.reshape(Cout, 1).astype(jnp.float32)

    out_slab = pl.pallas_call(
        _make_kernel(Wp, tm_out, Cout),
        out_shape=jax.ShapeDtypeStruct((N, Cout, n_tiles * tm_out), jnp.float32),
        grid=(N, n_tiles),
        in_specs=[
            pl.BlockSpec((None, None, C_PAD, wlen), lambda n, t: (n, t, 0, 0)),
            pl.BlockSpec((KH * KW, Cout, C_PAD), lambda n, t: (0, 0, 0)),
            pl.BlockSpec((Cout, 1), lambda n, t: (0, 0)),
        ],
        out_specs=pl.BlockSpec((None, Cout, tm_out), lambda n, t: (n, 0, t)),
        compiler_params=pltpu.CompilerParams(
            dimension_semantics=("parallel", "parallel")),
    )(wins, w9, b2d)

    # reassemble NCHW: drop per-tile lane padding, then junk cols/rows.
    out = out_slab.reshape(N, Cout, n_tiles, tm_out)[:, :, :, :th * Wp]
    out = out.reshape(N, Cout, n_tiles * th, Wp)[:, :, :H, :W]
    return out


def reference_forward(x, weight, bias):
    y = lax.conv_general_dilated(
        x, weight, window_strides=(1, 1), padding=((PAD, PAD), (PAD, PAD)),
        dimension_numbers=("NCHW", "OIHW", "NCHW"))
    y = y + bias.reshape(1, -1, 1, 1)
    y = jnp.minimum(y, 0.5)
    y = jnp.maximum(y, 0.3)
    return y


if __name__ == "__main__":
    key = jax.random.PRNGKey(0)
    kx, kw, kb = jax.random.split(key, 3)

    # module's own (small) shapes: Conv2d(3 -> 8, k=3, pad=1) on (1, 3, 64, 64)
    N, Cin, H, W, Cout = 1, 3, 64, 64, 8
    x = jax.random.normal(kx, (N, Cin, H, W), dtype=jnp.float32)

    # deterministic Conv2d-style init: U(-1/sqrt(fan_in), 1/sqrt(fan_in))
    fan_in = Cin * KH * KW
    bound = 1.0 / (fan_in ** 0.5)
    weight = jax.random.uniform(kw, (Cout, Cin, KH, KW), jnp.float32, -bound, bound)
    bias = jax.random.uniform(kb, (Cout,), jnp.float32, -bound, bound)

    fwd = jax.jit(model_forward)
    out = jax.block_until_ready(fwd(x, weight, bias))
    ref = jax.block_until_ready(reference_forward(x, weight, bias))

    assert out.shape == (N, Cout, H, W)
    assert jnp.allclose(out, ref, atol=1e-5, rtol=1e-5)
    print("KERNEL_OK")
</pallas_src>

<mosaic_0001>
module attributes {stable_mosaic.version = 11 : i64} {
  func.func @kernel(%arg0: i32, %arg1: i32, %arg2: memref<1x1x8x2432xf32, #tpu.memory_space<vmem>>, %arg3: memref<9x8x8xf32, #tpu.memory_space<vmem>>, %arg4: memref<8x1xf32, #tpu.memory_space<vmem>>, %arg5: memref<1x8x2176xf32, #tpu.memory_space<vmem>>) attributes {dimension_semantics = [#tpu.dimension_semantics<parallel>, #tpu.dimension_semantics<parallel>], iteration_bounds = array<i64: 1, 2>, scalar_prefetch = 0 : i64, scratch_operands = 0 : i64, tpu.core_type = #tpu.core_type<tc>, window_params = [{transform_indices = @transform_0, window_bounds = array<i64: 1, 1, 8, 2432>}, {pipeline_mode = #tpu.pipeline_mode<synchronous>, transform_indices = @transform_1, window_bounds = array<i64: 9, 8, 8>}, {pipeline_mode = #tpu.pipeline_mode<synchronous>, transform_indices = @transform_2, window_bounds = array<i64: 8, 1>}, {transform_indices = @transform_3, window_bounds = array<i64: 1, 8, 2176>}]} {
    %c0 = arith.constant 0 : index
    %c0_0 = arith.constant 0 : index
    %0 = vector.load %arg4[%c0, %c0_0] : memref<8x1xf32, #tpu.memory_space<vmem>>, vector<8x1xf32>
    %1 = vector.shape_cast %0 : vector<8x1xf32> to vector<8x1xf32>
    %2 = vector.broadcast %1 : vector<8x1xf32> to vector<8x2176xf32>
    %c0_1 = arith.constant 0 : index
    %c0_2 = arith.constant 0 : index
    %c0_3 = arith.constant 0 : index
    %3 = vector.load %arg5[%c0_1, %c0_2, %c0_3] : memref<1x8x2176xf32, #tpu.memory_space<vmem>>, vector<1x8x2176xf32>
    %4 = vector.shape_cast %3 : vector<1x8x2176xf32> to vector<8x2176xf32>
    %5 = vector.shape_cast %2 : vector<8x2176xf32> to vector<1x8x2176xf32>
    tpu.vector_store %arg5[%c0_1, %c0_2, %c0_3], %5 {strides = array<i32>} : memref<1x8x2176xf32, #tpu.memory_space<vmem>>, vector<1x8x2176xf32>,
    %c0_4 = arith.constant 0 : index
    %c0_5 = arith.constant 0 : index
    %c0_6 = arith.constant 0 : index
    %c0_7 = arith.constant 0 : index
    %6 = vector.load %arg2[%c0_4, %c0_5, %c0_6, %c0_7] : memref<1x1x8x2432xf32, #tpu.memory_space<vmem>>, vector<1x1x8x2176xf32>
    %7 = vector.shape_cast %6 : vector<1x1x8x2176xf32> to vector<8x2176xf32>
    %c0_8 = arith.constant 0 : index
    %c0_9 = arith.constant 0 : index
    %c0_10 = arith.constant 0 : index
    %8 = vector.load %arg5[%c0_8, %c0_9, %c0_10] : memref<1x8x2176xf32, #tpu.memory_space<vmem>>, vector<1x8x2176xf32>
    %9 = vector.shape_cast %8 : vector<1x8x2176xf32> to vector<8x2176xf32>
    %c0_11 = arith.constant 0 : index
    %c0_12 = arith.constant 0 : index
    %c0_13 = arith.constant 0 : index
    %10 = vector.load %arg3[%c0_11, %c0_12, %c0_13] : memref<9x8x8xf32, #tpu.memory_space<vmem>>, vector<1x8x8xf32>
    %11 = vector.shape_cast %10 : vector<1x8x8xf32> to vector<8x8xf32>
    %cst = arith.constant dense<0.000000e+00> : vector<8x2176xf32>
    %12 = tpu.matmul %11, %7, %cst {dimension_numbers = #tpu.dot_dimension_numbers<[1], [0], [0], [1], [0, 0, 1, 1], [], []>} : vector<8x8xf32>, vector<8x2176xf32>, vector<8x2176xf32> -> vector<8x2176xf32>
    %13 = arith.addf %9, %12 : vector<8x2176xf32>
    %c0_14 = arith.constant 0 : index
    %c0_15 = arith.constant 0 : index
    %c0_16 = arith.constant 0 : index
    %14 = vector.load %arg5[%c0_14, %c0_15, %c0_16] : memref<1x8x2176xf32, #tpu.memory_space<vmem>>, vector<1x8x2176xf32>
    %15 = vector.shape_cast %14 : vector<1x8x2176xf32> to vector<8x2176xf32>
    %16 = vector.shape_cast %13 : vector<8x2176xf32> to vector<1x8x2176xf32>
    tpu.vector_store %arg5[%c0_14, %c0_15, %c0_16], %16 {strides = array<i32>} : memref<1x8x2176xf32, #tpu.memory_space<vmem>>, vector<1x8x2176xf32>,
    %c0_17 = arith.constant 0 : index
    %c0_18 = arith.constant 0 : index
    %c0_19 = arith.constant 0 : index
    %c1 = arith.constant 1 : index
    %17 = vector.load %arg2[%c0_17, %c0_18, %c0_19, %c1] : memref<1x1x8x2432xf32, #tpu.memory_space<vmem>>, vector<1x1x8x2176xf32>
    %18 = vector.shape_cast %17 : vector<1x1x8x2176xf32> to vector<8x2176xf32>
    %c0_20 = arith.constant 0 : index
    %c0_21 = arith.constant 0 : index
    %c0_22 = arith.constant 0 : index
    %19 = vector.load %arg5[%c0_20, %c0_21, %c0_22] : memref<1x8x2176xf32, #tpu.memory_space<vmem>>, vector<1x8x2176xf32>
    %20 = vector.shape_cast %19 : vector<1x8x2176xf32> to vector<8x2176xf32>
    %c1_23 = arith.constant 1 : index
    %c0_24 = arith.constant 0 : index
    %c0_25 = arith.constant 0 : index
    %21 = vector.load %arg3[%c1_23, %c0_24, %c0_25] : memref<9x8x8xf32, #tpu.memory_space<vmem>>, vector<1x8x8xf32>
    %22 = vector.shape_cast %21 : vector<1x8x8xf32> to vector<8x8xf32>
    %cst_26 = arith.constant dense<0.000000e+00> : vector<8x2176xf32>
    %23 = tpu.matmul %22, %18, %cst_26 {dimension_numbers = #tpu.dot_dimension_numbers<[1], [0], [0], [1], [0, 0, 1, 1], [], []>} : vector<8x8xf32>, vector<8x2176xf32>, vector<8x2176xf32> -> vector<8x2176xf32>
    %24 = arith.addf %20, %23 : vector<8x2176xf32>
    %c0_27 = arith.constant 0 : index
    %c0_28 = arith.constant 0 : index
    %c0_29 = arith.constant 0 : index
    %25 = vector.load %arg5[%c0_27, %c0_28, %c0_29] : memref<1x8x2176xf32, #tpu.memory_space<vmem>>, vector<1x8x2176xf32>
    %26 = vector.shape_cast %25 : vector<1x8x2176xf32> to vector<8x2176xf32>
    %27 = vector.shape_cast %24 : vector<8x2176xf32> to vector<1x8x2176xf32>
    tpu.vector_store %arg5[%c0_27, %c0_28, %c0_29], %27 {strides = array<i32>} : memref<1x8x2176xf32, #tpu.memory_space<vmem>>, vector<1x8x2176xf32>,
    %c0_30 = arith.constant 0 : index
    %c0_31 = arith.constant 0 : index
    %c0_32 = arith.constant 0 : index
    %c2 = arith.constant 2 : index
    %28 = vector.load %arg2[%c0_30, %c0_31, %c0_32, %c2] : memref<1x1x8x2432xf32, #tpu.memory_space<vmem>>, vector<1x1x8x2176xf32>
    %29 = vector.shape_cast %28 : vector<1x1x8x2176xf32> to vector<8x2176xf32>
    %c0_33 = arith.constant 0 : index
    %c0_34 = arith.constant 0 : index
    %c0_35 = arith.constant 0 : index
    %30 = vector.load %arg5[%c0_33, %c0_34, %c0_35] : memref<1x8x2176xf32, #tpu.memory_space<vmem>>, vector<1x8x2176xf32>
    %31 = vector.shape_cast %30 : vector<1x8x2176xf32> to vector<8x2176xf32>
    %c2_36 = arith.constant 2 : index
    %c0_37 = arith.constant 0 : index
    %c0_38 = arith.constant 0 : index
    %32 = vector.load %arg3[%c2_36, %c0_37, %c0_38] : memref<9x8x8xf32, #tpu.memory_space<vmem>>, vector<1x8x8xf32>
    %33 = vector.shape_cast %32 : vector<1x8x8xf32> to vector<8x8xf32>
    %cst_39 = arith.constant dense<0.000000e+00> : vector<8x2176xf32>
    %34 = tpu.matmul %33, %29, %cst_39 {dimension_numbers = #tpu.dot_dimension_numbers<[1], [0], [0], [1], [0, 0, 1, 1], [], []>} : vector<8x8xf32>, vector<8x2176xf32>, vector<8x2176xf32> -> vector<8x2176xf32>
    %35 = arith.addf %31, %34 : vector<8x2176xf32>
    %c0_40 = arith.constant 0 : index
    %c0_41 = arith.constant 0 : index
    %c0_42 = arith.constant 0 : index
    %36 = vector.load %arg5[%c0_40, %c0_41, %c0_42] : memref<1x8x2176xf32, #tpu.memory_space<vmem>>, vector<1x8x2176xf32>
    %37 = vector.shape_cast %36 : vector<1x8x2176xf32> to vector<8x2176xf32>
    %38 = vector.shape_cast %35 : vector<8x2176xf32> to vector<1x8x2176xf32>
    tpu.vector_store %arg5[%c0_40, %c0_41, %c0_42], %38 {strides = array<i32>} : memref<1x8x2176xf32, #tpu.memory_space<vmem>>, vector<1x8x2176xf32>,
    %c0_43 = arith.constant 0 : index
    %c0_44 = arith.constant 0 : index
    %c0_45 = arith.constant 0 : index
    %c66 = arith.constant 66 : index
    %39 = vector.load %arg2[%c0_43, %c0_44, %c0_45, %c66] : memref<1x1x8x2432xf32, #tpu.memory_space<vmem>>, vector<1x1x8x2176xf32>
    %40 = vector.shape_cast %39 : vector<1x1x8x2176xf32> to vector<8x2176xf32>
    %c0_46 = arith.constant 0 : index
    %c0_47 = arith.constant 0 : index
    %c0_48 = arith.constant 0 : index
    %41 = vector.load %arg5[%c0_46, %c0_47, %c0_48] : memref<1x8x2176xf32, #tpu.memory_space<vmem>>, vector<1x8x2176xf32>
    %42 = vector.shape_cast %41 : vector<1x8x2176xf32> to vector<8x2176xf32>
    %c3 = arith.constant 3 : index
    %c0_49 = arith.constant 0 : index
    %c0_50 = arith.constant 0 : index
    %43 = vector.load %arg3[%c3, %c0_49, %c0_50] : memref<9x8x8xf32, #tpu.memory_space<vmem>>, vector<1x8x8xf32>
    %44 = vector.shape_cast %43 : vector<1x8x8xf32> to vector<8x8xf32>
    %cst_51 = arith.constant dense<0.000000e+00> : vector<8x2176xf32>
    %45 = tpu.matmul %44, %40, %cst_51 {dimension_numbers = #tpu.dot_dimension_numbers<[1], [0], [0], [1], [0, 0, 1, 1], [], []>} : vector<8x8xf32>, vector<8x2176xf32>, vector<8x2176xf32> -> vector<8x2176xf32>
    %46 = arith.addf %42, %45 : vector<8x2176xf32>
    %c0_52 = arith.constant 0 : index
    %c0_53 = arith.constant 0 : index
    %c0_54 = arith.constant 0 : index
    %47 = vector.load %arg5[%c0_52, %c0_53, %c0_54] : memref<1x8x2176xf32, #tpu.memory_space<vmem>>, vector<1x8x2176xf32>
    %48 = vector.shape_cast %47 : vector<1x8x2176xf32> to vector<8x2176xf32>
    %49 = vector.shape_cast %46 : vector<8x2176xf32> to vector<1x8x2176xf32>
    tpu.vector_store %arg5[%c0_52, %c0_53, %c0_54], %49 {strides = array<i32>} : memref<1x8x2176xf32, #tpu.memory_space<vmem>>, vector<1x8x2176xf32>,
    %c0_55 = arith.constant 0 : index
    %c0_56 = arith.constant 0 : index
    %c0_57 = arith.constant 0 : index
    %c67 = arith.constant 67 : index
    %50 = vector.load %arg2[%c0_55, %c0_56, %c0_57, %c67] : memref<1x1x8x2432xf32, #tpu.memory_space<vmem>>, vector<1x1x8x2176xf32>
    %51 = vector.shape_cast %50 : vector<1x1x8x2176xf32> to vector<8x2176xf32>
    %c0_58 = arith.constant 0 : index
    %c0_59 = arith.constant 0 : index
    %c0_60 = arith.constant 0 : index
    %52 = vector.load %arg5[%c0_58, %c0_59, %c0_60] : memref<1x8x2176xf32, #tpu.memory_space<vmem>>, vector<1x8x2176xf32>
    %53 = vector.shape_cast %52 : vector<1x8x2176xf32> to vector<8x2176xf32>
    %c4 = arith.constant 4 : index
    %c0_61 = arith.constant 0 : index
    %c0_62 = arith.constant 0 : index
    %54 = vector.load %arg3[%c4, %c0_61, %c0_62] : memref<9x8x8xf32, #tpu.memory_space<vmem>>, vector<1x8x8xf32>
    %55 = vector.shape_cast %54 : vector<1x8x8xf32> to vector<8x8xf32>
    %cst_63 = arith.constant dense<0.000000e+00> : vector<8x2176xf32>
    %56 = tpu.matmul %55, %51, %cst_63 {dimension_numbers = #tpu.dot_dimension_numbers<[1], [0], [0], [1], [0, 0, 1, 1], [], []>} : vector<8x8xf32>, vector<8x2176xf32>, vector<8x2176xf32> -> vector<8x2176xf32>
    %57 = arith.addf %53, %56 : vector<8x2176xf32>
    %c0_64 = arith.constant 0 : index
    %c0_65 = arith.constant 0 : index
    %c0_66 = arith.constant 0 : index
    %58 = vector.load %arg5[%c0_64, %c0_65, %c0_66] : memref<1x8x2176xf32, #tpu.memory_space<vmem>>, vector<1x8x2176xf32>
    %59 = vector.shape_cast %58 : vector<1x8x2176xf32> to vector<8x2176xf32>
    %60 = vector.shape_cast %57 : vector<8x2176xf32> to vector<1x8x2176xf32>
    tpu.vector_store %arg5[%c0_64, %c0_65, %c0_66], %60 {strides = array<i32>} : memref<1x8x2176xf32, #tpu.memory_space<vmem>>, vector<1x8x2176xf32>,
    %c0_67 = arith.constant 0 : index
    %c0_68 = arith.constant 0 : index
    %c0_69 = arith.constant 0 : index
    %c68 = arith.constant 68 : index
    %61 = vector.load %arg2[%c0_67, %c0_68, %c0_69, %c68] : memref<1x1x8x2432xf32, #tpu.memory_space<vmem>>, vector<1x1x8x2176xf32>
    %62 = vector.shape_cast %61 : vector<1x1x8x2176xf32> to vector<8x2176xf32>
    %c0_70 = arith.constant 0 : index
    %c0_71 = arith.constant 0 : index
    %c0_72 = arith.constant 0 : index
    %63 = vector.load %arg5[%c0_70, %c0_71, %c0_72] : memref<1x8x2176xf32, #tpu.memory_space<vmem>>, vector<1x8x2176xf32>
    %64 = vector.shape_cast %63 : vector<1x8x2176xf32> to vector<8x2176xf32>
    %c5 = arith.constant 5 : index
    %c0_73 = arith.constant 0 : index
    %c0_74 = arith.constant 0 : index
    %65 = vector.load %arg3[%c5, %c0_73, %c0_74] : memref<9x8x8xf32, #tpu.memory_space<vmem>>, vector<1x8x8xf32>
    %66 = vector.shape_cast %65 : vector<1x8x8xf32> to vector<8x8xf32>
    %cst_75 = arith.constant dense<0.000000e+00> : vector<8x2176xf32>
    %67 = tpu.matmul %66, %62, %cst_75 {dimension_numbers = #tpu.dot_dimension_numbers<[1], [0], [0], [1], [0, 0, 1, 1], [], []>} : vector<8x8xf32>, vector<8x2176xf32>, vector<8x2176xf32> -> vector<8x2176xf32>
    %68 = arith.addf %64, %67 : vector<8x2176xf32>
    %c0_76 = arith.constant 0 : index
    %c0_77 = arith.constant 0 : index
    %c0_78 = arith.constant 0 : index
    %69 = vector.load %arg5[%c0_76, %c0_77, %c0_78] : memref<1x8x2176xf32, #tpu.memory_space<vmem>>, vector<1x8x2176xf32>
    %70 = vector.shape_cast %69 : vector<1x8x2176xf32> to vector<8x2176xf32>
    %71 = vector.shape_cast %68 : vector<8x2176xf32> to vector<1x8x2176xf32>
    tpu.vector_store %arg5[%c0_76, %c0_77, %c0_78], %71 {strides = array<i32>} : memref<1x8x2176xf32, #tpu.memory_space<vmem>>, vector<1x8x2176xf32>,
    %c0_79 = arith.constant 0 : index
    %c0_80 = arith.constant 0 : index
    %c0_81 = arith.constant 0 : index
    %c132 = arith.constant 132 : index
    %72 = vector.load %arg2[%c0_79, %c0_80, %c0_81, %c132] : memref<1x1x8x2432xf32, #tpu.memory_space<vmem>>, vector<1x1x8x2176xf32>
    %73 = vector.shape_cast %72 : vector<1x1x8x2176xf32> to vector<8x2176xf32>
    %c0_82 = arith.constant 0 : index
    %c0_83 = arith.constant 0 : index
    %c0_84 = arith.constant 0 : index
    %74 = vector.load %arg5[%c0_82, %c0_83, %c0_84] : memref<1x8x2176xf32, #tpu.memory_space<vmem>>, vector<1x8x2176xf32>
    %75 = vector.shape_cast %74 : vector<1x8x2176xf32> to vector<8x2176xf32>
    %c6 = arith.constant 6 : index
    %c0_85 = arith.constant 0 : index
    %c0_86 = arith.constant 0 : index
    %76 = vector.load %arg3[%c6, %c0_85, %c0_86] : memref<9x8x8xf32, #tpu.memory_space<vmem>>, vector<1x8x8xf32>
    %77 = vector.shape_cast %76 : vector<1x8x8xf32> to vector<8x8xf32>
    %cst_87 = arith.constant dense<0.000000e+00> : vector<8x2176xf32>
    %78 = tpu.matmul %77, %73, %cst_87 {dimension_numbers = #tpu.dot_dimension_numbers<[1], [0], [0], [1], [0, 0, 1, 1], [], []>} : vector<8x8xf32>, vector<8x2176xf32>, vector<8x2176xf32> -> vector<8x2176xf32>
    %79 = arith.addf %75, %78 : vector<8x2176xf32>
    %c0_88 = arith.constant 0 : index
    %c0_89 = arith.constant 0 : index
    %c0_90 = arith.constant 0 : index
    %80 = vector.load %arg5[%c0_88, %c0_89, %c0_90] : memref<1x8x2176xf32, #tpu.memory_space<vmem>>, vector<1x8x2176xf32>
    %81 = vector.shape_cast %80 : vector<1x8x2176xf32> to vector<8x2176xf32>
    %82 = vector.shape_cast %79 : vector<8x2176xf32> to vector<1x8x2176xf32>
    tpu.vector_store %arg5[%c0_88, %c0_89, %c0_90], %82 {strides = array<i32>} : memref<1x8x2176xf32, #tpu.memory_space<vmem>>, vector<1x8x2176xf32>,
    %c0_91 = arith.constant 0 : index
    %c0_92 = arith.constant 0 : index
    %c0_93 = arith.constant 0 : index
    %c133 = arith.constant 133 : index
    %83 = vector.load %arg2[%c0_91, %c0_92, %c0_93, %c133] : memref<1x1x8x2432xf32, #tpu.memory_space<vmem>>, vector<1x1x8x2176xf32>
    %84 = vector.shape_cast %83 : vector<1x1x8x2176xf32> to vector<8x2176xf32>
    %c0_94 = arith.constant 0 : index
    %c0_95 = arith.constant 0 : index
    %c0_96 = arith.constant 0 : index
    %85 = vector.load %arg5[%c0_94, %c0_95, %c0_96] : memref<1x8x2176xf32, #tpu.memory_space<vmem>>, vector<1x8x2176xf32>
    %86 = vector.shape_cast %85 : vector<1x8x2176xf32> to vector<8x2176xf32>
    %c7 = arith.constant 7 : index
    %c0_97 = arith.constant 0 : index
    %c0_98 = arith.constant 0 : index
    %87 = vector.load %arg3[%c7, %c0_97, %c0_98] : memref<9x8x8xf32, #tpu.memory_space<vmem>>, vector<1x8x8xf32>
    %88 = vector.shape_cast %87 : vector<1x8x8xf32> to vector<8x8xf32>
    %cst_99 = arith.constant dense<0.000000e+00> : vector<8x2176xf32>
    %89 = tpu.matmul %88, %84, %cst_99 {dimension_numbers = #tpu.dot_dimension_numbers<[1], [0], [0], [1], [0, 0, 1, 1], [], []>} : vector<8x8xf32>, vector<8x2176xf32>, vector<8x2176xf32> -> vector<8x2176xf32>
    %90 = arith.addf %86, %89 : vector<8x2176xf32>
    %c0_100 = arith.constant 0 : index
    %c0_101 = arith.constant 0 : index
    %c0_102 = arith.constant 0 : index
    %91 = vector.load %arg5[%c0_100, %c0_101, %c0_102] : memref<1x8x2176xf32, #tpu.memory_space<vmem>>, vector<1x8x2176xf32>
    %92 = vector.shape_cast %91 : vector<1x8x2176xf32> to vector<8x2176xf32>
    %93 = vector.shape_cast %90 : vector<8x2176xf32> to vector<1x8x2176xf32>
    tpu.vector_store %arg5[%c0_100, %c0_101, %c0_102], %93 {strides = array<i32>} : memref<1x8x2176xf32, #tpu.memory_space<vmem>>, vector<1x8x2176xf32>,
    %c0_103 = arith.constant 0 : index
    %c0_104 = arith.constant 0 : index
    %c0_105 = arith.constant 0 : index
    %c134 = arith.constant 134 : index
    %94 = vector.load %arg2[%c0_103, %c0_104, %c0_105, %c134] : memref<1x1x8x2432xf32, #tpu.memory_space<vmem>>, vector<1x1x8x2176xf32>
    %95 = vector.shape_cast %94 : vector<1x1x8x2176xf32> to vector<8x2176xf32>
    %c0_106 = arith.constant 0 : index
    %c0_107 = arith.constant 0 : index
    %c0_108 = arith.constant 0 : index
    %96 = vector.load %arg5[%c0_106, %c0_107, %c0_108] : memref<1x8x2176xf32, #tpu.memory_space<vmem>>, vector<1x8x2176xf32>
    %97 = vector.shape_cast %96 : vector<1x8x2176xf32> to vector<8x2176xf32>
    %c8 = arith.constant 8 : index
    %c0_109 = arith.constant 0 : index
    %c0_110 = arith.constant 0 : index
    %98 = vector.load %arg3[%c8, %c0_109, %c0_110] : memref<9x8x8xf32, #tpu.memory_space<vmem>>, vector<1x8x8xf32>
    %99 = vector.shape_cast %98 : vector<1x8x8xf32> to vector<8x8xf32>
    %cst_111 = arith.constant dense<0.000000e+00> : vector<8x2176xf32>
    %100 = tpu.matmul %99, %95, %cst_111 {dimension_numbers = #tpu.dot_dimension_numbers<[1], [0], [0], [1], [0, 0, 1, 1], [], []>} : vector<8x8xf32>, vector<8x2176xf32>, vector<8x2176xf32> -> vector<8x2176xf32>
    %101 = arith.addf %97, %100 : vector<8x2176xf32>
    %c0_112 = arith.constant 0 : index
    %c0_113 = arith.constant 0 : index
    %c0_114 = arith.constant 0 : index
    %102 = vector.load %arg5[%c0_112, %c0_113, %c0_114] : memref<1x8x2176xf32, #tpu.memory_space<vmem>>, vector<1x8x2176xf32>
    %103 = vector.shape_cast %102 : vector<1x8x2176xf32> to vector<8x2176xf32>
    %104 = vector.shape_cast %101 : vector<8x2176xf32> to vector<1x8x2176xf32>
    tpu.vector_store %arg5[%c0_112, %c0_113, %c0_114], %104 {strides = array<i32>} : memref<1x8x2176xf32, #tpu.memory_space<vmem>>, vector<1x8x2176xf32>,
    %c0_115 = arith.constant 0 : index
    %c0_116 = arith.constant 0 : index
    %c0_117 = arith.constant 0 : index
    %105 = vector.load %arg5[%c0_115, %c0_116, %c0_117] : memref<1x8x2176xf32, #tpu.memory_space<vmem>>, vector<1x8x2176xf32>
    %106 = vector.shape_cast %105 : vector<1x8x2176xf32> to vector<8x2176xf32>
    %cst_118 = arith.constant 5.000000e-01 : f32
    %107 = vector.broadcast %cst_118 : f32 to vector<8x2176xf32>
    %108 = arith.minimumf %106, %107 : vector<8x2176xf32>
    %cst_119 = arith.constant 3.000000e-01 : f32
    %109 = vector.broadcast %cst_119 : f32 to vector<8x2176xf32>
    %110 = arith.maximumf %108, %109 : vector<8x2176xf32>
    %c0_120 = arith.constant 0 : index
    %c0_121 = arith.constant 0 : index
    %c0_122 = arith.constant 0 : index
    %111 = vector.load %arg5[%c0_120, %c0_121, %c0_122] : memref<1x8x2176xf32, #tpu.memory_space<vmem>>, vector<1x8x2176xf32>
    %112 = vector.shape_cast %111 : vector<1x8x2176xf32> to vector<8x2176xf32>
    %113 = vector.shape_cast %110 : vector<8x2176xf32> to vector<1x8x2176xf32>
    tpu.vector_store %arg5[%c0_120, %c0_121, %c0_122], %113 {strides = array<i32>} : memref<1x8x2176xf32, #tpu.memory_space<vmem>>, vector<1x8x2176xf32>,
    return
  }
  func.func @transform_0(%arg0: i32, %arg1: i32) -> (i32, i32, i32, i32) {
    %c0_i32 = arith.constant 0 : i32
    %c0_i32_0 = arith.constant 0 : i32
    %c0_i32_1 = arith.constant 0 : i32
    return %arg0, %arg1, %c0_i32, %c0_i32_0 : i32, i32, i32, i32
  }
  func.func @transform_1(%arg0: i32, %arg1: i32) -> (i32, i32, i32) {
    %c0_i32 = arith.constant 0 : i32
    %c0_i32_0 = arith.constant 0 : i32
    %c0_i32_1 = arith.constant 0 : i32
    %c0_i32_2 = arith.constant 0 : i32
    return %c0_i32, %c0_i32_0, %c0_i32_1 : i32, i32, i32
  }
  func.func @transform_2(%arg0: i32, %arg1: i32) -> (i32, i32) {
    %c0_i32 = arith.constant 0 : i32
    %c0_i32_0 = arith.constant 0 : i32
    %c0_i32_1 = arith.constant 0 : i32
    return %c0_i32, %c0_i32_0 : i32, i32
  }
  func.func @transform_3(%arg0: i32, %arg1: i32) -> (i32, i32, i32) {
    %c0_i32 = arith.constant 0 : i32
    %c0_i32_0 = arith.constant 0 : i32
    return %arg0, %c0_i32, %arg1 : i32, i32, i32
  }
}

</mosaic_0001>

<llo_original>
// kernel: model_forward.1
$region0: #{model_forward.1}
  #allocation0 [shape = 'u32[]', space=smem, size = 0x4, offset = 0x4, fixed_abs, tag = 'smem constant byte address 0x4 - core index']
  #allocation1 [shape = 'u32[144,128]{1,0:T(1,128)}', space=vmem, size = 0x12000, scoped, tag = 'internal scratch']
  %s0 = inlined_call_operand.vmem [shape: f32[1,2,8,2432], index: 0, kind: input, shape index: {}]
  %s1 = inlined_call_operand.vmem [shape: f32[9,8,8], index: 1, kind: input, shape index: {}]
  %s2 = inlined_call_operand.vmem [shape: f32[8,1], index: 2, kind: input, shape index: {}]
  %s3 = inlined_call_operand.vmem [shape: f32[1,8,4352], index: 3, kind: output, shape index: {}]
  %s4 = sld [smem:[#allocation0]]
  $region45: #{model_forward.1} parent=0
    _
  %s6 = ssub.s32 1, %s4
  %s7 = scalar_select 0, %s6, %s4
  loop: start=0, step=1, limit=4
  $region2: #{model_forward.1} parent=0 // loop_pre_header
    _
  $region3: #{model_forward.1} parent=0 // loop_header
    %s9 = sphi 0, %s13
    %p10 = scmp.ge.s32.totalorder %s9, 4
    %s16 = sphi 0, %s28
    %s17 = sphi 0, %s24
    %s18 = sphi 0, %s16
    %s19 = sphi 0, %s17
    %s20 = sphi 0, %s18
    %s21 = sphi 0, %s19
    %s33 = sphi 0, %s35
    %s36 = sphi 0, %s33
    %s37 = sphi 0, %s36
    %s53 = sphi 0, %s37
    %s57 = sphi 0, %s57
    %s59 = sphi 0, %s57
    %s60 = sphi 0, %s59
    %s74 = sphi 0, %s60
    %s78 = sphi 0, %s78
    %s80 = sphi 0, %s78
    %s81 = sphi 0, %s80
    %s95 = sphi 0, %s81
    %s103 = sphi 0, %s105
    %s106 = sphi 0, %s103
    %s107 = sphi 0, %s106
    %s123 = sphi 0, %s107
  $region4: #{model_forward.1} parent=0 // loop_header_branch
    %12 = sbr.rel (%p10) target = $region8
  $region5: #{model_forward.1} parent=0 // loop_body
    %s14 = ssub.s32 %s9, 1
    %s15 = ssub.s32 %s9, 2
    %s22 = sadd.s32 1, %s17
    %p23 = scmp.ge.s32.totalorder %s22, 2
    %s24 = scalar_select %p23, 0, %s22
    %s25 = sadd.s32 1, %s16
    %s26 = scalar_select %p23, %s25, %s16
    %p27 = scmp.ge.s32.totalorder %s26, 1
    %s28 = scalar_select %p27, 0, %s26
    %s29 = ssub.s32 %s16, %s28
    %s30 = ssub.s32 %s17, %s24
    %s31 = sor.u32 %s29, %s30
    %p32 = scmp.eq.s32.totalorder %s31, 0
    %s34 = sadd.s32 %s33, 1
    %s35 = scalar_select %p32, %s33, %s34
    %p38 = pneg %p32
    %p39 = scmp.eq.s32.totalorder %s9, 1
    %p40 = por %p38, %p39
    %p41 = scmp.ne.s32.totalorder %s33, %s36
    %p42 = scmp.eq.s32.totalorder %s9, 0
    %p43 = por %p41, %p42
    %p44 = scmp.ne.s32.totalorder %s33, %s36
    %p45 = scmp.eq.s32.totalorder %s14, 1
    %p46 = por %p44, %p45
    %p47 = scmp.ne.s32.totalorder %s36, %s37
    %p48 = scmp.eq.s32.totalorder %s14, 0
    %p49 = por %p47, %p48
    %p50 = scmp.ne.s32.totalorder %s36, %s37
    %p51 = scmp.eq.s32.totalorder %s15, 1
    %p52 = por %p50, %p51
    %p54 = scmp.ne.s32.totalorder %s37, %s53
    %p55 = scmp.eq.s32.totalorder %s15, 0
    %p56 = por %p54, %p55
    %s58 = sadd.s32 %s57, 1
    %p61 = scmp.eq.s32.totalorder %s9, 1
    %p62 = scmp.ne.s32.totalorder %s57, %s59
    %p63 = scmp.eq.s32.totalorder %s9, 0
    %p64 = por %p62, %p63
    %p65 = scmp.ne.s32.totalorder %s57, %s59
    %p66 = scmp.eq.s32.totalorder %s14, 1
    %p67 = por %p65, %p66
    %p68 = scmp.ne.s32.totalorder %s59, %s60
    %p69 = scmp.eq.s32.totalorder %s14, 0
    %p70 = por %p68, %p69
    %p71 = scmp.ne.s32.totalorder %s59, %s60
    %p72 = scmp.eq.s32.totalorder %s15, 1
    %p73 = por %p71, %p72
    %p75 = scmp.ne.s32.totalorder %s60, %s74
    %p76 = scmp.eq.s32.totalorder %s15, 0
    %p77 = por %p75, %p76
    %s79 = sadd.s32 %s78, 1
    %p82 = scmp.eq.s32.totalorder %s9, 1
    %p83 = scmp.ne.s32.totalorder %s78, %s80
    %p84 = scmp.eq.s32.totalorder %s9, 0
    %p85 = por %p83, %p84
    %p86 = scmp.ne.s32.totalorder %s78, %s80
    %p87 = scmp.eq.s32.totalorder %s14, 1
    %p88 = por %p86, %p87
    %p89 = scmp.ne.s32.totalorder %s80, %s81
    %p90 = scmp.eq.s32.totalorder %s14, 0
    %p91 = por %p89, %p90
    %p92 = scmp.ne.s32.totalorder %s80, %s81
    %p93 = scmp.eq.s32.totalorder %s15, 1
    %p94 = por %p92, %p93
    %p96 = scmp.ne.s32.totalorder %s81, %s95
    %p97 = scmp.eq.s32.totalorder %s15, 0
    %p98 = por %p96, %p97
    %s99 = ssub.s32 %s16, %s28
    %s100 = ssub.s32 %s17, %s24
    %s101 = sor.u32 %s99, %s100
    %p102 = scmp.eq.s32.totalorder %s101, 0
    %s104 = sadd.s32 %s103, 1
    %s105 = scalar_select %p102, %s103, %s104
    %p108 = pneg %p102
    %p109 = scmp.eq.s32.totalorder %s9, 1
    %p110 = por %p108, %p109
    %p111 = scmp.ne.s32.totalorder %s103, %s106
    %p112 = scmp.eq.s32.totalorder %s9, 0
    %p113 = por %p111, %p112
    %p114 = scmp.ne.s32.totalorder %s103, %s106
    %p115 = scmp.eq.s32.totalorder %s14, 1
    %p116 = por %p114, %p115
    %p117 = scmp.ne.s32.totalorder %s106, %s107
    %p118 = scmp.eq.s32.totalorder %s14, 0
    %p119 = por %p117, %p118
    %p120 = scmp.ne.s32.totalorder %s106, %s107
    %p121 = scmp.eq.s32.totalorder %s15, 1
    %p122 = por %p120, %p121
    %p124 = scmp.ne.s32.totalorder %s107, %s123
    %p125 = scmp.eq.s32.totalorder %s15, 0
    %p126 = por %p124, %p125
    %p127 = scmp.le.s32.totalorder 1, %s9
    %p128 = scmp.lt.s32.totalorder %s9, 3
    %p129 = pnand %p127, %p128
    %p130 = pneg %p129
    // Predicated region
    $region9: #{model_forward.1} parent=5 // pred_check
      _
    $region10: #{model_forward.1} parent=5 // pred_check_branch
      %132 = sbr.rel (%p129) target = $region12
    $region11: #{model_forward.1} parent=5 // pred_region
      %s133 = ssub.s32 %s9, 1
      // Predicated region
      $region13: #{model_forward.1} parent=11 // pred_check
        %p134 = pneg %p70
      $region14: #{model_forward.1} parent=11 // pred_check_branch
        %136 = sbr.rel (%p134) target = $region16
      $region15: #{model_forward.1} parent=11 // pred_region
        _
      $region16: #{model_forward.1} parent=11 // pred_fallthru
        _
      // Predicated region
      $region17: #{model_forward.1} parent=11 // pred_check
        %p137 = pneg %p91
      $region18: #{model_forward.1} parent=11 // pred_check_branch
        %139 = sbr.rel (%p137) target = $region20
      $region19: #{model_forward.1} parent=11 // pred_region
        _
      $region20: #{model_forward.1} parent=11 // pred_fallthru
        _
    $region12: #{model_forward.1} parent=5 // pred_fallthru
      _
    %p140 = scmp.lt.s32.totalorder %s9, 2
    // Predicated region
    $region21: #{model_forward.1} parent=5 // pred_check
      %p141 = pneg %p140
    $region22: #{model_forward.1} parent=5 // pred_check_branch
      %143 = sbr.rel (%p141) target = $region24
    $region23: #{model_forward.1} parent=5 // pred_region
      // Predicated region
      $region25: #{model_forward.1} parent=23 // pred_check
        %p144 = pneg %p43
      $region26: #{model_forward.1} parent=23 // pred_check_branch
        %146 = sbr.rel (%p144) target = $region28
      $region27: #{model_forward.1} parent=23 // pred_region
        %p147 = scmp.lt.s32.totalorder %s16, 0
        %s148 = scalar_select %p147, %s16, 0
        %p149 = scmp.lt.s32.totalorder %s17, 1
        %s150 = scalar_select %p149, %s17, 1
        %s151 = smul.addr %s150, 19
        %s152 = smul.addr %s148, 38
        %s153 = sadd.s32 %s151, %s152
        %s154 = smul.addr %s153, 8
        %s155 = scalar_lea.vmem %s0, %s154
      $region28: #{model_forward.1} parent=23 // pred_fallthru
        _
    $region24: #{model_forward.1} parent=5 // pred_fallthru
      _
    %p156 = scmp.le.s32.totalorder 1, %s9
    %p157 = scmp.lt.s32.totalorder %s9, 3
    %p158 = pnand %p156, %p157
    %p159 = pneg %p158
    // Predicated region
    $region29: #{model_forward.1} parent=5 // pred_check
      _
    $region30: #{model_forward.1} parent=5 // pred_check_branch
      %161 = sbr.rel (%p158) target = $region32
    $region31: #{model_forward.1} parent=5 // pred_region
      %s162 = ssub.s32 %s9, 1
      %p163 = scmp.lt.s32.totalorder %s18, 0
      %s164 = scalar_select %p163, %s18, 0
      %p165 = scmp.lt.s32.totalorder %s19, 1
      %s166 = scalar_select %p165, %s19, 1
      %s167 = smul.addr %s166, 19
      %s168 = smul.addr %s164, 38
      %s169 = sadd.s32 %s167, %s168
      %s170 = smul.addr %s169, 8
      %s171 = scalar_lea.vmem %s0, %s170
      %p172 = pneg %p49
      %p173 = pneg %p46
      %p174 = pneg %p70
      %p175 = pneg %p67
      %p176 = pneg %p91
      %p177 = pneg %p88
      %p178 = pneg %p119
      %p179 = pneg %p116
      %s180 = smul.u32 17, %s19
      %p181 = scmp.lt.s32.totalorder %s18, 0
      %s182 = scalar_select %p181, %s18, 0
      %p183 = scmp.lt.s32.totalorder %s180, 33
      %s184 = scalar_select %p183, %s180, 33
      %s185 = smul.addr %s182, 34
      %s186 = sadd.s32 %s184, %s185
      %s187 = smul.addr %s186, 8
      %s188 = scalar_lea.vmem %s3, %s187
      %p189 = scmp.lt.s32.totalorder %s18, 0
      %s190 = scalar_select %p189, %s18, 0
      %p191 = scmp.lt.s32.totalorder %s19, 1
      %s192 = scalar_select %p191, %s19, 1
      %s193 = smul.addr %s192, 19
      %s194 = smul.addr %s190, 38
      %s195 = sadd.s32 %s193, %s194
      %s196 = smul.addr %s195, 8
      %s197 = scalar_lea.vmem %s0, %s196
      %s198 = smul.u32 17, %s19
      %p199 = scmp.lt.s32.totalorder %s18, 0
      %s200 = scalar_select %p199, %s18, 0
      %p201 = scmp.lt.s32.totalorder %s198, 33
      %s202 = scalar_select %p201, %s198, 33
      %s203 = smul.addr %s200, 34
      %s204 = sadd.s32 %s202, %s203
      %s205 = smul.addr %s204, 8
      %s206 = scalar_lea.vmem %s3, %s205
      %s207 = smul.u32 17, %s19
      %v208 = vld [vmem:[%s2] sm:$0xff]
      %210 = vset.pattern.permute.xlu0 0
      %211 = vperm.xlu0 %210, %v208
      %v212 = vpop.permute.xlu0 %211
      %214 = vst [vmem:[%s206] sm:$0xff] %v212
      %215 = vst [vmem:[%s206 + $0x8] sm:$0xff] %v212
      %216 = vst [vmem:[%s206 + $0x10] sm:$0xff] %v212
      %217 = vst [vmem:[%s206 + $0x18] sm:$0xff] %v212
      %218 = vst [vmem:[%s206 + $0x20] sm:$0xff] %v212
      %219 = vst [vmem:[%s206 + $0x28] sm:$0xff] %v212
      %220 = vst [vmem:[%s206 + $0x30] sm:$0xff] %v212
      %221 = vst [vmem:[%s206 + $0x38] sm:$0xff] %v212
      %222 = vst [vmem:[%s206 + $0x40] sm:$0xff] %v212
      %223 = vst [vmem:[%s206 + $0x48] sm:$0xff] %v212
      %224 = vst [vmem:[%s206 + $0x50] sm:$0xff] %v212
      %225 = vst [vmem:[%s206 + $0x58] sm:$0xff] %v212
      %226 = vst [vmem:[%s206 + $0x60] sm:$0xff] %v212
      %227 = vst [vmem:[%s206 + $0x68] sm:$0xff] %v212
      %228 = vst [vmem:[%s206 + $0x70] sm:$0xff] %v212
      %229 = vst [vmem:[%s206 + $0x78] sm:$0xff] %v212
      %230 = vst [vmem:[%s206 + $0x80] sm:$0xff] %v212
      %v231 = vld [vmem:[%s197] sm:$0xff]
      %v232 = vld [vmem:[%s197 + $0x8] sm:$0xff]
      %v233 = vld [vmem:[%s197 + $0x10] sm:$0xff]
      %v234 = vld [vmem:[%s197 + $0x18] sm:$0xff]
      %v235 = vld [vmem:[%s197 + $0x20] sm:$0xff]
      %v236 = vld [vmem:[%s197 + $0x28] sm:$0xff]
      %v237 = vld [vmem:[%s197 + $0x30] sm:$0xff]
      %v238 = vld [vmem:[%s197 + $0x38] sm:$0xff]
      %v239 = vld [vmem:[%s197 + $0x40] sm:$0xff]
      %v240 = vld [vmem:[%s197 + $0x48] sm:$0xff]
      %v241 = vld [vmem:[%s197 + $0x50] sm:$0xff]
      %v242 = vld [vmem:[%s197 + $0x58] sm:$0xff]
      %v243 = vld [vmem:[%s197 + $0x60] sm:$0xff]
      %v244 = vld [vmem:[%s197 + $0x68] sm:$0xff]
      %v245 = vld [vmem:[%s197 + $0x70] sm:$0xff]
      %v246 = vld [vmem:[%s197 + $0x78] sm:$0xff]
      %v247 = vld [vmem:[%s197 + $0x80] sm:$0xff]
      %v248 = vld [vmem:[%s206] sm:$0xff]
      %v249 = vld [vmem:[%s206 + $0x8] sm:$0xff]
      %v250 = vld [vmem:[%s206 + $0x10] sm:$0xff]
      %v251 = vld [vmem:[%s206 + $0x18] sm:$0xff]
      %v252 = vld [vmem:[%s206 + $0x20] sm:$0xff]
      %v253 = vld [vmem:[%s206 + $0x28] sm:$0xff]
      %v254 = vld [vmem:[%s206 + $0x30] sm:$0xff]
      %v255 = vld [vmem:[%s206 + $0x38] sm:$0xff]
      %v256 = vld [vmem:[%s206 + $0x40] sm:$0xff]
      %v257 = vld [vmem:[%s206 + $0x48] sm:$0xff]
      %v258 = vld [vmem:[%s206 + $0x50] sm:$0xff]
      %v259 = vld [vmem:[%s206 + $0x58] sm:$0xff]
      %v260 = vld [vmem:[%s206 + $0x60] sm:$0xff]
      %v261 = vld [vmem:[%s206 + $0x68] sm:$0xff]
      %v262 = vld [vmem:[%s206 + $0x70] sm:$0xff]
      %v263 = vld [vmem:[%s206 + $0x78] sm:$0xff]
      %v264 = vld [vmem:[%s206 + $0x80] sm:$0xff]
      %v265 = vld [vmem:[%s1] sm:$0xff]
      %vm266 = vcmask 64512
      %v268 = vsel %vm266, %v265, 0
      %270 = vmatprep.subr.mxu0 %v232
      %271 = vmatpush1.msra.mxu0 %v231
      %272 = vmatprep.subr.mxu0 0.0
      %273 = vmatpush1.msra.mxu0 0.0
      %274 = vmatprep.subr.mxu0 0.0
      %275 = vmatpush1.msra.mxu0 0.0
      %276 = vmatprep.subr.mxu0 0.0
      %277 = vmatpush1.msra.mxu0 0.0
      %278 = vmatprep.subr.mxu0 0.0
      %279 = vmatpush1.msra.mxu0 0.0
      %280 = vmatprep.subr.mxu0 0.0
      %281 = vmatpush1.msra.mxu0 0.0
      %282 = vmatprep.subr.mxu0 0.0
      %283 = vmatpush1.msra.mxu0 0.0
      %284 = vmatprep.subr.mxu0 0.0
      %285 = vmatpush1.msra.mxu0 0.0
      %286 = vmatprep.subr.mxu0 0.0
      %287 = vmatpush1.msra.mxu0 0.0
      %288 = vmatprep.subr.mxu0 0.0
      %289 = vmatpush1.msra.mxu0 0.0
      %290 = vmatprep.subr.mxu0 0.0
      %291 = vmatpush1.msra.mxu0 0.0
      %292 = vmatprep.subr.mxu0 0.0
      %293 = vmatpush1.msra.mxu0 0.0
      %294 = vmatprep.subr.mxu0 0.0
      %295 = vmatpush1.msra.mxu0 0.0
      %296 = vmatprep.subr.mxu0 0.0
      %297 = vmatpush1.msra.mxu0 0.0
      %298 = vmatprep.subr.mxu0 0.0
      %299 = vmatpush1.msra.mxu0 0.0
      %300 = vmatprep.subr.mxu0 0.0
      %301 = vmatpush1.msra.mxu0 0.0
      %302 = vmatprep.subr.mxu0 0.0
      %303 = vmatpush1.msra.mxu0 0.0
      %304 = vmatprep.subr.mxu0 0.0
      %305 = vmatpush1.msra.mxu0 0.0
      %306 = vmatprep.subr.mxu0 0.0
      %307 = vmatpush1.msra.mxu0 0.0
      %308 = vmatprep.subr.mxu0 0.0
      %309 = vmatpush1.msra.mxu0 0.0
      %310 = vmatprep.subr.mxu0 0.0
      %311 = vmatpush1.msra.mxu0 0.0
      %312 = vmatprep.subr.mxu0 0.0
      %313 = vmatpush1.msra.mxu0 0.0
      %314 = vmatprep.subr.mxu0 0.0
      %315 = vmatpush1.msra.mxu0 0.0
      %316 = vmatprep.subr.mxu0 0.0
      %317 = vmatpush1.msra.mxu0 0.0
      %318 = vmatprep.subr.mxu0 0.0
      %319 = vmatpush1.msra.mxu0 0.0
      %320 = vmatprep.subr.mxu0 0.0
      %321 = vmatpush1.msra.mxu0 0.0
      %322 = vmatprep.subr.mxu0 0.0
      %323 = vmatpush1.msra.mxu0 0.0
      %324 = vmatprep.subr.mxu0 0.0
      %325 = vmatpush1.msra.mxu0 0.0
      %326 = vmatprep.subr.mxu0 0.0
      %327 = vmatpush1.msra.mxu0 0.0
      %328 = vmatprep.subr.mxu0 0.0
      %329 = vmatpush1.msra.mxu0 0.0
      %330 = vmatprep.subr.mxu0 0.0
      %331 = vmatpush1.msra.mxu0 0.0
      %332 = vmatprep.subr.mxu0 0.0
      %333 = vmatpush1.msra.mxu0 0.0
      %334 = vmatprep.mubr.f32.mxu0 0.0
      %335 = vmatmul.mubr.f32.gmra.mrb[0].mxu0 %v268
      %v336 = vpop.f32.mrb[0].mxu0
      %v337 = vadd.f32 0.0, %v336
      %v338 = vpop.f32.mrb[0].mxu0
      %v339 = vadd.f32 0.0, %v338
      %340 = vdwg.mxu0
      %341 = vmatprep.subr.mxu0 %v234
      %342 = vmatpush1.msra.mxu0 %v233
      %343 = vmatprep.subr.mxu0 0.0
      %344 = vmatpush1.msra.mxu0 0.0
      %345 = vmatprep.subr.mxu0 0.0
      %346 = vmatpush1.msra.mxu0 0.0
      %347 = vmatprep.subr.mxu0 0.0
      %348 = vmatpush1.msra.mxu0 0.0
      %349 = vmatprep.subr.mxu0 0.0
      %350 = vmatpush1.msra.mxu0 0.0
      %351 = vmatprep.subr.mxu0 0.0
      %352 = vmatpush1.msra.mxu0 0.0
      %353 = vmatprep.subr.mxu0 0.0
      %354 = vmatpush1.msra.mxu0 0.0
      %355 = vmatprep.subr.mxu0 0.0
      %356 = vmatpush1.msra.mxu0 0.0
      %357 = vmatprep.subr.mxu0 0.0
      %358 = vmatpush1.msra.mxu0 0.0
      %359 = vmatprep.subr.mxu0 0.0
      %360 = vmatpush1.msra.mxu0 0.0
      %361 = vmatprep.subr.mxu0 0.0
      %362 = vmatpush1.msra.mxu0 0.0
      %363 = vmatprep.subr.mxu0 0.0
      %364 = vmatpush1.msra.mxu0 0.0
      %365 = vmatprep.subr.mxu0 0.0
      %366 = vmatpush1.msra.mxu0 0.0
      %367 = vmatprep.subr.mxu0 0.0
      %368 = vmatpush1.msra.mxu0 0.0
      %369 = vmatprep.subr.mxu0 0.0
      %370 = vmatpush1.msra.mxu0 0.0
      %371 = vmatprep.subr.mxu0 0.0
      %372 = vmatpush1.msra.mxu0 0.0
      %373 = vmatprep.subr.mxu0 0.0
      %374 = vmatpush1.msra.mxu0 0.0
      %375 = vmatprep.subr.mxu0 0.0
      %376 = vmatpush1.msra.mxu0 0.0
      %377 = vmatprep.subr.mxu0 0.0
      %378 = vmatpush1.msra.mxu0 0.0
      %379 = vmatprep.subr.mxu0 0.0
      %380 = vmatpush1.msra.mxu0 0.0
      %381 = vmatprep.subr.mxu0 0.0
      %382 = vmatpush1.msra.mxu0 0.0
      %383 = vmatprep.subr.mxu0 0.0
      %384 = vmatpush1.msra.mxu0 0.0
      %385 = vmatprep.subr.mxu0 0.0
      %386 = vmatpush1.msra.mxu0 0.0
      %387 = vmatprep.subr.mxu0 0.0
      %388 = vmatpush1.msra.mxu0 0.0
      %389 = vmatprep.subr.mxu0 0.0
      %390 = vmatpush1.msra.mxu0 0.0
      %391 = vmatprep.subr.mxu0 0.0
      %392 = vmatpush1.msra.mxu0 0.0
      %393 = vmatprep.subr.mxu0 0.0
      %394 = vmatpush1.msra.mxu0 0.0
      %395 = vmatprep.subr.mxu0 0.0
      %396 = vmatpush1.msra.mxu0 0.0
      %397 = vmatprep.subr.mxu0 0.0
      %398 = vmatpush1.msra.mxu0 0.0
      %399 = vmatprep.subr.mxu0 0.0
      %400 = vmatpush1.msra.mxu0 0.0
      %401 = vmatprep.subr.mxu0 0.0
      %402 = vmatpush1.msra.mxu0 0.0
      %403 = vmatprep.subr.mxu0 0.0
      %404 = vmatpush1.msra.mxu0 0.0
      %405 = vmatprep.mubr.f32.mxu0 0.0
      %406 = vmatmul.mubr.f32.gmra.mrb[0].mxu0 %v268
      %v407 = vpop.f32.mrb[0].mxu0
      %v408 = vadd.f32 0.0, %v407
      %v409 = vpop.f32.mrb[0].mxu0
      %v410 = vadd.f32 0.0, %v409
      %411 = vdwg.mxu0
      %412 = vmatprep.subr.mxu0 %v236
      %413 = vmatpush1.msra.mxu0 %v235
      %414 = vmatprep.subr.mxu0 0.0
      %415 = vmatpush1.msra.mxu0 0.0
      %416 = vmatprep.subr.mxu0 0.0
      %417 = vmatpush1.msra.mxu0 0.0
      %418 = vmatprep.subr.mxu0 0.0
      %419 = vmatpush1.msra.mxu0 0.0
      %420 = vmatprep.subr.mxu0 0.0
      %421 = vmatpush1.msra.mxu0 0.0
      %422 = vmatprep.subr.mxu0 0.0
      %423 = vmatpush1.msra.mxu0 0.0
      %424 = vmatprep.subr.mxu0 0.0
      %425 = vmatpush1.msra.mxu0 0.0
      %426 = vmatprep.subr.mxu0 0.0
      %427 = vmatpush1.msra.mxu0 0.0
      %428 = vmatprep.subr.mxu0 0.0
      %429 = vmatpush1.msra.mxu0 0.0
      %430 = vmatprep.subr.mxu0 0.0
      %431 = vmatpush1.msra.mxu0 0.0
      %432 = vmatprep.subr.mxu0 0.0
      %433 = vmatpush1.msra.mxu0 0.0
      %434 = vmatprep.subr.mxu0 0.0
      %435 = vmatpush1.msra.mxu0 0.0
      %436 = vmatprep.subr.mxu0 0.0
      %437 = vmatpush1.msra.mxu0 0.0
      %438 = vmatprep.subr.mxu0 0.0
      %439 = vmatpush1.msra.mxu0 0.0
      %440 = vmatprep.subr.mxu0 0.0
      %441 = vmatpush1.msra.mxu0 0.0
      %442 = vmatprep.subr.mxu0 0.0
      %443 = vmatpush1.msra.mxu0 0.0
      %444 = vmatprep.subr.mxu0 0.0
      %445 = vmatpush1.msra.mxu0 0.0
      %446 = vmatprep.subr.mxu0 0.0
      %447 = vmatpush1.msra.mxu0 0.0
      %448 = vmatprep.subr.mxu0 0.0
      %449 = vmatpush1.msra.mxu0 0.0
      %450 = vmatprep.subr.mxu0 0.0
      %451 = vmatpush1.msra.mxu0 0.0
      %452 = vmatprep.subr.mxu0 0.0
      %453 = vmatpush1.msra.mxu0 0.0
      %454 = vmatprep.subr.mxu0 0.0
      %455 = vmatpush1.msra.mxu0 0.0
      %456 = vmatprep.subr.mxu0 0.0
      %457 = vmatpush1.msra.mxu0 0.0
      %458 = vmatprep.subr.mxu0 0.0
      %459 = vmatpush1.msra.mxu0 0.0
      %460 = vmatprep.subr.mxu0 0.0
      %461 = vmatpush1.msra.mxu0 0.0
      %462 = vmatprep.subr.mxu0 0.0
      %463 = vmatpush1.msra.mxu0 0.0
      %464 = vmatprep.subr.mxu0 0.0
      %465 = vmatpush1.msra.mxu0 0.0
      %466 = vmatprep.subr.mxu0 0.0
      %467 = vmatpush1.msra.mxu0 0.0
      %468 = vmatprep.subr.mxu0 0.0
      %469 = vmatpush1.msra.mxu0 0.0
      %470 = vmatprep.subr.mxu0 0.0
      %471 = vmatpush1.msra.mxu0 0.0
      %472 = vmatprep.subr.mxu0 0.0
      %473 = vmatpush1.msra.mxu0 0.0
      %474 = vmatprep.subr.mxu0 0.0
      %475 = vmatpush1.msra.mxu0 0.0
      %476 = vmatprep.mubr.f32.mxu0 0.0
      %477 = vmatmul.mubr.f32.gmra.mrb[0].mxu0 %v268
      %v478 = vpop.f32.mrb[0].mxu0
      %v479 = vadd.f32 0.0, %v478
      %v480 = vpop.f32.mrb[0].mxu0
      %v481 = vadd.f32 0.0, %v480
      %482 = vdwg.mxu0
      %483 = vmatprep.subr.mxu0 %v238
      %484 = vmatpush1.msra.mxu0 %v237
      %485 = vmatprep.subr.mxu0 0.0
      %486 = vmatpush1.msra.mxu0 0.0
      %487 = vmatprep.subr.mxu0 0.0
      %488 = vmatpush1.msra.mxu0 0.0
      %489 = vmatprep.subr.mxu0 0.0
      %490 = vmatpush1.msra.mxu0 0.0
      %491 = vmatprep.subr.mxu0 0.0
      %492 = vmatpush1.msra.mxu0 0.0
      %493 = vmatprep.subr.mxu0 0.0
      %494 = vmatpush1.msra.mxu0 0.0
      %495 = vmatprep.subr.mxu0 0.0
      %496 = vmatpush1.msra.mxu0 0.0
      %497 = vmatprep.subr.mxu0 0.0
      %498 = vmatpush1.msra.mxu0 0.0
      %499 = vmatprep.subr.mxu0 0.0
      %500 = vmatpush1.msra.mxu0 0.0
      %501 = vmatprep.subr.mxu0 0.0
      %502 = vmatpush1.msra.mxu0 0.0
      %503 = vmatprep.subr.mxu0 0.0
      %504 = vmatpush1.msra.mxu0 0.0
      %505 = vmatprep.subr.mxu0 0.0
      %506 = vmatpush1.msra.mxu0 0.0
      %507 = vmatprep.subr.mxu0 0.0
      %508 = vmatpush1.msra.mxu0 0.0
      %509 = vmatprep.subr.mxu0 0.0
      %510 = vmatpush1.msra.mxu0 0.0
      %511 = vmatprep.subr.mxu0 0.0
      %512 = vmatpush1.msra.mxu0 0.0
      %513 = vmatprep.subr.mxu0 0.0
      %514 = vmatpush1.msra.mxu0 0.0
      %515 = vmatprep.subr.mxu0 0.0
      %516 = vmatpush1.msra.mxu0 0.0
      %517 = vmatprep.subr.mxu0 0.0
      %518 = vmatpush1.msra.mxu0 0.0
      %519 = vmatprep.subr.mxu0 0.0
      %520 = vmatpush1.msra.mxu0 0.0
      %521 = vmatprep.subr.mxu0 0.0
      %522 = vmatpush1.msra.mxu0 0.0
      %523 = vmatprep.subr.mxu0 0.0
      %524 = vmatpush1.msra.mxu0 0.0
      %525 = vmatprep.subr.mxu0 0.0
      %526 = vmatpush1.msra.mxu0 0.0
      %527 = vmatprep.subr.mxu0 0.0
      %528 = vmatpush1.msra.mxu0 0.0
      %529 = vmatprep.subr.mxu0 0.0
      %530 = vmatpush1.msra.mxu0 0.0
      %531 = vmatprep.subr.mxu0 0.0
      %532 = vmatpush1.msra.mxu0 0.0
      %533 = vmatprep.subr.mxu0 0.0
      %534 = vmatpush1.msra.mxu0 0.0
      %535 = vmatprep.subr.mxu0 0.0
      %536 = vmatpush1.msra.mxu0 0.0
      %537 = vmatprep.subr.mxu0 0.0
      %538 = vmatpush1.msra.mxu0 0.0
      %539 = vmatprep.subr.mxu0 0.0
      %540 = vmatpush1.msra.mxu0 0.0
      %541 = vmatprep.subr.mxu0 0.0
      %542 = vmatpush1.msra.mxu0 0.0
      %543 = vmatprep.subr.mxu0 0.0
      %544 = vmatpush1.msra.mxu0 0.0
      %545 = vmatprep.subr.mxu0 0.0
      %546 = vmatpush1.msra.mxu0 0.0
      %547 = vmatprep.mubr.f32.mxu0 0.0
      %548 = vmatmul.mubr.f32.gmra.mrb[0].mxu0 %v268
      %v549 = vpop.f32.mrb[0].mxu0
      %v550 = vadd.f32 0.0, %v549
      %v551 = vpop.f32.mrb[0].mxu0
      %v552 = vadd.f32 0.0, %v551
      %553 = vdwg.mxu0
      %554 = vmatprep.subr.mxu0 %v240
      %555 = vmatpush1.msra.mxu0 %v239
      %556 = vmatprep.subr.mxu0 0.0
      %557 = vmatpush1.msra.mxu0 0.0
      %558 = vmatprep.subr.mxu0 0.0
      %559 = vmatpush1.msra.mxu0 0.0
      %560 = vmatprep.subr.mxu0 0.0
      %561 = vmatpush1.msra.mxu0 0.0
      %562 = vmatprep.subr.mxu0 0.0
      %563 = vmatpush1.msra.mxu0 0.0
      %564 = vmatprep.subr.mxu0 0.0
      %565 = vmatpush1.msra.mxu0 0.0
      %566 = vmatprep.subr.mxu0 0.0
      %567 = vmatpush1.msra.mxu0 0.0
      %568 = vmatprep.subr.mxu0 0.0
      %569 = vmatpush1.msra.mxu0 0.0
      %570 = vmatprep.subr.mxu0 0.0
      %571 = vmatpush1.msra.mxu0 0.0
      %572 = vmatprep.subr.mxu0 0.0
      %573 = vmatpush1.msra.mxu0 0.0
      %574 = vmatprep.subr.mxu0 0.0
      %575 = vmatpush1.msra.mxu0 0.0
      %576 = vmatprep.subr.mxu0 0.0
      %577 = vmatpush1.msra.mxu0 0.0
      %578 = vmatprep.subr.mxu0 0.0
      %579 = vmatpush1.msra.mxu0 0.0
      %580 = vmatprep.subr.mxu0 0.0
      %581 = vmatpush1.msra.mxu0 0.0
      %582 = vmatprep.subr.mxu0 0.0
      %583 = vmatpush1.msra.mxu0 0.0
      %584 = vmatprep.subr.mxu0 0.0
      %585 = vmatpush1.msra.mxu0 0.0
      %586 = vmatprep.subr.mxu0 0.0
      %587 = vmatpush1.msra.mxu0 0.0
      %588 = vmatprep.subr.mxu0 0.0
      %589 = vmatpush1.msra.mxu0 0.0
      %590 = vmatprep.subr.mxu0 0.0
      %591 = vmatpush1.msra.mxu0 0.0
      %592 = vmatprep.subr.mxu0 0.0
      %593 = vmatpush1.msra.mxu0 0.0
      %594 = vmatprep.subr.mxu0 0.0
      %595 = vmatpush1.msra.mxu0 0.0
      %596 = vmatprep.subr.mxu0 0.0
      %597 = vmatpush1.msra.mxu0 0.0
      %598 = vmatprep.subr.mxu0 0.0
      %599 = vmatpush1.msra.mxu0 0.0
      %600 = vmatprep.subr.mxu0 0.0
      %601 = vmatpush1.msra.mxu0 0.0
      %602 = vmatprep.subr.mxu0 0.0
      %603 = vmatpush1.msra.mxu0 0.0
      %604 = vmatprep.subr.mxu0 0.0
      %605 = vmatpush1.msra.mxu0 0.0
      %606 = vmatprep.subr.mxu0 0.0
      %607 = vmatpush1.msra.mxu0 0.0
      %608 = vmatprep.subr.mxu0 0.0
      %609 = vmatpush1.msra.mxu0 0.0
      %610 = vmatprep.subr.mxu0 0.0
      %611 = vmatpush1.msra.mxu0 0.0
      %612 = vmatprep.subr.mxu0 0.0
      %613 = vmatpush1.msra.mxu0 0.0
      %614 = vmatprep.subr.mxu0 0.0
      %615 = vmatpush1.msra.mxu0 0.0
      %616 = vmatprep.subr.mxu0 0.0
      %617 = vmatpush1.msra.mxu0 0.0
      %618 = vmatprep.mubr.f32.mxu0 0.0
      %619 = vmatmul.mubr.f32.gmra.mrb[0].mxu0 %v268
      %v620 = vpop.f32.mrb[0].mxu0
      %v621 = vadd.f32 0.0, %v620
      %v622 = vpop.f32.mrb[0].mxu0
      %v623 = vadd.f32 0.0, %v622
      %624 = vdwg.mxu0
      %625 = vmatprep.subr.mxu0 %v242
      %626 = vmatpush1.msra.mxu0 %v241
      %627 = vmatprep.subr.mxu0 0.0
      %628 = vmatpush1.msra.mxu0 0.0
      %629 = vmatprep.subr.mxu0 0.0
      %630 = vmatpush1.msra.mxu0 0.0
      %631 = vmatprep.subr.mxu0 0.0
      %632 = vmatpush1.msra.mxu0 0.0
      %633 = vmatprep.subr.mxu0 0.0
      %634 = vmatpush1.msra.mxu0 0.0
      %635 = vmatprep.subr.mxu0 0.0
      %636 = vmatpush1.msra.mxu0 0.0
      %637 = vmatprep.subr.mxu0 0.0
      %638 = vmatpush1.msra.mxu0 0.0
      %639 = vmatprep.subr.mxu0 0.0
      %640 = vmatpush1.msra.mxu0 0.0
      %641 = vmatprep.subr.mxu0 0.0
      %642 = vmatpush1.msra.mxu0 0.0
      %643 = vmatprep.subr.mxu0 0.0
      %644 = vmatpush1.msra.mxu0 0.0
      %645 = vmatprep.subr.mxu0 0.0
      %646 = vmatpush1.msra.mxu0 0.0
      %647 = vmatprep.subr.mxu0 0.0
      %648 = vmatpush1.msra.mxu0 0.0
      %649 = vmatprep.subr.mxu0 0.0
      %650 = vmatpush1.msra.mxu0 0.0
      %651 = vmatprep.subr.mxu0 0.0
      %652 = vmatpush1.msra.mxu0 0.0
      %653 = vmatprep.subr.mxu0 0.0
      %654 = vmatpush1.msra.mxu0 0.0
      %655 = vmatprep.subr.mxu0 0.0
      %656 = vmatpush1.msra.mxu0 0.0
      %657 = vmatprep.subr.mxu0 0.0
      %658 = vmatpush1.msra.mxu0 0.0
      %659 = vmatprep.subr.mxu0 0.0
      %660 = vmatpush1.msra.mxu0 0.0
      %661 = vmatprep.subr.mxu0 0.0
      %662 = vmatpush1.msra.mxu0 0.0
      %663 = vmatprep.subr.mxu0 0.0
      %664 = vmatpush1.msra.mxu0 0.0
      %665 = vmatprep.subr.mxu0 0.0
      %666 = vmatpush1.msra.mxu0 0.0
      %667 = vmatprep.subr.mxu0 0.0
      %668 = vmatpush1.msra.mxu0 0.0
      %669 = vmatprep.subr.mxu0 0.0
      %670 = vmatpush1.msra.mxu0 0.0
      %671 = vmatprep.subr.mxu0 0.0
      %672 = vmatpush1.msra.mxu0 0.0
      %673 = vmatprep.subr.mxu0 0.0
      %674 = vmatpush1.msra.mxu0 0.0
      %675 = vmatprep.subr.mxu0 0.0
      %676 = vmatpush1.msra.mxu0 0.0
      %677 = vmatprep.subr.mxu0 0.0
      %678 = vmatpush1.msra.mxu0 0.0
      %679 = vmatprep.subr.mxu0 0.0
      %680 = vmatpush1.msra.mxu0 0.0
      %681 = vmatprep.subr.mxu0 0.0
      %682 = vmatpush1.msra.mxu0 0.0
      %683 = vmatprep.subr.mxu0 0.0
      %684 = vmatpush1.msra.mxu0 0.0
      %685 = vmatprep.subr.mxu0 0.0
      %686 = vmatpush1.msra.mxu0 0.0
      %687 = vmatprep.subr.mxu0 0.0
      %688 = vmatpush1.msra.mxu0 0.0
      %689 = vmatprep.mubr.f32.mxu0 0.0
      %690 = vmatmul.mubr.f32.gmra.mrb[0].mxu0 %v268
      %v691 = vpop.f32.mrb[0].mxu0
      %v692 = vadd.f32 0.0, %v691
      %v693 = vpop.f32.mrb[0].mxu0
      %v694 = vadd.f32 0.0, %v693
      %695 = vdwg.mxu0
      %696 = vmatprep.subr.mxu0 %v244
      %697 = vmatpush1.msra.mxu0 %v243
      %698 = vmatprep.subr.mxu0 0.0
      %699 = vmatpush1.msra.mxu0 0.0
      %700 = vmatprep.subr.mxu0 0.0
      %701 = vmatpush1.msra.mxu0 0.0
      %702 = vmatprep.subr.mxu0 0.0
      %703 = vmatpush1.msra.mxu0 0.0
      %704 = vmatprep.subr.mxu0 0.0
      %705 = vmatpush1.msra.mxu0 0.0
      %706 = vmatprep.subr.mxu0 0.0
      %707 = vmatpush1.msra.mxu0 0.0
      %708 = vmatprep.subr.mxu0 0.0
      %709 = vmatpush1.msra.mxu0 0.0
      %710 = vmatprep.subr.mxu0 0.0
      %711 = vmatpush1.msra.mxu0 0.0
      %712 = vmatprep.subr.mxu0 0.0
      %713 = vmatpush1.msra.mxu0 0.0
      %714 = vmatprep.subr.mxu0 0.0
      %715 = vmatpush1.msra.mxu0 0.0
      %716 = vmatprep.subr.mxu0 0.0
      %717 = vmatpush1.msra.mxu0 0.0
      %718 = vmatprep.subr.mxu0 0.0
      %719 = vmatpush1.msra.mxu0 0.0
      %720 = vmatprep.subr.mxu0 0.0
      %721 = vmatpush1.msra.mxu0 0.0
      %722 = vmatprep.subr.mxu0 0.0
      %723 = vmatpush1.msra.mxu0 0.0
      %724 = vmatprep.subr.mxu0 0.0
      %725 = vmatpush1.msra.mxu0 0.0
      %726 = vmatprep.subr.mxu0 0.0
      %727 = vmatpush1.msra.mxu0 0.0
      %728 = vmatprep.subr.mxu0 0.0
      %729 = vmatpush1.msra.mxu0 0.0
      %730 = vmatprep.subr.mxu0 0.0
      %731 = vmatpush1.msra.mxu0 0.0
      %732 = vmatprep.subr.mxu0 0.0
      %733 = vmatpush1.msra.mxu0 0.0
      %734 = vmatprep.subr.mxu0 0.0
      %735 = vmatpush1.msra.mxu0 0.0
      %736 = vmatprep.subr.mxu0 0.0
      %737 = vmatpush1.msra.mxu0 0.0
      %738 = vmatprep.subr.mxu0 0.0
      %739 = vmatpush1.msra.mxu0 0.0
      %740 = vmatprep.subr.mxu0 0.0
      %741 = vmatpush1.msra.mxu0 0.0
      %742 = vmatprep.subr.mxu0 0.0
      %743 = vmatpush1.msra.mxu0 0.0
      %744 = vmatprep.subr.mxu0 0.0
      %745 = vmatpush1.msra.mxu0 0.0
      %746 = vmatprep.subr.mxu0 0.0
      %747 = vmatpush1.msra.mxu0 0.0
      %748 = vmatprep.subr.mxu0 0.0
      %749 = vmatpush1.msra.mxu0 0.0
      %750 = vmatprep.subr.mxu0 0.0
      %751 = vmatpush1.msra.mxu0 0.0
      %752 = vmatprep.subr.mxu0 0.0
      %753 = vmatpush1.msra.mxu0 0.0
      %754 = vmatprep.subr.mxu0 0.0
      %755 = vmatpush1.msra.mxu0 0.0
      %756 = vmatprep.subr.mxu0 0.0
      %757 = vmatpush1.msra.mxu0 0.0
      %758 = vmatprep.subr.mxu0 0.0
      %759 = vmatpush1.msra.mxu0 0.0
      %760 = vmatprep.mubr.f32.mxu0 0.0
      %761 = vmatmul.mubr.f32.gmra.mrb[0].mxu0 %v268
      %v762 = vpop.f32.mrb[0].mxu0
      %v763 = vadd.f32 0.0, %v762
      %v764 = vpop.f32.mrb[0].mxu0
      %v765 = vadd.f32 0.0, %v764
      %766 = vdwg.mxu0
      %767 = vmatprep.subr.mxu0 %v246
      %768 = vmatpush1.msra.mxu0 %v245
      %769 = vmatprep.subr.mxu0 0.0
      %770 = vmatpush1.msra.mxu0 0.0
      %771 = vmatprep.subr.mxu0 0.0
      %772 = vmatpush1.msra.mxu0 0.0
      %773 = vmatprep.subr.mxu0 0.0
      %774 = vmatpush1.msra.mxu0 0.0
      %775 = vmatprep.subr.mxu0 0.0
      %776 = vmatpush1.msra.mxu0 0.0
      %777 = vmatprep.subr.mxu0 0.0
      %778 = vmatpush1.msra.mxu0 0.0
      %779 = vmatprep.subr.mxu0 0.0
      %780 = vmatpush1.msra.mxu0 0.0
      %781 = vmatprep.subr.mxu0 0.0
      %782 = vmatpush1.msra.mxu0 0.0
      %783 = vmatprep.subr.mxu0 0.0
      %784 = vmatpush1.msra.mxu0 0.0
      %785 = vmatprep.subr.mxu0 0.0
      %786 = vmatpush1.msra.mxu0 0.0
      %787 = vmatprep.subr.mxu0 0.0
      %788 = vmatpush1.msra.mxu0 0.0
      %789 = vmatprep.subr.mxu0 0.0
      %790 = vmatpush1.msra.mxu0 0.0
      %791 = vmatprep.subr.mxu0 0.0
      %792 = vmatpush1.msra.mxu0 0.0
      %793 = vmatprep.subr.mxu0 0.0
      %794 = vmatpush1.msra.mxu0 0.0
      %795 = vmatprep.subr.mxu0 0.0
      %796 = vmatpush1.msra.mxu0 0.0
      %797 = vmatprep.subr.mxu0 0.0
      %798 = vmatpush1.msra.mxu0 0.0
      %799 = vmatprep.subr.mxu0 0.0
      %800 = vmatpush1.msra.mxu0 0.0
      %801 = vmatprep.subr.mxu0 0.0
      %802 = vmatpush1.msra.mxu0 0.0
      %803 = vmatprep.subr.mxu0 0.0
      %804 = vmatpush1.msra.mxu0 0.0
      %805 = vmatprep.subr.mxu0 0.0
      %806 = vmatpush1.msra.mxu0 0.0
      %807 = vmatprep.subr.mxu0 0.0
      %808 = vmatpush1.msra.mxu0 0.0
      %809 = vmatprep.subr.mxu0 0.0
      %810 = vmatpush1.msra.mxu0 0.0
      %811 = vmatprep.subr.mxu0 0.0
      %812 = vmatpush1.msra.mxu0 0.0
      %813 = vmatprep.subr.mxu0 0.0
      %814 = vmatpush1.msra.mxu0 0.0
      %815 = vmatprep.subr.mxu0 0.0
      %816 = vmatpush1.msra.mxu0 0.0
      %817 = vmatprep.subr.mxu0 0.0
      %818 = vmatpush1.msra.mxu0 0.0
      %819 = vmatprep.subr.mxu0 0.0
      %820 = vmatpush1.msra.mxu0 0.0
      %821 = vmatprep.subr.mxu0 0.0
      %822 = vmatpush1.msra.mxu0 0.0
      %823 = vmatprep.subr.mxu0 0.0
      %824 = vmatpush1.msra.mxu0 0.0
      %825 = vmatprep.subr.mxu0 0.0
      %826 = vmatpush1.msra.mxu0 0.0
      %827 = vmatprep.subr.mxu0 0.0
      %828 = vmatpush1.msra.mxu0 0.0
      %829 = vmatprep.subr.mxu0 0.0
      %830 = vmatpush1.msra.mxu0 0.0
      %831 = vmatprep.mubr.f32.mxu0 0.0
      %832 = vmatmul.mubr.f32.gmra.mrb[0].mxu0 %v268
      %v833 = vpop.f32.mrb[0].mxu0
      %v834 = vadd.f32 0.0, %v833
      %v835 = vpop.f32.mrb[0].mxu0
      %v836 = vadd.f32 0.0, %v835
      %837 = vdwg.mxu0
      %838 = vmatprep.subr.mxu0 0.0
      %839 = vmatpush1.msra.mxu0 %v247
      %840 = vmatprep.subr.mxu0 0.0
      %841 = vmatpush1.msra.mxu0 0.0
      %842 = vmatprep.subr.mxu0 0.0
      %843 = vmatpush1.msra.mxu0 0.0
      %844 = vmatprep.subr.mxu0 0.0
      %845 = vmatpush1.msra.mxu0 0.0
      %846 = vmatprep.subr.mxu0 0.0
      %847 = vmatpush1.msra.mxu0 0.0
      %848 = vmatprep.subr.mxu0 0.0
      %849 = vmatpush1.msra.mxu0 0.0
      %850 = vmatprep.subr.mxu0 0.0
      %851 = vmatpush1.msra.mxu0 0.0
      %852 = vmatprep.subr.mxu0 0.0
      %853 = vmatpush1.msra.mxu0 0.0
      %854 = vmatprep.subr.mxu0 0.0
      %855 = vmatpush1.msra.mxu0 0.0
      %856 = vmatprep.subr.mxu0 0.0
      %857 = vmatpush1.msra.mxu0 0.0
      %858 = vmatprep.subr.mxu0 0.0
      %859 = vmatpush1.msra.mxu0 0.0
      %860 = vmatprep.subr.mxu0 0.0
      %861 = vmatpush1.msra.mxu0 0.0
      %862 = vmatprep.subr.mxu0 0.0
      %863 = vmatpush1.msra.mxu0 0.0
      %864 = vmatprep.subr.mxu0 0.0
      %865 = vmatpush1.msra.mxu0 0.0
      %866 = vmatprep.subr.mxu0 0.0
      %867 = vmatpush1.msra.mxu0 0.0
      %868 = vmatprep.subr.mxu0 0.0
      %869 = vmatpush1.msra.mxu0 0.0
      %870 = vmatprep.subr.mxu0 0.0
      %871 = vmatpush1.msra.mxu0 0.0
      %872 = vmatprep.subr.mxu0 0.0
      %873 = vmatpush1.msra.mxu0 0.0
      %874 = vmatprep.subr.mxu0 0.0
      %875 = vmatpush1.msra.mxu0 0.0
      %876 = vmatprep.subr.mxu0 0.0
      %877 = vmatpush1.msra.mxu0 0.0
      %878 = vmatprep.subr.mxu0 0.0
      %879 = vmatpush1.msra.mxu0 0.0
      %880 = vmatprep.subr.mxu0 0.0
      %881 = vmatpush1.msra.mxu0 0.0
      %882 = vmatprep.subr.mxu0 0.0
      %883 = vmatpush1.msra.mxu0 0.0
      %884 = vmatprep.subr.mxu0 0.0
      %885 = vmatpush1.msra.mxu0 0.0
      %886 = vmatprep.subr.mxu0 0.0
      %887 = vmatpush1.msra.mxu0 0.0
      %888 = vmatprep.subr.mxu0 0.0
      %889 = vmatpush1.msra.mxu0 0.0
      %890 = vmatprep.subr.mxu0 0.0
      %891 = vmatpush1.msra.mxu0 0.0
      %892 = vmatprep.subr.mxu0 0.0
      %893 = vmatpush1.msra.mxu0 0.0
      %894 = vmatprep.subr.mxu0 0.0
      %895 = vmatpush1.msra.mxu0 0.0
      %896 = vmatprep.subr.mxu0 0.0
      %897 = vmatpush1.msra.mxu0 0.0
      %898 = vmatprep.subr.mxu0 0.0
      %899 = vmatpush1.msra.mxu0 0.0
      %900 = vmatprep.subr.mxu0 0.0
      %901 = vmatpush1.msra.mxu0 0.0
      %902 = vmatprep.mubr.f32.mxu0 0.0
      %903 = vmatmul.mubr.f32.gmra.mrb[0].mxu0 %v268
      %v904 = vpop.f32.mrb[0].mxu0
      %v905 = vadd.f32 0.0, %v904
      %v906 = vpop.f32.mrb[0].mxu0
      %907 = vdwg.mxu0
      %v908 = vadd.f32 %v248, %v337
      %v909 = vadd.f32 %v249, %v339
      %v910 = vadd.f32 %v250, %v408
      %v911 = vadd.f32 %v251, %v410
      %v912 = vadd.f32 %v252, %v479
      %v913 = vadd.f32 %v253, %v481
      %v914 = vadd.f32 %v254, %v550
      %v915 = vadd.f32 %v255, %v552
      %v916 = vadd.f32 %v256, %v621
      %v917 = vadd.f32 %v257, %v623
      %v918 = vadd.f32 %v258, %v692
      %v919 = vadd.f32 %v259, %v694
      %v920 = vadd.f32 %v260, %v763
      %v921 = vadd.f32 %v261, %v765
      %v922 = vadd.f32 %v262, %v834
      %v923 = vadd.f32 %v263, %v836
      %v924 = vadd.f32 %v264, %v905
      %925 = vst [vmem:[%s206] sm:$0xff] %v908
      %926 = vst [vmem:[%s206 + $0x8] sm:$0xff] %v909
      %927 = vst [vmem:[%s206 + $0x10] sm:$0xff] %v910
      %928 = vst [vmem:[%s206 + $0x18] sm:$0xff] %v911
      %929 = vst [vmem:[%s206 + $0x20] sm:$0xff] %v912
      %930 = vst [vmem:[%s206 + $0x28] sm:$0xff] %v913
      %931 = vst [vmem:[%s206 + $0x30] sm:$0xff] %v914
      %932 = vst [vmem:[%s206 + $0x38] sm:$0xff] %v915
      %933 = vst [vmem:[%s206 + $0x40] sm:$0xff] %v916
      %934 = vst [vmem:[%s206 + $0x48] sm:$0xff] %v917
      %935 = vst [vmem:[%s206 + $0x50] sm:$0xff] %v918
      %936 = vst [vmem:[%s206 + $0x58] sm:$0xff] %v919
      %937 = vst [vmem:[%s206 + $0x60] sm:$0xff] %v920
      %938 = vst [vmem:[%s206 + $0x68] sm:$0xff] %v921
      %939 = vst [vmem:[%s206 + $0x70] sm:$0xff] %v922
      %940 = vst [vmem:[%s206 + $0x78] sm:$0xff] %v923
      %941 = vst [vmem:[%s206 + $0x80] sm:$0xff] %v924
      %v942 = vld [vmem:[%s197] sm:$0xff]
      %v943 = vld [vmem:[%s197 + $0x8] sm:$0xff]
      %v944 = vld [vmem:[%s197 + $0x10] sm:$0xff]
      %v945 = vld [vmem:[%s197 + $0x18] sm:$0xff]
      %v946 = vld [vmem:[%s197 + $0x20] sm:$0xff]
      %v947 = vld [vmem:[%s197 + $0x28] sm:$0xff]
      %v948 = vld [vmem:[%s197 + $0x30] sm:$0xff]
      %v949 = vld [vmem:[%s197 + $0x38] sm:$0xff]
      %v950 = vld [vmem:[%s197 + $0x40] sm:$0xff]
      %v951 = vld [vmem:[%s197 + $0x48] sm:$0xff]
      %v952 = vld [vmem:[%s197 + $0x50] sm:$0xff]
      %v953 = vld [vmem:[%s197 + $0x58] sm:$0xff]
      %v954 = vld [vmem:[%s197 + $0x60] sm:$0xff]
      %v955 = vld [vmem:[%s197 + $0x68] sm:$0xff]
      %v956 = vld [vmem:[%s197 + $0x70] sm:$0xff]
      %v957 = vld [vmem:[%s197 + $0x78] sm:$0xff]
      %v958 = vld [vmem:[%s197 + $0x80] sm:$0xff]
      %v959 = vld [vmem:[%s197 + $0x88] sm:$0xff]
      %v960 = vld [vmem:[%s206] sm:$0xff]
      %v961 = vld [vmem:[%s206 + $0x8] sm:$0xff]
      %v962 = vld [vmem:[%s206 + $0x10] sm:$0xff]
      %v963 = vld [vmem:[%s206 + $0x18] sm:$0xff]
      %v964 = vld [vmem:[%s206 + $0x20] sm:$0xff]
      %v965 = vld [vmem:[%s206 + $0x28] sm:$0xff]
      %v966 = vld [vmem:[%s206 + $0x30] sm:$0xff]
      %v967 = vld [vmem:[%s206 + $0x38] sm:$0xff]
      %v968 = vld [vmem:[%s206 + $0x40] sm:$0xff]
      %v969 = vld [vmem:[%s206 + $0x48] sm:$0xff]
      %v970 = vld [vmem:[%s206 + $0x50] sm:$0xff]
      %v971 = vld [vmem:[%s206 + $0x58] sm:$0xff]
      %v972 = vld [vmem:[%s206 + $0x60] sm:$0xff]
      %v973 = vld [vmem:[%s206 + $0x68] sm:$0xff]
      %v974 = vld [vmem:[%s206 + $0x70] sm:$0xff]
      %v975 = vld [vmem:[%s206 + $0x78] sm:$0xff]
      %v976 = vld [vmem:[%s206 + $0x80] sm:$0xff]
      %s977 = scalar_lea.vmem %s1, 8
      %v978 = vld [vmem:[%s977] sm:$0xff]
      %997 = vrot.lane.b32.xlu0 %v942, 127
      %v998 = vpop.permute.xlu0 %997
      %999 = vrot.lane.b32.xlu0 %v943, 127
      %v1000 = vpop.permute.xlu0 %999
      %1001 = vrot.lane.b32.xlu0 %v944, 127
      %v1002 = vpop.permute.xlu0 %1001
      %1003 = vrot.lane.b32.xlu0 %v945, 127
      %v1004 = vpop.permute.xlu0 %1003
      %1005 = vrot.lane.b32.xlu0 %v946, 127
      %v1006 = vpop.permute.xlu0 %1005
      %1007 = vrot.lane.b32.xlu0 %v947, 127
      %v1008 = vpop.permute.xlu0 %1007
      %1009 = vrot.lane.b32.xlu0 %v948, 127
      %v1010 = vpop.permute.xlu0 %1009
      %1011 = vrot.lane.b32.xlu0 %v949, 127
      %v1012 = vpop.permute.xlu0 %1011
      %1013 = vrot.lane.b32.xlu0 %v950, 127
      %v1014 = vpop.permute.xlu0 %1013
      %1015 = vrot.lane.b32.xlu0 %v951, 127
      %v1016 = vpop.permute.xlu0 %1015
      %1017 = vrot.lane.b32.xlu0 %v952, 127
      %v1018 = vpop.permute.xlu0 %1017
      %1019 = vrot.lane.b32.xlu0 %v953, 127
      %v1020 = vpop.permute.xlu0 %1019
      %1021 = vrot.lane.b32.xlu0 %v954, 127
      %v1022 = vpop.permute.xlu0 %1021
      %1023 = vrot.lane.b32.xlu0 %v955, 127
      %v1024 = vpop.permute.xlu0 %1023
      %1025 = vrot.lane.b32.xlu0 %v956, 127
      %v1026 = vpop.permute.xlu0 %1025
      %1027 = vrot.lane.b32.xlu0 %v957, 127
      %v1028 = vpop.permute.xlu0 %1027
      %1029 = vrot.lane.b32.xlu0 %v958, 127
      %v1030 = vpop.permute.xlu0 %1029
      %1031 = vrot.lane.b32.xlu0 %v959, 127
      %v1032 = vpop.permute.xlu0 %1031
      %vm1033 = vcmask 1039360
      %v1034 = vsel %vm1033, %v998, %v1000
      %v1035 = vsel %vm1033, %v1000, %v1002
      %v1036 = vsel %vm1033, %v1002, %v1004
      %v1037 = vsel %vm1033, %v1004, %v1006
      %v1038 = vsel %vm1033, %v1006, %v1008
      %v1039 = vsel %vm1033, %v1008, %v1010
      %v1040 = vsel %vm1033, %v1010, %v1012
      %v1041 = vsel %vm1033, %v1012, %v1014
      %v1042 = vsel %vm1033, %v1014, %v1016
      %v1043 = vsel %vm1033, %v1016, %v1018
      %v1044 = vsel %vm1033, %v1018, %v1020
      %v1045 = vsel %vm1033, %v1020, %v1022
      %v1046 = vsel %vm1033, %v1022, %v1024
      %v1047 = vsel %vm1033, %v1024, %v1026
      %v1048 = vsel %vm1033, %v1026, %v1028
      %v1049 = vsel %vm1033, %v1028, %v1030
      %v1050 = vsel %vm1033, %v1030, %v1032
      %v1069 = vsel %vm266, %v978, 0
      %1071 = vmatprep.subr.mxu0 %v1035
      %1072 = vmatpush1.msra.mxu0 %v1034
      %1073 = vmatprep.subr.mxu0 0.0
      %1074 = vmatpush1.msra.mxu0 0.0
      %1075 = vmatprep.subr.mxu0 0.0
      %1076 = vmatpush1.msra.mxu0 0.0
      %1077 = vmatprep.subr.mxu0 0.0
      %1078 = vmatpush1.msra.mxu0 0.0
      %1079 = vmatprep.subr.mxu0 0.0
      %1080 = vmatpush1.msra.mxu0 0.0
      %1081 = vmatprep.subr.mxu0 0.0
      %1082 = vmatpush1.msra.mxu0 0.0
      %1083 = vmatprep.subr.mxu0 0.0
      %1084 = vmatpush1.msra.mxu0 0.0
      %1085 = vmatprep.subr.mxu0 0.0
      %1086 = vmatpush1.msra.mxu0 0.0
      %1087 = vmatprep.subr.mxu0 0.0
      %1088 = vmatpush1.msra.mxu0 0.0
      %1089 = vmatprep.subr.mxu0 0.0
      %1090 = vmatpush1.msra.mxu0 0.0
      %1091 = vmatprep.subr.mxu0 0.0
      %1092 = vmatpush1.msra.mxu0 0.0
      %1093 = vmatprep.subr.mxu0 0.0
      %1094 = vmatpush1.msra.mxu0 0.0
      %1095 = vmatprep.subr.mxu0 0.0
      %1096 = vmatpush1.msra.mxu0 0.0
      %1097 = vmatprep.subr.mxu0 0.0
      %1098 = vmatpush1.msra.mxu0 0.0
      %1099 = vmatprep.subr.mxu0 0.0
      %1100 = vmatpush1.msra.mxu0 0.0
      %1101 = vmatprep.subr.mxu0 0.0
      %1102 = vmatpush1.msra.mxu0 0.0
      %1103 = vmatprep.subr.mxu0 0.0
      %1104 = vmatpush1.msra.mxu0 0.0
      %1105 = vmatprep.subr.mxu0 0.0
      %1106 = vmatpush1.msra.mxu0 0.0
      %1107 = vmatprep.subr.mxu0 0.0
      %1108 = vmatpush1.msra.mxu0 0.0
      %1109 = vmatprep.subr.mxu0 0.0
      %1110 = vmatpush1.msra.mxu0 0.0
      %1111 = vmatprep.subr.mxu0 0.0
      %1112 = vmatpush1.msra.mxu0 0.0
      %1113 = vmatprep.subr.mxu0 0.0
      %1114 = vmatpush1.msra.mxu0 0.0
      %1115 = vmatprep.subr.mxu0 0.0
      %1116 = vmatpush1.msra.mxu0 0.0
      %1117 = vmatprep.subr.mxu0 0.0
      %1118 = vmatpush1.msra.mxu0 0.0
      %1119 = vmatprep.subr.mxu0 0.0
      %1120 = vmatpush1.msra.mxu0 0.0
      %1121 = vmatprep.subr.mxu0 0.0
      %1122 = vmatpush1.msra.mxu0 0.0
      %1123 = vmatprep.subr.mxu0 0.0
      %1124 = vmatpush1.msra.mxu0 0.0
      %1125 = vmatprep.subr.mxu0 0.0
      %1126 = vmatpush1.msra.mxu0 0.0
      %1127 = vmatprep.subr.mxu0 0.0
      %1128 = vmatpush1.msra.mxu0 0.0
      %1129 = vmatprep.subr.mxu0 0.0
      %1130 = vmatpush1.msra.mxu0 0.0
      %1131 = vmatprep.subr.mxu0 0.0
      %1132 = vmatpush1.msra.mxu0 0.0
      %1133 = vmatprep.subr.mxu0 0.0
      %1134 = vmatpush1.msra.mxu0 0.0
      %1135 = vmatprep.mubr.f32.mxu0 0.0
      %1136 = vmatmul.mubr.f32.gmra.mrb[0].mxu0 %v1069
      %v1137 = vpop.f32.mrb[0].mxu0
      %v1138 = vadd.f32 0.0, %v1137
      %v1139 = vpop.f32.mrb[0].mxu0
      %v1140 = vadd.f32 0.0, %v1139
      %1141 = vdwg.mxu0
      %1142 = vmatprep.subr.mxu0 %v1037
      %1143 = vmatpush1.msra.mxu0 %v1036
      %1144 = vmatprep.subr.mxu0 0.0
      %1145 = vmatpush1.msra.mxu0 0.0
      %1146 = vmatprep.subr.mxu0 0.0
      %1147 = vmatpush1.msra.mxu0 0.0
      %1148 = vmatprep.subr.mxu0 0.0
      %1149 = vmatpush1.msra.mxu0 0.0
      %1150 = vmatprep.subr.mxu0 0.0
      %1151 = vmatpush1.msra.mxu0 0.0
      %1152 = vmatprep.subr.mxu0 0.0
      %1153 = vmatpush1.msra.mxu0 0.0
      %1154 = vmatprep.subr.mxu0 0.0
      %1155 = vmatpush1.msra.mxu0 0.0
      %1156 = vmatprep.subr.mxu0 0.0
      %1157 = vmatpush1.msra.mxu0 0.0
      %1158 = vmatprep.subr.mxu0 0.0
      %1159 = vmatpush1.msra.mxu0 0.0
      %1160 = vmatprep.subr.mxu0 0.0
      %1161 = vmatpush1.msra.mxu0 0.0
      %1162 = vmatprep.subr.mxu0 0.0
      %1163 = vmatpush1.msra.mxu0 0.0
      %1164 = vmatprep.subr.mxu0 0.0
      %1165 = vmatpush1.msra.mxu0 0.0
      %1166 = vmatprep.subr.mxu0 0.0
      %1167 = vmatpush1.msra.mxu0 0.0
      %1168 = vmatprep.subr.mxu0 0.0
      %1169 = vmatpush1.msra.mxu0 0.0
      %1170 = vmatprep.subr.mxu0 0.0
      %1171 = vmatpush1.msra.mxu0 0.0
      %1172 = vmatprep.subr.mxu0 0.0
      %1173 = vmatpush1.msra.mxu0 0.0
      %1174 = vmatprep.subr.mxu0 0.0
      %1175 = vmatpush1.msra.mxu0 0.0
      %1176 = vmatprep.subr.mxu0 0.0
      %1177 = vmatpush1.msra.mxu0 0.0
      %1178 = vmatprep.subr.mxu0 0.0
      %1179 = vmatpush1.msra.mxu0 0.0
      %1180 = vmatprep.subr.mxu0 0.0
      %1181 = vmatpush1.msra.mxu0 0.0
      %1182 = vmatprep.subr.mxu0 0.0
      %1183 = vmatpush1.msra.mxu0 0.0
      %1184 = vmatprep.subr.mxu0 0.0
      %1185 = vmatpush1.msra.mxu0 0.0
      %1186 = vmatprep.subr.mxu0 0.0
      %1187 = vmatpush1.msra.mxu0 0.0
      %1188 = vmatprep.subr.mxu0 0.0
      %1189 = vmatpush1.msra.mxu0 0.0
      %1190 = vmatprep.subr.mxu0 0.0
      %1191 = vmatpush1.msra.mxu0 0.0
      %1192 = vmatprep.subr.mxu0 0.0
      %1193 = vmatpush1.msra.mxu0 0.0
      %1194 = vmatprep.subr.mxu0 0.0
      %1195 = vmatpush1.msra.mxu0 0.0
      %1196 = vmatprep.subr.mxu0 0.0
      %1197 = vmatpush1.msra.mxu0 0.0
      %1198 = vmatprep.subr.mxu0 0.0
      %1199 = vmatpush1.msra.mxu0 0.0
      %1200 = vmatprep.subr.mxu0 0.0
      %1201 = vmatpush1.msra.mxu0 0.0
      %1202 = vmatprep.subr.mxu0 0.0
      %1203 = vmatpush1.msra.mxu0 0.0
      %1204 = vmatprep.subr.mxu0 0.0
      %1205 = vmatpush1.msra.mxu0 0.0
      %1206 = vmatprep.mubr.f32.mxu0 0.0
      %1207 = vmatmul.mubr.f32.gmra.mrb[0].mxu0 %v1069
      %v1208 = vpop.f32.mrb[0].mxu0
      %v1209 = vadd.f32 0.0, %v1208
      %v1210 = vpop.f32.mrb[0].mxu0
      %v1211 = vadd.f32 0.0, %v1210
      %1212 = vdwg.mxu0
      %1213 = vmatprep.subr.mxu0 %v1039
      %1214 = vmatpush1.msra.mxu0 %v1038
      %1215 = vmatprep.subr.mxu0 0.0
      %1216 = vmatpush1.msra.mxu0 0.0
      %1217 = vmatprep.subr.mxu0 0.0
      %1218 = vmatpush1.msra.mxu0 0.0
      %1219 = vmatprep.subr.mxu0 0.0
      %1220 = vmatpush1.msra.mxu0 0.0
      %1221 = vmatprep.subr.mxu0 0.0
      %1222 = vmatpush1.msra.mxu0 0.0
      %1223 = vmatprep.subr.mxu0 0.0
      %1224 = vmatpush1.msra.mxu0 0.0
      %1225 = vmatprep.subr.mxu0 0.0
      %1226 = vmatpush1.msra.mxu0 0.0
      %1227 = vmatprep.subr.mxu0 0.0
      %1228 = vmatpush1.msra.mxu0 0.0
      %1229 = vmatprep.subr.mxu0 0.0
      %1230 = vmatpush1.msra.mxu0 0.0
      %1231 = vmatprep.subr.mxu0 0.0
      %1232 = vmatpush1.msra.mxu0 0.0
      %1233 = vmatprep.subr.mxu0 0.0
      %1234 = vmatpush1.msra.mxu0 0.0
      %1235 = vmatprep.subr.mxu0 0.0
      %1236 = vmatpush1.msra.mxu0 0.0
      %1237 = vmatprep.subr.mxu0 0.0
      %1238 = vmatpush1.msra.mxu0 0.0
      %1239 = vmatprep.subr.mxu0 0.0
      %1240 = vmatpush1.msra.mxu0 0.0
      %1241 = vmatprep.subr.mxu0 0.0
      %1242 = vmatpush1.msra.mxu0 0.0
      %1243 = vmatprep.subr.mxu0 0.0
      %1244 = vmatpush1.msra.mxu0 0.0
      %1245 = vmatprep.subr.mxu0 0.0
      %1246 = vmatpush1.msra.mxu0 0.0
      %1247 = vmatprep.subr.mxu0 0.0
      %1248 = vmatpush1.msra.mxu0 0.0
      %1249 = vmatprep.subr.mxu0 0.0
      %1250 = vmatpush1.msra.mxu0 0.0
      %1251 = vmatprep.subr.mxu0 0.0
      %1252 = vmatpush1.msra.mxu0 0.0
      %1253 = vmatprep.subr.mxu0 0.0
      %1254 = vmatpush1.msra.mxu0 0.0
      %1255 = vmatprep.subr.mxu0 0.0
      %1256 = vmatpush1.msra.mxu0 0.0
      %1257 = vmatprep.subr.mxu0 0.0
      %1258 = vmatpush1.msra.mxu0 0.0
      %1259 = vmatprep.subr.mxu0 0.0
      %1260 = vmatpush1.msra.mxu0 0.0
      %1261 = vmatprep.subr.mxu0 0.0
      %1262 = vmatpush1.msra.mxu0 0.0
      %1263 = vmatprep.subr.mxu0 0.0
      %1264 = vmatpush1.msra.mxu0 0.0
      %1265 = vmatprep.subr.mxu0 0.0
      %1266 = vmatpush1.msra.mxu0 0.0
      %1267 = vmatprep.subr.mxu0 0.0
      %1268 = vmatpush1.msra.mxu0 0.0
      %1269 = vmatprep.subr.mxu0 0.0
      %1270 = vmatpush1.msra.mxu0 0.0
      %1271 = vmatprep.subr.mxu0 0.0
      %1272 = vmatpush1.msra.mxu0 0.0
      %1273 = vmatprep.subr.mxu0 0.0
      %1274 = vmatpush1.msra.mxu0 0.0
      %1275 = vmatprep.subr.mxu0 0.0
      %1276 = vmatpush1.msra.mxu0 0.0
      %1277 = vmatprep.mubr.f32.mxu0 0.0
      %1278 = vmatmul.mubr.f32.gmra.mrb[0].mxu0 %v1069
      %v1279 = vpop.f32.mrb[0].mxu0
      %v1280 = vadd.f32 0.0, %v1279
      %v1281 = vpop.f32.mrb[0].mxu0
      %v1282 = vadd.f32 0.0, %v1281
      %1283 = vdwg.mxu0
      %1284 = vmatprep.subr.mxu0 %v1041
      %1285 = vmatpush1.msra.mxu0 %v1040
      %1286 = vmatprep.subr.mxu0 0.0
      %1287 = vmatpush1.msra.mxu0 0.0
      %1288 = vmatprep.subr.mxu0 0.0
      %1289 = vmatpush1.msra.mxu0 0.0
      %1290 = vmatprep.subr.mxu0 0.0
      %1291 = vmatpush1.msra.mxu0 0.0
      %1292 = vmatprep.subr.mxu0 0.0
      %1293 = vmatpush1.msra.mxu0 0.0
      %1294 = vmatprep.subr.mxu0 0.0
      %1295 = vmatpush1.msra.mxu0 0.0
      %1296 = vmatprep.subr.mxu0 0.0
      %1297 = vmatpush1.msra.mxu0 0.0
      %1298 = vmatprep.subr.mxu0 0.0
      %1299 = vmatpush1.msra.mxu0 0.0
      %1300 = vmatprep.subr.mxu0 0.0
      %1301 = vmatpush1.msra.mxu0 0.0
      %1302 = vmatprep.subr.mxu0 0.0
      %1303 = vmatpush1.msra.mxu0 0.0
      %1304 = vmatprep.subr.mxu0 0.0
      %1305 = vmatpush1.msra.mxu0 0.0
      %1306 = vmatprep.subr.mxu0 0.0
      %1307 = vmatpush1.msra.mxu0 0.0
      %1308 = vmatprep.subr.mxu0 0.0
      %1309 = vmatpush1.msra.mxu0 0.0
      %1310 = vmatprep.subr.mxu0 0.0
      %1311 = vmatpush1.msra.mxu0 0.0
      %1312 = vmatprep.subr.mxu0 0.0
      %1313 = vmatpush1.msra.mxu0 0.0
      %1314 = vmatprep.subr.mxu0 0.0
      %1315 = vmatpush1.msra.mxu0 0.0
      %1316 = vmatprep.subr.mxu0 0.0
      %1317 = vmatpush1.msra.mxu0 0.0
      %1318 = vmatprep.subr.mxu0 0.0
      %1319 = vmatpush1.msra.mxu0 0.0
      %1320 = vmatprep.subr.mxu0 0.0
      %1321 = vmatpush1.msra.mxu0 0.0
      %1322 = vmatprep.subr.mxu0 0.0
      %1323 = vmatpush1.msra.mxu0 0.0
      %1324 = vmatprep.subr.mxu0 0.0
      %1325 = vmatpush1.msra.mxu0 0.0
      %1326 = vmatprep.subr.mxu0 0.0
      %1327 = vmatpush1.msra.mxu0 0.0
      %1328 = vmatprep.subr.mxu0 0.0
      %1329 = vmatpush1.msra.mxu0 0.0
      %1330 = vmatprep.subr.mxu0 0.0
      %1331 = vmatpush1.msra.mxu0 0.0
      %1332 = vmatprep.subr.mxu0 0.0
      %1333 = vmatpush1.msra.mxu0 0.0
      %1334 = vmatprep.subr.mxu0 0.0
      %1335 = vmatpush1.msra.mxu0 0.0
      %1336 = vmatprep.subr.mxu0 0.0
      %1337 = vmatpush1.msra.mxu0 0.0
      %1338 = vmatprep.subr.mxu0 0.0
      %1339 = vmatpush1.msra.mxu0 0.0
      %1340 = vmatprep.subr.mxu0 0.0
      %1341 = vmatpush1.msra.mxu0 0.0
      %1342 = vmatprep.subr.mxu0 0.0
      %1343 = vmatpush1.msra.mxu0 0.0
      %1344 = vmatprep.subr.mxu0 0.0
      %1345 = vmatpush1.msra.mxu0 0.0
      %1346 = vmatprep.subr.mxu0 0.0
      %1347 = vmatpush1.msra.mxu0 0.0
      %1348 = vmatprep.mubr.f32.mxu0 0.0
      %1349 = vmatmul.mubr.f32.gmra.mrb[0].mxu0 %v1069
      %v1350 = vpop.f32.mrb[0].mxu0
      %v1351 = vadd.f32 0.0, %v1350
      %v1352 = vpop.f32.mrb[0].mxu0
      %v1353 = vadd.f32 0.0, %v1352
      %1354 = vdwg.mxu0
      %1355 = vmatprep.subr.mxu0 %v1043
      %1356 = vmatpush1.msra.mxu0 %v1042
      %1357 = vmatprep.subr.mxu0 0.0
      %1358 = vmatpush1.msra.mxu0 0.0
      %1359 = vmatprep.subr.mxu0 0.0
      %1360 = vmatpush1.msra.mxu0 0.0
      %1361 = vmatprep.subr.mxu0 0.0
      %1362 = vmatpush1.msra.mxu0 0.0
      %1363 = vmatprep.subr.mxu0 0.0
      %1364 = vmatpush1.msra.mxu0 0.0
      %1365 = vmatprep.subr.mxu0 0.0
      %1366 = vmatpush1.msra.mxu0 0.0
      %1367 = vmatprep.subr.mxu0 0.0
      %1368 = vmatpush1.msra.mxu0 0.0
      %1369 = vmatprep.subr.mxu0 0.0
      %1370 = vmatpush1.msra.mxu0 0.0
      %1371 = vmatprep.subr.mxu0 0.0
      %1372 = vmatpush1.msra.mxu0 0.0
      %1373 = vmatprep.subr.mxu0 0.0
      %1374 = vmatpush1.msra.mxu0 0.0
      %1375 = vmatprep.subr.mxu0 0.0
      %1376 = vmatpush1.msra.mxu0 0.0
      %1377 = vmatprep.subr.mxu0 0.0
      %1378 = vmatpush1.msra.mxu0 0.0
      %1379 = vmatprep.subr.mxu0 0.0
      %1380 = vmatpush1.msra.mxu0 0.0
      %1381 = vmatprep.subr.mxu0 0.0
      %1382 = vmatpush1.msra.mxu0 0.0
      %1383 = vmatprep.subr.mxu0 0.0
      %1384 = vmatpush1.msra.mxu0 0.0
      %1385 = vmatprep.subr.mxu0 0.0
      %1386 = vmatpush1.msra.mxu0 0.0
      %1387 = vmatprep.subr.mxu0 0.0
      %1388 = vmatpush1.msra.mxu0 0.0
      %1389 = vmatprep.subr.mxu0 0.0
      %1390 = vmatpush1.msra.mxu0 0.0
      %1391 = vmatprep.subr.mxu0 0.0
      %1392 = vmatpush1.msra.mxu0 0.0
      %1393 = vmatprep.subr.mxu0 0.0
      %1394 = vmatpush1.msra.mxu0 0.0
      %1395 = vmatprep.subr.mxu0 0.0
      %1396 = vmatpush1.msra.mxu0 0.0
      %1397 = vmatprep.subr.mxu0 0.0
      %1398 = vmatpush1.msra.mxu0 0.0
      %1399 = vmatprep.subr.mxu0 0.0
      %1400 = vmatpush1.msra.mxu0 0.0
      %1401 = vmatprep.subr.mxu0 0.0
      %1402 = vmatpush1.msra.mxu0 0.0
      %1403 = vmatprep.subr.mxu0 0.0
      %1404 = vmatpush1.msra.mxu0 0.0
      %1405 = vmatprep.subr.mxu0 0.0
      %1406 = vmatpush1.msra.mxu0 0.0
      %1407 = vmatprep.subr.mxu0 0.0
      %1408 = vmatpush1.msra.mxu0 0.0
      %1409 = vmatprep.subr.mxu0 0.0
      %1410 = vmatpush1.msra.mxu0 0.0
      %1411 = vmatprep.subr.mxu0 0.0
      %1412 = vmatpush1.msra.mxu0 0.0
      %1413 = vmatprep.subr.mxu0 0.0
      %1414 = vmatpush1.msra.mxu0 0.0
      %1415 = vmatprep.subr.mxu0 0.0
      %1416 = vmatpush1.msra.mxu0 0.0
      %1417 = vmatprep.subr.mxu0 0.0
      %1418 = vmatpush1.msra.mxu0 0.0
      %1419 = vmatprep.mubr.f32.mxu0 0.0
      %1420 = vmatmul.mubr.f32.gmra.mrb[0].mxu0 %v1069
      %v1421 = vpop.f32.mrb[0].mxu0
      %v1422 = vadd.f32 0.0, %v1421
      %v1423 = vpop.f32.mrb[0].mxu0
      %v1424 = vadd.f32 0.0, %v1423
      %1425 = vdwg.mxu0
      %1426 = vmatprep.subr.mxu0 %v1045
      %1427 = vmatpush1.msra.mxu0 %v1044
      %1428 = vmatprep.subr.mxu0 0.0
      %1429 = vmatpush1.msra.mxu0 0.0
      %1430 = vmatprep.subr.mxu0 0.0
      %1431 = vmatpush1.msra.mxu0 0.0
      %1432 = vmatprep.subr.mxu0 0.0
      %1433 = vmatpush1.msra.mxu0 0.0
      %1434 = vmatprep.subr.mxu0 0.0
      %1435 = vmatpush1.msra.mxu0 0.0
      %1436 = vmatprep.subr.mxu0 0.0
      %1437 = vmatpush1.msra.mxu0 0.0
      %1438 = vmatprep.subr.mxu0 0.0
      %1439 = vmatpush1.msra.mxu0 0.0
      %1440 = vmatprep.subr.mxu0 0.0
      %1441 = vmatpush1.msra.mxu0 0.0
      %1442 = vmatprep.subr.mxu0 0.0
      %1443 = vmatpush1.msra.mxu0 0.0
      %1444 = vmatprep.subr.mxu0 0.0
      %1445 = vmatpush1.msra.mxu0 0.0
      %1446 = vmatprep.subr.mxu0 0.0
      %1447 = vmatpush1.msra.mxu0 0.0
      %1448 = vmatprep.subr.mxu0 0.0
      %1449 = vmatpush1.msra.mxu0 0.0
      %1450 = vmatprep.subr.mxu0 0.0
      %1451 = vmatpush1.msra.mxu0 0.0
      %1452 = vmatprep.subr.mxu0 0.0
      %1453 = vmatpush1.msra.mxu0 0.0
      %1454 = vmatprep.subr.mxu0 0.0
      %1455 = vmatpush1.msra.mxu0 0.0
      %1456 = vmatprep.subr.mxu0 0.0
      %1457 = vmatpush1.msra.mxu0 0.0
      %1458 = vmatprep.subr.mxu0 0.0
      %1459 = vmatpush1.msra.mxu0 0.0
      %1460 = vmatprep.subr.mxu0 0.0
      %1461 = vmatpush1.msra.mxu0 0.0
      %1462 = vmatprep.subr.mxu0 0.0
      %1463 = vmatpush1.msra.mxu0 0.0
      %1464 = vmatprep.subr.mxu0 0.0
      %1465 = vmatpush1.msra.mxu0 0.0
      %1466 = vmatprep.subr.mxu0 0.0
      %1467 = vmatpush1.msra.mxu0 0.0
      %1468 = vmatprep.subr.mxu0 0.0
      %1469 = vmatpush1.msra.mxu0 0.0
      %1470 = vmatprep.subr.mxu0 0.0
      %1471 = vmatpush1.msra.mxu0 0.0
      %1472 = vmatprep.subr.mxu0 0.0
      %1473 = vmatpush1.msra.mxu0 0.0
      %1474 = vmatprep.subr.mxu0 0.0
      %1475 = vmatpush1.msra.mxu0 0.0
      %1476 = vmatprep.subr.mxu0 0.0
      %1477 = vmatpush1.msra.mxu0 0.0
      %1478 = vmatprep.subr.mxu0 0.0
      %1479 = vmatpush1.msra.mxu0 0.0
      %1480 = vmatprep.subr.mxu0 0.0
      %1481 = vmatpush1.msra.mxu0 0.0
      %1482 = vmatprep.subr.mxu0 0.0
      %1483 = vmatpush1.msra.mxu0 0.0
      %1484 = vmatprep.subr.mxu0 0.0
      %1485 = vmatpush1.msra.mxu0 0.0
      %1486 = vmatprep.subr.mxu0 0.0
      %1487 = vmatpush1.msra.mxu0 0.0
      %1488 = vmatprep.subr.mxu0 0.0
      %1489 = vmatpush1.msra.mxu0 0.0
      %1490 = vmatprep.mubr.f32.mxu0 0.0
      %1491 = vmatmul.mubr.f32.gmra.mrb[0].mxu0 %v1069
      %v1492 = vpop.f32.mrb[0].mxu0
      %v1493 = vadd.f32 0.0, %v1492
      %v1494 = vpop.f32.mrb[0].mxu0
      %v1495 = vadd.f32 0.0, %v1494
      %1496 = vdwg.mxu0
      %1497 = vmatprep.subr.mxu0 %v1047
      %1498 = vmatpush1.msra.mxu0 %v1046
      %1499 = vmatprep.subr.mxu0 0.0
      %1500 = vmatpush1.msra.mxu0 0.0
      %1501 = vmatprep.subr.mxu0 0.0
      %1502 = vmatpush1.msra.mxu0 0.0
      %1503 = vmatprep.subr.mxu0 0.0
      %1504 = vmatpush1.msra.mxu0 0.0
      %1505 = vmatprep.subr.mxu0 0.0
      %1506 = vmatpush1.msra.mxu0 0.0
      %1507 = vmatprep.subr.mxu0 0.0
      %1508 = vmatpush1.msra.mxu0 0.0
      %1509 = vmatprep.subr.mxu0 0.0
      %1510 = vmatpush1.msra.mxu0 0.0
      %1511 = vmatprep.subr.mxu0 0.0
      %1512 = vmatpush1.msra.mxu0 0.0
      %1513 = vmatprep.subr.mxu0 0.0
      %1514 = vmatpush1.msra.mxu0 0.0
      %1515 = vmatprep.subr.mxu0 0.0
      %1516 = vmatpush1.msra.mxu0 0.0
      %1517 = vmatprep.subr.mxu0 0.0
      %1518 = vmatpush1.msra.mxu0 0.0
      %1519 = vmatprep.subr.mxu0 0.0
      %1520 = vmatpush1.msra.mxu0 0.0
      %1521 = vmatprep.subr.mxu0 0.0
      %1522 = vmatpush1.msra.mxu0 0.0
      %1523 = vmatprep.subr.mxu0 0.0
      %1524 = vmatpush1.msra.mxu0 0.0
      %1525 = vmatprep.subr.mxu0 0.0
      %1526 = vmatpush1.msra.mxu0 0.0
      %1527 = vmatprep.subr.mxu0 0.0
      %1528 = vmatpush1.msra.mxu0 0.0
      %1529 = vmatprep.subr.mxu0 0.0
      %1530 = vmatpush1.msra.mxu0 0.0
      %1531 = vmatprep.subr.mxu0 0.0
      %1532 = vmatpush1.msra.mxu0 0.0
      %1533 = vmatprep.subr.mxu0 0.0
      %1534 = vmatpush1.msra.mxu0 0.0
      %1535 = vmatprep.subr.mxu0 0.0
      %1536 = vmatpush1.msra.mxu0 0.0
      %1537 = vmatprep.subr.mxu0 0.0
      %1538 = vmatpush1.msra.mxu0 0.0
      %1539 = vmatprep.subr.mxu0 0.0
      %1540 = vmatpush1.msra.mxu0 0.0
      %1541 = vmatprep.subr.mxu0 0.0
      %1542 = vmatpush1.msra.mxu0 0.0
      %1543 = vmatprep.subr.mxu0 0.0
      %1544 = vmatpush1.msra.mxu0 0.0
      %1545 = vmatprep.subr.mxu0 0.0
      %1546 = vmatpush1.msra.mxu0 0.0
      %1547 = vmatprep.subr.mxu0 0.0
      %1548 = vmatpush1.msra.mxu0 0.0
      %1549 = vmatprep.subr.mxu0 0.0
      %1550 = vmatpush1.msra.mxu0 0.0
      %1551 = vmatprep.subr.mxu0 0.0
      %1552 = vmatpush1.msra.mxu0 0.0
      %1553 = vmatprep.subr.mxu0 0.0
      %1554 = vmatpush1.msra.mxu0 0.0
      %1555 = vmatprep.subr.mxu0 0.0
      %1556 = vmatpush1.msra.mxu0 0.0
      %1557 = vmatprep.subr.mxu0 0.0
      %1558 = vmatpush1.msra.mxu0 0.0
      %1559 = vmatprep.subr.mxu0 0.0
      %1560 = vmatpush1.msra.mxu0 0.0
      %1561 = vmatprep.mubr.f32.mxu0 0.0
      %1562 = vmatmul.mubr.f32.gmra.mrb[0].mxu0 %v1069
      %v1563 = vpop.f32.mrb[0].mxu0
      %v1564 = vadd.f32 0.0, %v1563
      %v1565 = vpop.f32.mrb[0].mxu0
      %v1566 = vadd.f32 0.0, %v1565
      %1567 = vdwg.mxu0
      %1568 = vmatprep.subr.mxu0 %v1049
      %1569 = vmatpush1.msra.mxu0 %v1048
      %1570 = vmatprep.subr.mxu0 0.0
      %1571 = vmatpush1.msra.mxu0 0.0
      %1572 = vmatprep.subr.mxu0 0.0
      %1573 = vmatpush1.msra.mxu0 0.0
      %1574 = vmatprep.subr.mxu0 0.0
      %1575 = vmatpush1.msra.mxu0 0.0
      %1576 = vmatprep.subr.mxu0 0.0
      %1577 = vmatpush1.msra.mxu0 0.0
      %1578 = vmatprep.subr.mxu0 0.0
      %1579 = vmatpush1.msra.mxu0 0.0
      %1580 = vmatprep.subr.mxu0 0.0
      %1581 = vmatpush1.msra.mxu0 0.0
      %1582 = vmatprep.subr.mxu0 0.0
      %1583 = vmatpush1.msra.mxu0 0.0
      %1584 = vmatprep.subr.mxu0 0.0
      %1585 = vmatpush1.msra.mxu0 0.0
      %1586 = vmatprep.subr.mxu0 0.0
      %1587 = vmatpush1.msra.mxu0 0.0
      %1588 = vmatprep.subr.mxu0 0.0
      %1589 = vmatpush1.msra.mxu0 0.0
      %1590 = vmatprep.subr.mxu0 0.0
      %1591 = vmatpush1.msra.mxu0 0.0
      %1592 = vmatprep.subr.mxu0 0.0
      %1593 = vmatpush1.msra.mxu0 0.0
      %1594 = vmatprep.subr.mxu0 0.0
      %1595 = vmatpush1.msra.mxu0 0.0
      %1596 = vmatprep.subr.mxu0 0.0
      %1597 = vmatpush1.msra.mxu0 0.0
      %1598 = vmatprep.subr.mxu0 0.0
      %1599 = vmatpush1.msra.mxu0 0.0
      %1600 = vmatprep.subr.mxu0 0.0
      %1601 = vmatpush1.msra.mxu0 0.0
      %1602 = vmatprep.subr.mxu0 0.0
      %1603 = vmatpush1.msra.mxu0 0.0
      %1604 = vmatprep.subr.mxu0 0.0
      %1605 = vmatpush1.msra.mxu0 0.0
      %1606 = vmatprep.subr.mxu0 0.0
      %1607 = vmatpush1.msra.mxu0 0.0
      %1608 = vmatprep.subr.mxu0 0.0
      %1609 = vmatpush1.msra.mxu0 0.0
      %1610 = vmatprep.subr.mxu0 0.0
      %1611 = vmatpush1.msra.mxu0 0.0
      %1612 = vmatprep.subr.mxu0 0.0
      %1613 = vmatpush1.msra.mxu0 0.0
      %1614 = vmatprep.subr.mxu0 0.0
      %1615 = vmatpush1.msra.mxu0 0.0
      %1616 = vmatprep.subr.mxu0 0.0
      %1617 = vmatpush1.msra.mxu0 0.0
      %1618 = vmatprep.subr.mxu0 0.0
      %1619 = vmatpush1.msra.mxu0 0.0
      %1620 = vmatprep.subr.mxu0 0.0
      %1621 = vmatpush1.msra.mxu0 0.0
      %1622 = vmatprep.subr.mxu0 0.0
      %1623 = vmatpush1.msra.mxu0 0.0
      %1624 = vmatprep.subr.mxu0 0.0
      %1625 = vmatpush1.msra.mxu0 0.0
      %1626 = vmatprep.subr.mxu0 0.0
      %1627 = vmatpush1.msra.mxu0 0.0
      %1628 = vmatprep.subr.mxu0 0.0
      %1629 = vmatpush1.msra.mxu0 0.0
      %1630 = vmatprep.subr.mxu0 0.0
      %1631 = vmatpush1.msra.mxu0 0.0
      %1632 = vmatprep.mubr.f32.mxu0 0.0
      %1633 = vmatmul.mubr.f32.gmra.mrb[0].mxu0 %v1069
      %v1634 = vpop.f32.mrb[0].mxu0
      %v1635 = vadd.f32 0.0, %v1634
      %v1636 = vpop.f32.mrb[0].mxu0
      %v1637 = vadd.f32 0.0, %v1636
      %1638 = vdwg.mxu0
      %1639 = vmatprep.subr.mxu0 0.0
      %1640 = vmatpush1.msra.mxu0 %v1050
      %1641 = vmatprep.subr.mxu0 0.0
      %1642 = vmatpush1.msra.mxu0 0.0
      %1643 = vmatprep.subr.mxu0 0.0
      %1644 = vmatpush1.msra.mxu0 0.0
      %1645 = vmatprep.subr.mxu0 0.0
      %1646 = vmatpush1.msra.mxu0 0.0
      %1647 = vmatprep.subr.mxu0 0.0
      %1648 = vmatpush1.msra.mxu0 0.0
      %1649 = vmatprep.subr.mxu0 0.0
      %1650 = vmatpush1.msra.mxu0 0.0
      %1651 = vmatprep.subr.mxu0 0.0
      %1652 = vmatpush1.msra.mxu0 0.0
      %1653 = vmatprep.subr.mxu0 0.0
      %1654 = vmatpush1.msra.mxu0 0.0
      %1655 = vmatprep.subr.mxu0 0.0
      %1656 = vmatpush1.msra.mxu0 0.0
      %1657 = vmatprep.subr.mxu0 0.0
      %1658 = vmatpush1.msra.mxu0 0.0
      %1659 = vmatprep.subr.mxu0 0.0
      %1660 = vmatpush1.msra.mxu0 0.0
      %1661 = vmatprep.subr.mxu0 0.0
      %1662 = vmatpush1.msra.mxu0 0.0
      %1663 = vmatprep.subr.mxu0 0.0
      %1664 = vmatpush1.msra.mxu0 0.0
      %1665 = vmatprep.subr.mxu0 0.0
      %1666 = vmatpush1.msra.mxu0 0.0
      %1667 = vmatprep.subr.mxu0 0.0
      %1668 = vmatpush1.msra.mxu0 0.0
      %1669 = vmatprep.subr.mxu0 0.0
      %1670 = vmatpush1.msra.mxu0 0.0
      %1671 = vmatprep.subr.mxu0 0.0
      %1672 = vmatpush1.msra.mxu0 0.0
      %1673 = vmatprep.subr.mxu0 0.0
      %1674 = vmatpush1.msra.mxu0 0.0
      %1675 = vmatprep.subr.mxu0 0.0
      %1676 = vmatpush1.msra.mxu0 0.0
      %1677 = vmatprep.subr.mxu0 0.0
      %1678 = vmatpush1.msra.mxu0 0.0
      %1679 = vmatprep.subr.mxu0 0.0
      %1680 = vmatpush1.msra.mxu0 0.0
      %1681 = vmatprep.subr.mxu0 0.0
      %1682 = vmatpush1.msra.mxu0 0.0
      %1683 = vmatprep.subr.mxu0 0.0
      %1684 = vmatpush1.msra.mxu0 0.0
      %1685 = vmatprep.subr.mxu0 0.0
      %1686 = vmatpush1.msra.mxu0 0.0
      %1687 = vmatprep.subr.mxu0 0.0
      %1688 = vmatpush1.msra.mxu0 0.0
      %1689 = vmatprep.subr.mxu0 0.0
      %1690 = vmatpush1.msra.mxu0 0.0
      %1691 = vmatprep.subr.mxu0 0.0
      %1692 = vmatpush1.msra.mxu0 0.0
      %1693 = vmatprep.subr.mxu0 0.0
      %1694 = vmatpush1.msra.mxu0 0.0
      %1695 = vmatprep.subr.mxu0 0.0
      %1696 = vmatpush1.msra.mxu0 0.0
      %1697 = vmatprep.subr.mxu0 0.0
      %1698 = vmatpush1.msra.mxu0 0.0
      %1699 = vmatprep.subr.mxu0 0.0
      %1700 = vmatpush1.msra.mxu0 0.0
      %1701 = vmatprep.subr.mxu0 0.0
      %1702 = vmatpush1.msra.mxu0 0.0
      %1703 = vmatprep.mubr.f32.mxu0 0.0
      %1704 = vmatmul.mubr.f32.gmra.mrb[0].mxu0 %v1069
      %v1705 = vpop.f32.mrb[0].mxu0
      %v1706 = vadd.f32 0.0, %v1705
      %v1707 = vpop.f32.mrb[0].mxu0
      %1708 = vdwg.mxu0
      %v1709 = vadd.f32 %v960, %v1138
      %v1710 = vadd.f32 %v961, %v1140
      %v1711 = vadd.f32 %v962, %v1209
      %v1712 = vadd.f32 %v963, %v1211
      %v1713 = vadd.f32 %v964, %v1280
      %v1714 = vadd.f32 %v965, %v1282
      %v1715 = vadd.f32 %v966, %v1351
      %v1716 = vadd.f32 %v967, %v1353
      %v1717 = vadd.f32 %v968, %v1422
      %v1718 = vadd.f32 %v969, %v1424
      %v1719 = vadd.f32 %v970, %v1493
      %v1720 = vadd.f32 %v971, %v1495
      %v1721 = vadd.f32 %v972, %v1564
      %v1722 = vadd.f32 %v973, %v1566
      %v1723 = vadd.f32 %v974, %v1635
      %v1724 = vadd.f32 %v975, %v1637
      %v1725 = vadd.f32 %v976, %v1706
      %1726 = vst [vmem:[%s206] sm:$0xff] %v1709
      %1727 = vst [vmem:[%s206 + $0x8] sm:$0xff] %v1710
      %1728 = vst [vmem:[%s206 + $0x10] sm:$0xff] %v1711
      %1729 = vst [vmem:[%s206 + $0x18] sm:$0xff] %v1712
      %1730 = vst [vmem:[%s206 + $0x20] sm:$0xff] %v1713
      %1731 = vst [vmem:[%s206 + $0x28] sm:$0xff] %v1714
      %1732 = vst [vmem:[%s206 + $0x30] sm:$0xff] %v1715
      %1733 = vst [vmem:[%s206 + $0x38] sm:$0xff] %v1716
      %1734 = vst [vmem:[%s206 + $0x40] sm:$0xff] %v1717
      %1735 = vst [vmem:[%s206 + $0x48] sm:$0xff] %v1718
      %1736 = vst [vmem:[%s206 + $0x50] sm:$0xff] %v1719
      %1737 = vst [vmem:[%s206 + $0x58] sm:$0xff] %v1720
      %1738 = vst [vmem:[%s206 + $0x60] sm:$0xff] %v1721
      %1739 = vst [vmem:[%s206 + $0x68] sm:$0xff] %v1722
      %1740 = vst [vmem:[%s206 + $0x70] sm:$0xff] %v1723
      %1741 = vst [vmem:[%s206 + $0x78] sm:$0xff] %v1724
      %1742 = vst [vmem:[%s206 + $0x80] sm:$0xff] %v1725
      %v1743 = vld [vmem:[%s197] sm:$0xff]
      %v1744 = vld [vmem:[%s197 + $0x8] sm:$0xff]
      %v1745 = vld [vmem:[%s197 + $0x10] sm:$0xff]
      %v1746 = vld [vmem:[%s197 + $0x18] sm:$0xff]
      %v1747 = vld [vmem:[%s197 + $0x20] sm:$0xff]
      %v1748 = vld [vmem:[%s197 + $0x28] sm:$0xff]
      %v1749 = vld [vmem:[%s197 + $0x30] sm:$0xff]
      %v1750 = vld [vmem:[%s197 + $0x38] sm:$0xff]
      %v1751 = vld [vmem:[%s197 + $0x40] sm:$0xff]
      %v1752 = vld [vmem:[%s197 + $0x48] sm:$0xff]
      %v1753 = vld [vmem:[%s197 + $0x50] sm:$0xff]
      %v1754 = vld [vmem:[%s197 + $0x58] sm:$0xff]
      %v1755 = vld [vmem:[%s197 + $0x60] sm:$0xff]
      %v1756 = vld [vmem:[%s197 + $0x68] sm:$0xff]
      %v1757 = vld [vmem:[%s197 + $0x70] sm:$0xff]
      %v1758 = vld [vmem:[%s197 + $0x78] sm:$0xff]
      %v1759 = vld [vmem:[%s197 + $0x80] sm:$0xff]
      %v1760 = vld [vmem:[%s197 + $0x88] sm:$0xff]
      %v1761 = vld [vmem:[%s206] sm:$0xff]
      %v1762 = vld [vmem:[%s206 + $0x8] sm:$0xff]
      %v1763 = vld [vmem:[%s206 + $0x10] sm:$0xff]
      %v1764 = vld [vmem:[%s206 + $0x18] sm:$0xff]
      %v1765 = vld [vmem:[%s206 + $0x20] sm:$0xff]
      %v1766 = vld [vmem:[%s206 + $0x28] sm:$0xff]
      %v1767 = vld [vmem:[%s206 + $0x30] sm:$0xff]
      %v1768 = vld [vmem:[%s206 + $0x38] sm:$0xff]
      %v1769 = vld [vmem:[%s206 + $0x40] sm:$0xff]
      %v1770 = vld [vmem:[%s206 + $0x48] sm:$0xff]
      %v1771 = vld [vmem:[%s206 + $0x50] sm:$0xff]
      %v1772 = vld [vmem:[%s206 + $0x58] sm:$0xff]
      %v1773 = vld [vmem:[%s206 + $0x60] sm:$0xff]
      %v1774 = vld [vmem:[%s206 + $0x68] sm:$0xff]
      %v1775 = vld [vmem:[%s206 + $0x70] sm:$0xff]
      %v1776 = vld [vmem:[%s206 + $0x78] sm:$0xff]
      %v1777 = vld [vmem:[%s206 + $0x80] sm:$0xff]
      %s1778 = scalar_lea.vmem %s1, 16
      %v1779 = vld [vmem:[%s1778] sm:$0xff]
      %1798 = vrot.lane.b32.xlu0 %v1743, 126
      %v1799 = vpop.permute.xlu0 %1798
      %1800 = vrot.lane.b32.xlu0 %v1744, 126
      %v1801 = vpop.permute.xlu0 %1800
      %1802 = vrot.lane.b32.xlu0 %v1745, 126
      %v1803 = vpop.permute.xlu0 %1802
      %1804 = vrot.lane.b32.xlu0 %v1746, 126
      %v1805 = vpop.permute.xlu0 %1804
      %1806 = vrot.lane.b32.xlu0 %v1747, 126
      %v1807 = vpop.permute.xlu0 %1806
      %1808 = vrot.lane.b32.xlu0 %v1748, 126
      %v1809 = vpop.permute.xlu0 %1808
      %1810 = vrot.lane.b32.xlu0 %v1749, 126
      %v1811 = vpop.permute.xlu0 %1810
      %1812 = vrot.lane.b32.xlu0 %v1750, 126
      %v1813 = vpop.permute.xlu0 %1812
      %1814 = vrot.lane.b32.xlu0 %v1751, 126
      %v1815 = vpop.permute.xlu0 %1814
      %1816 = vrot.lane.b32.xlu0 %v1752, 126
      %v1817 = vpop.permute.xlu0 %1816
      %1818 = vrot.lane.b32.xlu0 %v1753, 126
      %v1819 = vpop.permute.xlu0 %1818
      %1820 = vrot.lane.b32.xlu0 %v1754, 126
      %v1821 = vpop.permute.xlu0 %1820
      %1822 = vrot.lane.b32.xlu0 %v1755, 126
      %v1823 = vpop.permute.xlu0 %1822
      %1824 = vrot.lane.b32.xlu0 %v1756, 126
      %v1825 = vpop.permute.xlu0 %1824
      %1826 = vrot.lane.b32.xlu0 %v1757, 126
      %v1827 = vpop.permute.xlu0 %1826
      %1828 = vrot.lane.b32.xlu0 %v1758, 126
      %v1829 = vpop.permute.xlu0 %1828
      %1830 = vrot.lane.b32.xlu0 %v1759, 126
      %v1831 = vpop.permute.xlu0 %1830
      %1832 = vrot.lane.b32.xlu0 %v1760, 126
      %v1833 = vpop.permute.xlu0 %1832
      %vm1834 = vcmask 1031168
      %v1835 = vsel %vm1834, %v1799, %v1801
      %v1836 = vsel %vm1834, %v1801, %v1803
      %v1837 = vsel %vm1834, %v1803, %v1805
      %v1838 = vsel %vm1834, %v1805, %v1807
      %v1839 = vsel %vm1834, %v1807, %v1809
      %v1840 = vsel %vm1834, %v1809, %v1811
      %v1841 = vsel %vm1834, %v1811, %v1813
      %v1842 = vsel %vm1834, %v1813, %v1815
      %v1843 = vsel %vm1834, %v1815, %v1817
      %v1844 = vsel %vm1834, %v1817, %v1819
      %v1845 = vsel %vm1834, %v1819, %v1821
      %v1846 = vsel %vm1834, %v1821, %v1823
      %v1847 = vsel %vm1834, %v1823, %v1825
      %v1848 = vsel %vm1834, %v1825, %v1827
      %v1849 = vsel %vm1834, %v1827, %v1829
      %v1850 = vsel %vm1834, %v1829, %v1831
      %v1851 = vsel %vm1834, %v1831, %v1833
      %v1870 = vsel %vm266, %v1779, 0
      %1872 = vmatprep.subr.mxu0 %v1836
      %1873 = vmatpush1.msra.mxu0 %v1835
      %1874 = vmatprep.subr.mxu0 0.0
      %1875 = vmatpush1.msra.mxu0 0.0
      %1876 = vmatprep.subr.mxu0 0.0
      %1877 = vmatpush1.msra.mxu0 0.0
      %1878 = vmatprep.subr.mxu0 0.0
      %1879 = vmatpush1.msra.mxu0 0.0
      %1880 = vmatprep.subr.mxu0 0.0
      %1881 = vmatpush1.msra.mxu0 0.0
      %1882 = vmatprep.subr.mxu0 0.0
      %1883 = vmatpush1.msra.mxu0 0.0
      %1884 = vmatprep.subr.mxu0 0.0
      %1885 = vmatpush1.msra.mxu0 0.0
      %1886 = vmatprep.subr.mxu0 0.0
      %1887 = vmatpush1.msra.mxu0 0.0
      %1888 = vmatprep.subr.mxu0 0.0
      %1889 = vmatpush1.msra.mxu0 0.0
      %1890 = vmatprep.subr.mxu0 0.0
      %1891 = vmatpush1.msra.mxu0 0.0
      %1892 = vmatprep.subr.mxu0 0.0
      %1893 = vmatpush1.msra.mxu0 0.0
      %1894 = vmatprep.subr.mxu0 0.0
      %1895 = vmatpush1.msra.mxu0 0.0
      %1896 = vmatprep.subr.mxu0 0.0
      %1897 = vmatpush1.msra.mxu0 0.0
      %1898 = vmatprep.subr.mxu0 0.0
      %1899 = vmatpush1.msra.mxu0 0.0
      %1900 = vmatprep.subr.mxu0 0.0
      %1901 = vmatpush1.msra.mxu0 0.0
      %1902 = vmatprep.subr.mxu0 0.0
      %1903 = vmatpush1.msra.mxu0 0.0
      %1904 = vmatprep.subr.mxu0 0.0
      %1905 = vmatpush1.msra.mxu0 0.0
      %1906 = vmatprep.subr.mxu0 0.0
      %1907 = vmatpush1.msra.mxu0 0.0
      %1908 = vmatprep.subr.mxu0 0.0
      %1909 = vmatpush1.msra.mxu0 0.0
      %1910 = vmatprep.subr.mxu0 0.0
      %1911 = vmatpush1.msra.mxu0 0.0
      %1912 = vmatprep.subr.mxu0 0.0
      %1913 = vmatpush1.msra.mxu0 0.0
      %1914 = vmatprep.subr.mxu0 0.0
      %1915 = vmatpush1.msra.mxu0 0.0
      %1916 = vmatprep.subr.mxu0 0.0
      %1917 = vmatpush1.msra.mxu0 0.0
      %1918 = vmatprep.subr.mxu0 0.0
      %1919 = vmatpush1.msra.mxu0 0.0
      %1920 = vmatprep.subr.mxu0 0.0
      %1921 = vmatpush1.msra.mxu0 0.0
      %1922 = vmatprep.subr.mxu0 0.0
      %1923 = vmatpush1.msra.mxu0 0.0
      %1924 = vmatprep.subr.mxu0 0.0
      %1925 = vmatpush1.msra.mxu0 0.0
      %1926 = vmatprep.subr.mxu0 0.0
      %1927 = vmatpush1.msra.mxu0 0.0
      %1928 = vmatprep.subr.mxu0 0.0
      %1929 = vmatpush1.msra.mxu0 0.0
      %1930 = vmatprep.subr.mxu0 0.0
      %1931 = vmatpush1.msra.mxu0 0.0
      %1932 = vmatprep.subr.mxu0 0.0
      %1933 = vmatpush1.msra.mxu0 0.0
      %1934 = vmatprep.subr.mxu0 0.0
      %1935 = vmatpush1.msra.mxu0 0.0
      %1936 = vmatprep.mubr.f32.mxu0 0.0
      %1937 = vmatmul.mubr.f32.gmra.mrb[0].mxu0 %v1870
      %v1938 = vpop.f32.mrb[0].mxu0
      %v1939 = vadd.f32 0.0, %v1938
      %v1940 = vpop.f32.mrb[0].mxu0
      %v1941 = vadd.f32 0.0, %v1940
      %1942 = vdwg.mxu0
      %1943 = vmatprep.subr.mxu0 %v1838
      %1944 = vmatpush1.msra.mxu0 %v1837
      %1945 = vmatprep.subr.mxu0 0.0
      %1946 = vmatpush1.msra.mxu0 0.0
      %1947 = vmatprep.subr.mxu0 0.0
      %1948 = vmatpush1.msra.mxu0 0.0
      %1949 = vmatprep.subr.mxu0 0.0
      %1950 = vmatpush1.msra.mxu0 0.0
      %1951 = vmatprep.subr.mxu0 0.0
      %1952 = vmatpush1.msra.mxu0 0.0
      %1953 = vmatprep.subr.mxu0 0.0
      %1954 = vmatpush1.msra.mxu0 0.0
      %1955 = vmatprep.subr.mxu0 0.0
      %1956 = vmatpush1.msra.mxu0 0.0
      %1957 = vmatprep.subr.mxu0 0.0
      %1958 = vmatpush1.msra.mxu0 0.0
      %1959 = vmatprep.subr.mxu0 0.0
      %1960 = vmatpush1.msra.mxu0 0.0
      %1961 = vmatprep.subr.mxu0 0.0
      %1962 = vmatpush1.msra.mxu0 0.0
      %1963 = vmatprep.subr.mxu0 0.0
      %1964 = vmatpush1.msra.mxu0 0.0
      %1965 = vmatprep.subr.mxu0 0.0
      %1966 = vmatpush1.msra.mxu0 0.0
      %1967 = vmatprep.subr.mxu0 0.0
      %1968 = vmatpush1.msra.mxu0 0.0
      %1969 = vmatprep.subr.mxu0 0.0
      %1970 = vmatpush1.msra.mxu0 0.0
      %1971 = vmatprep.subr.mxu0 0.0
      %1972 = vmatpush1.msra.mxu0 0.0
      %1973 = vmatprep.subr.mxu0 0.0
      %1974 = vmatpush1.msra.mxu0 0.0
      %1975 = vmatprep.subr.mxu0 0.0
      %1976 = vmatpush1.msra.mxu0 0.0
      %1977 = vmatprep.subr.mxu0 0.0
      %1978 = vmatpush1.msra.mxu0 0.0
      %1979 = vmatprep.subr.mxu0 0.0
      %1980 = vmatpush1.msra.mxu0 0.0
      %1981 = vmatprep.subr.mxu0 0.0
      %1982 = vmatpush1.msra.mxu0 0.0
      %1983 = vmatprep.subr.mxu0 0.0
      %1984 = vmatpush1.msra.mxu0 0.0
      %1985 = vmatprep.subr.mxu0 0.0
      %1986 = vmatpush1.msra.mxu0 0.0
      %1987 = vmatprep.subr.mxu0 0.0
      %1988 = vmatpush1.msra.mxu0 0.0
      %1989 = vmatprep.subr.mxu0 0.0
      %1990 = vmatpush1.msra.mxu0 0.0
      %1991 = vmatprep.subr.mxu0 0.0
      %1992 = vmatpush1.msra.mxu0 0.0
      %1993 = vmatprep.subr.mxu0 0.0
      %1994 = vmatpush1.msra.mxu0 0.0
      %1995 = vmatprep.subr.mxu0 0.0
      %1996 = vmatpush1.msra.mxu0 0.0
      %1997 = vmatprep.subr.mxu0 0.0
      %1998 = vmatpush1.msra.mxu0 0.0
      %1999 = vmatprep.subr.mxu0 0.0
      %2000 = vmatpush1.msra.mxu0 0.0
      %2001 = vmatprep.subr.mxu0 0.0
      %2002 = vmatpush1.msra.mxu0 0.0
      %2003 = vmatprep.subr.mxu0 0.0
      %2004 = vmatpush1.msra.mxu0 0.0
      %2005 = vmatprep.subr.mxu0 0.0
      %2006 = vmatpush1.msra.mxu0 0.0
      %2007 = vmatprep.mubr.f32.mxu0 0.0
      %2008 = vmatmul.mubr.f32.gmra.mrb[0].mxu0 %v1870
      %v2009 = vpop.f32.mrb[0].mxu0
      %v2010 = vadd.f32 0.0, %v2009
      %v2011 = vpop.f32.mrb[0].mxu0
      %v2012 = vadd.f32 0.0, %v2011
      %2013 = vdwg.mxu0
      %2014 = vmatprep.subr.mxu0 %v1840
      %2015 = vmatpush1.msra.mxu0 %v1839
      %2016 = vmatprep.subr.mxu0 0.0
      %2017 = vmatpush1.msra.mxu0 0.0
      %2018 = vmatprep.subr.mxu0 0.0
      %2019 = vmatpush1.msra.mxu0 0.0
      %2020 = vmatprep.subr.mxu0 0.0
      %2021 = vmatpush1.msra.mxu0 0.0
      %2022 = vmatprep.subr.mxu0 0.0
      %2023 = vmatpush1.msra.mxu0 0.0
      %2024 = vmatprep.subr.mxu0 0.0
      %2025 = vmatpush1.msra.mxu0 0.0
      %2026 = vmatprep.subr.mxu0 0.0
      %2027 = vmatpush1.msra.mxu0 0.0
      %2028 = vmatprep.subr.mxu0 0.0
      %2029 = vmatpush1.msra.mxu0 0.0
      %2030 = vmatprep.subr.mxu0 0.0
      %2031 = vmatpush1.msra.mxu0 0.0
      %2032 = vmatprep.subr.mxu0 0.0
      %2033 = vmatpush1.msra.mxu0 0.0
      %2034 = vmatprep.subr.mxu0 0.0
      %2035 = vmatpush1.msra.mxu0 0.0
      %2036 = vmatprep.subr.mxu0 0.0
      %2037 = vmatpush1.msra.mxu0 0.0
      %2038 = vmatprep.subr.mxu0 0.0
      %2039 = vmatpush1.msra.mxu0 0.0
      %2040 = vmatprep.subr.mxu0 0.0
      %2041 = vmatpush1.msra.mxu0 0.0
      %2042 = vmatprep.subr.mxu0 0.0
      %2043 = vmatpush1.msra.mxu0 0.0
      %2044 = vmatprep.subr.mxu0 0.0
      %2045 = vmatpush1.msra.mxu0 0.0
      %2046 = vmatprep.subr.mxu0 0.0
      %2047 = vmatpush1.msra.mxu0 0.0
      %2048 = vmatprep.subr.mxu0 0.0
      %2049 = vmatpush1.msra.mxu0 0.0
      %2050 = vmatprep.subr.mxu0 0.0
      %2051 = vmatpush1.msra.mxu0 0.0
      %2052 = vmatprep.subr.mxu0 0.0
      %2053 = vmatpush1.msra.mxu0 0.0
      %2054 = vmatprep.subr.mxu0 0.0
      %2055 = vmatpush1.msra.mxu0 0.0
      %2056 = vmatprep.subr.mxu0 0.0
      %2057 = vmatpush1.msra.mxu0 0.0
      %2058 = vmatprep.subr.mxu0 0.0
      %2059 = vmatpush1.msra.mxu0 0.0
      %2060 = vmatprep.subr.mxu0 0.0
      %2061 = vmatpush1.msra.mxu0 0.0
      %2062 = vmatprep.subr.mxu0 0.0
      %2063 = vmatpush1.msra.mxu0 0.0
      %2064 = vmatprep.subr.mxu0 0.0
      %2065 = vmatpush1.msra.mxu0 0.0
      %2066 = vmatprep.subr.mxu0 0.0
      %2067 = vmatpush1.msra.mxu0 0.0
      %2068 = vmatprep.subr.mxu0 0.0
      %2069 = vmatpush1.msra.mxu0 0.0
      %2070 = vmatprep.subr.mxu0 0.0
      %2071 = vmatpush1.msra.mxu0 0.0
      %2072 = vmatprep.subr.mxu0 0.0
      %2073 = vmatpush1.msra.mxu0 0.0
      %2074 = vmatprep.subr.mxu0 0.0
      %2075 = vmatpush1.msra.mxu0 0.0
      %2076 = vmatprep.subr.mxu0 0.0
      %2077 = vmatpush1.msra.mxu0 0.0
      %2078 = vmatprep.mubr.f32.mxu0 0.0
      %2079 = vmatmul.mubr.f32.gmra.mrb[0].mxu0 %v1870
      %v2080 = vpop.f32.mrb[0].mxu0
      %v2081 = vadd.f32 0.0, %v2080
      %v2082 = vpop.f32.mrb[0].mxu0
      %v2083 = vadd.f32 0.0, %v2082
      %2084 = vdwg.mxu0
      %2085 = vmatprep.subr.mxu0 %v1842
      %2086 = vmatpush1.msra.mxu0 %v1841
      %2087 = vmatprep.subr.mxu0 0.0
      %2088 = vmatpush1.msra.mxu0 0.0
      %2089 = vmatprep.subr.mxu0 0.0
      %2090 = vmatpush1.msra.mxu0 0.0
      %2091 = vmatprep.subr.mxu0 0.0
      %2092 = vmatpush1.msra.mxu0 0.0
      %2093 = vmatprep.subr.mxu0 0.0
      %2094 = vmatpush1.msra.mxu0 0.0
      %2095 = vmatprep.subr.mxu0 0.0
      %2096 = vmatpush1.msra.mxu0 0.0
      %2097 = vmatprep.subr.mxu0 0.0
      %2098 = vmatpush1.msra.mxu0 0.0
      %2099 = vmatprep.subr.mxu0 0.0
      %2100 = vmatpush1.msra.mxu0 0.0
      %2101 = vmatprep.subr.mxu0 0.0
      %2102 = vmatpush1.msra.mxu0 0.0
      %2103 = vmatprep.subr.mxu0 0.0
      %2104 = vmatpush1.msra.mxu0 0.0
      %2105 = vmatprep.subr.mxu0 0.0
      %2106 = vmatpush1.msra.mxu0 0.0
      %2107 = vmatprep.subr.mxu0 0.0
      %2108 = vmatpush1.msra.mxu0 0.0
      %2109 = vmatprep.subr.mxu0 0.0
      %2110 = vmatpush1.msra.mxu0 0.0
      %2111 = vmatprep.subr.mxu0 0.0
      %2112 = vmatpush1.msra.mxu0 0.0
      %2113 = vmatprep.subr.mxu0 0.0
      %2114 = vmatpush1.msra.mxu0 0.0
      %2115 = vmatprep.subr.mxu0 0.0
      %2116 = vmatpush1.msra.mxu0 0.0
      %2117 = vmatprep.subr.mxu0 0.0
      %2118 = vmatpush1.msra.mxu0 0.0
      %2119 = vmatprep.subr.mxu0 0.0
      %2120 = vmatpush1.msra.mxu0 0.0
      %2121 = vmatprep.subr.mxu0 0.0
      %2122 = vmatpush1.msra.mxu0 0.0
      %2123 = vmatprep.subr.mxu0 0.0
      %2124 = vmatpush1.msra.mxu0 0.0
      %2125 = vmatprep.subr.mxu0 0.0
      %2126 = vmatpush1.msra.mxu0 0.0
      %2127 = vmatprep.subr.mxu0 0.0
      %2128 = vmatpush1.msra.mxu0 0.0
      %2129 = vmatprep.subr.mxu0 0.0
      %2130 = vmatpush1.msra.mxu0 0.0
      %2131 = vmatprep.subr.mxu0 0.0
      %2132 = vmatpush1.msra.mxu0 0.0
      %2133 = vmatprep.subr.mxu0 0.0
      %2134 = vmatpush1.msra.mxu0 0.0
      %2135 = vmatprep.subr.mxu0 0.0
      %2136 = vmatpush1.msra.mxu0 0.0
      %2137 = vmatprep.subr.mxu0 0.0
      %2138 = vmatpush1.msra.mxu0 0.0
      %2139 = vmatprep.subr.mxu0 0.0
      %2140 = vmatpush1.msra.mxu0 0.0
      %2141 = vmatprep.subr.mxu0 0.0
      %2142 = vmatpush1.msra.mxu0 0.0
      %2143 = vmatprep.subr.mxu0 0.0
      %2144 = vmatpush1.msra.mxu0 0.0
      %2145 = vmatprep.subr.mxu0 0.0
      %2146 = vmatpush1.msra.mxu0 0.0
      %2147 = vmatprep.subr.mxu0 0.0
      %2148 = vmatpush1.msra.mxu0 0.0
      %2149 = vmatprep.mubr.f32.mxu0 0.0
      %2150 = vmatmul.mubr.f32.gmra.mrb[0].mxu0 %v1870
      %v2151 = vpop.f32.mrb[0].mxu0
      %v2152 = vadd.f32 0.0, %v2151
      %v2153 = vpop.f32.mrb[0].mxu0
      %v2154 = vadd.f32 0.0, %v2153
      %2155 = vdwg.mxu0
      %2156 = vmatprep.subr.mxu0 %v1844
      %2157 = vmatpush1.msra.mxu0 %v1843
      %2158 = vmatprep.subr.mxu0 0.0
      %2159 = vmatpush1.msra.mxu0 0.0
      %2160 = vmatprep.subr.mxu0 0.0
      %2161 = vmatpush1.msra.mxu0 0.0
      %2162 = vmatprep.subr.mxu0 0.0
      %2163 = vmatpush1.msra.mxu0 0.0
      %2164 = vmatprep.subr.mxu0 0.0
      %2165 = vmatpush1.msra.mxu0 0.0
      %2166 = vmatprep.subr.mxu0 0.0
      %2167 = vmatpush1.msra.mxu0 0.0
      %2168 = vmatprep.subr.mxu0 0.0
      %2169 = vmatpush1.msra.mxu0 0.0
      %2170 = vmatprep.subr.mxu0 0.0
      %2171 = vmatpush1.msra.mxu0 0.0
      %2172 = vmatprep.subr.mxu0 0.0
      %2173 = vmatpush1.msra.mxu0 0.0
      %2174 = vmatprep.subr.mxu0 0.0
      %2175 = vmatpush1.msra.mxu0 0.0
      %2176 = vmatprep.subr.mxu0 0.0
      %2177 = vmatpush1.msra.mxu0 0.0
      %2178 = vmatprep.subr.mxu0 0.0
      %2179 = vmatpush1.msra.mxu0 0.0
      %2180 = vmatprep.subr.mxu0 0.0
      %2181 = vmatpush1.msra.mxu0 0.0
      %2182 = vmatprep.subr.mxu0 0.0
      %2183 = vmatpush1.msra.mxu0 0.0
      %2184 = vmatprep.subr.mxu0 0.0
      %2185 = vmatpush1.msra.mxu0 0.0
      %2186 = vmatprep.subr.mxu0 0.0
      %2187 = vmatpush1.msra.mxu0 0.0
      %2188 = vmatprep.subr.mxu0 0.0
      %2189 = vmatpush1.msra.mxu0 0.0
      %2190 = vmatprep.subr.mxu0 0.0
      %2191 = vmatpush1.msra.mxu0 0.0
      %2192 = vmatprep.subr.mxu0 0.0
      %2193 = vmatpush1.msra.mxu0 0.0
      %2194 = vmatprep.subr.mxu0 0.0
      %2195 = vmatpush1.msra.mxu0 0.0
      %2196 = vmatprep.subr.mxu0 0.0
      %2197 = vmatpush1.msra.mxu0 0.0
      %2198 = vmatprep.subr.mxu0 0.0
      %2199 = vmatpush1.msra.mxu0 0.0
      %2200 = vmatprep.subr.mxu0 0.0
      %2201 = vmatpush1.msra.mxu0 0.0
      %2202 = vmatprep.subr.mxu0 0.0
      %2203 = vmatpush1.msra.mxu0 0.0
      %2204 = vmatprep.subr.mxu0 0.0
      %2205 = vmatpush1.msra.mxu0 0.0
      %2206 = vmatprep.subr.mxu0 0.0
      %2207 = vmatpush1.msra.mxu0 0.0
      %2208 = vmatprep.subr.mxu0 0.0
      %2209 = vmatpush1.msra.mxu0 0.0
      %2210 = vmatprep.subr.mxu0 0.0
      %2211 = vmatpush1.msra.mxu0 0.0
      %2212 = vmatprep.subr.mxu0 0.0
      %2213 = vmatpush1.msra.mxu0 0.0
      %2214 = vmatprep.subr.mxu0 0.0
      %2215 = vmatpush1.msra.mxu0 0.0
      %2216 = vmatprep.subr.mxu0 0.0
      %2217 = vmatpush1.msra.mxu0 0.0
      %2218 = vmatprep.subr.mxu0 0.0
      %2219 = vmatpush1.msra.mxu0 0.0
      %2220 = vmatprep.mubr.f32.mxu0 0.0
      %2221 = vmatmul.mubr.f32.gmra.mrb[0].mxu0 %v1870
      %v2222 = vpop.f32.mrb[0].mxu0
      %v2223 = vadd.f32 0.0, %v2222
      %v2224 = vpop.f32.mrb[0].mxu0
      %v2225 = vadd.f32 0.0, %v2224
      %2226 = vdwg.mxu0
      %2227 = vmatprep.subr.mxu0 %v1846
      %2228 = vmatpush1.msra.mxu0 %v1845
      %2229 = vmatprep.subr.mxu0 0.0
      %2230 = vmatpush1.msra.mxu0 0.0
      %2231 = vmatprep.subr.mxu0 0.0
      %2232 = vmatpush1.msra.mxu0 0.0
      %2233 = vmatprep.subr.mxu0 0.0
      %2234 = vmatpush1.msra.mxu0 0.0
      %2235 = vmatprep.subr.mxu0 0.0
      %2236 = vmatpush1.msra.mxu0 0.0
      %2237 = vmatprep.subr.mxu0 0.0
      %2238 = vmatpush1.msra.mxu0 0.0
      %2239 = vmatprep.subr.mxu0 0.0
      %2240 = vmatpush1.msra.mxu0 0.0
      %2241 = vmatprep.subr.mxu0 0.0
      %2242 = vmatpush1.msra.mxu0 0.0
      %2243 = vmatprep.subr.mxu0 0.0
      %2244 = vmatpush1.msra.mxu0 0.0
      %2245 = vmatprep.subr.mxu0 0.0
      %2246 = vmatpush1.msra.mxu0 0.0
      %2247 = vmatprep.subr.mxu0 0.0
      %2248 = vmatpush1.msra.mxu0 0.0
      %2249 = vmatprep.subr.mxu0 0.0
      %2250 = vmatpush1.msra.mxu0 0.0
      %2251 = vmatprep.subr.mxu0 0.0
      %2252 = vmatpush1.msra.mxu0 0.0
      %2253 = vmatprep.subr.mxu0 0.0
      %2254 = vmatpush1.msra.mxu0 0.0
      %2255 = vmatprep.subr.mxu0 0.0
      %2256 = vmatpush1.msra.mxu0 0.0
      %2257 = vmatprep.subr.mxu0 0.0
      %2258 = vmatpush1.msra.mxu0 0.0
      %2259 = vmatprep.subr.mxu0 0.0
      %2260 = vmatpush1.msra.mxu0 0.0
      %2261 = vmatprep.subr.mxu0 0.0
      %2262 = vmatpush1.msra.mxu0 0.0
      %2263 = vmatprep.subr.mxu0 0.0
      %2264 = vmatpush1.msra.mxu0 0.0
      %2265 = vmatprep.subr.mxu0 0.0
      %2266 = vmatpush1.msra.mxu0 0.0
      %2267 = vmatprep.subr.mxu0 0.0
      %2268 = vmatpush1.msra.mxu0 0.0
      %2269 = vmatprep.subr.mxu0 0.0
      %2270 = vmatpush1.msra.mxu0 0.0
      %2271 = vmatprep.subr.mxu0 0.0
      %2272 = vmatpush1.msra.mxu0 0.0
      %2273 = vmatprep.subr.mxu0 0.0
      %2274 = vmatpush1.msra.mxu0 0.0
      %2275 = vmatprep.subr.mxu0 0.0
      %2276 = vmatpush1.msra.mxu0 0.0
      %2277 = vmatprep.subr.mxu0 0.0
      %2278 = vmatpush1.msra.mxu0 0.0
      %2279 = vmatprep.subr.mxu0 0.0
      %2280 = vmatpush1.msra.mxu0 0.0
      %2281 = vmatprep.subr.mxu0 0.0
      %2282 = vmatpush1.msra.mxu0 0.0
      %2283 = vmatprep.subr.mxu0 0.0
      %2284 = vmatpush1.msra.mxu0 0.0
      %2285 = vmatprep.subr.mxu0 0.0
      %2286 = vmatpush1.msra.mxu0 0.0
      %2287 = vmatprep.subr.mxu0 0.0
      %2288 = vmatpush1.msra.mxu0 0.0
      %2289 = vmatprep.subr.mxu0 0.0
      %2290 = vmatpush1.msra.mxu0 0.0
      %2291 = vmatprep.mubr.f32.mxu0 0.0
      %2292 = vmatmul.mubr.f32.gmra.mrb[0].mxu0 %v1870
      %v2293 = vpop.f32.mrb[0].mxu0
      %v2294 = vadd.f32 0.0, %v2293
      %v2295 = vpop.f32.mrb[0].mxu0
      %v2296 = vadd.f32 0.0, %v2295
      %2297 = vdwg.mxu0
      %2298 = vmatprep.subr.mxu0 %v1848
      %2299 = vmatpush1.msra.mxu0 %v1847
      %2300 = vmatprep.subr.mxu0 0.0
      %2301 = vmatpush1.msra.mxu0 0.0
      %2302 = vmatprep.subr.mxu0 0.0
      %2303 = vmatpush1.msra.mxu0 0.0
      %2304 = vmatprep.subr.mxu0 0.0
      %2305 = vmatpush1.msra.mxu0 0.0
      %2306 = vmatprep.subr.mxu0 0.0
      %2307 = vmatpush1.msra.mxu0 0.0
      %2308 = vmatprep.subr.mxu0 0.0
      %2309 = vmatpush1.msra.mxu0 0.0
      %2310 = vmatprep.subr.mxu0 0.0
      %2311 = vmatpush1.msra.mxu0 0.0
      %2312 = vmatprep.subr.mxu0 0.0
      %2313 = vmatpush1.msra.mxu0 0.0
      %2314 = vmatprep.subr.mxu0 0.0
      %2315 = vmatpush1.msra.mxu0 0.0
      %2316 = vmatprep.subr.mxu0 0.0
      %2317 = vmatpush1.msra.mxu0 0.0
      %2318 = vmatprep.subr.mxu0 0.0
      %2319 = vmatpush1.msra.mxu0 0.0
      %2320 = vmatprep.subr.mxu0 0.0
      %2321 = vmatpush1.msra.mxu0 0.0
      %2322 = vmatprep.subr.mxu0 0.0
      %2323 = vmatpush1.msra.mxu0 0.0
      %2324 = vmatprep.subr.mxu0 0.0
      %2325 = vmatpush1.msra.mxu0 0.0
      %2326 = vmatprep.subr.mxu0 0.0
      %2327 = vmatpush1.msra.mxu0 0.0
      %2328 = vmatprep.subr.mxu0 0.0
      %2329 = vmatpush1.msra.mxu0 0.0
      %2330 = vmatprep.subr.mxu0 0.0
      %2331 = vmatpush1.msra.mxu0 0.0
      %2332 = vmatprep.subr.mxu0 0.0
      %2333 = vmatpush1.msra.mxu0 0.0
      %2334 = vmatprep.subr.mxu0 0.0
      %2335 = vmatpush1.msra.mxu0 0.0
      %2336 = vmatprep.subr.mxu0 0.0
      %2337 = vmatpush1.msra.mxu0 0.0
      %2338 = vmatprep.subr.mxu0 0.0
      %2339 = vmatpush1.msra.mxu0 0.0
      %2340 = vmatprep.subr.mxu0 0.0
      %2341 = vmatpush1.msra.mxu0 0.0
      %2342 = vmatprep.subr.mxu0 0.0
      %2343 = vmatpush1.msra.mxu0 0.0
      %2344 = vmatprep.subr.mxu0 0.0
      %2345 = vmatpush1.msra.mxu0 0.0
      %2346 = vmatprep.subr.mxu0 0.0
      %2347 = vmatpush1.msra.mxu0 0.0
      %2348 = vmatprep.subr.mxu0 0.0
      %2349 = vmatpush1.msra.mxu0 0.0
      %2350 = vmatprep.subr.mxu0 0.0
      %2351 = vmatpush1.msra.mxu0 0.0
      %2352 = vmatprep.subr.mxu0 0.0
      %2353 = vmatpush1.msra.mxu0 0.0
      %2354 = vmatprep.subr.mxu0 0.0
      %2355 = vmatpush1.msra.mxu0 0.0
      %2356 = vmatprep.subr.mxu0 0.0
      %2357 = vmatpush1.msra.mxu0 0.0
      %2358 = vmatprep.subr.mxu0 0.0
      %2359 = vmatpush1.msra.mxu0 0.0
      %2360 = vmatprep.subr.mxu0 0.0
      %2361 = vmatpush1.msra.mxu0 0.0
      %2362 = vmatprep.mubr.f32.mxu0 0.0
      %2363 = vmatmul.mubr.f32.gmra.mrb[0].mxu0 %v1870
      %v2364 = vpop.f32.mrb[0].mxu0
      %v2365 = vadd.f32 0.0, %v2364
      %v2366 = vpop.f32.mrb[0].mxu0
      %v2367 = vadd.f32 0.0, %v2366
      %2368 = vdwg.mxu0
      %2369 = vmatprep.subr.mxu0 %v1850
      %2370 = vmatpush1.msra.mxu0 %v1849
      %2371 = vmatprep.subr.mxu0 0.0
      %2372 = vmatpush1.msra.mxu0 0.0
      %2373 = vmatprep.subr.mxu0 0.0
      %2374 = vmatpush1.msra.mxu0 0.0
      %2375 = vmatprep.subr.mxu0 0.0
      %2376 = vmatpush1.msra.mxu0 0.0
      %2377 = vmatprep.subr.mxu0 0.0
      %2378 = vmatpush1.msra.mxu0 0.0
      %2379 = vmatprep.subr.mxu0 0.0
      %2380 = vmatpush1.msra.mxu0 0.0
      %2381 = vmatprep.subr.mxu0 0.0
      %2382 = vmatpush1.msra.mxu0 0.0
      %2383 = vmatprep.subr.mxu0 0.0
      %2384 = vmatpush1.msra.mxu0 0.0
      %2385 = vmatprep.subr.mxu0 0.0
      %2386 = vmatpush1.msra.mxu0 0.0
      %2387 = vmatprep.subr.mxu0 0.0
      %2388 = vmatpush1.msra.mxu0 0.0
      %2389 = vmatprep.subr.mxu0 0.0
      %2390 = vmatpush1.msra.mxu0 0.0
      %2391 = vmatprep.subr.mxu0 0.0
      %2392 = vmatpush1.msra.mxu0 0.0
      %2393 = vmatprep.subr.mxu0 0.0
      %2394 = vmatpush1.msra.mxu0 0.0
      %2395 = vmatprep.subr.mxu0 0.0
      %2396 = vmatpush1.msra.mxu0 0.0
      %2397 = vmatprep.subr.mxu0 0.0
      %2398 = vmatpush1.msra.mxu0 0.0
      %2399 = vmatprep.subr.mxu0 0.0
      %2400 = vmatpush1.msra.mxu0 0.0
      %2401 = vmatprep.subr.mxu0 0.0
      %2402 = vmatpush1.msra.mxu0 0.0
      %2403 = vmatprep.subr.mxu0 0.0
      %2404 = vmatpush1.msra.mxu0 0.0
      %2405 = vmatprep.subr.mxu0 0.0
      %2406 = vmatpush1.msra.mxu0 0.0
      %2407 = vmatprep.subr.mxu0 0.0
      %2408 = vmatpush1.msra.mxu0 0.0
      %2409 = vmatprep.subr.mxu0 0.0
      %2410 = vmatpush1.msra.mxu0 0.0
      %2411 = vmatprep.subr.mxu0 0.0
      %2412 = vmatpush1.msra.mxu0 0.0
      %2413 = vmatprep.subr.mxu0 0.0
      %2414 = vmatpush1.msra.mxu0 0.0
      %2415 = vmatprep.subr.mxu0 0.0
      %2416 = vmatpush1.msra.mxu0 0.0
      %2417 = vmatprep.subr.mxu0 0.0
      %2418 = vmatpush1.msra.mxu0 0.0
      %2419 = vmatprep.subr.mxu0 0.0
      %2420 = vmatpush1.msra.mxu0 0.0
      %2421 = vmatprep.subr.mxu0 0.0
      %2422 = vmatpush1.msra.mxu0 0.0
      %2423 = vmatprep.subr.mxu0 0.0
      %2424 = vmatpush1.msra.mxu0 0.0
      %2425 = vmatprep.subr.mxu0 0.0
      %2426 = vmatpush1.msra.mxu0 0.0
      %2427 = vmatprep.subr.mxu0 0.0
      %2428 = vmatpush1.msra.mxu0 0.0
      %2429 = vmatprep.subr.mxu0 0.0
      %2430 = vmatpush1.msra.mxu0 0.0
      %2431 = vmatprep.subr.mxu0 0.0
      %2432 = vmatpush1.msra.mxu0 0.0
      %2433 = vmatprep.mubr.f32.mxu0 0.0
      %2434 = vmatmul.mubr.f32.gmra.mrb[0].mxu0 %v1870
      %v2435 = vpop.f32.mrb[0].mxu0
      %v2436 = vadd.f32 0.0, %v2435
      %v2437 = vpop.f32.mrb[0].mxu0
      %v2438 = vadd.f32 0.0, %v2437
      %2439 = vdwg.mxu0
      %2440 = vmatprep.subr.mxu0 0.0
      %2441 = vmatpush1.msra.mxu0 %v1851
      %2442 = vmatprep.subr.mxu0 0.0
      %2443 = vmatpush1.msra.mxu0 0.0
      %2444 = vmatprep.subr.mxu0 0.0
      %2445 = vmatpush1.msra.mxu0 0.0
      %2446 = vmatprep.subr.mxu0 0.0
      %2447 = vmatpush1.msra.mxu0 0.0
      %2448 = vmatprep.subr.mxu0 0.0
      %2449 = vmatpush1.msra.mxu0 0.0
      %2450 = vmatprep.subr.mxu0 0.0
      %2451 = vmatpush1.msra.mxu0 0.0
      %2452 = vmatprep.subr.mxu0 0.0
      %2453 = vmatpush1.msra.mxu0 0.0
      %2454 = vmatprep.subr.mxu0 0.0
      %2455 = vmatpush1.msra.mxu0 0.0
      %2456 = vmatprep.subr.mxu0 0.0
      %2457 = vmatpush1.msra.mxu0 0.0
      %2458 = vmatprep.subr.mxu0 0.0
      %2459 = vmatpush1.msra.mxu0 0.0
      %2460 = vmatprep.subr.mxu0 0.0
      %2461 = vmatpush1.msra.mxu0 0.0
      %2462 = vmatprep.subr.mxu0 0.0
      %2463 = vmatpush1.msra.mxu0 0.0
      %2464 = vmatprep.subr.mxu0 0.0
      %2465 = vmatpush1.msra.mxu0 0.0
      %2466 = vmatprep.subr.mxu0 0.0
      %2467 = vmatpush1.msra.mxu0 0.0
      %2468 = vmatprep.subr.mxu0 0.0
      %2469 = vmatpush1.msra.mxu0 0.0
      %2470 = vmatprep.subr.mxu0 0.0
      %2471 = vmatpush1.msra.mxu0 0.0
      %2472 = vmatprep.subr.mxu0 0.0
      %2473 = vmatpush1.msra.mxu0 0.0
      %2474 = vmatprep.subr.mxu0 0.0
      %2475 = vmatpush1.msra.mxu0 0.0
      %2476 = vmatprep.subr.mxu0 0.0
      %2477 = vmatpush1.msra.mxu0 0.0
      %2478 = vmatprep.subr.mxu0 0.0
      %2479 = vmatpush1.msra.mxu0 0.0
      %2480 = vmatprep.subr.mxu0 0.0
      %2481 = vmatpush1.msra.mxu0 0.0
      %2482 = vmatprep.subr.mxu0 0.0
      %2483 = vmatpush1.msra.mxu0 0.0
      %2484 = vmatprep.subr.mxu0 0.0
      %2485 = vmatpush1.msra.mxu0 0.0
      %2486 = vmatprep.subr.mxu0 0.0
      %2487 = vmatpush1.msra.mxu0 0.0
      %2488 = vmatprep.subr.mxu0 0.0
      %2489 = vmatpush1.msra.mxu0 0.0
      %2490 = vmatprep.subr.mxu0 0.0
      %2491 = vmatpush1.msra.mxu0 0.0
      %2492 = vmatprep.subr.mxu0 0.0
      %2493 = vmatpush1.msra.mxu0 0.0
      %2494 = vmatprep.subr.mxu0 0.0
      %2495 = vmatpush1.msra.mxu0 0.0
      %2496 = vmatprep.subr.mxu0 0.0
      %2497 = vmatpush1.msra.mxu0 0.0
      %2498 = vmatprep.subr.mxu0 0.0
      %2499 = vmatpush1.msra.mxu0 0.0
      %2500 = vmatprep.subr.mxu0 0.0
      %2501 = vmatpush1.msra.mxu0 0.0
      %2502 = vmatprep.subr.mxu0 0.0
      %2503 = vmatpush1.msra.mxu0 0.0
      %2504 = vmatprep.mubr.f32.mxu0 0.0
      %2505 = vmatmul.mubr.f32.gmra.mrb[0].mxu0 %v1870
      %v2506 = vpop.f32.mrb[0].mxu0
      %v2507 = vadd.f32 0.0, %v2506
      %v2508 = vpop.f32.mrb[0].mxu0
      %2509 = vdwg.mxu0
      %v2510 = vadd.f32 %v1761, %v1939
      %v2511 = vadd.f32 %v1762, %v1941
      %v2512 = vadd.f32 %v1763, %v2010
      %v2513 = vadd.f32 %v1764, %v2012
      %v2514 = vadd.f32 %v1765, %v2081
      %v2515 = vadd.f32 %v1766, %v2083
      %v2516 = vadd.f32 %v1767, %v2152
      %v2517 = vadd.f32 %v1768, %v2154
      %v2518 = vadd.f32 %v1769, %v2223
      %v2519 = vadd.f32 %v1770, %v2225
      %v2520 = vadd.f32 %v1771, %v2294
      %v2521 = vadd.f32 %v1772, %v2296
      %v2522 = vadd.f32 %v1773, %v2365
      %v2523 = vadd.f32 %v1774, %v2367
      %v2524 = vadd.f32 %v1775, %v2436
      %v2525 = vadd.f32 %v1776, %v2438
      %v2526 = vadd.f32 %v1777, %v2507
      %2527 = vst [vmem:[%s206] sm:$0xff] %v2510
      %2528 = vst [vmem:[%s206 + $0x8] sm:$0xff] %v2511
      %2529 = vst [vmem:[%s206 + $0x10] sm:$0xff] %v2512
      %2530 = vst [vmem:[%s206 + $0x18] sm:$0xff] %v2513
      %2531 = vst [vmem:[%s206 + $0x20] sm:$0xff] %v2514
      %2532 = vst [vmem:[%s206 + $0x28] sm:$0xff] %v2515
      %2533 = vst [vmem:[%s206 + $0x30] sm:$0xff] %v2516
      %2534 = vst [vmem:[%s206 + $0x38] sm:$0xff] %v2517
      %2535 = vst [vmem:[%s206 + $0x40] sm:$0xff] %v2518
      %2536 = vst [vmem:[%s206 + $0x48] sm:$0xff] %v2519
      %2537 = vst [vmem:[%s206 + $0x50] sm:$0xff] %v2520
      %2538 = vst [vmem:[%s206 + $0x58] sm:$0xff] %v2521
      %2539 = vst [vmem:[%s206 + $0x60] sm:$0xff] %v2522
      %2540 = vst [vmem:[%s206 + $0x68] sm:$0xff] %v2523
      %2541 = vst [vmem:[%s206 + $0x70] sm:$0xff] %v2524
      %2542 = vst [vmem:[%s206 + $0x78] sm:$0xff] %v2525
      %2543 = vst [vmem:[%s206 + $0x80] sm:$0xff] %v2526
      %v2544 = vld [vmem:[%s197] sm:$0xff]
      %v2545 = vld [vmem:[%s197 + $0x8] sm:$0xff]
      %v2546 = vld [vmem:[%s197 + $0x10] sm:$0xff]
      %v2547 = vld [vmem:[%s197 + $0x18] sm:$0xff]
      %v2548 = vld [vmem:[%s197 + $0x20] sm:$0xff]
      %v2549 = vld [vmem:[%s197 + $0x28] sm:$0xff]
      %v2550 = vld [vmem:[%s197 + $0x30] sm:$0xff]
      %v2551 = vld [vmem:[%s197 + $0x38] sm:$0xff]
      %v2552 = vld [vmem:[%s197 + $0x40] sm:$0xff]
      %v2553 = vld [vmem:[%s197 + $0x48] sm:$0xff]
      %v2554 = vld [vmem:[%s197 + $0x50] sm:$0xff]
      %v2555 = vld [vmem:[%s197 + $0x58] sm:$0xff]
      %v2556 = vld [vmem:[%s197 + $0x60] sm:$0xff]
      %v2557 = vld [vmem:[%s197 + $0x68] sm:$0xff]
      %v2558 = vld [vmem:[%s197 + $0x70] sm:$0xff]
      %v2559 = vld [vmem:[%s197 + $0x78] sm:$0xff]
      %v2560 = vld [vmem:[%s197 + $0x80] sm:$0xff]
      %v2561 = vld [vmem:[%s197 + $0x88] sm:$0xff]
      %v2562 = vld [vmem:[%s206] sm:$0xff]
      %v2563 = vld [vmem:[%s206 + $0x8] sm:$0xff]
      %v2564 = vld [vmem:[%s206 + $0x10] sm:$0xff]
      %v2565 = vld [vmem:[%s206 + $0x18] sm:$0xff]
      %v2566 = vld [vmem:[%s206 + $0x20] sm:$0xff]
      %v2567 = vld [vmem:[%s206 + $0x28] sm:$0xff]
      %v2568 = vld [vmem:[%s206 + $0x30] sm:$0xff]
      %v2569 = vld [vmem:[%s206 + $0x38] sm:$0xff]
      %v2570 = vld [vmem:[%s206 + $0x40] sm:$0xff]
      %v2571 = vld [vmem:[%s206 + $0x48] sm:$0xff]
      %v2572 = vld [vmem:[%s206 + $0x50] sm:$0xff]
      %v2573 = vld [vmem:[%s206 + $0x58] sm:$0xff]
      %v2574 = vld [vmem:[%s206 + $0x60] sm:$0xff]
      %v2575 = vld [vmem:[%s206 + $0x68] sm:$0xff]
      %v2576 = vld [vmem:[%s206 + $0x70] sm:$0xff]
      %v2577 = vld [vmem:[%s206 + $0x78] sm:$0xff]
      %v2578 = vld [vmem:[%s206 + $0x80] sm:$0xff]
      %s2579 = scalar_lea.vmem %s1, 24
      %v2580 = vld [vmem:[%s2579] sm:$0xff]
      %2599 = vrot.lane.b32.xlu0 %v2544, 62
      %v2600 = vpop.permute.xlu0 %2599
      %2601 = vrot.lane.b32.xlu0 %v2545, 62
      %v2602 = vpop.permute.xlu0 %2601
      %2603 = vrot.lane.b32.xlu0 %v2546, 62
      %v2604 = vpop.permute.xlu0 %2603
      %2605 = vrot.lane.b32.xlu0 %v2547, 62
      %v2606 = vpop.permute.xlu0 %2605
      %2607 = vrot.lane.b32.xlu0 %v2548, 62
      %v2608 = vpop.permute.xlu0 %2607
      %2609 = vrot.lane.b32.xlu0 %v2549, 62
      %v2610 = vpop.permute.xlu0 %2609
      %2611 = vrot.lane.b32.xlu0 %v2550, 62
      %v2612 = vpop.permute.xlu0 %2611
      %2613 = vrot.lane.b32.xlu0 %v2551, 62
      %v2614 = vpop.permute.xlu0 %2613
      %2615 = vrot.lane.b32.xlu0 %v2552, 62
      %v2616 = vpop.permute.xlu0 %2615
      %2617 = vrot.lane.b32.xlu0 %v2553, 62
      %v2618 = vpop.permute.xlu0 %2617
      %2619 = vrot.lane.b32.xlu0 %v2554, 62
      %v2620 = vpop.permute.xlu0 %2619
      %2621 = vrot.lane.b32.xlu0 %v2555, 62
      %v2622 = vpop.permute.xlu0 %2621
      %2623 = vrot.lane.b32.xlu0 %v2556, 62
      %v2624 = vpop.permute.xlu0 %2623
      %2625 = vrot.lane.b32.xlu0 %v2557, 62
      %v2626 = vpop.permute.xlu0 %2625
      %2627 = vrot.lane.b32.xlu0 %v2558, 62
      %v2628 = vpop.permute.xlu0 %2627
      %2629 = vrot.lane.b32.xlu0 %v2559, 62
      %v2630 = vpop.permute.xlu0 %2629
      %2631 = vrot.lane.b32.xlu0 %v2560, 62
      %v2632 = vpop.permute.xlu0 %2631
      %2633 = vrot.lane.b32.xlu0 %v2561, 62
      %v2634 = vpop.permute.xlu0 %2633
      %vm2635 = vcmask 506880
      %v2636 = vsel %vm2635, %v2600, %v2602
      %v2637 = vsel %vm2635, %v2602, %v2604
      %v2638 = vsel %vm2635, %v2604, %v2606
      %v2639 = vsel %vm2635, %v2606, %v2608
      %v2640 = vsel %vm2635, %v2608, %v2610
      %v2641 = vsel %vm2635, %v2610, %v2612
      %v2642 = vsel %vm2635, %v2612, %v2614
      %v2643 = vsel %vm2635, %v2614, %v2616
      %v2644 = vsel %vm2635, %v2616, %v2618
      %v2645 = vsel %vm2635, %v2618, %v2620
      %v2646 = vsel %vm2635, %v2620, %v2622
      %v2647 = vsel %vm2635, %v2622, %v2624
      %v2648 = vsel %vm2635, %v2624, %v2626
      %v2649 = vsel %vm2635, %v2626, %v2628
      %v2650 = vsel %vm2635, %v2628, %v2630
      %v2651 = vsel %vm2635, %v2630, %v2632
      %v2652 = vsel %vm2635, %v2632, %v2634
      %v2671 = vsel %vm266, %v2580, 0
      %2673 = vmatprep.subr.mxu0 %v2637
      %2674 = vmatpush1.msra.mxu0 %v2636
      %2675 = vmatprep.subr.mxu0 0.0
      %2676 = vmatpush1.msra.mxu0 0.0
      %2677 = vmatprep.subr.mxu0 0.0
      %2678 = vmatpush1.msra.mxu0 0.0
      %2679 = vmatprep.subr.mxu0 0.0
      %2680 = vmatpush1.msra.mxu0 0.0
      %2681 = vmatprep.subr.mxu0 0.0
      %2682 = vmatpush1.msra.mxu0 0.0
      %2683 = vmatprep.subr.mxu0 0.0
      %2684 = vmatpush1.msra.mxu0 0.0
      %2685 = vmatprep.subr.mxu0 0.0
      %2686 = vmatpush1.msra.mxu0 0.0
      %2687 = vmatprep.subr.mxu0 0.0
      %2688 = vmatpush1.msra.mxu0 0.0
      %2689 = vmatprep.subr.mxu0 0.0
      %2690 = vmatpush1.msra.mxu0 0.0
      %2691 = vmatprep.subr.mxu0 0.0
      %2692 = vmatpush1.msra.mxu0 0.0
      %2693 = vmatprep.subr.mxu0 0.0
      %2694 = vmatpush1.msra.mxu0 0.0
      %2695 = vmatprep.subr.mxu0 0.0
      %2696 = vmatpush1.msra.mxu0 0.0
      %2697 = vmatprep.subr.mxu0 0.0
      %2698 = vmatpush1.msra.mxu0 0.0
      %2699 = vmatprep.subr.mxu0 0.0
      %2700 = vmatpush1.msra.mxu0 0.0
      %2701 = vmatprep.subr.mxu0 0.0
      %2702 = vmatpush1.msra.mxu0 0.0
      %2703 = vmatprep.subr.mxu0 0.0
      %2704 = vmatpush1.msra.mxu0 0.0
      %2705 = vmatprep.subr.mxu0 0.0
      %2706 = vmatpush1.msra.mxu0 0.0
      %2707 = vmatprep.subr.mxu0 0.0
      %2708 = vmatpush1.msra.mxu0 0.0
      %2709 = vmatprep.subr.mxu0 0.0
      %2710 = vmatpush1.msra.mxu0 0.0
      %2711 = vmatprep.subr.mxu0 0.0
      %2712 = vmatpush1.msra.mxu0 0.0
      %2713 = vmatprep.subr.mxu0 0.0
      %2714 = vmatpush1.msra.mxu0 0.0
      %2715 = vmatprep.subr.mxu0 0.0
      %2716 = vmatpush1.msra.mxu0 0.0
      %2717 = vmatprep.subr.mxu0 0.0
      %2718 = vmatpush1.msra.mxu0 0.0
      %2719 = vmatprep.subr.mxu0 0.0
      %2720 = vmatpush1.msra.mxu0 0.0
      %2721 = vmatprep.subr.mxu0 0.0
      %2722 = vmatpush1.msra.mxu0 0.0
      %2723 = vmatprep.subr.mxu0 0.0
      %2724 = vmatpush1.msra.mxu0 0.0
      %2725 = vmatprep.subr.mxu0 0.0
      %2726 = vmatpush1.msra.mxu0 0.0
      %2727 = vmatprep.subr.mxu0 0.0
      %2728 = vmatpush1.msra.mxu0 0.0
      %2729 = vmatprep.subr.mxu0 0.0
      %2730 = vmatpush1.msra.mxu0 0.0
      %2731 = vmatprep.subr.mxu0 0.0
      %2732 = vmatpush1.msra.mxu0 0.0
      %2733 = vmatprep.subr.mxu0 0.0
      %2734 = vmatpush1.msra.mxu0 0.0
      %2735 = vmatprep.subr.mxu0 0.0
      %2736 = vmatpush1.msra.mxu0 0.0
      %2737 = vmatprep.mubr.f32.mxu0 0.0
      %2738 = vmatmul.mubr.f32.gmra.mrb[0].mxu0 %v2671
      %v2739 = vpop.f32.mrb[0].mxu0
      %v2740 = vadd.f32 0.0, %v2739
      %v2741 = vpop.f32.mrb[0].mxu0
      %v2742 = vadd.f32 0.0, %v2741
      %2743 = vdwg.mxu0
      %2744 = vmatprep.subr.mxu0 %v2639
      %2745 = vmatpush1.msra.mxu0 %v2638
      %2746 = vmatprep.subr.mxu0 0.0
      %2747 = vmatpush1.msra.mxu0 0.0
      %2748 = vmatprep.subr.mxu0 0.0
      %2749 = vmatpush1.msra.mxu0 0.0
      %2750 = vmatprep.subr.mxu0 0.0
      %2751 = vmatpush1.msra.mxu0 0.0
      %2752 = vmatprep.subr.mxu0 0.0
      %2753 = vmatpush1.msra.mxu0 0.0
      %2754 = vmatprep.subr.mxu0 0.0
      %2755 = vmatpush1.msra.mxu0 0.0
      %2756 = vmatprep.subr.mxu0 0.0
      %2757 = vmatpush1.msra.mxu0 0.0
      %2758 = vmatprep.subr.mxu0 0.0
      %2759 = vmatpush1.msra.mxu0 0.0
      %2760 = vmatprep.subr.mxu0 0.0
      %2761 = vmatpush1.msra.mxu0 0.0
      %2762 = vmatprep.subr.mxu0 0.0
      %2763 = vmatpush1.msra.mxu0 0.0
      %2764 = vmatprep.subr.mxu0 0.0
      %2765 = vmatpush1.msra.mxu0 0.0
      %2766 = vmatprep.subr.mxu0 0.0
      %2767 = vmatpush1.msra.mxu0 0.0
      %2768 = vmatprep.subr.mxu0 0.0
      %2769 = vmatpush1.msra.mxu0 0.0
      %2770 = vmatprep.subr.mxu0 0.0
      %2771 = vmatpush1.msra.mxu0 0.0
      %2772 = vmatprep.subr.mxu0 0.0
      %2773 = vmatpush1.msra.mxu0 0.0
      %2774 = vmatprep.subr.mxu0 0.0
      %2775 = vmatpush1.msra.mxu0 0.0
      %2776 = vmatprep.subr.mxu0 0.0
      %2777 = vmatpush1.msra.mxu0 0.0
      %2778 = vmatprep.subr.mxu0 0.0
      %2779 = vmatpush1.msra.mxu0 0.0
      %2780 = vmatprep.subr.mxu0 0.0
      %2781 = vmatpush1.msra.mxu0 0.0
      %2782 = vmatprep.subr.mxu0 0.0
      %2783 = vmatpush1.msra.mxu0 0.0
      %2784 = vmatprep.subr.mxu0 0.0
      %2785 = vmatpush1.msra.mxu0 0.0
      %2786 = vmatprep.subr.mxu0 0.0
      %2787 = vmatpush1.msra.mxu0 0.0
      %2788 = vmatprep.subr.mxu0 0.0
      %2789 = vmatpush1.msra.mxu0 0.0
      %2790 = vmatprep.subr.mxu0 0.0
      %2791 = vmatpush1.msra.mxu0 0.0
      %2792 = vmatprep.subr.mxu0 0.0
      %2793 = vmatpush1.msra.mxu0 0.0
      %2794 = vmatprep.subr.mxu0 0.0
      %2795 = vmatpush1.msra.mxu0 0.0
      %2796 = vmatprep.subr.mxu0 0.0
      %2797 = vmatpush1.msra.mxu0 0.0
      %2798 = vmatprep.subr.mxu0 0.0
      %2799 = vmatpush1.msra.mxu0 0.0
      %2800 = vmatprep.subr.mxu0 0.0
      %2801 = vmatpush1.msra.mxu0 0.0
      %2802 = vmatprep.subr.mxu0 0.0
      %2803 = vmatpush1.msra.mxu0 0.0
      %2804 = vmatprep.subr.mxu0 0.0
      %2805 = vmatpush1.msra.mxu0 0.0
      %2806 = vmatprep.subr.mxu0 0.0
      %2807 = vmatpush1.msra.mxu0 0.0
      %2808 = vmatprep.mubr.f32.mxu0 0.0
      %2809 = vmatmul.mubr.f32.gmra.mrb[0].mxu0 %v2671
      %v2810 = vpop.f32.mrb[0].mxu0
      %v2811 = vadd.f32 0.0, %v2810
      %v2812 = vpop.f32.mrb[0].mxu0
      %v2813 = vadd.f32 0.0, %v2812
      %2814 = vdwg.mxu0
      %2815 = vmatprep.subr.mxu0 %v2641
      %2816 = vmatpush1.msra.mxu0 %v2640
      %2817 = vmatprep.subr.mxu0 0.0
      %2818 = vmatpush1.msra.mxu0 0.0
      %2819 = vmatprep.subr.mxu0 0.0
      %2820 = vmatpush1.msra.mxu0 0.0
      %2821 = vmatprep.subr.mxu0 0.0
      %2822 = vmatpush1.msra.mxu0 0.0
      %2823 = vmatprep.subr.mxu0 0.0
      %2824 = vmatpush1.msra.mxu0 0.0
      %2825 = vmatprep.subr.mxu0 0.0
      %2826 = vmatpush1.msra.mxu0 0.0
      %2827 = vmatprep.subr.mxu0 0.0
      %2828 = vmatpush1.msra.mxu0 0.0
      %2829 = vmatprep.subr.mxu0 0.0
      %2830 = vmatpush1.msra.mxu0 0.0
      %2831 = vmatprep.subr.mxu0 0.0
      %2832 = vmatpush1.msra.mxu0 0.0
      %2833 = vmatprep.subr.mxu0 0.0
      %2834 = vmatpush1.msra.mxu0 0.0
      %2835 = vmatprep.subr.mxu0 0.0
      %2836 = vmatpush1.msra.mxu0 0.0
      %2837 = vmatprep.subr.mxu0 0.0
      %2838 = vmatpush1.msra.mxu0 0.0
      %2839 = vmatprep.subr.mxu0 0.0
      %2840 = vmatpush1.msra.mxu0 0.0
      %2841 = vmatprep.subr.mxu0 0.0
      %2842 = vmatpush1.msra.mxu0 0.0
      %2843 = vmatprep.subr.mxu0 0.0
      %2844 = vmatpush1.msra.mxu0 0.0
      %2845 = vmatprep.subr.mxu0 0.0
      %2846 = vmatpush1.msra.mxu0 0.0
      %2847 = vmatprep.subr.mxu0 0.0
      %2848 = vmatpush1.msra.mxu0 0.0
      %2849 = vmatprep.subr.mxu0 0.0
      %2850 = vmatpush1.msra.mxu0 0.0
      %2851 = vmatprep.subr.mxu0 0.0
      %2852 = vmatpush1.msra.mxu0 0.0
      %2853 = vmatprep.subr.mxu0 0.0
      %2854 = vmatpush1.msra.mxu0 0.0
      %2855 = vmatprep.subr.mxu0 0.0
      %2856 = vmatpush1.msra.mxu0 0.0
      %2857 = vmatprep.subr.mxu0 0.0
      %2858 = vmatpush1.msra.mxu0 0.0
      %2859 = vmatprep.subr.mxu0 0.0
      %2860 = vmatpush1.msra.mxu0 0.0
      %2861 = vmatprep.subr.mxu0 0.0
      %2862 = vmatpush1.msra.mxu0 0.0
      %2863 = vmatprep.subr.mxu0 0.0
      %2864 = vmatpush1.msra.mxu0 0.0
      %2865 = vmatprep.subr.mxu0 0.0
      %2866 = vmatpush1.msra.mxu0 0.0
      %2867 = vmatprep.subr.mxu0 0.0
      %2868 = vmatpush1.msra.mxu0 0.0
      %2869 = vmatprep.subr.mxu0 0.0
      %2870 = vmatpush1.msra.mxu0 0.0
      %2871 = vmatprep.subr.mxu0 0.0
      %2872 = vmatpush1.msra.mxu0 0.0
      %2873 = vmatprep.subr.mxu0 0.0
      %2874 = vmatpush1.msra.mxu0 0.0
      %2875 = vmatprep.subr.mxu0 0.0
      %2876 = vmatpush1.msra.mxu0 0.0
      %2877 = vmatprep.subr.mxu0 0.0
      %2878 = vmatpush1.msra.mxu0 0.0
      %2879 = vmatprep.mubr.f32.mxu0 0.0
      %2880 = vmatmul.mubr.f32.gmra.mrb[0].mxu0 %v2671
      %v2881 = vpop.f32.mrb[0].mxu0
      %v2882 = vadd.f32 0.0, %v2881
      %v2883 = vpop.f32.mrb[0].mxu0
      %v2884 = vadd.f32 0.0, %v2883
      %2885 = vdwg.mxu0
      %2886 = vmatprep.subr.mxu0 %v2643
      %2887 = vmatpush1.msra.mxu0 %v2642
      %2888 = vmatprep.subr.mxu0 0.0
      %2889 = vmatpush1.msra.mxu0 0.0
      %2890 = vmatprep.subr.mxu0 0.0
      %2891 = vmatpush1.msra.mxu0 0.0
      %2892 = vmatprep.subr.mxu0 0.0
      %2893 = vmatpush1.msra.mxu0 0.0
      %2894 = vmatprep.subr.mxu0 0.0
      %2895 = vmatpush1.msra.mxu0 0.0
      %2896 = vmatprep.subr.mxu0 0.0
      %2897 = vmatpush1.msra.mxu0 0.0
      %2898 = vmatprep.subr.mxu0 0.0
      %2899 = vmatpush1.msra.mxu0 0.0
      %2900 = vmatprep.subr.mxu0 0.0
      %2901 = vmatpush1.msra.mxu0 0.0
      %2902 = vmatprep.subr.mxu0 0.0
      %2903 = vmatpush1.msra.mxu0 0.0
      %2904 = vmatprep.subr.mxu0 0.0
      %2905 = vmatpush1.msra.mxu0 0.0
      %2906 = vmatprep.subr.mxu0 0.0
      %2907 = vmatpush1.msra.mxu0 0.0
      %2908 = vmatprep.subr.mxu0 0.0
      %2909 = vmatpush1.msra.mxu0 0.0
      %2910 = vmatprep.subr.mxu0 0.0
      %2911 = vmatpush1.msra.mxu0 0.0
      %2912 = vmatprep.subr.mxu0 0.0
      %2913 = vmatpush1.msra.mxu0 0.0
      %2914 = vmatprep.subr.mxu0 0.0
      %2915 = vmatpush1.msra.mxu0 0.0
      %2916 = vmatprep.subr.mxu0 0.0
      %2917 = vmatpush1.msra.mxu0 0.0
      %2918 = vmatprep.subr.mxu0 0.0
      %2919 = vmatpush1.msra.mxu0 0.0
      %2920 = vmatprep.subr.mxu0 0.0
      %2921 = vmatpush1.msra.mxu0 0.0
      %2922 = vmatprep.subr.mxu0 0.0
      %2923 = vmatpush1.msra.mxu0 0.0
      %2924 = vmatprep.subr.mxu0 0.0
      %2925 = vmatpush1.msra.mxu0 0.0
      %2926 = vmatprep.subr.mxu0 0.0
      %2927 = vmatpush1.msra.mxu0 0.0
      %2928 = vmatprep.subr.mxu0 0.0
      %2929 = vmatpush1.msra.mxu0 0.0
      %2930 = vmatprep.subr.mxu0 0.0
      %2931 = vmatpush1.msra.mxu0 0.0
      %2932 = vmatprep.subr.mxu0 0.0
      %2933 = vmatpush1.msra.mxu0 0.0
      %2934 = vmatprep.subr.mxu0 0.0
      %2935 = vmatpush1.msra.mxu0 0.0
      %2936 = vmatprep.subr.mxu0 0.0
      %2937 = vmatpush1.msra.mxu0 0.0
      %2938 = vmatprep.subr.mxu0 0.0
      %2939 = vmatpush1.msra.mxu0 0.0
      %2940 = vmatprep.subr.mxu0 0.0
      %2941 = vmatpush1.msra.mxu0 0.0
      %2942 = vmatprep.subr.mxu0 0.0
      %2943 = vmatpush1.msra.mxu0 0.0
      %2944 = vmatprep.subr.mxu0 0.0
      %2945 = vmatpush1.msra.mxu0 0.0
      %2946 = vmatprep.subr.mxu0 0.0
      %2947 = vmatpush1.msra.mxu0 0.0
      %2948 = vmatprep.subr.mxu0 0.0
      %2949 = vmatpush1.msra.mxu0 0.0
      %2950 = vmatprep.mubr.f32.mxu0 0.0
      %2951 = vmatmul.mubr.f32.gmra.mrb[0].mxu0 %v2671
      %v2952 = vpop.f32.mrb[0].mxu0
      %v2953 = vadd.f32 0.0, %v2952
      %v2954 = vpop.f32.mrb[0].mxu0
      %v2955 = vadd.f32 0.0, %v2954
      %2956 = vdwg.mxu0
      %2957 = vmatprep.subr.mxu0 %v2645
      %2958 = vmatpush1.msra.mxu0 %v2644
      %2959 = vmatprep.subr.mxu0 0.0
      %2960 = vmatpush1.msra.mxu0 0.0
      %2961 = vmatprep.subr.mxu0 0.0
      %2962 = vmatpush1.msra.mxu0 0.0
      %2963 = vmatprep.subr.mxu0 0.0
      %2964 = vmatpush1.msra.mxu0 0.0
      %2965 = vmatprep.subr.mxu0 0.0
      %2966 = vmatpush1.msra.mxu0 0.0
      %2967 = vmatprep.subr.mxu0 0.0
      %2968 = vmatpush1.msra.mxu0 0.0
      %2969 = vmatprep.subr.mxu0 0.0
      %2970 = vmatpush1.msra.mxu0 0.0
      %2971 = vmatprep.subr.mxu0 0.0
      %2972 = vmatpush1.msra.mxu0 0.0
      %2973 = vmatprep.subr.mxu0 0.0
      %2974 = vmatpush1.msra.mxu0 0.0
      %2975 = vmatprep.subr.mxu0 0.0
      %2976 = vmatpush1.msra.mxu0 0.0
      %2977 = vmatprep.subr.mxu0 0.0
      %2978 = vmatpush1.msra.mxu0 0.0
      %2979 = vmatprep.subr.mxu0 0.0
      %2980 = vmatpush1.msra.mxu0 0.0
      %2981 = vmatprep.subr.mxu0 0.0
      %2982 = vmatpush1.msra.mxu0 0.0
      %2983 = vmatprep.subr.mxu0 0.0
      %2984 = vmatpush1.msra.mxu0 0.0
      %2985 = vmatprep.subr.mxu0 0.0
      %2986 = vmatpush1.msra.mxu0 0.0
      %2987 = vmatprep.subr.mxu0 0.0
      %2988 = vmatpush1.msra.mxu0 0.0
      %2989 = vmatprep.subr.mxu0 0.0
      %2990 = vmatpush1.msra.mxu0 0.0
      %2991 = vmatprep.subr.mxu0 0.0
      %2992 = vmatpush1.msra.mxu0 0.0
      %2993 = vmatprep.subr.mxu0 0.0
      %2994 = vmatpush1.msra.mxu0 0.0
      %2995 = vmatprep.subr.mxu0 0.0
      %2996 = vmatpush1.msra.mxu0 0.0
      %2997 = vmatprep.subr.mxu0 0.0
      %2998 = vmatpush1.msra.mxu0 0.0
      %2999 = vmatprep.subr.mxu0 0.0
      %3000 = vmatpush1.msra.mxu0 0.0
      %3001 = vmatprep.subr.mxu0 0.0
      %3002 = vmatpush1.msra.mxu0 0.0
      %3003 = vmatprep.subr.mxu0 0.0
      %3004 = vmatpush1.msra.mxu0 0.0
      %3005 = vmatprep.subr.mxu0 0.0
      %3006 = vmatpush1.msra.mxu0 0.0
      %3007 = vmatprep.subr.mxu0 0.0
      %3008 = vmatpush1.msra.mxu0 0.0
      %3009 = vmatprep.subr.mxu0 0.0
      %3010 = vmatpush1.msra.mxu0 0.0
      %3011 = vmatprep.subr.mxu0 0.0
      %3012 = vmatpush1.msra.mxu0 0.0
      %3013 = vmatprep.subr.mxu0 0.0
      %3014 = vmatpush1.msra.mxu0 0.0
      %3015 = vmatprep.subr.mxu0 0.0
      %3016 = vmatpush1.msra.mxu0 0.0
      %3017 = vmatprep.subr.mxu0 0.0
      %3018 = vmatpush1.msra.mxu0 0.0
      %3019 = vmatprep.subr.mxu0 0.0
      %3020 = vmatpush1.msra.mxu0 0.0
      %3021 = vmatprep.mubr.f32.mxu0 0.0
      %3022 = vmatmul.mubr.f32.gmra.mrb[0].mxu0 %v2671
      %v3023 = vpop.f32.mrb[0].mxu0
      %v3024 = vadd.f32 0.0, %v3023
      %v3025 = vpop.f32.mrb[0].mxu0
      %v3026 = vadd.f32 0.0, %v3025
      %3027 = vdwg.mxu0
      %3028 = vmatprep.subr.mxu0 %v2647
      %3029 = vmatpush1.msra.mxu0 %v2646
      %3030 = vmatprep.subr.mxu0 0.0
      %3031 = vmatpush1.msra.mxu0 0.0
      %3032 = vmatprep.subr.mxu0 0.0
      %3033 = vmatpush1.msra.mxu0 0.0
      %3034 = vmatprep.subr.mxu0 0.0
      %3035 = vmatpush1.msra.mxu0 0.0
      %3036 = vmatprep.subr.mxu0 0.0
      %3037 = vmatpush1.msra.mxu0 0.0
      %3038 = vmatprep.subr.mxu0 0.0
      %3039 = vmatpush1.msra.mxu0 0.0
      %3040 = vmatprep.subr.mxu0 0.0
      %3041 = vmatpush1.msra.mxu0 0.0
      %3042 = vmatprep.subr.mxu0 0.0
      %3043 = vmatpush1.msra.mxu0 0.0
      %3044 = vmatprep.subr.mxu0 0.0
      %3045 = vmatpush1.msra.mxu0 0.0
      %3046 = vmatprep.subr.mxu0 0.0
      %3047 = vmatpush1.msra.mxu0 0.0
      %3048 = vmatprep.subr.mxu0 0.0
      %3049 = vmatpush1.msra.mxu0 0.0
      %3050 = vmatprep.subr.mxu0 0.0
      %3051 = vmatpush1.msra.mxu0 0.0
      %3052 = vmatprep.subr.mxu0 0.0
      %3053 = vmatpush1.msra.mxu0 0.0
      %3054 = vmatprep.subr.mxu0 0.0
      %3055 = vmatpush1.msra.mxu0 0.0
      %3056 = vmatprep.subr.mxu0 0.0
      %3057 = vmatpush1.msra.mxu0 0.0
      %3058 = vmatprep.subr.mxu0 0.0
      %3059 = vmatpush1.msra.mxu0 0.0
      %3060 = vmatprep.subr.mxu0 0.0
      %3061 = vmatpush1.msra.mxu0 0.0
      %3062 = vmatprep.subr.mxu0 0.0
      %3063 = vmatpush1.msra.mxu0 0.0
      %3064 = vmatprep.subr.mxu0 0.0
      %3065 = vmatpush1.msra.mxu0 0.0
      %3066 = vmatprep.subr.mxu0 0.0
      %3067 = vmatpush1.msra.mxu0 0.0
      %3068 = vmatprep.subr.mxu0 0.0
      %3069 = vmatpush1.msra.mxu0 0.0
      %3070 = vmatprep.subr.mxu0 0.0
      %3071 = vmatpush1.msra.mxu0 0.0
      %3072 = vmatprep.subr.mxu0 0.0
      %3073 = vmatpush1.msra.mxu0 0.0
      %3074 = vmatprep.subr.mxu0 0.0
      %3075 = vmatpush1.msra.mxu0 0.0
      %3076 = vmatprep.subr.mxu0 0.0
      %3077 = vmatpush1.msra.mxu0 0.0
      %3078 = vmatprep.subr.mxu0 0.0
      %3079 = vmatpush1.msra.mxu0 0.0
      %3080 = vmatprep.subr.mxu0 0.0
      %3081 = vmatpush1.msra.mxu0 0.0
      %3082 = vmatprep.subr.mxu0 0.0
      %3083 = vmatpush1.msra.mxu0 0.0
      %3084 = vmatprep.subr.mxu0 0.0
      %3085 = vmatpush1.msra.mxu0 0.0
      %3086 = vmatprep.subr.mxu0 0.0
      %3087 = vmatpush1.msra.mxu0 0.0
      %3088 = vmatprep.subr.mxu0 0.0
      %3089 = vmatpush1.msra.mxu0 0.0
      %3090 = vmatprep.subr.mxu0 0.0
      %3091 = vmatpush1.msra.mxu0 0.0
      %3092 = vmatprep.mubr.f32.mxu0 0.0
      %3093 = vmatmul.mubr.f32.gmra.mrb[0].mxu0 %v2671
      %v3094 = vpop.f32.mrb[0].mxu0
      %v3095 = vadd.f32 0.0, %v3094
      %v3096 = vpop.f32.mrb[0].mxu0
      %v3097 = vadd.f32 0.0, %v3096
      %3098 = vdwg.mxu0
      %3099 = vmatprep.subr.mxu0 %v2649
      %3100 = vmatpush1.msra.mxu0 %v2648
      %3101 = vmatprep.subr.mxu0 0.0
      %3102 = vmatpush1.msra.mxu0 0.0
      %3103 = vmatprep.subr.mxu0 0.0
      %3104 = vmatpush1.msra.mxu0 0.0
      %3105 = vmatprep.subr.mxu0 0.0
      %3106 = vmatpush1.msra.mxu0 0.0
      %3107 = vmatprep.subr.mxu0 0.0
      %3108 = vmatpush1.msra.mxu0 0.0
      %3109 = vmatprep.subr.mxu0 0.0
      %3110 = vmatpush1.msra.mxu0 0.0
      %3111 = vmatprep.subr.mxu0 0.0
      %3112 = vmatpush1.msra.mxu0 0.0
      %3113 = vmatprep.subr.mxu0 0.0
      %3114 = vmatpush1.msra.mxu0 0.0
      %3115 = vmatprep.subr.mxu0 0.0
      %3116 = vmatpush1.msra.mxu0 0.0
      %3117 = vmatprep.subr.mxu0 0.0
      %3118 = vmatpush1.msra.mxu0 0.0
      %3119 = vmatprep.subr.mxu0 0.0
      %3120 = vmatpush1.msra.mxu0 0.0
      %3121 = vmatprep.subr.mxu0 0.0
      %3122 = vmatpush1.msra.mxu0 0.0
      %3123 = vmatprep.subr.mxu0 0.0
      %3124 = vmatpush1.msra.mxu0 0.0
      %3125 = vmatprep.subr.mxu0 0.0
      %3126 = vmatpush1.msra.mxu0 0.0
      %3127 = vmatprep.subr.mxu0 0.0
      %3128 = vmatpush1.msra.mxu0 0.0
      %3129 = vmatprep.subr.mxu0 0.0
      %3130 = vmatpush1.msra.mxu0 0.0
      %3131 = vmatprep.subr.mxu0 0.0
      %3132 = vmatpush1.msra.mxu0 0.0
      %3133 = vmatprep.subr.mxu0 0.0
      %3134 = vmatpush1.msra.mxu0 0.0
      %3135 = vmatprep.subr.mxu0 0.0
      %3136 = vmatpush1.msra.mxu0 0.0
      %3137 = vmatprep.subr.mxu0 0.0
      %3138 = vmatpush1.msra.mxu0 0.0
      %3139 = vmatprep.subr.mxu0 0.0
      %3140 = vmatpush1.msra.mxu0 0.0
      %3141 = vmatprep.subr.mxu0 0.0
      %3142 = vmatpush1.msra.mxu0 0.0
      %3143 = vmatprep.subr.mxu0 0.0
      %3144 = vmatpush1.msra.mxu0 0.0
      %3145 = vmatprep.subr.mxu0 0.0
      %3146 = vmatpush1.msra.mxu0 0.0
      %3147 = vmatprep.subr.mxu0 0.0
      %3148 = vmatpush1.msra.mxu0 0.0
      %3149 = vmatprep.subr.mxu0 0.0
      %3150 = vmatpush1.msra.mxu0 0.0
      %3151 = vmatprep.subr.mxu0 0.0
      %3152 = vmatpush1.msra.mxu0 0.0
      %3153 = vmatprep.subr.mxu0 0.0
      %3154 = vmatpush1.msra.mxu0 0.0
      %3155 = vmatprep.subr.mxu0 0.0
      %3156 = vmatpush1.msra.mxu0 0.0
      %3157 = vmatprep.subr.mxu0 0.0
      %3158 = vmatpush1.msra.mxu0 0.0
      %3159 = vmatprep.subr.mxu0 0.0
      %3160 = vmatpush1.msra.mxu0 0.0
      %3161 = vmatprep.subr.mxu0 0.0
      %3162 = vmatpush1.msra.mxu0 0.0
      %3163 = vmatprep.mubr.f32.mxu0 0.0
      %3164 = vmatmul.mubr.f32.gmra.mrb[0].mxu0 %v2671
      %v3165 = vpop.f32.mrb[0].mxu0
      %v3166 = vadd.f32 0.0, %v3165
      %v3167 = vpop.f32.mrb[0].mxu0
      %v3168 = vadd.f32 0.0, %v3167
      %3169 = vdwg.mxu0
      %3170 = vmatprep.subr.mxu0 %v2651
      %3171 = vmatpush1.msra.mxu0 %v2650
      %3172 = vmatprep.subr.mxu0 0.0
      %3173 = vmatpush1.msra.mxu0 0.0
      %3174 = vmatprep.subr.mxu0 0.0
      %3175 = vmatpush1.msra.mxu0 0.0
      %3176 = vmatprep.subr.mxu0 0.0
      %3177 = vmatpush1.msra.mxu0 0.0
      %3178 = vmatprep.subr.mxu0 0.0
      %3179 = vmatpush1.msra.mxu0 0.0
      %3180 = vmatprep.subr.mxu0 0.0
      %3181 = vmatpush1.msra.mxu0 0.0
      %3182 = vmatprep.subr.mxu0 0.0
      %3183 = vmatpush1.msra.mxu0 0.0
      %3184 = vmatprep.subr.mxu0 0.0
      %3185 = vmatpush1.msra.mxu0 0.0
      %3186 = vmatprep.subr.mxu0 0.0
      %3187 = vmatpush1.msra.mxu0 0.0
      %3188 = vmatprep.subr.mxu0 0.0
      %3189 = vmatpush1.msra.mxu0 0.0
      %3190 = vmatprep.subr.mxu0 0.0
      %3191 = vmatpush1.msra.mxu0 0.0
      %3192 = vmatprep.subr.mxu0 0.0
      %3193 = vmatpush1.msra.mxu0 0.0
      %3194 = vmatprep.subr.mxu0 0.0
      %3195 = vmatpush1.msra.mxu0 0.0
      %3196 = vmatprep.subr.mxu0 0.0
      %3197 = vmatpush1.msra.mxu0 0.0
      %3198 = vmatprep.subr.mxu0 0.0
      %3199 = vmatpush1.msra.mxu0 0.0
      %3200 = vmatprep.subr.mxu0 0.0
      %3201 = vmatpush1.msra.mxu0 0.0
      %3202 = vmatprep.subr.mxu0 0.0
      %3203 = vmatpush1.msra.mxu0 0.0
      %3204 = vmatprep.subr.mxu0 0.0
      %3205 = vmatpush1.msra.mxu0 0.0
      %3206 = vmatprep.subr.mxu0 0.0
      %3207 = vmatpush1.msra.mxu0 0.0
      %3208 = vmatprep.subr.mxu0 0.0
      %3209 = vmatpush1.msra.mxu0 0.0
      %3210 = vmatprep.subr.mxu0 0.0
      %3211 = vmatpush1.msra.mxu0 0.0
      %3212 = vmatprep.subr.mxu0 0.0
      %3213 = vmatpush1.msra.mxu0 0.0
      %3214 = vmatprep.subr.mxu0 0.0
      %3215 = vmatpush1.msra.mxu0 0.0
      %3216 = vmatprep.subr.mxu0 0.0
      %3217 = vmatpush1.msra.mxu0 0.0
      %3218 = vmatprep.subr.mxu0 0.0
      %3219 = vmatpush1.msra.mxu0 0.0
      %3220 = vmatprep.subr.mxu0 0.0
      %3221 = vmatpush1.msra.mxu0 0.0
      %3222 = vmatprep.subr.mxu0 0.0
      %3223 = vmatpush1.msra.mxu0 0.0
      %3224 = vmatprep.subr.mxu0 0.0
      %3225 = vmatpush1.msra.mxu0 0.0
      %3226 = vmatprep.subr.mxu0 0.0
      %3227 = vmatpush1.msra.mxu0 0.0
      %3228 = vmatprep.subr.mxu0 0.0
      %3229 = vmatpush1.msra.mxu0 0.0
      %3230 = vmatprep.subr.mxu0 0.0
      %3231 = vmatpush1.msra.mxu0 0.0
      %3232 = vmatprep.subr.mxu0 0.0
      %3233 = vmatpush1.msra.mxu0 0.0
      %3234 = vmatprep.mubr.f32.mxu0 0.0
      %3235 = vmatmul.mubr.f32.gmra.mrb[0].mxu0 %v2671
      %v3236 = vpop.f32.mrb[0].mxu0
      %v3237 = vadd.f32 0.0, %v3236
      %v3238 = vpop.f32.mrb[0].mxu0
      %v3239 = vadd.f32 0.0, %v3238
      %3240 = vdwg.mxu0
      %3241 = vmatprep.subr.mxu0 0.0
      %3242 = vmatpush1.msra.mxu0 %v2652
      %3243 = vmatprep.subr.mxu0 0.0
      %3244 = vmatpush1.msra.mxu0 0.0
      %3245 = vmatprep.subr.mxu0 0.0
      %3246 = vmatpush1.msra.mxu0 0.0
      %3247 = vmatprep.subr.mxu0 0.0
      %3248 = vmatpush1.msra.mxu0 0.0
      %3249 = vmatprep.subr.mxu0 0.0
      %3250 = vmatpush1.msra.mxu0 0.0
      %3251 = vmatprep.subr.mxu0 0.0
      %3252 = vmatpush1.msra.mxu0 0.0
      %3253 = vmatprep.subr.mxu0 0.0
      %3254 = vmatpush1.msra.mxu0 0.0
      %3255 = vmatprep.subr.mxu0 0.0
      %3256 = vmatpush1.msra.mxu0 0.0
      %3257 = vmatprep.subr.mxu0 0.0
      %3258 = vmatpush1.msra.mxu0 0.0
      %3259 = vmatprep.subr.mxu0 0.0
      %3260 = vmatpush1.msra.mxu0 0.0
      %3261 = vmatprep.subr.mxu0 0.0
      %3262 = vmatpush1.msra.mxu0 0.0
      %3263 = vmatprep.subr.mxu0 0.0
      %3264 = vmatpush1.msra.mxu0 0.0
      %3265 = vmatprep.subr.mxu0 0.0
      %3266 = vmatpush1.msra.mxu0 0.0
      %3267 = vmatprep.subr.mxu0 0.0
      %3268 = vmatpush1.msra.mxu0 0.0
      %3269 = vmatprep.subr.mxu0 0.0
      %3270 = vmatpush1.msra.mxu0 0.0
      %3271 = vmatprep.subr.mxu0 0.0
      %3272 = vmatpush1.msra.mxu0 0.0
      %3273 = vmatprep.subr.mxu0 0.0
      %3274 = vmatpush1.msra.mxu0 0.0
      %3275 = vmatprep.subr.mxu0 0.0
      %3276 = vmatpush1.msra.mxu0 0.0
      %3277 = vmatprep.subr.mxu0 0.0
      %3278 = vmatpush1.msra.mxu0 0.0
      %3279 = vmatprep.subr.mxu0 0.0
      %3280 = vmatpush1.msra.mxu0 0.0
      %3281 = vmatprep.subr.mxu0 0.0
      %3282 = vmatpush1.msra.mxu0 0.0
      %3283 = vmatprep.subr.mxu0 0.0
      %3284 = vmatpush1.msra.mxu0 0.0
      %3285 = vmatprep.subr.mxu0 0.0
      %3286 = vmatpush1.msra.mxu0 0.0
      %3287 = vmatprep.subr.mxu0 0.0
      %3288 = vmatpush1.msra.mxu0 0.0
      %3289 = vmatprep.subr.mxu0 0.0
      %3290 = vmatpush1.msra.mxu0 0.0
      %3291 = vmatprep.subr.mxu0 0.0
      %3292 = vmatpush1.msra.mxu0 0.0
      %3293 = vmatprep.subr.mxu0 0.0
      %3294 = vmatpush1.msra.mxu0 0.0
      %3295 = vmatprep.subr.mxu0 0.0
      %3296 = vmatpush1.msra.mxu0 0.0
      %3297 = vmatprep.subr.mxu0 0.0
      %3298 = vmatpush1.msra.mxu0 0.0
      %3299 = vmatprep.subr.mxu0 0.0
      %3300 = vmatpush1.msra.mxu0 0.0
      %3301 = vmatprep.subr.mxu0 0.0
      %3302 = vmatpush1.msra.mxu0 0.0
      %3303 = vmatprep.subr.mxu0 0.0
      %3304 = vmatpush1.msra.mxu0 0.0
      %3305 = vmatprep.mubr.f32.mxu0 0.0
      %3306 = vmatmul.mubr.f32.gmra.mrb[0].mxu0 %v2671
      %v3307 = vpop.f32.mrb[0].mxu0
      %v3308 = vadd.f32 0.0, %v3307
      %v3309 = vpop.f32.mrb[0].mxu0
      %3310 = vdwg.mxu0
      %v3311 = vadd.f32 %v2562, %v2740
      %v3312 = vadd.f32 %v2563, %v2742
      %v3313 = vadd.f32 %v2564, %v2811
      %v3314 = vadd.f32 %v2565, %v2813
      %v3315 = vadd.f32 %v2566, %v2882
      %v3316 = vadd.f32 %v2567, %v2884
      %v3317 = vadd.f32 %v2568, %v2953
      %v3318 = vadd.f32 %v2569, %v2955
      %v3319 = vadd.f32 %v2570, %v3024
      %v3320 = vadd.f32 %v2571, %v3026
      %v3321 = vadd.f32 %v2572, %v3095
      %v3322 = vadd.f32 %v2573, %v3097
      %v3323 = vadd.f32 %v2574, %v3166
      %v3324 = vadd.f32 %v2575, %v3168
      %v3325 = vadd.f32 %v2576, %v3237
      %v3326 = vadd.f32 %v2577, %v3239
      %v3327 = vadd.f32 %v2578, %v3308
      %3328 = vst [vmem:[%s206] sm:$0xff] %v3311
      %3329 = vst [vmem:[%s206 + $0x8] sm:$0xff] %v3312
      %3330 = vst [vmem:[%s206 + $0x10] sm:$0xff] %v3313
      %3331 = vst [vmem:[%s206 + $0x18] sm:$0xff] %v3314
      %3332 = vst [vmem:[%s206 + $0x20] sm:$0xff] %v3315
      %3333 = vst [vmem:[%s206 + $0x28] sm:$0xff] %v3316
      %3334 = vst [vmem:[%s206 + $0x30] sm:$0xff] %v3317
      %3335 = vst [vmem:[%s206 + $0x38] sm:$0xff] %v3318
      %3336 = vst [vmem:[%s206 + $0x40] sm:$0xff] %v3319
      %3337 = vst [vmem:[%s206 + $0x48] sm:$0xff] %v3320
      %3338 = vst [vmem:[%s206 + $0x50] sm:$0xff] %v3321
      %3339 = vst [vmem:[%s206 + $0x58] sm:$0xff] %v3322
      %3340 = vst [vmem:[%s206 + $0x60] sm:$0xff] %v3323
      %3341 = vst [vmem:[%s206 + $0x68] sm:$0xff] %v3324
      %3342 = vst [vmem:[%s206 + $0x70] sm:$0xff] %v3325
      %3343 = vst [vmem:[%s206 + $0x78] sm:$0xff] %v3326
      %3344 = vst [vmem:[%s206 + $0x80] sm:$0xff] %v3327
      %v3345 = vld [vmem:[%s197] sm:$0xff]
      %v3346 = vld [vmem:[%s197 + $0x8] sm:$0xff]
      %v3347 = vld [vmem:[%s197 + $0x10] sm:$0xff]
      %v3348 = vld [vmem:[%s197 + $0x18] sm:$0xff]
      %v3349 = vld [vmem:[%s197 + $0x20] sm:$0xff]
      %v3350 = vld [vmem:[%s197 + $0x28] sm:$0xff]
      %v3351 = vld [vmem:[%s197 + $0x30] sm:$0xff]
      %v3352 = vld [vmem:[%s197 + $0x38] sm:$0xff]
      %v3353 = vld [vmem:[%s197 + $0x40] sm:$0xff]
      %v3354 = vld [vmem:[%s197 + $0x48] sm:$0xff]
      %v3355 = vld [vmem:[%s197 + $0x50] sm:$0xff]
      %v3356 = vld [vmem:[%s197 + $0x58] sm:$0xff]
      %v3357 = vld [vmem:[%s197 + $0x60] sm:$0xff]
      %v3358 = vld [vmem:[%s197 + $0x68] sm:$0xff]
      %v3359 = vld [vmem:[%s197 + $0x70] sm:$0xff]
      %v3360 = vld [vmem:[%s197 + $0x78] sm:$0xff]
      %v3361 = vld [vmem:[%s197 + $0x80] sm:$0xff]
      %v3362 = vld [vmem:[%s197 + $0x88] sm:$0xff]
      %v3363 = vld [vmem:[%s206] sm:$0xff]
      %v3364 = vld [vmem:[%s206 + $0x8] sm:$0xff]
      %v3365 = vld [vmem:[%s206 + $0x10] sm:$0xff]
      %v3366 = vld [vmem:[%s206 + $0x18] sm:$0xff]
      %v3367 = vld [vmem:[%s206 + $0x20] sm:$0xff]
      %v3368 = vld [vmem:[%s206 + $0x28] sm:$0xff]
      %v3369 = vld [vmem:[%s206 + $0x30] sm:$0xff]
      %v3370 = vld [vmem:[%s206 + $0x38] sm:$0xff]
      %v3371 = vld [vmem:[%s206 + $0x40] sm:$0xff]
      %v3372 = vld [vmem:[%s206 + $0x48] sm:$0xff]
      %v3373 = vld [vmem:[%s206 + $0x50] sm:$0xff]
      %v3374 = vld [vmem:[%s206 + $0x58] sm:$0xff]
      %v3375 = vld [vmem:[%s206 + $0x60] sm:$0xff]
      %v3376 = vld [vmem:[%s206 + $0x68] sm:$0xff]
      %v3377 = vld [vmem:[%s206 + $0x70] sm:$0xff]
      %v3378 = vld [vmem:[%s206 + $0x78] sm:$0xff]
      %v3379 = vld [vmem:[%s206 + $0x80] sm:$0xff]
      %s3380 = scalar_lea.vmem %s1, 32
      %v3381 = vld [vmem:[%s3380] sm:$0xff]
      %3400 = vrot.lane.b32.xlu0 %v3345, 61
      %v3401 = vpop.permute.xlu0 %3400
      %3402 = vrot.lane.b32.xlu0 %v3346, 61
      %v3403 = vpop.permute.xlu0 %3402
      %3404 = vrot.lane.b32.xlu0 %v3347, 61
      %v3405 = vpop.permute.xlu0 %3404
      %3406 = vrot.lane.b32.xlu0 %v3348, 61
      %v3407 = vpop.permute.xlu0 %3406
      %3408 = vrot.lane.b32.xlu0 %v3349, 61
      %v3409 = vpop.permute.xlu0 %3408
      %3410 = vrot.lane.b32.xlu0 %v3350, 61
      %v3411 = vpop.permute.xlu0 %3410
      %3412 = vrot.lane.b32.xlu0 %v3351, 61
      %v3413 = vpop.permute.xlu0 %3412
      %3414 = vrot.lane.b32.xlu0 %v3352, 61
      %v3415 = vpop.permute.xlu0 %3414
      %3416 = vrot.lane.b32.xlu0 %v3353, 61
      %v3417 = vpop.permute.xlu0 %3416
      %3418 = vrot.lane.b32.xlu0 %v3354, 61
      %v3419 = vpop.permute.xlu0 %3418
      %3420 = vrot.lane.b32.xlu0 %v3355, 61
      %v3421 = vpop.permute.xlu0 %3420
      %3422 = vrot.lane.b32.xlu0 %v3356, 61
      %v3423 = vpop.permute.xlu0 %3422
      %3424 = vrot.lane.b32.xlu0 %v3357, 61
      %v3425 = vpop.permute.xlu0 %3424
      %3426 = vrot.lane.b32.xlu0 %v3358, 61
      %v3427 = vpop.permute.xlu0 %3426
      %3428 = vrot.lane.b32.xlu0 %v3359, 61
      %v3429 = vpop.permute.xlu0 %3428
      %3430 = vrot.lane.b32.xlu0 %v3360, 61
      %v3431 = vpop.permute.xlu0 %3430
      %3432 = vrot.lane.b32.xlu0 %v3361, 61
      %v3433 = vpop.permute.xlu0 %3432
      %3434 = vrot.lane.b32.xlu0 %v3362, 61
      %v3435 = vpop.permute.xlu0 %3434
      %vm3436 = vcmask 498688
      %v3437 = vsel %vm3436, %v3401, %v3403
      %v3438 = vsel %vm3436, %v3403, %v3405
      %v3439 = vsel %vm3436, %v3405, %v3407
      %v3440 = vsel %vm3436, %v3407, %v3409
      %v3441 = vsel %vm3436, %v3409, %v3411
      %v3442 = vsel %vm3436, %v3411, %v3413
      %v3443 = vsel %vm3436, %v3413, %v3415
      %v3444 = vsel %vm3436, %v3415, %v3417
      %v3445 = vsel %vm3436, %v3417, %v3419
      %v3446 = vsel %vm3436, %v3419, %v3421
      %v3447 = vsel %vm3436, %v3421, %v3423
      %v3448 = vsel %vm3436, %v3423, %v3425
      %v3449 = vsel %vm3436, %v3425, %v3427
      %v3450 = vsel %vm3436, %v3427, %v3429
      %v3451 = vsel %vm3436, %v3429, %v3431
      %v3452 = vsel %vm3436, %v3431, %v3433
      %v3453 = vsel %vm3436, %v3433, %v3435
      %v3472 = vsel %vm266, %v3381, 0
      %3474 = vmatprep.subr.mxu0 %v3438
      %3475 = vmatpush1.msra.mxu0 %v3437
      %3476 = vmatprep.subr.mxu0 0.0
      %3477 = vmatpush1.msra.mxu0 0.0
      %3478 = vmatprep.subr.mxu0 0.0
      %3479 = vmatpush1.msra.mxu0 0.0
      %3480 = vmatprep.subr.mxu0 0.0
      %3481 = vmatpush1.msra.mxu0 0.0
      %3482 = vmatprep.subr.mxu0 0.0
      %3483 = vmatpush1.msra.mxu0 0.0
      %3484 = vmatprep.subr.mxu0 0.0
      %3485 = vmatpush1.msra.mxu0 0.0
      %3486 = vmatprep.subr.mxu0 0.0
      %3487 = vmatpush1.msra.mxu0 0.0
      %3488 = vmatprep.subr.mxu0 0.0
      %3489 = vmatpush1.msra.mxu0 0.0
      %3490 = vmatprep.subr.mxu0 0.0
      %3491 = vmatpush1.msra.mxu0 0.0
      %3492 = vmatprep.subr.mxu0 0.0
      %3493 = vmatpush1.msra.mxu0 0.0
      %3494 = vmatprep.subr.mxu0 0.0
      %3495 = vmatpush1.msra.mxu0 0.0
      %3496 = vmatprep.subr.mxu0 0.0
      %3497 = vmatpush1.msra.mxu0 0.0
      %3498 = vmatprep.subr.mxu0 0.0
      %3499 = vmatpush1.msra.mxu0 0.0
      %3500 = vmatprep.subr.mxu0 0.0
      %3501 = vmatpush1.msra.mxu0 0.0
      %3502 = vmatprep.subr.mxu0 0.0
      %3503 = vmatpush1.msra.mxu0 0.0
      %3504 = vmatprep.subr.mxu0 0.0
      %3505 = vmatpush1.msra.mxu0 0.0
      %3506 = vmatprep.subr.mxu0 0.0
      %3507 = vmatpush1.msra.mxu0 0.0
      %3508 = vmatprep.subr.mxu0 0.0
      %3509 = vmatpush1.msra.mxu0 0.0
      %3510 = vmatprep.subr.mxu0 0.0
      %3511 = vmatpush1.msra.mxu0 0.0
      %3512 = vmatprep.subr.mxu0 0.0
      %3513 = vmatpush1.msra.mxu0 0.0
      %3514 = vmatprep.subr.mxu0 0.0
      %3515 = vmatpush1.msra.mxu0 0.0
      %3516 = vmatprep.subr.mxu0 0.0
      %3517 = vmatpush1.msra.mxu0 0.0
      %3518 = vmatprep.subr.mxu0 0.0
      %3519 = vmatpush1.msra.mxu0 0.0
      %3520 = vmatprep.subr.mxu0 0.0
      %3521 = vmatpush1.msra.mxu0 0.0
      %3522 = vmatprep.subr.mxu0 0.0
      %3523 = vmatpush1.msra.mxu0 0.0
      %3524 = vmatprep.subr.mxu0 0.0
      %3525 = vmatpush1.msra.mxu0 0.0
      %3526 = vmatprep.subr.mxu0 0.0
      %3527 = vmatpush1.msra.mxu0 0.0
      %3528 = vmatprep.subr.mxu0 0.0
      %3529 = vmatpush1.msra.mxu0 0.0
      %3530 = vmatprep.subr.mxu0 0.0
      %3531 = vmatpush1.msra.mxu0 0.0
      %3532 = vmatprep.subr.mxu0 0.0
      %3533 = vmatpush1.msra.mxu0 0.0
      %3534 = vmatprep.subr.mxu0 0.0
      %3535 = vmatpush1.msra.mxu0 0.0
      %3536 = vmatprep.subr.mxu0 0.0
      %3537 = vmatpush1.msra.mxu0 0.0
      %3538 = vmatprep.mubr.f32.mxu0 0.0
      %3539 = vmatmul.mubr.f32.gmra.mrb[0].mxu0 %v3472
      %v3540 = vpop.f32.mrb[0].mxu0
      %v3541 = vadd.f32 0.0, %v3540
      %v3542 = vpop.f32.mrb[0].mxu0
      %v3543 = vadd.f32 0.0, %v3542
      %3544 = vdwg.mxu0
      %3545 = vmatprep.subr.mxu0 %v3440
      %3546 = vmatpush1.msra.mxu0 %v3439
      %3547 = vmatprep.subr.mxu0 0.0
      %3548 = vmatpush1.msra.mxu0 0.0
      %3549 = vmatprep.subr.mxu0 0.0
      %3550 = vmatpush1.msra.mxu0 0.0
      %3551 = vmatprep.subr.mxu0 0.0
      %3552 = vmatpush1.msra.mxu0 0.0
      %3553 = vmatprep.subr.mxu0 0.0
      %3554 = vmatpush1.msra.mxu0 0.0
      %3555 = vmatprep.subr.mxu0 0.0
      %3556 = vmatpush1.msra.mxu0 0.0
      %3557 = vmatprep.subr.mxu0 0.0
      %3558 = vmatpush1.msra.mxu0 0.0
      %3559 = vmatprep.subr.mxu0 0.0
      %3560 = vmatpush1.msra.mxu0 0.0
      %3561 = vmatprep.subr.mxu0 0.0
      %3562 = vmatpush1.msra.mxu0 0.0
      %3563 = vmatprep.subr.mxu0 0.0
      %3564 = vmatpush1.msra.mxu0 0.0
      %3565 = vmatprep.subr.mxu0 0.0
      %3566 = vmatpush1.msra.mxu0 0.0
      %3567 = vmatprep.subr.mxu0 0.0
      %3568 = vmatpush1.msra.mxu0 0.0
      %3569 = vmatprep.subr.mxu0 0.0
      %3570 = vmatpush1.msra.mxu0 0.0
      %3571 = vmatprep.subr.mxu0 0.0
      %3572 = vmatpush1.msra.mxu0 0.0
      %3573 = vmatprep.subr.mxu0 0.0
      %3574 = vmatpush1.msra.mxu0 0.0
      %3575 = vmatprep.subr.mxu0 0.0
      %3576 = vmatpush1.msra.mxu0 0.0
      %3577 = vmatprep.subr.mxu0 0.0
      %3578 = vmatpush1.msra.mxu0 0.0
      %3579 = vmatprep.subr.mxu0 0.0
      %3580 = vmatpush1.msra.mxu0 0.0
      %3581 = vmatprep.subr.mxu0 0.0
      %3582 = vmatpush1.msra.mxu0 0.0
      %3583 = vmatprep.subr.mxu0 0.0
      %3584 = vmatpush1.msra.mxu0 0.0
      %3585 = vmatprep.subr.mxu0 0.0
      %3586 = vmatpush1.msra.mxu0 0.0
      %3587 = vmatprep.subr.mxu0 0.0
      %3588 = vmatpush1.msra.mxu0 0.0
      %3589 = vmatprep.subr.mxu0 0.0
      %3590 = vmatpush1.msra.mxu0 0.0
      %3591 = vmatprep.subr.mxu0 0.0
      %3592 = vmatpush1.msra.mxu0 0.0
      %3593 = vmatprep.subr.mxu0 0.0
      %3594 = vmatpush1.msra.mxu0 0.0
      %3595 = vmatprep.subr.mxu0 0.0
      %3596 = vmatpush1.msra.mxu0 0.0
      %3597 = vmatprep.subr.mxu0 0.0
      %3598 = vmatpush1.msra.mxu0 0.0
      %3599 = vmatprep.subr.mxu0 0.0
      %3600 = vmatpush1.msra.mxu0 0.0
      %3601 = vmatprep.subr.mxu0 0.0
      %3602 = vmatpush1.msra.mxu0 0.0
      %3603 = vmatprep.subr.mxu0 0.0
      %3604 = vmatpush1.msra.mxu0 0.0
      %3605 = vmatprep.subr.mxu0 0.0
      %3606 = vmatpush1.msra.mxu0 0.0
      %3607 = vmatprep.subr.mxu0 0.0
      %3608 = vmatpush1.msra.mxu0 0.0
      %3609 = vmatprep.mubr.f32.mxu0 0.0
      %3610 = vmatmul.mubr.f32.gmra.mrb[0].mxu0 %v3472
      %v3611 = vpop.f32.mrb[0].mxu0
      %v3612 = vadd.f32 0.0, %v3611
      %v3613 = vpop.f32.mrb[0].mxu0
      %v3614 = vadd.f32 0.0, %v3613
      %3615 = vdwg.mxu0
      %3616 = vmatprep.subr.mxu0 %v3442
      %3617 = vmatpush1.msra.mxu0 %v3441
      %3618 = vmatprep.subr.mxu0 0.0
      %3619 = vmatpush1.msra.mxu0 0.0
      %3620 = vmatprep.subr.mxu0 0.0
      %3621 = vmatpush1.msra.mxu0 0.0
      %3622 = vmatprep.subr.mxu0 0.0
      %3623 = vmatpush1.msra.mxu0 0.0
      %3624 = vmatprep.subr.mxu0 0.0
      %3625 = vmatpush1.msra.mxu0 0.0
      %3626 = vmatprep.subr.mxu0 0.0
      %3627 = vmatpush1.msra.mxu0 0.0
      %3628 = vmatprep.subr.mxu0 0.0
      %3629 = vmatpush1.msra.mxu0 0.0
      %3630 = vmatprep.subr.mxu0 0.0
      %3631 = vmatpush1.msra.mxu0 0.0
      %3632 = vmatprep.subr.mxu0 0.0
      %3633 = vmatpush1.msra.mxu0 0.0
      %3634 = vmatprep.subr.mxu0 0.0
      %3635 = vmatpush1.msra.mxu0 0.0
      %3636 = vmatprep.subr.mxu0 0.0
      %3637 = vmatpush1.msra.mxu0 0.0
      %3638 = vmatprep.subr.mxu0 0.0
      %3639 = vmatpush1.msra.mxu0 0.0
      %3640 = vmatprep.subr.mxu0 0.0
      %3641 = vmatpush1.msra.mxu0 0.0
      %3642 = vmatprep.subr.mxu0 0.0
      %3643 = vmatpush1.msra.mxu0 0.0
      %3644 = vmatprep.subr.mxu0 0.0
      %3645 = vmatpush1.msra.mxu0 0.0
      %3646 = vmatprep.subr.mxu0 0.0
      %3647 = vmatpush1.msra.mxu0 0.0
      %3648 = vmatprep.subr.mxu0 0.0
      %3649 = vmatpush1.msra.mxu0 0.0
      %3650 = vmatprep.subr.mxu0 0.0
      %3651 = vmatpush1.msra.mxu0 0.0
      %3652 = vmatprep.subr.mxu0 0.0
      %3653 = vmatpush1.msra.mxu0 0.0
      %3654 = vmatprep.subr.mxu0 0.0
      %3655 = vmatpush1.msra.mxu0 0.0
      %3656 = vmatprep.subr.mxu0 0.0
      %3657 = vmatpush1.msra.mxu0 0.0
      %3658 = vmatprep.subr.mxu0 0.0
      %3659 = vmatpush1.msra.mxu0 0.0
      %3660 = vmatprep.subr.mxu0 0.0
      %3661 = vmatpush1.msra.mxu0 0.0
      %3662 = vmatprep.subr.mxu0 0.0
      %3663 = vmatpush1.msra.mxu0 0.0
      %3664 = vmatprep.subr.mxu0 0.0
      %3665 = vmatpush1.msra.mxu0 0.0
      %3666 = vmatprep.subr.mxu0 0.0
      %3667 = vmatpush1.msra.mxu0 0.0
      %3668 = vmatprep.subr.mxu0 0.0
      %3669 = vmatpush1.msra.mxu0 0.0
      %3670 = vmatprep.subr.mxu0 0.0
      %3671 = vmatpush1.msra.mxu0 0.0
      %3672 = vmatprep.subr.mxu0 0.0
      %3673 = vmatpush1.msra.mxu0 0.0
      %3674 = vmatprep.subr.mxu0 0.0
      %3675 = vmatpush1.msra.mxu0 0.0
      %3676 = vmatprep.subr.mxu0 0.0
      %3677 = vmatpush1.msra.mxu0 0.0
      %3678 = vmatprep.subr.mxu0 0.0
      %3679 = vmatpush1.msra.mxu0 0.0
      %3680 = vmatprep.mubr.f32.mxu0 0.0
      %3681 = vmatmul.mubr.f32.gmra.mrb[0].mxu0 %v3472
      %v3682 = vpop.f32.mrb[0].mxu0
      %v3683 = vadd.f32 0.0, %v3682
      %v3684 = vpop.f32.mrb[0].mxu0
      %v3685 = vadd.f32 0.0, %v3684
      %3686 = vdwg.mxu0
      %3687 = vmatprep.subr.mxu0 %v3444
      %3688 = vmatpush1.msra.mxu0 %v3443
      %3689 = vmatprep.subr.mxu0 0.0
      %3690 = vmatpush1.msra.mxu0 0.0
      %3691 = vmatprep.subr.mxu0 0.0
      %3692 = vmatpush1.msra.mxu0 0.0
      %3693 = vmatprep.subr.mxu0 0.0
      %3694 = vmatpush1.msra.mxu0 0.0
      %3695 = vmatprep.subr.mxu0 0.0
      %3696 = vmatpush1.msra.mxu0 0.0
      %3697 = vmatprep.subr.mxu0 0.0
      %3698 = vmatpush1.msra.mxu0 0.0
      %3699 = vmatprep.subr.mxu0 0.0
      %3700 = vmatpush1.msra.mxu0 0.0
      %3701 = vmatprep.subr.mxu0 0.0
      %3702 = vmatpush1.msra.mxu0 0.0
      %3703 = vmatprep.subr.mxu0 0.0
      %3704 = vmatpush1.msra.mxu0 0.0
      %3705 = vmatprep.subr.mxu0 0.0
      %3706 = vmatpush1.msra.mxu0 0.0
      %3707 = vmatprep.subr.mxu0 0.0
      %3708 = vmatpush1.msra.mxu0 0.0
      %3709 = vmatprep.subr.mxu0 0.0
      %3710 = vmatpush1.msra.mxu0 0.0
      %3711 = vmatprep.subr.mxu0 0.0
      %3712 = vmatpush1.msra.mxu0 0.0
      %3713 = vmatprep.subr.mxu0 0.0
      %3714 = vmatpush1.msra.mxu0 0.0
      %3715 = vmatprep.subr.mxu0 0.0
      %3716 = vmatpush1.msra.mxu0 0.0
      %3717 = vmatprep.subr.mxu0 0.0
      %3718 = vmatpush1.msra.mxu0 0.0
      %3719 = vmatprep.subr.mxu0 0.0
      %3720 = vmatpush1.msra.mxu0 0.0
      %3721 = vmatprep.subr.mxu0 0.0
      %3722 = vmatpush1.msra.mxu0 0.0
      %3723 = vmatprep.subr.mxu0 0.0
      %3724 = vmatpush1.msra.mxu0 0.0
      %3725 = vmatprep.subr.mxu0 0.0
      %3726 = vmatpush1.msra.mxu0 0.0
      %3727 = vmatprep.subr.mxu0 0.0
      %3728 = vmatpush1.msra.mxu0 0.0
      %3729 = vmatprep.subr.mxu0 0.0
      %3730 = vmatpush1.msra.mxu0 0.0
      %3731 = vmatprep.subr.mxu0 0.0
      %3732 = vmatpush1.msra.mxu0 0.0
      %3733 = vmatprep.subr.mxu0 0.0
      %3734 = vmatpush1.msra.mxu0 0.0
      %3735 = vmatprep.subr.mxu0 0.0
      %3736 = vmatpush1.msra.mxu0 0.0
      %3737 = vmatprep.subr.mxu0 0.0
      %3738 = vmatpush1.msra.mxu0 0.0
      %3739 = vmatprep.subr.mxu0 0.0
      %3740 = vmatpush1.msra.mxu0 0.0
      %3741 = vmatprep.subr.mxu0 0.0
      %3742 = vmatpush1.msra.mxu0 0.0
      %3743 = vmatprep.subr.mxu0 0.0
      %3744 = vmatpush1.msra.mxu0 0.0
      %3745 = vmatprep.subr.mxu0 0.0
      %3746 = vmatpush1.msra.mxu0 0.0
      %3747 = vmatprep.subr.mxu0 0.0
      %3748 = vmatpush1.msra.mxu0 0.0
      %3749 = vmatprep.subr.mxu0 0.0
      %3750 = vmatpush1.msra.mxu0 0.0
      %3751 = vmatprep.mubr.f32.mxu0 0.0
      %3752 = vmatmul.mubr.f32.gmra.mrb[0].mxu0 %v3472
      %v3753 = vpop.f32.mrb[0].mxu0
      %v3754 = vadd.f32 0.0, %v3753
      %v3755 = vpop.f32.mrb[0].mxu0
      %v3756 = vadd.f32 0.0, %v3755
      %3757 = vdwg.mxu0
      %3758 = vmatprep.subr.mxu0 %v3446
      %3759 = vmatpush1.msra.mxu0 %v3445
      %3760 = vmatprep.subr.mxu0 0.0
      %3761 = vmatpush1.msra.mxu0 0.0
      %3762 = vmatprep.subr.mxu0 0.0
      %3763 = vmatpush1.msra.mxu0 0.0
      %3764 = vmatprep.subr.mxu0 0.0
      %3765 = vmatpush1.msra.mxu0 0.0
      %3766 = vmatprep.subr.mxu0 0.0
      %3767 = vmatpush1.msra.mxu0 0.0
      %3768 = vmatprep.subr.mxu0 0.0
      %3769 = vmatpush1.msra.mxu0 0.0
      %3770 = vmatprep.subr.mxu0 0.0
      %3771 = vmatpush1.msra.mxu0 0.0
      %3772 = vmatprep.subr.mxu0 0.0
      %3773 = vmatpush1.msra.mxu0 0.0
      %3774 = vmatprep.subr.mxu0 0.0
      %3775 = vmatpush1.msra.mxu0 0.0
      %3776 = vmatprep.subr.mxu0 0.0
      %3777 = vmatpush1.msra.mxu0 0.0
      %3778 = vmatprep.subr.mxu0 0.0
      %3779 = vmatpush1.msra.mxu0 0.0
      %3780 = vmatprep.subr.mxu0 0.0
      %3781 = vmatpush1.msra.mxu0 0.0
      %3782 = vmatprep.subr.mxu0 0.0
      %3783 = vmatpush1.msra.mxu0 0.0
      %3784 = vmatprep.subr.mxu0 0.0
      %3785 = vmatpush1.msra.mxu0 0.0
      %3786 = vmatprep.subr.mxu0 0.0
      %3787 = vmatpush1.msra.mxu0 0.0
      %3788 = vmatprep.subr.mxu0 0.0
      %3789 = vmatpush1.msra.mxu0 0.0
      %3790 = vmatprep.subr.mxu0 0.0
      %3791 = vmatpush1.msra.mxu0 0.0
      %3792 = vmatprep.subr.mxu0 0.0
      %3793 = vmatpush1.msra.mxu0 0.0
      %3794 = vmatprep.subr.mxu0 0.0
      %3795 = vmatpush1.msra.mxu0 0.0
      %3796 = vmatprep.subr.mxu0 0.0
      %3797 = vmatpush1.msra.mxu0 0.0
      %3798 = vmatprep.subr.mxu0 0.0
      %3799 = vmatpush1.msra.mxu0 0.0
      %3800 = vmatprep.subr.mxu0 0.0
      %3801 = vmatpush1.msra.mxu0 0.0
      %3802 = vmatprep.subr.mxu0 0.0
      %3803 = vmatpush1.msra.mxu0 0.0
      %3804 = vmatprep.subr.mxu0 0.0
      %3805 = vmatpush1.msra.mxu0 0.0
      %3806 = vmatprep.subr.mxu0 0.0
      %3807 = vmatpush1.msra.mxu0 0.0
      %3808 = vmatprep.subr.mxu0 0.0
      %3809 = vmatpush1.msra.mxu0 0.0
      %3810 = vmatprep.subr.mxu0 0.0
      %3811 = vmatpush1.msra.mxu0 0.0
      %3812 = vmatprep.subr.mxu0 0.0
      %3813 = vmatpush1.msra.mxu0 0.0
      %3814 = vmatprep.subr.mxu0 0.0
      %3815 = vmatpush1.msra.mxu0 0.0
      %3816 = vmatprep.subr.mxu0 0.0
      %3817 = vmatpush1.msra.mxu0 0.0
      %3818 = vmatprep.subr.mxu0 0.0
      %3819 = vmatpush1.msra.mxu0 0.0
      %3820 = vmatprep.subr.mxu0 0.0
      %3821 = vmatpush1.msra.mxu0 0.0
      %3822 = vmatprep.mubr.f32.mxu0 0.0
      %3823 = vmatmul.mubr.f32.gmra.mrb[0].mxu0 %v3472
      %v3824 = vpop.f32.mrb[0].mxu0
      %v3825 = vadd.f32 0.0, %v3824
      %v3826 = vpop.f32.mrb[0].mxu0
      %v3827 = vadd.f32 0.0, %v3826
      %3828 = vdwg.mxu0
      %3829 = vmatprep.subr.mxu0 %v3448
      %3830 = vmatpush1.msra.mxu0 %v3447
      %3831 = vmatprep.subr.mxu0 0.0
      %3832 = vmatpush1.msra.mxu0 0.0
      %3833 = vmatprep.subr.mxu0 0.0
      %3834 = vmatpush1.msra.mxu0 0.0
      %3835 = vmatprep.subr.mxu0 0.0
      %3836 = vmatpush1.msra.mxu0 0.0
      %3837 = vmatprep.subr.mxu0 0.0
      %3838 = vmatpush1.msra.mxu0 0.0
      %3839 = vmatprep.subr.mxu0 0.0
      %3840 = vmatpush1.msra.mxu0 0.0
      %3841 = vmatprep.subr.mxu0 0.0
      %3842 = vmatpush1.msra.mxu0 0.0
      %3843 = vmatprep.subr.mxu0 0.0
      %3844 = vmatpush1.msra.mxu0 0.0
      %3845 = vmatprep.subr.mxu0 0.0
      %3846 = vmatpush1.msra.mxu0 0.0
      %3847 = vmatprep.subr.mxu0 0.0
      %3848 = vmatpush1.msra.mxu0 0.0
      %3849 = vmatprep.subr.mxu0 0.0
      %3850 = vmatpush1.msra.mxu0 0.0
      %3851 = vmatprep.subr.mxu0 0.0
      %3852 = vmatpush1.msra.mxu0 0.0
      %3853 = vmatprep.subr.mxu0 0.0
      %3854 = vmatpush1.msra.mxu0 0.0
      %3855 = vmatprep.subr.mxu0 0.0
      %3856 = vmatpush1.msra.mxu0 0.0
      %3857 = vmatprep.subr.mxu0 0.0
      %3858 = vmatpush1.msra.mxu0 0.0
      %3859 = vmatprep.subr.mxu0 0.0
      %3860 = vmatpush1.msra.mxu0 0.0
      %3861 = vmatprep.subr.mxu0 0.0
      %3862 = vmatpush1.msra.mxu0 0.0
      %3863 = vmatprep.subr.mxu0 0.0
      %3864 = vmatpush1.msra.mxu0 0.0
      %3865 = vmatprep.subr.mxu0 0.0
      %3866 = vmatpush1.msra.mxu0 0.0
      %3867 = vmatprep.subr.mxu0 0.0
      %3868 = vmatpush1.msra.mxu0 0.0
      %3869 = vmatprep.subr.mxu0 0.0
      %3870 = vmatpush1.msra.mxu0 0.0
      %3871 = vmatprep.subr.mxu0 0.0
      %3872 = vmatpush1.msra.mxu0 0.0
      %3873 = vmatprep.subr.mxu0 0.0
      %3874 = vmatpush1.msra.mxu0 0.0
      %3875 = vmatprep.subr.mxu0 0.0
      %3876 = vmatpush1.msra.mxu0 0.0
      %3877 = vmatprep.subr.mxu0 0.0
      %3878 = vmatpush1.msra.mxu0 0.0
      %3879 = vmatprep.subr.mxu0 0.0
      %3880 = vmatpush1.msra.mxu0 0.0
      %3881 = vmatprep.subr.mxu0 0.0
      %3882 = vmatpush1.msra.mxu0 0.0
      %3883 = vmatprep.subr.mxu0 0.0
      %3884 = vmatpush1.msra.mxu0 0.0
      %3885 = vmatprep.subr.mxu0 0.0
      %3886 = vmatpush1.msra.mxu0 0.0
      %3887 = vmatprep.subr.mxu0 0.0
      %3888 = vmatpush1.msra.mxu0 0.0
      %3889 = vmatprep.subr.mxu0 0.0
      %3890 = vmatpush1.msra.mxu0 0.0
      %3891 = vmatprep.subr.mxu0 0.0
      %3892 = vmatpush1.msra.mxu0 0.0
      %3893 = vmatprep.mubr.f32.mxu0 0.0
      %3894 = vmatmul.mubr.f32.gmra.mrb[0].mxu0 %v3472
      %v3895 = vpop.f32.mrb[0].mxu0
      %v3896 = vadd.f32 0.0, %v3895
      %v3897 = vpop.f32.mrb[0].mxu0
      %v3898 = vadd.f32 0.0, %v3897
      %3899 = vdwg.mxu0
      %3900 = vmatprep.subr.mxu0 %v3450
      %3901 = vmatpush1.msra.mxu0 %v3449
      %3902 = vmatprep.subr.mxu0 0.0
      %3903 = vmatpush1.msra.mxu0 0.0
      %3904 = vmatprep.subr.mxu0 0.0
      %3905 = vmatpush1.msra.mxu0 0.0
      %3906 = vmatprep.subr.mxu0 0.0
      %3907 = vmatpush1.msra.mxu0 0.0
      %3908 = vmatprep.subr.mxu0 0.0
      %3909 = vmatpush1.msra.mxu0 0.0
      %3910 = vmatprep.subr.mxu0 0.0
      %3911 = vmatpush1.msra.mxu0 0.0
      %3912 = vmatprep.subr.mxu0 0.0
      %3913 = vmatpush1.msra.mxu0 0.0
      %3914 = vmatprep.subr.mxu0 0.0
      %3915 = vmatpush1.msra.mxu0 0.0
      %3916 = vmatprep.subr.mxu0 0.0
      %3917 = vmatpush1.msra.mxu0 0.0
      %3918 = vmatprep.subr.mxu0 0.0
      %3919 = vmatpush1.msra.mxu0 0.0
      %3920 = vmatprep.subr.mxu0 0.0
      %3921 = vmatpush1.msra.mxu0 0.0
      %3922 = vmatprep.subr.mxu0 0.0
      %3923 = vmatpush1.msra.mxu0 0.0
      %3924 = vmatprep.subr.mxu0 0.0
      %3925 = vmatpush1.msra.mxu0 0.0
      %3926 = vmatprep.subr.mxu0 0.0
      %3927 = vmatpush1.msra.mxu0 0.0
      %3928 = vmatprep.subr.mxu0 0.0
      %3929 = vmatpush1.msra.mxu0 0.0
      %3930 = vmatprep.subr.mxu0 0.0
      %3931 = vmatpush1.msra.mxu0 0.0
      %3932 = vmatprep.subr.mxu0 0.0
      %3933 = vmatpush1.msra.mxu0 0.0
      %3934 = vmatprep.subr.mxu0 0.0
      %3935 = vmatpush1.msra.mxu0 0.0
      %3936 = vmatprep.subr.mxu0 0.0
      %3937 = vmatpush1.msra.mxu0 0.0
      %3938 = vmatprep.subr.mxu0 0.0
      %3939 = vmatpush1.msra.mxu0 0.0
      %3940 = vmatprep.subr.mxu0 0.0
      %3941 = vmatpush1.msra.mxu0 0.0
      %3942 = vmatprep.subr.mxu0 0.0
      %3943 = vmatpush1.msra.mxu0 0.0
      %3944 = vmatprep.subr.mxu0 0.0
      %3945 = vmatpush1.msra.mxu0 0.0
      %3946 = vmatprep.subr.mxu0 0.0
      %3947 = vmatpush1.msra.mxu0 0.0
      %3948 = vmatprep.subr.mxu0 0.0
      %3949 = vmatpush1.msra.mxu0 0.0
      %3950 = vmatprep.subr.mxu0 0.0
      %3951 = vmatpush1.msra.mxu0 0.0
      %3952 = vmatprep.subr.mxu0 0.0
      %3953 = vmatpush1.msra.mxu0 0.0
      %3954 = vmatprep.subr.mxu0 0.0
      %3955 = vmatpush1.msra.mxu0 0.0
      %3956 = vmatprep.subr.mxu0 0.0
      %3957 = vmatpush1.msra.mxu0 0.0
      %3958 = vmatprep.subr.mxu0 0.0
      %3959 = vmatpush1.msra.mxu0 0.0
      %3960 = vmatprep.subr.mxu0 0.0
      %3961 = vmatpush1.msra.mxu0 0.0
      %3962 = vmatprep.subr.mxu0 0.0
      %3963 = vmatpush1.msra.mxu0 0.0
      %3964 = vmatprep.mubr.f32.mxu0 0.0
      %3965 = vmatmul.mubr.f32.gmra.mrb[0].mxu0 %v3472
      %v3966 = vpop.f32.mrb[0].mxu0
      %v3967 = vadd.f32 0.0, %v3966
      %v3968 = vpop.f32.mrb[0].mxu0
      %v3969 = vadd.f32 0.0, %v3968
      %3970 = vdwg.mxu0
      %3971 = vmatprep.subr.mxu0 %v3452
      %3972 = vmatpush1.msra.mxu0 %v3451
      %3973 = vmatprep.subr.mxu0 0.0
      %3974 = vmatpush1.msra.mxu0 0.0
      %3975 = vmatprep.subr.mxu0 0.0
      %3976 = vmatpush1.msra.mxu0 0.0
      %3977 = vmatprep.subr.mxu0 0.0
      %3978 = vmatpush1.msra.mxu0 0.0
      %3979 = vmatprep.subr.mxu0 0.0
      %3980 = vmatpush1.msra.mxu0 0.0
      %3981 = vmatprep.subr.mxu0 0.0
      %3982 = vmatpush1.msra.mxu0 0.0
      %3983 = vmatprep.subr.mxu0 0.0
      %3984 = vmatpush1.msra.mxu0 0.0
      %3985 = vmatprep.subr.mxu0 0.0
      %3986 = vmatpush1.msra.mxu0 0.0
      %3987 = vmatprep.subr.mxu0 0.0
      %3988 = vmatpush1.msra.mxu0 0.0
      %3989 = vmatprep.subr.mxu0 0.0
      %3990 = vmatpush1.msra.mxu0 0.0
      %3991 = vmatprep.subr.mxu0 0.0
      %3992 = vmatpush1.msra.mxu0 0.0
      %3993 = vmatprep.subr.mxu0 0.0
      %3994 = vmatpush1.msra.mxu0 0.0
      %3995 = vmatprep.subr.mxu0 0.0
      %3996 = vmatpush1.msra.mxu0 0.0
      %3997 = vmatprep.subr.mxu0 0.0
      %3998 = vmatpush1.msra.mxu0 0.0
      %3999 = vmatprep.subr.mxu0 0.0
      %4000 = vmatpush1.msra.mxu0 0.0
      %4001 = vmatprep.subr.mxu0 0.0
      %4002 = vmatpush1.msra.mxu0 0.0
      %4003 = vmatprep.subr.mxu0 0.0
      %4004 = vmatpush1.msra.mxu0 0.0
      %4005 = vmatprep.subr.mxu0 0.0
      %4006 = vmatpush1.msra.mxu0 0.0
      %4007 = vmatprep.subr.mxu0 0.0
      %4008 = vmatpush1.msra.mxu0 0.0
      %4009 = vmatprep.subr.mxu0 0.0
      %4010 = vmatpush1.msra.mxu0 0.0
      %4011 = vmatprep.subr.mxu0 0.0
      %4012 = vmatpush1.msra.mxu0 0.0
      %4013 = vmatprep.subr.mxu0 0.0
      %4014 = vmatpush1.msra.mxu0 0.0
      %4015 = vmatprep.subr.mxu0 0.0
      %4016 = vmatpush1.msra.mxu0 0.0
      %4017 = vmatprep.subr.mxu0 0.0
      %4018 = vmatpush1.msra.mxu0 0.0
      %4019 = vmatprep.subr.mxu0 0.0
      %4020 = vmatpush1.msra.mxu0 0.0
      %4021 = vmatprep.subr.mxu0 0.0
      %4022 = vmatpush1.msra.mxu0 0.0
      %4023 = vmatprep.subr.mxu0 0.0
      %4024 = vmatpush1.msra.mxu0 0.0
      %4025 = vmatprep.subr.mxu0 0.0
      %4026 = vmatpush1.msra.mxu0 0.0
      %4027 = vmatprep.subr.mxu0 0.0
      %4028 = vmatpush1.msra.mxu0 0.0
      %4029 = vmatprep.subr.mxu0 0.0
      %4030 = vmatpush1.msra.mxu0 0.0
      %4031 = vmatprep.subr.mxu0 0.0
      %4032 = vmatpush1.msra.mxu0 0.0
      %4033 = vmatprep.subr.mxu0 0.0
      %4034 = vmatpush1.msra.mxu0 0.0
      %4035 = vmatprep.mubr.f32.mxu0 0.0
      %4036 = vmatmul.mubr.f32.gmra.mrb[0].mxu0 %v3472
      %v4037 = vpop.f32.mrb[0].mxu0
      %v4038 = vadd.f32 0.0, %v4037
      %v4039 = vpop.f32.mrb[0].mxu0
      %v4040 = vadd.f32 0.0, %v4039
      %4041 = vdwg.mxu0
      %4042 = vmatprep.subr.mxu0 0.0
      %4043 = vmatpush1.msra.mxu0 %v3453
      %4044 = vmatprep.subr.mxu0 0.0
      %4045 = vmatpush1.msra.mxu0 0.0
      %4046 = vmatprep.subr.mxu0 0.0
      %4047 = vmatpush1.msra.mxu0 0.0
      %4048 = vmatprep.subr.mxu0 0.0
      %4049 = vmatpush1.msra.mxu0 0.0
      %4050 = vmatprep.subr.mxu0 0.0
      %4051 = vmatpush1.msra.mxu0 0.0
      %4052 = vmatprep.subr.mxu0 0.0
      %4053 = vmatpush1.msra.mxu0 0.0
      %4054 = vmatprep.subr.mxu0 0.0
      %4055 = vmatpush1.msra.mxu0 0.0
      %4056 = vmatprep.subr.mxu0 0.0
      %4057 = vmatpush1.msra.mxu0 0.0
      %4058 = vmatprep.subr.mxu0 0.0
      %4059 = vmatpush1.msra.mxu0 0.0
      %4060 = vmatprep.subr.mxu0 0.0
      %4061 = vmatpush1.msra.mxu0 0.0
      %4062 = vmatprep.subr.mxu0 0.0
      %4063 = vmatpush1.msra.mxu0 0.0
      %4064 = vmatprep.subr.mxu0 0.0
      %4065 = vmatpush1.msra.mxu0 0.0
      %4066 = vmatprep.subr.mxu0 0.0
      %4067 = vmatpush1.msra.mxu0 0.0
      %4068 = vmatprep.subr.mxu0 0.0
      %4069 = vmatpush1.msra.mxu0 0.0
      %4070 = vmatprep.subr.mxu0 0.0
      %4071 = vmatpush1.msra.mxu0 0.0
      %4072 = vmatprep.subr.mxu0 0.0
      %4073 = vmatpush1.msra.mxu0 0.0
      %4074 = vmatprep.subr.mxu0 0.0
      %4075 = vmatpush1.msra.mxu0 0.0
      %4076 = vmatprep.subr.mxu0 0.0
      %4077 = vmatpush1.msra.mxu0 0.0
      %4078 = vmatprep.subr.mxu0 0.0
      %4079 = vmatpush1.msra.mxu0 0.0
      %4080 = vmatprep.subr.mxu0 0.0
      %4081 = vmatpush1.msra.mxu0 0.0
      %4082 = vmatprep.subr.mxu0 0.0
      %4083 = vmatpush1.msra.mxu0 0.0
      %4084 = vmatprep.subr.mxu0 0.0
      %4085 = vmatpush1.msra.mxu0 0.0
      %4086 = vmatprep.subr.mxu0 0.0
      %4087 = vmatpush1.msra.mxu0 0.0
      %4088 = vmatprep.subr.mxu0 0.0
      %4089 = vmatpush1.msra.mxu0 0.0
      %4090 = vmatprep.subr.mxu0 0.0
      %4091 = vmatpush1.msra.mxu0 0.0
      %4092 = vmatprep.subr.mxu0 0.0
      %4093 = vmatpush1.msra.mxu0 0.0
      %4094 = vmatprep.subr.mxu0 0.0
      %4095 = vmatpush1.msra.mxu0 0.0
      %4096 = vmatprep.subr.mxu0 0.0
      %4097 = vmatpush1.msra.mxu0 0.0
      %4098 = vmatprep.subr.mxu0 0.0
      %4099 = vmatpush1.msra.mxu0 0.0
      %4100 = vmatprep.subr.mxu0 0.0
      %4101 = vmatpush1.msra.mxu0 0.0
      %4102 = vmatprep.subr.mxu0 0.0
      %4103 = vmatpush1.msra.mxu0 0.0
      %4104 = vmatprep.subr.mxu0 0.0
      %4105 = vmatpush1.msra.mxu0 0.0
      %4106 = vmatprep.mubr.f32.mxu0 0.0
      %4107 = vmatmul.mubr.f32.gmra.mrb[0].mxu0 %v3472
      %v4108 = vpop.f32.mrb[0].mxu0
      %v4109 = vadd.f32 0.0, %v4108
      %v4110 = vpop.f32.mrb[0].mxu0
      %4111 = vdwg.mxu0
      %v4112 = vadd.f32 %v3363, %v3541
      %v4113 = vadd.f32 %v3364, %v3543
      %v4114 = vadd.f32 %v3365, %v3612
      %v4115 = vadd.f32 %v3366, %v3614
      %v4116 = vadd.f32 %v3367, %v3683
      %v4117 = vadd.f32 %v3368, %v3685
      %v4118 = vadd.f32 %v3369, %v3754
      %v4119 = vadd.f32 %v3370, %v3756
      %v4120 = vadd.f32 %v3371, %v3825
      %v4121 = vadd.f32 %v3372, %v3827
      %v4122 = vadd.f32 %v3373, %v3896
      %v4123 = vadd.f32 %v3374, %v3898
      %v4124 = vadd.f32 %v3375, %v3967
      %v4125 = vadd.f32 %v3376, %v3969
      %v4126 = vadd.f32 %v3377, %v4038
      %v4127 = vadd.f32 %v3378, %v4040
      %v4128 = vadd.f32 %v3379, %v4109
      %4129 = vst [vmem:[%s206] sm:$0xff] %v4112
      %4130 = vst [vmem:[%s206 + $0x8] sm:$0xff] %v4113
      %4131 = vst [vmem:[%s206 + $0x10] sm:$0xff] %v4114
      %4132 = vst [vmem:[%s206 + $0x18] sm:$0xff] %v4115
      %4133 = vst [vmem:[%s206 + $0x20] sm:$0xff] %v4116
      %4134 = vst [vmem:[%s206 + $0x28] sm:$0xff] %v4117
      %4135 = vst [vmem:[%s206 + $0x30] sm:$0xff] %v4118
      %4136 = vst [vmem:[%s206 + $0x38] sm:$0xff] %v4119
      %4137 = vst [vmem:[%s206 + $0x40] sm:$0xff] %v4120
      %4138 = vst [vmem:[%s206 + $0x48] sm:$0xff] %v4121
      %4139 = vst [vmem:[%s206 + $0x50] sm:$0xff] %v4122
      %4140 = vst [vmem:[%s206 + $0x58] sm:$0xff] %v4123
      %4141 = vst [vmem:[%s206 + $0x60] sm:$0xff] %v4124
      %4142 = vst [vmem:[%s206 + $0x68] sm:$0xff] %v4125
      %4143 = vst [vmem:[%s206 + $0x70] sm:$0xff] %v4126
      %4144 = vst [vmem:[%s206 + $0x78] sm:$0xff] %v4127
      %4145 = vst [vmem:[%s206 + $0x80] sm:$0xff] %v4128
      %v4146 = vld [vmem:[%s197] sm:$0xff]
      %v4147 = vld [vmem:[%s197 + $0x8] sm:$0xff]
      %v4148 = vld [vmem:[%s197 + $0x10] sm:$0xff]
      %v4149 = vld [vmem:[%s197 + $0x18] sm:$0xff]
      %v4150 = vld [vmem:[%s197 + $0x20] sm:$0xff]
      %v4151 = vld [vmem:[%s197 + $0x28] sm:$0xff]
      %v4152 = vld [vmem:[%s197 + $0x30] sm:$0xff]
      %v4153 = vld [vmem:[%s197 + $0x38] sm:$0xff]
      %v4154 = vld [vmem:[%s197 + $0x40] sm:$0xff]
      %v4155 = vld [vmem:[%s197 + $0x48] sm:$0xff]
      %v4156 = vld [vmem:[%s197 + $0x50] sm:$0xff]
      %v4157 = vld [vmem:[%s197 + $0x58] sm:$0xff]
      %v4158 = vld [vmem:[%s197 + $0x60] sm:$0xff]
      %v4159 = vld [vmem:[%s197 + $0x68] sm:$0xff]
      %v4160 = vld [vmem:[%s197 + $0x70] sm:$0xff]
      %v4161 = vld [vmem:[%s197 + $0x78] sm:$0xff]
      %v4162 = vld [vmem:[%s197 + $0x80] sm:$0xff]
      %v4163 = vld [vmem:[%s197 + $0x88] sm:$0xff]
      %v4164 = vld [vmem:[%s206] sm:$0xff]
      %v4165 = vld [vmem:[%s206 + $0x8] sm:$0xff]
      %v4166 = vld [vmem:[%s206 + $0x10] sm:$0xff]
      %v4167 = vld [vmem:[%s206 + $0x18] sm:$0xff]
      %v4168 = vld [vmem:[%s206 + $0x20] sm:$0xff]
      %v4169 = vld [vmem:[%s206 + $0x28] sm:$0xff]
      %v4170 = vld [vmem:[%s206 + $0x30] sm:$0xff]
      %v4171 = vld [vmem:[%s206 + $0x38] sm:$0xff]
      %v4172 = vld [vmem:[%s206 + $0x40] sm:$0xff]
      %v4173 = vld [vmem:[%s206 + $0x48] sm:$0xff]
      %v4174 = vld [vmem:[%s206 + $0x50] sm:$0xff]
      %v4175 = vld [vmem:[%s206 + $0x58] sm:$0xff]
      %v4176 = vld [vmem:[%s206 + $0x60] sm:$0xff]
      %v4177 = vld [vmem:[%s206 + $0x68] sm:$0xff]
      %v4178 = vld [vmem:[%s206 + $0x70] sm:$0xff]
      %v4179 = vld [vmem:[%s206 + $0x78] sm:$0xff]
      %v4180 = vld [vmem:[%s206 + $0x80] sm:$0xff]
      %s4181 = scalar_lea.vmem %s1, 40
      %v4182 = vld [vmem:[%s4181] sm:$0xff]
      %4201 = vrot.lane.b32.xlu0 %v4146, 60
      %v4202 = vpop.permute.xlu0 %4201
      %4203 = vrot.lane.b32.xlu0 %v4147, 60
      %v4204 = vpop.permute.xlu0 %4203
      %4205 = vrot.lane.b32.xlu0 %v4148, 60
      %v4206 = vpop.permute.xlu0 %4205
      %4207 = vrot.lane.b32.xlu0 %v4149, 60
      %v4208 = vpop.permute.xlu0 %4207
      %4209 = vrot.lane.b32.xlu0 %v4150, 60
      %v4210 = vpop.permute.xlu0 %4209
      %4211 = vrot.lane.b32.xlu0 %v4151, 60
      %v4212 = vpop.permute.xlu0 %4211
      %4213 = vrot.lane.b32.xlu0 %v4152, 60
      %v4214 = vpop.permute.xlu0 %4213
      %4215 = vrot.lane.b32.xlu0 %v4153, 60
      %v4216 = vpop.permute.xlu0 %4215
      %4217 = vrot.lane.b32.xlu0 %v4154, 60
      %v4218 = vpop.permute.xlu0 %4217
      %4219 = vrot.lane.b32.xlu0 %v4155, 60
      %v4220 = vpop.permute.xlu0 %4219
      %4221 = vrot.lane.b32.xlu0 %v4156, 60
      %v4222 = vpop.permute.xlu0 %4221
      %4223 = vrot.lane.b32.xlu0 %v4157, 60
      %v4224 = vpop.permute.xlu0 %4223
      %4225 = vrot.lane.b32.xlu0 %v4158, 60
      %v4226 = vpop.permute.xlu0 %4225
      %4227 = vrot.lane.b32.xlu0 %v4159, 60
      %v4228 = vpop.permute.xlu0 %4227
      %4229 = vrot.lane.b32.xlu0 %v4160, 60
      %v4230 = vpop.permute.xlu0 %4229
      %4231 = vrot.lane.b32.xlu0 %v4161, 60
      %v4232 = vpop.permute.xlu0 %4231
      %4233 = vrot.lane.b32.xlu0 %v4162, 60
      %v4234 = vpop.permute.xlu0 %4233
      %4235 = vrot.lane.b32.xlu0 %v4163, 60
      %v4236 = vpop.permute.xlu0 %4235
      %vm4237 = vcmask 490496
      %v4238 = vsel %vm4237, %v4202, %v4204
      %v4239 = vsel %vm4237, %v4204, %v4206
      %v4240 = vsel %vm4237, %v4206, %v4208
      %v4241 = vsel %vm4237, %v4208, %v4210
      %v4242 = vsel %vm4237, %v4210, %v4212
      %v4243 = vsel %vm4237, %v4212, %v4214
      %v4244 = vsel %vm4237, %v4214, %v4216
      %v4245 = vsel %vm4237, %v4216, %v4218
      %v4246 = vsel %vm4237, %v4218, %v4220
      %v4247 = vsel %vm4237, %v4220, %v4222
      %v4248 = vsel %vm4237, %v4222, %v4224
      %v4249 = vsel %vm4237, %v4224, %v4226
      %v4250 = vsel %vm4237, %v4226, %v4228
      %v4251 = vsel %vm4237, %v4228, %v4230
      %v4252 = vsel %vm4237, %v4230, %v4232
      %v4253 = vsel %vm4237, %v4232, %v4234
      %v4254 = vsel %vm4237, %v4234, %v4236
      %v4273 = vsel %vm266, %v4182, 0
      %4275 = vmatprep.subr.mxu0 %v4239
      %4276 = vmatpush1.msra.mxu0 %v4238
      %4277 = vmatprep.subr.mxu0 0.0
      %4278 = vmatpush1.msra.mxu0 0.0
      %4279 = vmatprep.subr.mxu0 0.0
      %4280 = vmatpush1.msra.mxu0 0.0
      %4281 = vmatprep.subr.mxu0 0.0
      %4282 = vmatpush1.msra.mxu0 0.0
      %4283 = vmatprep.subr.mxu0 0.0
      %4284 = vmatpush1.msra.mxu0 0.0
      %4285 = vmatprep.subr.mxu0 0.0
      %4286 = vmatpush1.msra.mxu0 0.0
      %4287 = vmatprep.subr.mxu0 0.0
      %4288 = vmatpush1.msra.mxu0 0.0
      %4289 = vmatprep.subr.mxu0 0.0
      %4290 = vmatpush1.msra.mxu0 0.0
      %4291 = vmatprep.subr.mxu0 0.0
      %4292 = vmatpush1.msra.mxu0 0.0
      %4293 = vmatprep.subr.mxu0 0.0
      %4294 = vmatpush1.msra.mxu0 0.0
      %4295 = vmatprep.subr.mxu0 0.0
      %4296 = vmatpush1.msra.mxu0 0.0
      %4297 = vmatprep.subr.mxu0 0.0
      %4298 = vmatpush1.msra.mxu0 0.0
      %4299 = vmatprep.subr.mxu0 0.0
      %4300 = vmatpush1.msra.mxu0 0.0
      %4301 = vmatprep.subr.mxu0 0.0
      %4302 = vmatpush1.msra.mxu0 0.0
      %4303 = vmatprep.subr.mxu0 0.0
      %4304 = vmatpush1.msra.mxu0 0.0
      %4305 = vmatprep.subr.mxu0 0.0
      %4306 = vmatpush1.msra.mxu0 0.0
      %4307 = vmatprep.subr.mxu0 0.0
      %4308 = vmatpush1.msra.mxu0 0.0
      %4309 = vmatprep.subr.mxu0 0.0
      %4310 = vmatpush1.msra.mxu0 0.0
      %4311 = vmatprep.subr.mxu0 0.0
      %4312 = vmatpush1.msra.mxu0 0.0
      %4313 = vmatprep.subr.mxu0 0.0
      %4314 = vmatpush1.msra.mxu0 0.0
      %4315 = vmatprep.subr.mxu0 0.0
      %4316 = vmatpush1.msra.mxu0 0.0
      %4317 = vmatprep.subr.mxu0 0.0
      %4318 = vmatpush1.msra.mxu0 0.0
      %4319 = vmatprep.subr.mxu0 0.0
      %4320 = vmatpush1.msra.mxu0 0.0
      %4321 = vmatprep.subr.mxu0 0.0
      %4322 = vmatpush1.msra.mxu0 0.0
      %4323 = vmatprep.subr.mxu0 0.0
      %4324 = vmatpush1.msra.mxu0 0.0
      %4325 = vmatprep.subr.mxu0 0.0
      %4326 = vmatpush1.msra.mxu0 0.0
      %4327 = vmatprep.subr.mxu0 0.0
      %4328 = vmatpush1.msra.mxu0 0.0
      %4329 = vmatprep.subr.mxu0 0.0
      %4330 = vmatpush1.msra.mxu0 0.0
      %4331 = vmatprep.subr.mxu0 0.0
      %4332 = vmatpush1.msra.mxu0 0.0
      %4333 = vmatprep.subr.mxu0 0.0
      %4334 = vmatpush1.msra.mxu0 0.0
      %4335 = vmatprep.subr.mxu0 0.0
      %4336 = vmatpush1.msra.mxu0 0.0
      %4337 = vmatprep.subr.mxu0 0.0
      %4338 = vmatpush1.msra.mxu0 0.0
      %4339 = vmatprep.mubr.f32.mxu0 0.0
      %4340 = vmatmul.mubr.f32.gmra.mrb[0].mxu0 %v4273
      %v4341 = vpop.f32.mrb[0].mxu0
      %v4342 = vadd.f32 0.0, %v4341
      %v4343 = vpop.f32.mrb[0].mxu0
      %v4344 = vadd.f32 0.0, %v4343
      %4345 = vdwg.mxu0
      %4346 = vmatprep.subr.mxu0 %v4241
      %4347 = vmatpush1.msra.mxu0 %v4240
      %4348 = vmatprep.subr.mxu0 0.0
      %4349 = vmatpush1.msra.mxu0 0.0
      %4350 = vmatprep.subr.mxu0 0.0
      %4351 = vmatpush1.msra.mxu0 0.0
      %4352 = vmatprep.subr.mxu0 0.0
      %4353 = vmatpush1.msra.mxu0 0.0
      %4354 = vmatprep.subr.mxu0 0.0
      %4355 = vmatpush1.msra.mxu0 0.0
      %4356 = vmatprep.subr.mxu0 0.0
      %4357 = vmatpush1.msra.mxu0 0.0
      %4358 = vmatprep.subr.mxu0 0.0
      %4359 = vmatpush1.msra.mxu0 0.0
      %4360 = vmatprep.subr.mxu0 0.0
      %4361 = vmatpush1.msra.mxu0 0.0
      %4362 = vmatprep.subr.mxu0 0.0
      %4363 = vmatpush1.msra.mxu0 0.0
      %4364 = vmatprep.subr.mxu0 0.0
      %4365 = vmatpush1.msra.mxu0 0.0
      %4366 = vmatprep.subr.mxu0 0.0
      %4367 = vmatpush1.msra.mxu0 0.0
      %4368 = vmatprep.subr.mxu0 0.0
      %4369 = vmatpush1.msra.mxu0 0.0
      %4370 = vmatprep.subr.mxu0 0.0
      %4371 = vmatpush1.msra.mxu0 0.0
      %4372 = vmatprep.subr.mxu0 0.0
      %4373 = vmatpush1.msra.mxu0 0.0
      %4374 = vmatprep.subr.mxu0 0.0
      %4375 = vmatpush1.msra.mxu0 0.0
      %4376 = vmatprep.subr.mxu0 0.0
      %4377 = vmatpush1.msra.mxu0 0.0
      %4378 = vmatprep.subr.mxu0 0.0
      %4379 = vmatpush1.msra.mxu0 0.0
      %4380 = vmatprep.subr.mxu0 0.0
      %4381 = vmatpush1.msra.mxu0 0.0
      %4382 = vmatprep.subr.mxu0 0.0
      %4383 = vmatpush1.msra.mxu0 0.0
      %4384 = vmatprep.subr.mxu0 0.0
      %4385 = vmatpush1.msra.mxu0 0.0
      %4386 = vmatprep.subr.mxu0 0.0
      %4387 = vmatpush1.msra.mxu0 0.0
      %4388 = vmatprep.subr.mxu0 0.0
      %4389 = vmatpush1.msra.mxu0 0.0
      %4390 = vmatprep.subr.mxu0 0.0
      %4391 = vmatpush1.msra.mxu0 0.0
      %4392 = vmatprep.subr.mxu0 0.0
      %4393 = vmatpush1.msra.mxu0 0.0
      %4394 = vmatprep.subr.mxu0 0.0
      %4395 = vmatpush1.msra.mxu0 0.0
      %4396 = vmatprep.subr.mxu0 0.0
      %4397 = vmatpush1.msra.mxu0 0.0
      %4398 = vmatprep.subr.mxu0 0.0
      %4399 = vmatpush1.msra.mxu0 0.0
      %4400 = vmatprep.subr.mxu0 0.0
      %4401 = vmatpush1.msra.mxu0 0.0
      %4402 = vmatprep.subr.mxu0 0.0
      %4403 = vmatpush1.msra.mxu0 0.0
      %4404 = vmatprep.subr.mxu0 0.0
      %4405 = vmatpush1.msra.mxu0 0.0
      %4406 = vmatprep.subr.mxu0 0.0
      %4407 = vmatpush1.msra.mxu0 0.0
      %4408 = vmatprep.subr.mxu0 0.0
      %4409 = vmatpush1.msra.mxu0 0.0
      %4410 = vmatprep.mubr.f32.mxu0 0.0
      %4411 = vmatmul.mubr.f32.gmra.mrb[0].mxu0 %v4273
      %v4412 = vpop.f32.mrb[0].mxu0
      %v4413 = vadd.f32 0.0, %v4412
      %v4414 = vpop.f32.mrb[0].mxu0
      %v4415 = vadd.f32 0.0, %v4414
      %4416 = vdwg.mxu0
      %4417 = vmatprep.subr.mxu0 %v4243
      %4418 = vmatpush1.msra.mxu0 %v4242
      %4419 = vmatprep.subr.mxu0 0.0
      %4420 = vmatpush1.msra.mxu0 0.0
      %4421 = vmatprep.subr.mxu0 0.0
      %4422 = vmatpush1.msra.mxu0 0.0
      %4423 = vmatprep.subr.mxu0 0.0
      %4424 = vmatpush1.msra.mxu0 0.0
      %4425 = vmatprep.subr.mxu0 0.0
      %4426 = vmatpush1.msra.mxu0 0.0
      %4427 = vmatprep.subr.mxu0 0.0
      %4428 = vmatpush1.msra.mxu0 0.0
      %4429 = vmatprep.subr.mxu0 0.0
      %4430 = vmatpush1.msra.mxu0 0.0
      %4431 = vmatprep.subr.mxu0 0.0
      %4432 = vmatpush1.msra.mxu0 0.0
      %4433 = vmatprep.subr.mxu0 0.0
      %4434 = vmatpush1.msra.mxu0 0.0
      %4435 = vmatprep.subr.mxu0 0.0
      %4436 = vmatpush1.msra.mxu0 0.0
      %4437 = vmatprep.subr.mxu0 0.0
      %4438 = vmatpush1.msra.mxu0 0.0
      %4439 = vmatprep.subr.mxu0 0.0
      %4440 = vmatpush1.msra.mxu0 0.0
      %4441 = vmatprep.subr.mxu0 0.0
      %4442 = vmatpush1.msra.mxu0 0.0
      %4443 = vmatprep.subr.mxu0 0.0
      %4444 = vmatpush1.msra.mxu0 0.0
      %4445 = vmatprep.subr.mxu0 0.0
      %4446 = vmatpush1.msra.mxu0 0.0
      %4447 = vmatprep.subr.mxu0 0.0
      %4448 = vmatpush1.msra.mxu0 0.0
      %4449 = vmatprep.subr.mxu0 0.0
      %4450 = vmatpush1.msra.mxu0 0.0
      %4451 = vmatprep.subr.mxu0 0.0
      %4452 = vmatpush1.msra.mxu0 0.0
      %4453 = vmatprep.subr.mxu0 0.0
      %4454 = vmatpush1.msra.mxu0 0.0
      %4455 = vmatprep.subr.mxu0 0.0
      %4456 = vmatpush1.msra.mxu0 0.0
      %4457 = vmatprep.subr.mxu0 0.0
      %4458 = vmatpush1.msra.mxu0 0.0
      %4459 = vmatprep.subr.mxu0 0.0
      %4460 = vmatpush1.msra.mxu0 0.0
      %4461 = vmatprep.subr.mxu0 0.0
      %4462 = vmatpush1.msra.mxu0 0.0
      %4463 = vmatprep.subr.mxu0 0.0
      %4464 = vmatpush1.msra.mxu0 0.0
      %4465 = vmatprep.subr.mxu0 0.0
      %4466 = vmatpush1.msra.mxu0 0.0
      %4467 = vmatprep.subr.mxu0 0.0
      %4468 = vmatpush1.msra.mxu0 0.0
      %4469 = vmatprep.subr.mxu0 0.0
      %4470 = vmatpush1.msra.mxu0 0.0
      %4471 = vmatprep.subr.mxu0 0.0
      %4472 = vmatpush1.msra.mxu0 0.0
      %4473 = vmatprep.subr.mxu0 0.0
      %4474 = vmatpush1.msra.mxu0 0.0
      %4475 = vmatprep.subr.mxu0 0.0
      %4476 = vmatpush1.msra.mxu0 0.0
      %4477 = vmatprep.subr.mxu0 0.0
      %4478 = vmatpush1.msra.mxu0 0.0
      %4479 = vmatprep.subr.mxu0 0.0
      %4480 = vmatpush1.msra.mxu0 0.0
      %4481 = vmatprep.mubr.f32.mxu0 0.0
      %4482 = vmatmul.mubr.f32.gmra.mrb[0].mxu0 %v4273
      %v4483 = vpop.f32.mrb[0].mxu0
      %v4484 = vadd.f32 0.0, %v4483
      %v4485 = vpop.f32.mrb[0].mxu0
      %v4486 = vadd.f32 0.0, %v4485
      %4487 = vdwg.mxu0
      %4488 = vmatprep.subr.mxu0 %v4245
      %4489 = vmatpush1.msra.mxu0 %v4244
      %4490 = vmatprep.subr.mxu0 0.0
      %4491 = vmatpush1.msra.mxu0 0.0
      %4492 = vmatprep.subr.mxu0 0.0
      %4493 = vmatpush1.msra.mxu0 0.0
      %4494 = vmatprep.subr.mxu0 0.0
      %4495 = vmatpush1.msra.mxu0 0.0
      %4496 = vmatprep.subr.mxu0 0.0
      %4497 = vmatpush1.msra.mxu0 0.0
      %4498 = vmatprep.subr.mxu0 0.0
      %4499 = vmatpush1.msra.mxu0 0.0
      %4500 = vmatprep.subr.mxu0 0.0
      %4501 = vmatpush1.msra.mxu0 0.0
      %4502 = vmatprep.subr.mxu0 0.0
      %4503 = vmatpush1.msra.mxu0 0.0
      %4504 = vmatprep.subr.mxu0 0.0
      %4505 = vmatpush1.msra.mxu0 0.0
      %4506 = vmatprep.subr.mxu0 0.0
      %4507 = vmatpush1.msra.mxu0 0.0
      %4508 = vmatprep.subr.mxu0 0.0
      %4509 = vmatpush1.msra.mxu0 0.0
      %4510 = vmatprep.subr.mxu0 0.0
      %4511 = vmatpush1.msra.mxu0 0.0
      %4512 = vmatprep.subr.mxu0 0.0
      %4513 = vmatpush1.msra.mxu0 0.0
      %4514 = vmatprep.subr.mxu0 0.0
      %4515 = vmatpush1.msra.mxu0 0.0
      %4516 = vmatprep.subr.mxu0 0.0
      %4517 = vmatpush1.msra.mxu0 0.0
      %4518 = vmatprep.subr.mxu0 0.0
      %4519 = vmatpush1.msra.mxu0 0.0
      %4520 = vmatprep.subr.mxu0 0.0
      %4521 = vmatpush1.msra.mxu0 0.0
      %4522 = vmatprep.subr.mxu0 0.0
      %4523 = vmatpush1.msra.mxu0 0.0
      %4524 = vmatprep.subr.mxu0 0.0
      %4525 = vmatpush1.msra.mxu0 0.0
      %4526 = vmatprep.subr.mxu0 0.0
      %4527 = vmatpush1.msra.mxu0 0.0
      %4528 = vmatprep.subr.mxu0 0.0
      %4529 = vmatpush1.msra.mxu0 0.0
      %4530 = vmatprep.subr.mxu0 0.0
      %4531 = vmatpush1.msra.mxu0 0.0
      %4532 = vmatprep.subr.mxu0 0.0
      %4533 = vmatpush1.msra.mxu0 0.0
      %4534 = vmatprep.subr.mxu0 0.0
      %4535 = vmatpush1.msra.mxu0 0.0
      %4536 = vmatprep.subr.mxu0 0.0
      %4537 = vmatpush1.msra.mxu0 0.0
      %4538 = vmatprep.subr.mxu0 0.0
      %4539 = vmatpush1.msra.mxu0 0.0
      %4540 = vmatprep.subr.mxu0 0.0
      %4541 = vmatpush1.msra.mxu0 0.0
      %4542 = vmatprep.subr.mxu0 0.0
      %4543 = vmatpush1.msra.mxu0 0.0
      %4544 = vmatprep.subr.mxu0 0.0
      %4545 = vmatpush1.msra.mxu0 0.0
      %4546 = vmatprep.subr.mxu0 0.0
      %4547 = vmatpush1.msra.mxu0 0.0
      %4548 = vmatprep.subr.mxu0 0.0
      %4549 = vmatpush1.msra.mxu0 0.0
      %4550 = vmatprep.subr.mxu0 0.0
      %4551 = vmatpush1.msra.mxu0 0.0
      %4552 = vmatprep.mubr.f32.mxu0 0.0
      %4553 = vmatmul.mubr.f32.gmra.mrb[0].mxu0 %v4273
      %v4554 = vpop.f32.mrb[0].mxu0
      %v4555 = vadd.f32 0.0, %v4554
      %v4556 = vpop.f32.mrb[0].mxu0
      %v4557 = vadd.f32 0.0, %v4556
      %4558 = vdwg.mxu0
      %4559 = vmatprep.subr.mxu0 %v4247
      %4560 = vmatpush1.msra.mxu0 %v4246
      %4561 = vmatprep.subr.mxu0 0.0
      %4562 = vmatpush1.msra.mxu0 0.0
      %4563 = vmatprep.subr.mxu0 0.0
      %4564 = vmatpush1.msra.mxu0 0.0
      %4565 = vmatprep.subr.mxu0 0.0
      %4566 = vmatpush1.msra.mxu0 0.0
      %4567 = vmatprep.subr.mxu0 0.0
      %4568 = vmatpush1.msra.mxu0 0.0
      %4569 = vmatprep.subr.mxu0 0.0
      %4570 = vmatpush1.msra.mxu0 0.0
      %4571 = vmatprep.subr.mxu0 0.0
      %4572 = vmatpush1.msra.mxu0 0.0
      %4573 = vmatprep.subr.mxu0 0.0
      %4574 = vmatpush1.msra.mxu0 0.0
      %4575 = vmatprep.subr.mxu0 0.0
      %4576 = vmatpush1.msra.mxu0 0.0
      %4577 = vmatprep.subr.mxu0 0.0
      %4578 = vmatpush1.msra.mxu0 0.0
      %4579 = vmatprep.subr.mxu0 0.0
      %4580 = vmatpush1.msra.mxu0 0.0
      %4581 = vmatprep.subr.mxu0 0.0
      %4582 = vmatpush1.msra.mxu0 0.0
      %4583 = vmatprep.subr.mxu0 0.0
      %4584 = vmatpush1.msra.mxu0 0.0
      %4585 = vmatprep.subr.mxu0 0.0
      %4586 = vmatpush1.msra.mxu0 0.0
      %4587 = vmatprep.subr.mxu0 0.0
      %4588 = vmatpush1.msra.mxu0 0.0
      %4589 = vmatprep.subr.mxu0 0.0
      %4590 = vmatpush1.msra.mxu0 0.0
      %4591 = vmatprep.subr.mxu0 0.0
      %4592 = vmatpush1.msra.mxu0 0.0
      %4593 = vmatprep.subr.mxu0 0.0
      %4594 = vmatpush1.msra.mxu0 0.0
      %4595 = vmatprep.subr.mxu0 0.0
      %4596 = vmatpush1.msra.mxu0 0.0
      %4597 = vmatprep.subr.mxu0 0.0
      %4598 = vmatpush1.msra.mxu0 0.0
      %4599 = vmatprep.subr.mxu0 0.0
      %4600 = vmatpush1.msra.mxu0 0.0
      %4601 = vmatprep.subr.mxu0 0.0
      %4602 = vmatpush1.msra.mxu0 0.0
      %4603 = vmatprep.subr.mxu0 0.0
      %4604 = vmatpush1.msra.mxu0 0.0
      %4605 = vmatprep.subr.mxu0 0.0
      %4606 = vmatpush1.msra.mxu0 0.0
      %4607 = vmatprep.subr.mxu0 0.0
      %4608 = vmatpush1.msra.mxu0 0.0
      %4609 = vmatprep.subr.mxu0 0.0
      %4610 = vmatpush1.msra.mxu0 0.0
      %4611 = vmatprep.subr.mxu0 0.0
      %4612 = vmatpush1.msra.mxu0 0.0
      %4613 = vmatprep.subr.mxu0 0.0
      %4614 = vmatpush1.msra.mxu0 0.0
      %4615 = vmatprep.subr.mxu0 0.0
      %4616 = vmatpush1.msra.mxu0 0.0
      %4617 = vmatprep.subr.mxu0 0.0
      %4618 = vmatpush1.msra.mxu0 0.0
      %4619 = vmatprep.subr.mxu0 0.0
      %4620 = vmatpush1.msra.mxu0 0.0
      %4621 = vmatprep.subr.mxu0 0.0
      %4622 = vmatpush1.msra.mxu0 0.0
      %4623 = vmatprep.mubr.f32.mxu0 0.0
      %4624 = vmatmul.mubr.f32.gmra.mrb[0].mxu0 %v4273
      %v4625 = vpop.f32.mrb[0].mxu0
      %v4626 = vadd.f32 0.0, %v4625
      %v4627 = vpop.f32.mrb[0].mxu0
      %v4628 = vadd.f32 0.0, %v4627
      %4629 = vdwg.mxu0
      %4630 = vmatprep.subr.mxu0 %v4249
      %4631 = vmatpush1.msra.mxu0 %v4248
      %4632 = vmatprep.subr.mxu0 0.0
      %4633 = vmatpush1.msra.mxu0 0.0
      %4634 = vmatprep.subr.mxu0 0.0
      %4635 = vmatpush1.msra.mxu0 0.0
      %4636 = vmatprep.subr.mxu0 0.0
      %4637 = vmatpush1.msra.mxu0 0.0
      %4638 = vmatprep.subr.mxu0 0.0
      %4639 = vmatpush1.msra.mxu0 0.0
      %4640 = vmatprep.subr.mxu0 0.0
      %4641 = vmatpush1.msra.mxu0 0.0
      %4642 = vmatprep.subr.mxu0 0.0
      %4643 = vmatpush1.msra.mxu0 0.0
      %4644 = vmatprep.subr.mxu0 0.0
      %4645 = vmatpush1.msra.mxu0 0.0
      %4646 = vmatprep.subr.mxu0 0.0
      %4647 = vmatpush1.msra.mxu0 0.0
      %4648 = vmatprep.subr.mxu0 0.0
      %4649 = vmatpush1.msra.mxu0 0.0
      %4650 = vmatprep.subr.mxu0 0.0
      %4651 = vmatpush1.msra.mxu0 0.0
      %4652 = vmatprep.subr.mxu0 0.0
      %4653 = vmatpush1.msra.mxu0 0.0
      %4654 = vmatprep.subr.mxu0 0.0
      %4655 = vmatpush1.msra.mxu0 0.0
      %4656 = vmatprep.subr.mxu0 0.0
      %4657 = vmatpush1.msra.mxu0 0.0
      %4658 = vmatprep.subr.mxu0 0.0
      %4659 = vmatpush1.msra.mxu0 0.0
      %4660 = vmatprep.subr.mxu0 0.0
      %4661 = vmatpush1.msra.mxu0 0.0
      %4662 = vmatprep.subr.mxu0 0.0
      %4663 = vmatpush1.msra.mxu0 0.0
      %4664 = vmatprep.subr.mxu0 0.0
      %4665 = vmatpush1.msra.mxu0 0.0
      %4666 = vmatprep.subr.mxu0 0.0
      %4667 = vmatpush1.msra.mxu0 0.0
      %4668 = vmatprep.subr.mxu0 0.0
      %4669 = vmatpush1.msra.mxu0 0.0
      %4670 = vmatprep.subr.mxu0 0.0
      %4671 = vmatpush1.msra.mxu0 0.0
      %4672 = vmatprep.subr.mxu0 0.0
      %4673 = vmatpush1.msra.mxu0 0.0
      %4674 = vmatprep.subr.mxu0 0.0
      %4675 = vmatpush1.msra.mxu0 0.0
      %4676 = vmatprep.subr.mxu0 0.0
      %4677 = vmatpush1.msra.mxu0 0.0
      %4678 = vmatprep.subr.mxu0 0.0
      %4679 = vmatpush1.msra.mxu0 0.0
      %4680 = vmatprep.subr.mxu0 0.0
      %4681 = vmatpush1.msra.mxu0 0.0
      %4682 = vmatprep.subr.mxu0 0.0
      %4683 = vmatpush1.msra.mxu0 0.0
      %4684 = vmatprep.subr.mxu0 0.0
      %4685 = vmatpush1.msra.mxu0 0.0
      %4686 = vmatprep.subr.mxu0 0.0
      %4687 = vmatpush1.msra.mxu0 0.0
      %4688 = vmatprep.subr.mxu0 0.0
      %4689 = vmatpush1.msra.mxu0 0.0
      %4690 = vmatprep.subr.mxu0 0.0
      %4691 = vmatpush1.msra.mxu0 0.0
      %4692 = vmatprep.subr.mxu0 0.0
      %4693 = vmatpush1.msra.mxu0 0.0
      %4694 = vmatprep.mubr.f32.mxu0 0.0
      %4695 = vmatmul.mubr.f32.gmra.mrb[0].mxu0 %v4273
      %v4696 = vpop.f32.mrb[0].mxu0
      %v4697 = vadd.f32 0.0, %v4696
      %v4698 = vpop.f32.mrb[0].mxu0
      %v4699 = vadd.f32 0.0, %v4698
      %4700 = vdwg.mxu0
      %4701 = vmatprep.subr.mxu0 %v4251
      %4702 = vmatpush1.msra.mxu0 %v4250
      %4703 = vmatprep.subr.mxu0 0.0
      %4704 = vmatpush1.msra.mxu0 0.0
      %4705 = vmatprep.subr.mxu0 0.0
      %4706 = vmatpush1.msra.mxu0 0.0
      %4707 = vmatprep.subr.mxu0 0.0
      %4708 = vmatpush1.msra.mxu0 0.0
      %4709 = vmatprep.subr.mxu0 0.0
      %4710 = vmatpush1.msra.mxu0 0.0
      %4711 = vmatprep.subr.mxu0 0.0
      %4712 = vmatpush1.msra.mxu0 0.0
      %4713 = vmatprep.subr.mxu0 0.0
      %4714 = vmatpush1.msra.mxu0 0.0
      %4715 = vmatprep.subr.mxu0 0.0
      %4716 = vmatpush1.msra.mxu0 0.0
      %4717 = vmatprep.subr.mxu0 0.0
      %4718 = vmatpush1.msra.mxu0 0.0
      %4719 = vmatprep.subr.mxu0 0.0
      %4720 = vmatpush1.msra.mxu0 0.0
      %4721 = vmatprep.subr.mxu0 0.0
      %4722 = vmatpush1.msra.mxu0 0.0
      %4723 = vmatprep.subr.mxu0 0.0
      %4724 = vmatpush1.msra.mxu0 0.0
      %4725 = vmatprep.subr.mxu0 0.0
      %4726 = vmatpush1.msra.mxu0 0.0
      %4727 = vmatprep.subr.mxu0 0.0
      %4728 = vmatpush1.msra.mxu0 0.0
      %4729 = vmatprep.subr.mxu0 0.0
      %4730 = vmatpush1.msra.mxu0 0.0
      %4731 = vmatprep.subr.mxu0 0.0
      %4732 = vmatpush1.msra.mxu0 0.0
      %4733 = vmatprep.subr.mxu0 0.0
      %4734 = vmatpush1.msra.mxu0 0.0
      %4735 = vmatprep.subr.mxu0 0.0
      %4736 = vmatpush1.msra.mxu0 0.0
      %4737 = vmatprep.subr.mxu0 0.0
      %4738 = vmatpush1.msra.mxu0 0.0
      %4739 = vmatprep.subr.mxu0 0.0
      %4740 = vmatpush1.msra.mxu0 0.0
      %4741 = vmatprep.subr.mxu0 0.0
      %4742 = vmatpush1.msra.mxu0 0.0
      %4743 = vmatprep.subr.mxu0 0.0
      %4744 = vmatpush1.msra.mxu0 0.0
      %4745 = vmatprep.subr.mxu0 0.0
      %4746 = vmatpush1.msra.mxu0 0.0
      %4747 = vmatprep.subr.mxu0 0.0
      %4748 = vmatpush1.msra.mxu0 0.0
      %4749 = vmatprep.subr.mxu0 0.0
      %4750 = vmatpush1.msra.mxu0 0.0
      %4751 = vmatprep.subr.mxu0 0.0
      %4752 = vmatpush1.msra.mxu0 0.0
      %4753 = vmatprep.subr.mxu0 0.0
      %4754 = vmatpush1.msra.mxu0 0.0
      %4755 = vmatprep.subr.mxu0 0.0
      %4756 = vmatpush1.msra.mxu0 0.0
      %4757 = vmatprep.subr.mxu0 0.0
      %4758 = vmatpush1.msra.mxu0 0.0
      %4759 = vmatprep.subr.mxu0 0.0
      %4760 = vmatpush1.msra.mxu0 0.0
      %4761 = vmatprep.subr.mxu0 0.0
      %4762 = vmatpush1.msra.mxu0 0.0
      %4763 = vmatprep.subr.mxu0 0.0
      %4764 = vmatpush1.msra.mxu0 0.0
      %4765 = vmatprep.mubr.f32.mxu0 0.0
      %4766 = vmatmul.mubr.f32.gmra.mrb[0].mxu0 %v4273
      %v4767 = vpop.f32.mrb[0].mxu0
      %v4768 = vadd.f32 0.0, %v4767
      %v4769 = vpop.f32.mrb[0].mxu0
      %v4770 = vadd.f32 0.0, %v4769
      %4771 = vdwg.mxu0
      %4772 = vmatprep.subr.mxu0 %v4253
      %4773 = vmatpush1.msra.mxu0 %v4252
      %4774 = vmatprep.subr.mxu0 0.0
      %4775 = vmatpush1.msra.mxu0 0.0
      %4776 = vmatprep.subr.mxu0 0.0
      %4777 = vmatpush1.msra.mxu0 0.0
      %4778 = vmatprep.subr.mxu0 0.0
      %4779 = vmatpush1.msra.mxu0 0.0
      %4780 = vmatprep.subr.mxu0 0.0
      %4781 = vmatpush1.msra.mxu0 0.0
      %4782 = vmatprep.subr.mxu0 0.0
      %4783 = vmatpush1.msra.mxu0 0.0
      %4784 = vmatprep.subr.mxu0 0.0
      %4785 = vmatpush1.msra.mxu0 0.0
      %4786 = vmatprep.subr.mxu0 0.0
      %4787 = vmatpush1.msra.mxu0 0.0
      %4788 = vmatprep.subr.mxu0 0.0
      %4789 = vmatpush1.msra.mxu0 0.0
      %4790 = vmatprep.subr.mxu0 0.0
      %4791 = vmatpush1.msra.mxu0 0.0
      %4792 = vmatprep.subr.mxu0 0.0
      %4793 = vmatpush1.msra.mxu0 0.0
      %4794 = vmatprep.subr.mxu0 0.0
      %4795 = vmatpush1.msra.mxu0 0.0
      %4796 = vmatprep.subr.mxu0 0.0
      %4797 = vmatpush1.msra.mxu0 0.0
      %4798 = vmatprep.subr.mxu0 0.0
      %4799 = vmatpush1.msra.mxu0 0.0
      %4800 = vmatprep.subr.mxu0 0.0
      %4801 = vmatpush1.msra.mxu0 0.0
      %4802 = vmatprep.subr.mxu0 0.0
      %4803 = vmatpush1.msra.mxu0 0.0
      %4804 = vmatprep.subr.mxu0 0.0
      %4805 = vmatpush1.msra.mxu0 0.0
      %4806 = vmatprep.subr.mxu0 0.0
      %4807 = vmatpush1.msra.mxu0 0.0
      %4808 = vmatprep.subr.mxu0 0.0
      %4809 = vmatpush1.msra.mxu0 0.0
      %4810 = vmatprep.subr.mxu0 0.0
      %4811 = vmatpush1.msra.mxu0 0.0
      %4812 = vmatprep.subr.mxu0 0.0
      %4813 = vmatpush1.msra.mxu0 0.0
      %4814 = vmatprep.subr.mxu0 0.0
      %4815 = vmatpush1.msra.mxu0 0.0
      %4816 = vmatprep.subr.mxu0 0.0
      %4817 = vmatpush1.msra.mxu0 0.0
      %4818 = vmatprep.subr.mxu0 0.0
      %4819 = vmatpush1.msra.mxu0 0.0
      %4820 = vmatprep.subr.mxu0 0.0
      %4821 = vmatpush1.msra.mxu0 0.0
      %4822 = vmatprep.subr.mxu0 0.0
      %4823 = vmatpush1.msra.mxu0 0.0
      %4824 = vmatprep.subr.mxu0 0.0
      %4825 = vmatpush1.msra.mxu0 0.0
      %4826 = vmatprep.subr.mxu0 0.0
      %4827 = vmatpush1.msra.mxu0 0.0
      %4828 = vmatprep.subr.mxu0 0.0
      %4829 = vmatpush1.msra.mxu0 0.0
      %4830 = vmatprep.subr.mxu0 0.0
      %4831 = vmatpush1.msra.mxu0 0.0
      %4832 = vmatprep.subr.mxu0 0.0
      %4833 = vmatpush1.msra.mxu0 0.0
      %4834 = vmatprep.subr.mxu0 0.0
      %4835 = vmatpush1.msra.mxu0 0.0
      %4836 = vmatprep.mubr.f32.mxu0 0.0
      %4837 = vmatmul.mubr.f32.gmra.mrb[0].mxu0 %v4273
      %v4838 = vpop.f32.mrb[0].mxu0
      %v4839 = vadd.f32 0.0, %v4838
      %v4840 = vpop.f32.mrb[0].mxu0
      %v4841 = vadd.f32 0.0, %v4840
      %4842 = vdwg.mxu0
      %4843 = vmatprep.subr.mxu0 0.0
      %4844 = vmatpush1.msra.mxu0 %v4254
      %4845 = vmatprep.subr.mxu0 0.0
      %4846 = vmatpush1.msra.mxu0 0.0
      %4847 = vmatprep.subr.mxu0 0.0
      %4848 = vmatpush1.msra.mxu0 0.0
      %4849 = vmatprep.subr.mxu0 0.0
      %4850 = vmatpush1.msra.mxu0 0.0
      %4851 = vmatprep.subr.mxu0 0.0
      %4852 = vmatpush1.msra.mxu0 0.0
      %4853 = vmatprep.subr.mxu0 0.0
      %4854 = vmatpush1.msra.mxu0 0.0
      %4855 = vmatprep.subr.mxu0 0.0
      %4856 = vmatpush1.msra.mxu0 0.0
      %4857 = vmatprep.subr.mxu0 0.0
      %4858 = vmatpush1.msra.mxu0 0.0
      %4859 = vmatprep.subr.mxu0 0.0
      %4860 = vmatpush1.msra.mxu0 0.0
      %4861 = vmatprep.subr.mxu0 0.0
      %4862 = vmatpush1.msra.mxu0 0.0
      %4863 = vmatprep.subr.mxu0 0.0
      %4864 = vmatpush1.msra.mxu0 0.0
      %4865 = vmatprep.subr.mxu0 0.0
      %4866 = vmatpush1.msra.mxu0 0.0
      %4867 = vmatprep.subr.mxu0 0.0
      %4868 = vmatpush1.msra.mxu0 0.0
      %4869 = vmatprep.subr.mxu0 0.0
      %4870 = vmatpush1.msra.mxu0 0.0
      %4871 = vmatprep.subr.mxu0 0.0
      %4872 = vmatpush1.msra.mxu0 0.0
      %4873 = vmatprep.subr.mxu0 0.0
      %4874 = vmatpush1.msra.mxu0 0.0
      %4875 = vmatprep.subr.mxu0 0.0
      %4876 = vmatpush1.msra.mxu0 0.0
      %4877 = vmatprep.subr.mxu0 0.0
      %4878 = vmatpush1.msra.mxu0 0.0
      %4879 = vmatprep.subr.mxu0 0.0
      %4880 = vmatpush1.msra.mxu0 0.0
      %4881 = vmatprep.subr.mxu0 0.0
      %4882 = vmatpush1.msra.mxu0 0.0
      %4883 = vmatprep.subr.mxu0 0.0
      %4884 = vmatpush1.msra.mxu0 0.0
      %4885 = vmatprep.subr.mxu0 0.0
      %4886 = vmatpush1.msra.mxu0 0.0
      %4887 = vmatprep.subr.mxu0 0.0
      %4888 = vmatpush1.msra.mxu0 0.0
      %4889 = vmatprep.subr.mxu0 0.0
      %4890 = vmatpush1.msra.mxu0 0.0
      %4891 = vmatprep.subr.mxu0 0.0
      %4892 = vmatpush1.msra.mxu0 0.0
      %4893 = vmatprep.subr.mxu0 0.0
      %4894 = vmatpush1.msra.mxu0 0.0
      %4895 = vmatprep.subr.mxu0 0.0
      %4896 = vmatpush1.msra.mxu0 0.0
      %4897 = vmatprep.subr.mxu0 0.0
      %4898 = vmatpush1.msra.mxu0 0.0
      %4899 = vmatprep.subr.mxu0 0.0
      %4900 = vmatpush1.msra.mxu0 0.0
      %4901 = vmatprep.subr.mxu0 0.0
      %4902 = vmatpush1.msra.mxu0 0.0
      %4903 = vmatprep.subr.mxu0 0.0
      %4904 = vmatpush1.msra.mxu0 0.0
      %4905 = vmatprep.subr.mxu0 0.0
      %4906 = vmatpush1.msra.mxu0 0.0
      %4907 = vmatprep.mubr.f32.mxu0 0.0
      %4908 = vmatmul.mubr.f32.gmra.mrb[0].mxu0 %v4273
      %v4909 = vpop.f32.mrb[0].mxu0
      %v4910 = vadd.f32 0.0, %v4909
      %v4911 = vpop.f32.mrb[0].mxu0
      %4912 = vdwg.mxu0
      %v4913 = vadd.f32 %v4164, %v4342
      %v4914 = vadd.f32 %v4165, %v4344
      %v4915 = vadd.f32 %v4166, %v4413
      %v4916 = vadd.f32 %v4167, %v4415
      %v4917 = vadd.f32 %v4168, %v4484
      %v4918 = vadd.f32 %v4169, %v4486
      %v4919 = vadd.f32 %v4170, %v4555
      %v4920 = vadd.f32 %v4171, %v4557
      %v4921 = vadd.f32 %v4172, %v4626
      %v4922 = vadd.f32 %v4173, %v4628
      %v4923 = vadd.f32 %v4174, %v4697
      %v4924 = vadd.f32 %v4175, %v4699
      %v4925 = vadd.f32 %v4176, %v4768
      %v4926 = vadd.f32 %v4177, %v4770
      %v4927 = vadd.f32 %v4178, %v4839
      %v4928 = vadd.f32 %v4179, %v4841
      %v4929 = vadd.f32 %v4180, %v4910
      %4930 = vst [vmem:[%s206] sm:$0xff] %v4913
      %4931 = vst [vmem:[%s206 + $0x8] sm:$0xff] %v4914
      %4932 = vst [vmem:[%s206 + $0x10] sm:$0xff] %v4915
      %4933 = vst [vmem:[%s206 + $0x18] sm:$0xff] %v4916
      %4934 = vst [vmem:[%s206 + $0x20] sm:$0xff] %v4917
      %4935 = vst [vmem:[%s206 + $0x28] sm:$0xff] %v4918
      %4936 = vst [vmem:[%s206 + $0x30] sm:$0xff] %v4919
      %4937 = vst [vmem:[%s206 + $0x38] sm:$0xff] %v4920
      %4938 = vst [vmem:[%s206 + $0x40] sm:$0xff] %v4921
      %4939 = vst [vmem:[%s206 + $0x48] sm:$0xff] %v4922
      %4940 = vst [vmem:[%s206 + $0x50] sm:$0xff] %v4923
      %4941 = vst [vmem:[%s206 + $0x58] sm:$0xff] %v4924
      %4942 = vst [vmem:[%s206 + $0x60] sm:$0xff] %v4925
      %4943 = vst [vmem:[%s206 + $0x68] sm:$0xff] %v4926
      %4944 = vst [vmem:[%s206 + $0x70] sm:$0xff] %v4927
      %4945 = vst [vmem:[%s206 + $0x78] sm:$0xff] %v4928
      %4946 = vst [vmem:[%s206 + $0x80] sm:$0xff] %v4929
      %v4947 = vld [vmem:[%s197 + $0x8] sm:$0xff]
      %v4948 = vld [vmem:[%s197 + $0x10] sm:$0xff]
      %v4949 = vld [vmem:[%s197 + $0x18] sm:$0xff]
      %v4950 = vld [vmem:[%s197 + $0x20] sm:$0xff]
      %v4951 = vld [vmem:[%s197 + $0x28] sm:$0xff]
      %v4952 = vld [vmem:[%s197 + $0x30] sm:$0xff]
      %v4953 = vld [vmem:[%s197 + $0x38] sm:$0xff]
      %v4954 = vld [vmem:[%s197 + $0x40] sm:$0xff]
      %v4955 = vld [vmem:[%s197 + $0x48] sm:$0xff]
      %v4956 = vld [vmem:[%s197 + $0x50] sm:$0xff]
      %v4957 = vld [vmem:[%s197 + $0x58] sm:$0xff]
      %v4958 = vld [vmem:[%s197 + $0x60] sm:$0xff]
      %v4959 = vld [vmem:[%s197 + $0x68] sm:$0xff]
      %v4960 = vld [vmem:[%s197 + $0x70] sm:$0xff]
      %v4961 = vld [vmem:[%s197 + $0x78] sm:$0xff]
      %v4962 = vld [vmem:[%s197 + $0x80] sm:$0xff]
      %v4963 = vld [vmem:[%s197 + $0x88] sm:$0xff]
      %v4964 = vld [vmem:[%s197 + $0x90] sm:$0xff]
      %v4965 = vld [vmem:[%s206] sm:$0xff]
      %v4966 = vld [vmem:[%s206 + $0x8] sm:$0xff]
      %v4967 = vld [vmem:[%s206 + $0x10] sm:$0xff]
      %v4968 = vld [vmem:[%s206 + $0x18] sm:$0xff]
      %v4969 = vld [vmem:[%s206 + $0x20] sm:$0xff]
      %v4970 = vld [vmem:[%s206 + $0x28] sm:$0xff]
      %v4971 = vld [vmem:[%s206 + $0x30] sm:$0xff]
      %v4972 = vld [vmem:[%s206 + $0x38] sm:$0xff]
      %v4973 = vld [vmem:[%s206 + $0x40] sm:$0xff]
      %v4974 = vld [vmem:[%s206 + $0x48] sm:$0xff]
      %v4975 = vld [vmem:[%s206 + $0x50] sm:$0xff]
      %v4976 = vld [vmem:[%s206 + $0x58] sm:$0xff]
      %v4977 = vld [vmem:[%s206 + $0x60] sm:$0xff]
      %v4978 = vld [vmem:[%s206 + $0x68] sm:$0xff]
      %v4979 = vld [vmem:[%s206 + $0x70] sm:$0xff]
      %v4980 = vld [vmem:[%s206 + $0x78] sm:$0xff]
      %v4981 = vld [vmem:[%s206 + $0x80] sm:$0xff]
      %s4982 = scalar_lea.vmem %s1, 48
      %v4983 = vld [vmem:[%s4982] sm:$0xff]
      %5002 = vrot.lane.b32.xlu0 %v4947, 124
      %v5003 = vpop.permute.xlu0 %5002
      %5004 = vrot.lane.b32.xlu0 %v4948, 124
      %v5005 = vpop.permute.xlu0 %5004
      %5006 = vrot.lane.b32.xlu0 %v4949, 124
      %v5007 = vpop.permute.xlu0 %5006
      %5008 = vrot.lane.b32.xlu0 %v4950, 124
      %v5009 = vpop.permute.xlu0 %5008
      %5010 = vrot.lane.b32.xlu0 %v4951, 124
      %v5011 = vpop.permute.xlu0 %5010
      %5012 = vrot.lane.b32.xlu0 %v4952, 124
      %v5013 = vpop.permute.xlu0 %5012
      %5014 = vrot.lane.b32.xlu0 %v4953, 124
      %v5015 = vpop.permute.xlu0 %5014
      %5016 = vrot.lane.b32.xlu0 %v4954, 124
      %v5017 = vpop.permute.xlu0 %5016
      %5018 = vrot.lane.b32.xlu0 %v4955, 124
      %v5019 = vpop.permute.xlu0 %5018
      %5020 = vrot.lane.b32.xlu0 %v4956, 124
      %v5021 = vpop.permute.xlu0 %5020
      %5022 = vrot.lane.b32.xlu0 %v4957, 124
      %v5023 = vpop.permute.xlu0 %5022
      %5024 = vrot.lane.b32.xlu0 %v4958, 124
      %v5025 = vpop.permute.xlu0 %5024
      %5026 = vrot.lane.b32.xlu0 %v4959, 124
      %v5027 = vpop.permute.xlu0 %5026
      %5028 = vrot.lane.b32.xlu0 %v4960, 124
      %v5029 = vpop.permute.xlu0 %5028
      %5030 = vrot.lane.b32.xlu0 %v4961, 124
      %v5031 = vpop.permute.xlu0 %5030
      %5032 = vrot.lane.b32.xlu0 %v4962, 124
      %v5033 = vpop.permute.xlu0 %5032
      %5034 = vrot.lane.b32.xlu0 %v4963, 124
      %v5035 = vpop.permute.xlu0 %5034
      %5036 = vrot.lane.b32.xlu0 %v4964, 124
      %v5037 = vpop.permute.xlu0 %5036
      %vm5038 = vcmask 1014784
      %v5039 = vsel %vm5038, %v5003, %v5005
      %v5040 = vsel %vm5038, %v5005, %v5007
      %v5041 = vsel %vm5038, %v5007, %v5009
      %v5042 = vsel %vm5038, %v5009, %v5011
      %v5043 = vsel %vm5038, %v5011, %v5013
      %v5044 = vsel %vm5038, %v5013, %v5015
      %v5045 = vsel %vm5038, %v5015, %v5017
      %v5046 = vsel %vm5038, %v5017, %v5019
      %v5047 = vsel %vm5038, %v5019, %v5021
      %v5048 = vsel %vm5038, %v5021, %v5023
      %v5049 = vsel %vm5038, %v5023, %v5025
      %v5050 = vsel %vm5038, %v5025, %v5027
      %v5051 = vsel %vm5038, %v5027, %v5029
      %v5052 = vsel %vm5038, %v5029, %v5031
      %v5053 = vsel %vm5038, %v5031, %v5033
      %v5054 = vsel %vm5038, %v5033, %v5035
      %v5055 = vsel %vm5038, %v5035, %v5037
      %v5074 = vsel %vm266, %v4983, 0
      %5076 = vmatprep.subr.mxu0 %v5040
      %5077 = vmatpush1.msra.mxu0 %v5039
      %5078 = vmatprep.subr.mxu0 0.0
      %5079 = vmatpush1.msra.mxu0 0.0
      %5080 = vmatprep.subr.mxu0 0.0
      %5081 = vmatpush1.msra.mxu0 0.0
      %5082 = vmatprep.subr.mxu0 0.0
      %5083 = vmatpush1.msra.mxu0 0.0
      %5084 = vmatprep.subr.mxu0 0.0
      %5085 = vmatpush1.msra.mxu0 0.0
      %5086 = vmatprep.subr.mxu0 0.0
      %5087 = vmatpush1.msra.mxu0 0.0
      %5088 = vmatprep.subr.mxu0 0.0
      %5089 = vmatpush1.msra.mxu0 0.0
      %5090 = vmatprep.subr.mxu0 0.0
      %5091 = vmatpush1.msra.mxu0 0.0
      %5092 = vmatprep.subr.mxu0 0.0
      %5093 = vmatpush1.msra.mxu0 0.0
      %5094 = vmatprep.subr.mxu0 0.0
      %5095 = vmatpush1.msra.mxu0 0.0
      %5096 = vmatprep.subr.mxu0 0.0
      %5097 = vmatpush1.msra.mxu0 0.0
      %5098 = vmatprep.subr.mxu0 0.0
      %5099 = vmatpush1.msra.mxu0 0.0
      %5100 = vmatprep.subr.mxu0 0.0
      %5101 = vmatpush1.msra.mxu0 0.0
      %5102 = vmatprep.subr.mxu0 0.0
      %5103 = vmatpush1.msra.mxu0 0.0
      %5104 = vmatprep.subr.mxu0 0.0
      %5105 = vmatpush1.msra.mxu0 0.0
      %5106 = vmatprep.subr.mxu0 0.0
      %5107 = vmatpush1.msra.mxu0 0.0
      %5108 = vmatprep.subr.mxu0 0.0
      %5109 = vmatpush1.msra.mxu0 0.0
      %5110 = vmatprep.subr.mxu0 0.0
      %5111 = vmatpush1.msra.mxu0 0.0
      %5112 = vmatprep.subr.mxu0 0.0
      %5113 = vmatpush1.msra.mxu0 0.0
      %5114 = vmatprep.subr.mxu0 0.0
      %5115 = vmatpush1.msra.mxu0 0.0
      %5116 = vmatprep.subr.mxu0 0.0
      %5117 = vmatpush1.msra.mxu0 0.0
      %5118 = vmatprep.subr.mxu0 0.0
      %5119 = vmatpush1.msra.mxu0 0.0
      %5120 = vmatprep.subr.mxu0 0.0
      %5121 = vmatpush1.msra.mxu0 0.0
      %5122 = vmatprep.subr.mxu0 0.0
      %5123 = vmatpush1.msra.mxu0 0.0
      %5124 = vmatprep.subr.mxu0 0.0
      %5125 = vmatpush1.msra.mxu0 0.0
      %5126 = vmatprep.subr.mxu0 0.0
      %5127 = vmatpush1.msra.mxu0 0.0
      %5128 = vmatprep.subr.mxu0 0.0
      %5129 = vmatpush1.msra.mxu0 0.0
      %5130 = vmatprep.subr.mxu0 0.0
      %5131 = vmatpush1.msra.mxu0 0.0
      %5132 = vmatprep.subr.mxu0 0.0
      %5133 = vmatpush1.msra.mxu0 0.0
      %5134 = vmatprep.subr.mxu0 0.0
      %5135 = vmatpush1.msra.mxu0 0.0
      %5136 = vmatprep.subr.mxu0 0.0
      %5137 = vmatpush1.msra.mxu0 0.0
      %5138 = vmatprep.subr.mxu0 0.0
      %5139 = vmatpush1.msra.mxu0 0.0
      %5140 = vmatprep.mubr.f32.mxu0 0.0
      %5141 = vmatmul.mubr.f32.gmra.mrb[0].mxu0 %v5074
      %v5142 = vpop.f32.mrb[0].mxu0
      %v5143 = vadd.f32 0.0, %v5142
      %v5144 = vpop.f32.mrb[0].mxu0
      %v5145 = vadd.f32 0.0, %v5144
      %5146 = vdwg.mxu0
      %5147 = vmatprep.subr.mxu0 %v5042
      %5148 = vmatpush1.msra.mxu0 %v5041
      %5149 = vmatprep.subr.mxu0 0.0
      %5150 = vmatpush1.msra.mxu0 0.0
      %5151 = vmatprep.subr.mxu0 0.0
      %5152 = vmatpush1.msra.mxu0 0.0
      %5153 = vmatprep.subr.mxu0 0.0
      %5154 = vmatpush1.msra.mxu0 0.0
      %5155 = vmatprep.subr.mxu0 0.0
      %5156 = vmatpush1.msra.mxu0 0.0
      %5157 = vmatprep.subr.mxu0 0.0
      %5158 = vmatpush1.msra.mxu0 0.0
      %5159 = vmatprep.subr.mxu0 0.0
      %5160 = vmatpush1.msra.mxu0 0.0
      %5161 = vmatprep.subr.mxu0 0.0
      %5162 = vmatpush1.msra.mxu0 0.0
      %5163 = vmatprep.subr.mxu0 0.0
      %5164 = vmatpush1.msra.mxu0 0.0
      %5165 = vmatprep.subr.mxu0 0.0
      %5166 = vmatpush1.msra.mxu0 0.0
      %5167 = vmatprep.subr.mxu0 0.0
      %5168 = vmatpush1.msra.mxu0 0.0
      %5169 = vmatprep.subr.mxu0 0.0
      %5170 = vmatpush1.msra.mxu0 0.0
      %5171 = vmatprep.subr.mxu0 0.0
      %5172 = vmatpush1.msra.mxu0 0.0
      %5173 = vmatprep.subr.mxu0 0.0
      %5174 = vmatpush1.msra.mxu0 0.0
      %5175 = vmatprep.subr.mxu0 0.0
      %5176 = vmatpush1.msra.mxu0 0.0
      %5177 = vmatprep.subr.mxu0 0.0
      %5178 = vmatpush1.msra.mxu0 0.0
      %5179 = vmatprep.subr.mxu0 0.0
      %5180 = vmatpush1.msra.mxu0 0.0
      %5181 = vmatprep.subr.mxu0 0.0
      %5182 = vmatpush1.msra.mxu0 0.0
      %5183 = vmatprep.subr.mxu0 0.0
      %5184 = vmatpush1.msra.mxu0 0.0
      %5185 = vmatprep.subr.mxu0 0.0
      %5186 = vmatpush1.msra.mxu0 0.0
      %5187 = vmatprep.subr.mxu0 0.0
      %5188 = vmatpush1.msra.mxu0 0.0
      %5189 = vmatprep.subr.mxu0 0.0
      %5190 = vmatpush1.msra.mxu0 0.0
      %5191 = vmatprep.subr.mxu0 0.0
      %5192 = vmatpush1.msra.mxu0 0.0
      %5193 = vmatprep.subr.mxu0 0.0
      %5194 = vmatpush1.msra.mxu0 0.0
      %5195 = vmatprep.subr.mxu0 0.0
      %5196 = vmatpush1.msra.mxu0 0.0
      %5197 = vmatprep.subr.mxu0 0.0
      %5198 = vmatpush1.msra.mxu0 0.0
      %5199 = vmatprep.subr.mxu0 0.0
      %5200 = vmatpush1.msra.mxu0 0.0
      %5201 = vmatprep.subr.mxu0 0.0
      %5202 = vmatpush1.msra.mxu0 0.0
      %5203 = vmatprep.subr.mxu0 0.0
      %5204 = vmatpush1.msra.mxu0 0.0
      %5205 = vmatprep.subr.mxu0 0.0
      %5206 = vmatpush1.msra.mxu0 0.0
      %5207 = vmatprep.subr.mxu0 0.0
      %5208 = vmatpush1.msra.mxu0 0.0
      %5209 = vmatprep.subr.mxu0 0.0
      %5210 = vmatpush1.msra.mxu0 0.0
      %5211 = vmatprep.mubr.f32.mxu0 0.0
      %5212 = vmatmul.mubr.f32.gmra.mrb[0].mxu0 %v5074
      %v5213 = vpop.f32.mrb[0].mxu0
      %v5214 = vadd.f32 0.0, %v5213
      %v5215 = vpop.f32.mrb[0].mxu0
      %v5216 = vadd.f32 0.0, %v5215
      %5217 = vdwg.mxu0
      %5218 = vmatprep.subr.mxu0 %v5044
      %5219 = vmatpush1.msra.mxu0 %v5043
      %5220 = vmatprep.subr.mxu0 0.0
      %5221 = vmatpush1.msra.mxu0 0.0
      %5222 = vmatprep.subr.mxu0 0.0
      %5223 = vmatpush1.msra.mxu0 0.0
      %5224 = vmatprep.subr.mxu0 0.0
      %5225 = vmatpush1.msra.mxu0 0.0
      %5226 = vmatprep.subr.mxu0 0.0
      %5227 = vmatpush1.msra.mxu0 0.0
      %5228 = vmatprep.subr.mxu0 0.0
      %5229 = vmatpush1.msra.mxu0 0.0
      %5230 = vmatprep.subr.mxu0 0.0
      %5231 = vmatpush1.msra.mxu0 0.0
      %5232 = vmatprep.subr.mxu0 0.0
      %5233 = vmatpush1.msra.mxu0 0.0
      %5234 = vmatprep.subr.mxu0 0.0
      %5235 = vmatpush1.msra.mxu0 0.0
      %5236 = vmatprep.subr.mxu0 0.0
      %5237 = vmatpush1.msra.mxu0 0.0
      %5238 = vmatprep.subr.mxu0 0.0
      %5239 = vmatpush1.msra.mxu0 0.0
      %5240 = vmatprep.subr.mxu0 0.0
      %5241 = vmatpush1.msra.mxu0 0.0
      %5242 = vmatprep.subr.mxu0 0.0
      %5243 = vmatpush1.msra.mxu0 0.0
      %5244 = vmatprep.subr.mxu0 0.0
      %5245 = vmatpush1.msra.mxu0 0.0
      %5246 = vmatprep.subr.mxu0 0.0
      %5247 = vmatpush1.msra.mxu0 0.0
      %5248 = vmatprep.subr.mxu0 0.0
      %5249 = vmatpush1.msra.mxu0 0.0
      %5250 = vmatprep.subr.mxu0 0.0
      %5251 = vmatpush1.msra.mxu0 0.0
      %5252 = vmatprep.subr.mxu0 0.0
      %5253 = vmatpush1.msra.mxu0 0.0
      %5254 = vmatprep.subr.mxu0 0.0
      %5255 = vmatpush1.msra.mxu0 0.0
      %5256 = vmatprep.subr.mxu0 0.0
      %5257 = vmatpush1.msra.mxu0 0.0
      %5258 = vmatprep.subr.mxu0 0.0
      %5259 = vmatpush1.msra.mxu0 0.0
      %5260 = vmatprep.subr.mxu0 0.0
      %5261 = vmatpush1.msra.mxu0 0.0
      %5262 = vmatprep.subr.mxu0 0.0
      %5263 = vmatpush1.msra.mxu0 0.0
      %5264 = vmatprep.subr.mxu0 0.0
      %5265 = vmatpush1.msra.mxu0 0.0
      %5266 = vmatprep.subr.mxu0 0.0
      %5267 = vmatpush1.msra.mxu0 0.0
      %5268 = vmatprep.subr.mxu0 0.0
      %5269 = vmatpush1.msra.mxu0 0.0
      %5270 = vmatprep.subr.mxu0 0.0
      %5271 = vmatpush1.msra.mxu0 0.0
      %5272 = vmatprep.subr.mxu0 0.0
      %5273 = vmatpush1.msra.mxu0 0.0
      %5274 = vmatprep.subr.mxu0 0.0
      %5275 = vmatpush1.msra.mxu0 0.0
      %5276 = vmatprep.subr.mxu0 0.0
      %5277 = vmatpush1.msra.mxu0 0.0
      %5278 = vmatprep.subr.mxu0 0.0
      %5279 = vmatpush1.msra.mxu0 0.0
      %5280 = vmatprep.subr.mxu0 0.0
      %5281 = vmatpush1.msra.mxu0 0.0
      %5282 = vmatprep.mubr.f32.mxu0 0.0
      %5283 = vmatmul.mubr.f32.gmra.mrb[0].mxu0 %v5074
      %v5284 = vpop.f32.mrb[0].mxu0
      %v5285 = vadd.f32 0.0, %v5284
      %v5286 = vpop.f32.mrb[0].mxu0
      %v5287 = vadd.f32 0.0, %v5286
      %5288 = vdwg.mxu0
      %5289 = vmatprep.subr.mxu0 %v5046
      %5290 = vmatpush1.msra.mxu0 %v5045
      %5291 = vmatprep.subr.mxu0 0.0
      %5292 = vmatpush1.msra.mxu0 0.0
      %5293 = vmatprep.subr.mxu0 0.0
      %5294 = vmatpush1.msra.mxu0 0.0
      %5295 = vmatprep.subr.mxu0 0.0
      %5296 = vmatpush1.msra.mxu0 0.0
      %5297 = vmatprep.subr.mxu0 0.0
      %5298 = vmatpush1.msra.mxu0 0.0
      %5299 = vmatprep.subr.mxu0 0.0
      %5300 = vmatpush1.msra.mxu0 0.0
      %5301 = vmatprep.subr.mxu0 0.0
      %5302 = vmatpush1.msra.mxu0 0.0
      %5303 = vmatprep.subr.mxu0 0.0
      %5304 = vmatpush1.msra.mxu0 0.0
      %5305 = vmatprep.subr.mxu0 0.0
      %5306 = vmatpush1.msra.mxu0 0.0
      %5307 = vmatprep.subr.mxu0 0.0
      %5308 = vmatpush1.msra.mxu0 0.0
      %5309 = vmatprep.subr.mxu0 0.0
      %5310 = vmatpush1.msra.mxu0 0.0
      %5311 = vmatprep.subr.mxu0 0.0
      %5312 = vmatpush1.msra.mxu0 0.0
      %5313 = vmatprep.subr.mxu0 0.0
      %5314 = vmatpush1.msra.mxu0 0.0
      %5315 = vmatprep.subr.mxu0 0.0
      %5316 = vmatpush1.msra.mxu0 0.0
      %5317 = vmatprep.subr.mxu0 0.0
      %5318 = vmatpush1.msra.mxu0 0.0
      %5319 = vmatprep.subr.mxu0 0.0
      %5320 = vmatpush1.msra.mxu0 0.0
      %5321 = vmatprep.subr.mxu0 0.0
      %5322 = vmatpush1.msra.mxu0 0.0
      %5323 = vmatprep.subr.mxu0 0.0
      %5324 = vmatpush1.msra.mxu0 0.0
      %5325 = vmatprep.subr.mxu0 0.0
      %5326 = vmatpush1.msra.mxu0 0.0
      %5327 = vmatprep.subr.mxu0 0.0
      %5328 = vmatpush1.msra.mxu0 0.0
      %5329 = vmatprep.subr.mxu0 0.0
      %5330 = vmatpush1.msra.mxu0 0.0
      %5331 = vmatprep.subr.mxu0 0.0
      %5332 = vmatpush1.msra.mxu0 0.0
      %5333 = vmatprep.subr.mxu0 0.0
      %5334 = vmatpush1.msra.mxu0 0.0
      %5335 = vmatprep.subr.mxu0 0.0
      %5336 = vmatpush1.msra.mxu0 0.0
      %5337 = vmatprep.subr.mxu0 0.0
      %5338 = vmatpush1.msra.mxu0 0.0
      %5339 = vmatprep.subr.mxu0 0.0
      %5340 = vmatpush1.msra.mxu0 0.0
      %5341 = vmatprep.subr.mxu0 0.0
      %5342 = vmatpush1.msra.mxu0 0.0
      %5343 = vmatprep.subr.mxu0 0.0
      %5344 = vmatpush1.msra.mxu0 0.0
      %5345 = vmatprep.subr.mxu0 0.0
      %5346 = vmatpush1.msra.mxu0 0.0
      %5347 = vmatprep.subr.mxu0 0.0
      %5348 = vmatpush1.msra.mxu0 0.0
      %5349 = vmatprep.subr.mxu0 0.0
      %5350 = vmatpush1.msra.mxu0 0.0
      %5351 = vmatprep.subr.mxu0 0.0
      %5352 = vmatpush1.msra.mxu0 0.0
      %5353 = vmatprep.mubr.f32.mxu0 0.0
      %5354 = vmatmul.mubr.f32.gmra.mrb[0].mxu0 %v5074
      %v5355 = vpop.f32.mrb[0].mxu0
      %v5356 = vadd.f32 0.0, %v5355
      %v5357 = vpop.f32.mrb[0].mxu0
      %v5358 = vadd.f32 0.0, %v5357
      %5359 = vdwg.mxu0
      %5360 = vmatprep.subr.mxu0 %v5048
      %5361 = vmatpush1.msra.mxu0 %v5047
      %5362 = vmatprep.subr.mxu0 0.0
      %5363 = vmatpush1.msra.mxu0 0.0
      %5364 = vmatprep.subr.mxu0 0.0
      %5365 = vmatpush1.msra.mxu0 0.0
      %5366 = vmatprep.subr.mxu0 0.0
      %5367 = vmatpush1.msra.mxu0 0.0
      %5368 = vmatprep.subr.mxu0 0.0
      %5369 = vmatpush1.msra.mxu0 0.0
      %5370 = vmatprep.subr.mxu0 0.0
      %5371 = vmatpush1.msra.mxu0 0.0
      %5372 = vmatprep.subr.mxu0 0.0
      %5373 = vmatpush1.msra.mxu0 0.0
      %5374 = vmatprep.subr.mxu0 0.0
      %5375 = vmatpush1.msra.mxu0 0.0
      %5376 = vmatprep.subr.mxu0 0.0
      %5377 = vmatpush1.msra.mxu0 0.0
      %5378 = vmatprep.subr.mxu0 0.0
      %5379 = vmatpush1.msra.mxu0 0.0
      %5380 = vmatprep.subr.mxu0 0.0
      %5381 = vmatpush1.msra.mxu0 0.0
      %5382 = vmatprep.subr.mxu0 0.0
      %5383 = vmatpush1.msra.mxu0 0.0
      %5384 = vmatprep.subr.mxu0 0.0
      %5385 = vmatpush1.msra.mxu0 0.0
      %5386 = vmatprep.subr.mxu0 0.0
      %5387 = vmatpush1.msra.mxu0 0.0
      %5388 = vmatprep.subr.mxu0 0.0
      %5389 = vmatpush1.msra.mxu0 0.0
      %5390 = vmatprep.subr.mxu0 0.0
      %5391 = vmatpush1.msra.mxu0 0.0
      %5392 = vmatprep.subr.mxu0 0.0
      %5393 = vmatpush1.msra.mxu0 0.0
      %5394 = vmatprep.subr.mxu0 0.0
      %5395 = vmatpush1.msra.mxu0 0.0
      %5396 = vmatprep.subr.mxu0 0.0
      %5397 = vmatpush1.msra.mxu0 0.0
      %5398 = vmatprep.subr.mxu0 0.0
      %5399 = vmatpush1.msra.mxu0 0.0
      %5400 = vmatprep.subr.mxu0 0.0
      %5401 = vmatpush1.msra.mxu0 0.0
      %5402 = vmatprep.subr.mxu0 0.0
      %5403 = vmatpush1.msra.mxu0 0.0
      %5404 = vmatprep.subr.mxu0 0.0
      %5405 = vmatpush1.msra.mxu0 0.0
      %5406 = vmatprep.subr.mxu0 0.0
      %5407 = vmatpush1.msra.mxu0 0.0
      %5408 = vmatprep.subr.mxu0 0.0
      %5409 = vmatpush1.msra.mxu0 0.0
      %5410 = vmatprep.subr.mxu0 0.0
      %5411 = vmatpush1.msra.mxu0 0.0
      %5412 = vmatprep.subr.mxu0 0.0
      %5413 = vmatpush1.msra.mxu0 0.0
      %5414 = vmatprep.subr.mxu0 0.0
      %5415 = vmatpush1.msra.mxu0 0.0
      %5416 = vmatprep.subr.mxu0 0.0
      %5417 = vmatpush1.msra.mxu0 0.0
      %5418 = vmatprep.subr.mxu0 0.0
      %5419 = vmatpush1.msra.mxu0 0.0
      %5420 = vmatprep.subr.mxu0 0.0
      %5421 = vmatpush1.msra.mxu0 0.0
      %5422 = vmatprep.subr.mxu0 0.0
      %5423 = vmatpush1.msra.mxu0 0.0
      %5424 = vmatprep.mubr.f32.mxu0 0.0
      %5425 = vmatmul.mubr.f32.gmra.mrb[0].mxu0 %v5074
      %v5426 = vpop.f32.mrb[0].mxu0
      %v5427 = vadd.f32 0.0, %v5426
      %v5428 = vpop.f32.mrb[0].mxu0
      %v5429 = vadd.f32 0.0, %v5428
      %5430 = vdwg.mxu0
      %5431 = vmatprep.subr.mxu0 %v5050
      %5432 = vmatpush1.msra.mxu0 %v5049
      %5433 = vmatprep.subr.mxu0 0.0
      %5434 = vmatpush1.msra.mxu0 0.0
      %5435 = vmatprep.subr.mxu0 0.0
      %5436 = vmatpush1.msra.mxu0 0.0
      %5437 = vmatprep.subr.mxu0 0.0
      %5438 = vmatpush1.msra.mxu0 0.0
      %5439 = vmatprep.subr.mxu0 0.0
      %5440 = vmatpush1.msra.mxu0 0.0
      %5441 = vmatprep.subr.mxu0 0.0
      %5442 = vmatpush1.msra.mxu0 0.0
      %5443 = vmatprep.subr.mxu0 0.0
      %5444 = vmatpush1.msra.mxu0 0.0
      %5445 = vmatprep.subr.mxu0 0.0
      %5446 = vmatpush1.msra.mxu0 0.0
      %5447 = vmatprep.subr.mxu0 0.0
      %5448 = vmatpush1.msra.mxu0 0.0
      %5449 = vmatprep.subr.mxu0 0.0
      %5450 = vmatpush1.msra.mxu0 0.0
      %5451 = vmatprep.subr.mxu0 0.0
      %5452 = vmatpush1.msra.mxu0 0.0
      %5453 = vmatprep.subr.mxu0 0.0
      %5454 = vmatpush1.msra.mxu0 0.0
      %5455 = vmatprep.subr.mxu0 0.0
      %5456 = vmatpush1.msra.mxu0 0.0
      %5457 = vmatprep.subr.mxu0 0.0
      %5458 = vmatpush1.msra.mxu0 0.0
      %5459 = vmatprep.subr.mxu0 0.0
      %5460 = vmatpush1.msra.mxu0 0.0
      %5461 = vmatprep.subr.mxu0 0.0
      %5462 = vmatpush1.msra.mxu0 0.0
      %5463 = vmatprep.subr.mxu0 0.0
      %5464 = vmatpush1.msra.mxu0 0.0
      %5465 = vmatprep.subr.mxu0 0.0
      %5466 = vmatpush1.msra.mxu0 0.0
      %5467 = vmatprep.subr.mxu0 0.0
      %5468 = vmatpush1.msra.mxu0 0.0
      %5469 = vmatprep.subr.mxu0 0.0
      %5470 = vmatpush1.msra.mxu0 0.0
      %5471 = vmatprep.subr.mxu0 0.0
      %5472 = vmatpush1.msra.mxu0 0.0
      %5473 = vmatprep.subr.mxu0 0.0
      %5474 = vmatpush1.msra.mxu0 0.0
      %5475 = vmatprep.subr.mxu0 0.0
      %5476 = vmatpush1.msra.mxu0 0.0
      %5477 = vmatprep.subr.mxu0 0.0
      %5478 = vmatpush1.msra.mxu0 0.0
      %5479 = vmatprep.subr.mxu0 0.0
      %5480 = vmatpush1.msra.mxu0 0.0
      %5481 = vmatprep.subr.mxu0 0.0
      %5482 = vmatpush1.msra.mxu0 0.0
      %5483 = vmatprep.subr.mxu0 0.0
      %5484 = vmatpush1.msra.mxu0 0.0
      %5485 = vmatprep.subr.mxu0 0.0
      %5486 = vmatpush1.msra.mxu0 0.0
      %5487 = vmatprep.subr.mxu0 0.0
      %5488 = vmatpush1.msra.mxu0 0.0
      %5489 = vmatprep.subr.mxu0 0.0
      %5490 = vmatpush1.msra.mxu0 0.0
      %5491 = vmatprep.subr.mxu0 0.0
      %5492 = vmatpush1.msra.mxu0 0.0
      %5493 = vmatprep.subr.mxu0 0.0
      %5494 = vmatpush1.msra.mxu0 0.0
      %5495 = vmatprep.mubr.f32.mxu0 0.0
      %5496 = vmatmul.mubr.f32.gmra.mrb[0].mxu0 %v5074
      %v5497 = vpop.f32.mrb[0].mxu0
      %v5498 = vadd.f32 0.0, %v5497
      %v5499 = vpop.f32.mrb[0].mxu0
      %v5500 = vadd.f32 0.0, %v5499
      %5501 = vdwg.mxu0
      %5502 = vmatprep.subr.mxu0 %v5052
      %5503 = vmatpush1.msra.mxu0 %v5051
      %5504 = vmatprep.subr.mxu0 0.0
      %5505 = vmatpush1.msra.mxu0 0.0
      %5506 = vmatprep.subr.mxu0 0.0
      %5507 = vmatpush1.msra.mxu0 0.0
      %5508 = vmatprep.subr.mxu0 0.0
      %5509 = vmatpush1.msra.mxu0 0.0
      %5510 = vmatprep.subr.mxu0 0.0
      %5511 = vmatpush1.msra.mxu0 0.0
      %5512 = vmatprep.subr.mxu0 0.0
      %5513 = vmatpush1.msra.mxu0 0.0
      %5514 = vmatprep.subr.mxu0 0.0
      %5515 = vmatpush1.msra.mxu0 0.0
      %5516 = vmatprep.subr.mxu0 0.0
      %5517 = vmatpush1.msra.mxu0 0.0
      %5518 = vmatprep.subr.mxu0 0.0
      %5519 = vmatpush1.msra.mxu0 0.0
      %5520 = vmatprep.subr.mxu0 0.0
      %5521 = vmatpush1.msra.mxu0 0.0
      %5522 = vmatprep.subr.mxu0 0.0
      %5523 = vmatpush1.msra.mxu0 0.0
      %5524 = vmatprep.subr.mxu0 0.0
      %5525 = vmatpush1.msra.mxu0 0.0
      %5526 = vmatprep.subr.mxu0 0.0
      %5527 = vmatpush1.msra.mxu0 0.0
      %5528 = vmatprep.subr.mxu0 0.0
      %5529 = vmatpush1.msra.mxu0 0.0
      %5530 = vmatprep.subr.mxu0 0.0
      %5531 = vmatpush1.msra.mxu0 0.0
      %5532 = vmatprep.subr.mxu0 0.0
      %5533 = vmatpush1.msra.mxu0 0.0
      %5534 = vmatprep.subr.mxu0 0.0
      %5535 = vmatpush1.msra.mxu0 0.0
      %5536 = vmatprep.subr.mxu0 0.0
      %5537 = vmatpush1.msra.mxu0 0.0
      %5538 = vmatprep.subr.mxu0 0.0
      %5539 = vmatpush1.msra.mxu0 0.0
      %5540 = vmatprep.subr.mxu0 0.0
      %5541 = vmatpush1.msra.mxu0 0.0
      %5542 = vmatprep.subr.mxu0 0.0
      %5543 = vmatpush1.msra.mxu0 0.0
      %5544 = vmatprep.subr.mxu0 0.0
      %5545 = vmatpush1.msra.mxu0 0.0
      %5546 = vmatprep.subr.mxu0 0.0
      %5547 = vmatpush1.msra.mxu0 0.0
      %5548 = vmatprep.subr.mxu0 0.0
      %5549 = vmatpush1.msra.mxu0 0.0
      %5550 = vmatprep.subr.mxu0 0.0
      %5551 = vmatpush1.msra.mxu0 0.0
      %5552 = vmatprep.subr.mxu0 0.0
      %5553 = vmatpush1.msra.mxu0 0.0
      %5554 = vmatprep.subr.mxu0 0.0
      %5555 = vmatpush1.msra.mxu0 0.0
      %5556 = vmatprep.subr.mxu0 0.0
      %5557 = vmatpush1.msra.mxu0 0.0
      %5558 = vmatprep.subr.mxu0 0.0
      %5559 = vmatpush1.msra.mxu0 0.0
      %5560 = vmatprep.subr.mxu0 0.0
      %5561 = vmatpush1.msra.mxu0 0.0
      %5562 = vmatprep.subr.mxu0 0.0
      %5563 = vmatpush1.msra.mxu0 0.0
      %5564 = vmatprep.subr.mxu0 0.0
      %5565 = vmatpush1.msra.mxu0 0.0
      %5566 = vmatprep.mubr.f32.mxu0 0.0
      %5567 = vmatmul.mubr.f32.gmra.mrb[0].mxu0 %v5074
      %v5568 = vpop.f32.mrb[0].mxu0
      %v5569 = vadd.f32 0.0, %v5568
      %v5570 = vpop.f32.mrb[0].mxu0
      %v5571 = vadd.f32 0.0, %v5570
      %5572 = vdwg.mxu0
      %5573 = vmatprep.subr.mxu0 %v5054
      %5574 = vmatpush1.msra.mxu0 %v5053
      %5575 = vmatprep.subr.mxu0 0.0
      %5576 = vmatpush1.msra.mxu0 0.0
      %5577 = vmatprep.subr.mxu0 0.0
      %5578 = vmatpush1.msra.mxu0 0.0
      %5579 = vmatprep.subr.mxu0 0.0
      %5580 = vmatpush1.msra.mxu0 0.0
      %5581 = vmatprep.subr.mxu0 0.0
      %5582 = vmatpush1.msra.mxu0 0.0
      %5583 = vmatprep.subr.mxu0 0.0
      %5584 = vmatpush1.msra.mxu0 0.0
      %5585 = vmatprep.subr.mxu0 0.0
      %5586 = vmatpush1.msra.mxu0 0.0
      %5587 = vmatprep.subr.mxu0 0.0
      %5588 = vmatpush1.msra.mxu0 0.0
      %5589 = vmatprep.subr.mxu0 0.0
      %5590 = vmatpush1.msra.mxu0 0.0
      %5591 = vmatprep.subr.mxu0 0.0
      %5592 = vmatpush1.msra.mxu0 0.0
      %5593 = vmatprep.subr.mxu0 0.0
      %5594 = vmatpush1.msra.mxu0 0.0
      %5595 = vmatprep.subr.mxu0 0.0
      %5596 = vmatpush1.msra.mxu0 0.0
      %5597 = vmatprep.subr.mxu0 0.0
      %5598 = vmatpush1.msra.mxu0 0.0
      %5599 = vmatprep.subr.mxu0 0.0
      %5600 = vmatpush1.msra.mxu0 0.0
      %5601 = vmatprep.subr.mxu0 0.0
      %5602 = vmatpush1.msra.mxu0 0.0
      %5603 = vmatprep.subr.mxu0 0.0
      %5604 = vmatpush1.msra.mxu0 0.0
      %5605 = vmatprep.subr.mxu0 0.0
      %5606 = vmatpush1.msra.mxu0 0.0
      %5607 = vmatprep.subr.mxu0 0.0
      %5608 = vmatpush1.msra.mxu0 0.0
      %5609 = vmatprep.subr.mxu0 0.0
      %5610 = vmatpush1.msra.mxu0 0.0
      %5611 = vmatprep.subr.mxu0 0.0
      %5612 = vmatpush1.msra.mxu0 0.0
      %5613 = vmatprep.subr.mxu0 0.0
      %5614 = vmatpush1.msra.mxu0 0.0
      %5615 = vmatprep.subr.mxu0 0.0
      %5616 = vmatpush1.msra.mxu0 0.0
      %5617 = vmatprep.subr.mxu0 0.0
      %5618 = vmatpush1.msra.mxu0 0.0
      %5619 = vmatprep.subr.mxu0 0.0
      %5620 = vmatpush1.msra.mxu0 0.0
      %5621 = vmatprep.subr.mxu0 0.0
      %5622 = vmatpush1.msra.mxu0 0.0
      %5623 = vmatprep.subr.mxu0 0.0
      %5624 = vmatpush1.msra.mxu0 0.0
      %5625 = vmatprep.subr.mxu0 0.0
      %5626 = vmatpush1.msra.mxu0 0.0
      %5627 = vmatprep.subr.mxu0 0.0
      %5628 = vmatpush1.msra.mxu0 0.0
      %5629 = vmatprep.subr.mxu0 0.0
      %5630 = vmatpush1.msra.mxu0 0.0
      %5631 = vmatprep.subr.mxu0 0.0
      %5632 = vmatpush1.msra.mxu0 0.0
      %5633 = vmatprep.subr.mxu0 0.0
      %5634 = vmatpush1.msra.mxu0 0.0
      %5635 = vmatprep.subr.mxu0 0.0
      %5636 = vmatpush1.msra.mxu0 0.0
      %5637 = vmatprep.mubr.f32.mxu0 0.0
      %5638 = vmatmul.mubr.f32.gmra.mrb[0].mxu0 %v5074
      %v5639 = vpop.f32.mrb[0].mxu0
      %v5640 = vadd.f32 0.0, %v5639
      %v5641 = vpop.f32.mrb[0].mxu0
      %v5642 = vadd.f32 0.0, %v5641
      %5643 = vdwg.mxu0
      %5644 = vmatprep.subr.mxu0 0.0
      %5645 = vmatpush1.msra.mxu0 %v5055
      %5646 = vmatprep.subr.mxu0 0.0
      %5647 = vmatpush1.msra.mxu0 0.0
      %5648 = vmatprep.subr.mxu0 0.0
      %5649 = vmatpush1.msra.mxu0 0.0
      %5650 = vmatprep.subr.mxu0 0.0
      %5651 = vmatpush1.msra.mxu0 0.0
      %5652 = vmatprep.subr.mxu0 0.0
      %5653 = vmatpush1.msra.mxu0 0.0
      %5654 = vmatprep.subr.mxu0 0.0
      %5655 = vmatpush1.msra.mxu0 0.0
      %5656 = vmatprep.subr.mxu0 0.0
      %5657 = vmatpush1.msra.mxu0 0.0
      %5658 = vmatprep.subr.mxu0 0.0
      %5659 = vmatpush1.msra.mxu0 0.0
      %5660 = vmatprep.subr.mxu0 0.0
      %5661 = vmatpush1.msra.mxu0 0.0
      %5662 = vmatprep.subr.mxu0 0.0
      %5663 = vmatpush1.msra.mxu0 0.0
      %5664 = vmatprep.subr.mxu0 0.0
      %5665 = vmatpush1.msra.mxu0 0.0
      %5666 = vmatprep.subr.mxu0 0.0
      %5667 = vmatpush1.msra.mxu0 0.0
      %5668 = vmatprep.subr.mxu0 0.0
      %5669 = vmatpush1.msra.mxu0 0.0
      %5670 = vmatprep.subr.mxu0 0.0
      %5671 = vmatpush1.msra.mxu0 0.0
      %5672 = vmatprep.subr.mxu0 0.0
      %5673 = vmatpush1.msra.mxu0 0.0
      %5674 = vmatprep.subr.mxu0 0.0
      %5675 = vmatpush1.msra.mxu0 0.0
      %5676 = vmatprep.subr.mxu0 0.0
      %5677 = vmatpush1.msra.mxu0 0.0
      %5678 = vmatprep.subr.mxu0 0.0
      %5679 = vmatpush1.msra.mxu0 0.0
      %5680 = vmatprep.subr.mxu0 0.0
      %5681 = vmatpush1.msra.mxu0 0.0
      %5682 = vmatprep.subr.mxu0 0.0
      %5683 = vmatpush1.msra.mxu0 0.0
      %5684 = vmatprep.subr.mxu0 0.0
      %5685 = vmatpush1.msra.mxu0 0.0
      %5686 = vmatprep.subr.mxu0 0.0
      %5687 = vmatpush1.msra.mxu0 0.0
      %5688 = vmatprep.subr.mxu0 0.0
      %5689 = vmatpush1.msra.mxu0 0.0
      %5690 = vmatprep.subr.mxu0 0.0
      %5691 = vmatpush1.msra.mxu0 0.0
      %5692 = vmatprep.subr.mxu0 0.0
      %5693 = vmatpush1.msra.mxu0 0.0
      %5694 = vmatprep.subr.mxu0 0.0
      %5695 = vmatpush1.msra.mxu0 0.0
      %5696 = vmatprep.subr.mxu0 0.0
      %5697 = vmatpush1.msra.mxu0 0.0
      %5698 = vmatprep.subr.mxu0 0.0
      %5699 = vmatpush1.msra.mxu0 0.0
      %5700 = vmatprep.subr.mxu0 0.0
      %5701 = vmatpush1.msra.mxu0 0.0
      %5702 = vmatprep.subr.mxu0 0.0
      %5703 = vmatpush1.msra.mxu0 0.0
      %5704 = vmatprep.subr.mxu0 0.0
      %5705 = vmatpush1.msra.mxu0 0.0
      %5706 = vmatprep.subr.mxu0 0.0
      %5707 = vmatpush1.msra.mxu0 0.0
      %5708 = vmatprep.mubr.f32.mxu0 0.0
      %5709 = vmatmul.mubr.f32.gmra.mrb[0].mxu0 %v5074
      %v5710 = vpop.f32.mrb[0].mxu0
      %v5711 = vadd.f32 0.0, %v5710
      %v5712 = vpop.f32.mrb[0].mxu0
      %5713 = vdwg.mxu0
      %v5714 = vadd.f32 %v4965, %v5143
      %v5715 = vadd.f32 %v4966, %v5145
      %v5716 = vadd.f32 %v4967, %v5214
      %v5717 = vadd.f32 %v4968, %v5216
      %v5718 = vadd.f32 %v4969, %v5285
      %v5719 = vadd.f32 %v4970, %v5287
      %v5720 = vadd.f32 %v4971, %v5356
      %v5721 = vadd.f32 %v4972, %v5358
      %v5722 = vadd.f32 %v4973, %v5427
      %v5723 = vadd.f32 %v4974, %v5429
      %v5724 = vadd.f32 %v4975, %v5498
      %v5725 = vadd.f32 %v4976, %v5500
      %v5726 = vadd.f32 %v4977, %v5569
      %v5727 = vadd.f32 %v4978, %v5571
      %v5728 = vadd.f32 %v4979, %v5640
      %v5729 = vadd.f32 %v4980, %v5642
      %v5730 = vadd.f32 %v4981, %v5711
      %5731 = vst [vmem:[%s206] sm:$0xff] %v5714
      %5732 = vst [vmem:[%s206 + $0x8] sm:$0xff] %v5715
      %5733 = vst [vmem:[%s206 + $0x10] sm:$0xff] %v5716
      %5734 = vst [vmem:[%s206 + $0x18] sm:$0xff] %v5717
      %5735 = vst [vmem:[%s206 + $0x20] sm:$0xff] %v5718
      %5736 = vst [vmem:[%s206 + $0x28] sm:$0xff] %v5719
      %5737 = vst [vmem:[%s206 + $0x30] sm:$0xff] %v5720
      %5738 = vst [vmem:[%s206 + $0x38] sm:$0xff] %v5721
      %5739 = vst [vmem:[%s206 + $0x40] sm:$0xff] %v5722
      %5740 = vst [vmem:[%s206 + $0x48] sm:$0xff] %v5723
      %5741 = vst [vmem:[%s206 + $0x50] sm:$0xff] %v5724
      %5742 = vst [vmem:[%s206 + $0x58] sm:$0xff] %v5725
      %5743 = vst [vmem:[%s206 + $0x60] sm:$0xff] %v5726
      %5744 = vst [vmem:[%s206 + $0x68] sm:$0xff] %v5727
      %5745 = vst [vmem:[%s206 + $0x70] sm:$0xff] %v5728
      %5746 = vst [vmem:[%s206 + $0x78] sm:$0xff] %v5729
      %5747 = vst [vmem:[%s206 + $0x80] sm:$0xff] %v5730
      %v5748 = vld [vmem:[%s197 + $0x8] sm:$0xff]
      %v5749 = vld [vmem:[%s197 + $0x10] sm:$0xff]
      %v5750 = vld [vmem:[%s197 + $0x18] sm:$0xff]
      %v5751 = vld [vmem:[%s197 + $0x20] sm:$0xff]
      %v5752 = vld [vmem:[%s197 + $0x28] sm:$0xff]
      %v5753 = vld [vmem:[%s197 + $0x30] sm:$0xff]
      %v5754 = vld [vmem:[%s197 + $0x38] sm:$0xff]
      %v5755 = vld [vmem:[%s197 + $0x40] sm:$0xff]
      %v5756 = vld [vmem:[%s197 + $0x48] sm:$0xff]
      %v5757 = vld [vmem:[%s197 + $0x50] sm:$0xff]
      %v5758 = vld [vmem:[%s197 + $0x58] sm:$0xff]
      %v5759 = vld [vmem:[%s197 + $0x60] sm:$0xff]
      %v5760 = vld [vmem:[%s197 + $0x68] sm:$0xff]
      %v5761 = vld [vmem:[%s197 + $0x70] sm:$0xff]
      %v5762 = vld [vmem:[%s197 + $0x78] sm:$0xff]
      %v5763 = vld [vmem:[%s197 + $0x80] sm:$0xff]
      %v5764 = vld [vmem:[%s197 + $0x88] sm:$0xff]
      %v5765 = vld [vmem:[%s197 + $0x90] sm:$0xff]
      %v5766 = vld [vmem:[%s206] sm:$0xff]
      %v5767 = vld [vmem:[%s206 + $0x8] sm:$0xff]
      %v5768 = vld [vmem:[%s206 + $0x10] sm:$0xff]
      %v5769 = vld [vmem:[%s206 + $0x18] sm:$0xff]
      %v5770 = vld [vmem:[%s206 + $0x20] sm:$0xff]
      %v5771 = vld [vmem:[%s206 + $0x28] sm:$0xff]
      %v5772 = vld [vmem:[%s206 + $0x30] sm:$0xff]
      %v5773 = vld [vmem:[%s206 + $0x38] sm:$0xff]
      %v5774 = vld [vmem:[%s206 + $0x40] sm:$0xff]
      %v5775 = vld [vmem:[%s206 + $0x48] sm:$0xff]
      %v5776 = vld [vmem:[%s206 + $0x50] sm:$0xff]
      %v5777 = vld [vmem:[%s206 + $0x58] sm:$0xff]
      %v5778 = vld [vmem:[%s206 + $0x60] sm:$0xff]
      %v5779 = vld [vmem:[%s206 + $0x68] sm:$0xff]
      %v5780 = vld [vmem:[%s206 + $0x70] sm:$0xff]
      %v5781 = vld [vmem:[%s206 + $0x78] sm:$0xff]
      %v5782 = vld [vmem:[%s206 + $0x80] sm:$0xff]
      %s5783 = scalar_lea.vmem %s1, 56
      %v5784 = vld [vmem:[%s5783] sm:$0xff]
      %5803 = vrot.lane.b32.xlu0 %v5748, 123
      %v5804 = vpop.permute.xlu0 %5803
      %5805 = vrot.lane.b32.xlu0 %v5749, 123
      %v5806 = vpop.permute.xlu0 %5805
      %5807 = vrot.lane.b32.xlu0 %v5750, 123
      %v5808 = vpop.permute.xlu0 %5807
      %5809 = vrot.lane.b32.xlu0 %v5751, 123
      %v5810 = vpop.permute.xlu0 %5809
      %5811 = vrot.lane.b32.xlu0 %v5752, 123
      %v5812 = vpop.permute.xlu0 %5811
      %5813 = vrot.lane.b32.xlu0 %v5753, 123
      %v5814 = vpop.permute.xlu0 %5813
      %5815 = vrot.lane.b32.xlu0 %v5754, 123
      %v5816 = vpop.permute.xlu0 %5815
      %5817 = vrot.lane.b32.xlu0 %v5755, 123
      %v5818 = vpop.permute.xlu0 %5817
      %5819 = vrot.lane.b32.xlu0 %v5756, 123
      %v5820 = vpop.permute.xlu0 %5819
      %5821 = vrot.lane.b32.xlu0 %v5757, 123
      %v5822 = vpop.permute.xlu0 %5821
      %5823 = vrot.lane.b32.xlu0 %v5758, 123
      %v5824 = vpop.permute.xlu0 %5823
      %5825 = vrot.lane.b32.xlu0 %v5759, 123
      %v5826 = vpop.permute.xlu0 %5825
      %5827 = vrot.lane.b32.xlu0 %v5760, 123
      %v5828 = vpop.permute.xlu0 %5827
      %5829 = vrot.lane.b32.xlu0 %v5761, 123
      %v5830 = vpop.permute.xlu0 %5829
      %5831 = vrot.lane.b32.xlu0 %v5762, 123
      %v5832 = vpop.permute.xlu0 %5831
      %5833 = vrot.lane.b32.xlu0 %v5763, 123
      %v5834 = vpop.permute.xlu0 %5833
      %5835 = vrot.lane.b32.xlu0 %v5764, 123
      %v5836 = vpop.permute.xlu0 %5835
      %5837 = vrot.lane.b32.xlu0 %v5765, 123
      %v5838 = vpop.permute.xlu0 %5837
      %vm5839 = vcmask 1006592
      %v5840 = vsel %vm5839, %v5804, %v5806
      %v5841 = vsel %vm5839, %v5806, %v5808
      %v5842 = vsel %vm5839, %v5808, %v5810
      %v5843 = vsel %vm5839, %v5810, %v5812
      %v5844 = vsel %vm5839, %v5812, %v5814
      %v5845 = vsel %vm5839, %v5814, %v5816
      %v5846 = vsel %vm5839, %v5816, %v5818
      %v5847 = vsel %vm5839, %v5818, %v5820
      %v5848 = vsel %vm5839, %v5820, %v5822
      %v5849 = vsel %vm5839, %v5822, %v5824
      %v5850 = vsel %vm5839, %v5824, %v5826
      %v5851 = vsel %vm5839, %v5826, %v5828
      %v5852 = vsel %vm5839, %v5828, %v5830
      %v5853 = vsel %vm5839, %v5830, %v5832
      %v5854 = vsel %vm5839, %v5832, %v5834
      %v5855 = vsel %vm5839, %v5834, %v5836
      %v5856 = vsel %vm5839, %v5836, %v5838
      %v5875 = vsel %vm266, %v5784, 0
      %5877 = vmatprep.subr.mxu0 %v5841
      %5878 = vmatpush1.msra.mxu0 %v5840
      %5879 = vmatprep.subr.mxu0 0.0
      %5880 = vmatpush1.msra.mxu0 0.0
      %5881 = vmatprep.subr.mxu0 0.0
      %5882 = vmatpush1.msra.mxu0 0.0
      %5883 = vmatprep.subr.mxu0 0.0
      %5884 = vmatpush1.msra.mxu0 0.0
      %5885 = vmatprep.subr.mxu0 0.0
      %5886 = vmatpush1.msra.mxu0 0.0
      %5887 = vmatprep.subr.mxu0 0.0
      %5888 = vmatpush1.msra.mxu0 0.0
      %5889 = vmatprep.subr.mxu0 0.0
      %5890 = vmatpush1.msra.mxu0 0.0
      %5891 = vmatprep.subr.mxu0 0.0
      %5892 = vmatpush1.msra.mxu0 0.0
      %5893 = vmatprep.subr.mxu0 0.0
      %5894 = vmatpush1.msra.mxu0 0.0
      %5895 = vmatprep.subr.mxu0 0.0
      %5896 = vmatpush1.msra.mxu0 0.0
      %5897 = vmatprep.subr.mxu0 0.0
      %5898 = vmatpush1.msra.mxu0 0.0
      %5899 = vmatprep.subr.mxu0 0.0
      %5900 = vmatpush1.msra.mxu0 0.0
      %5901 = vmatprep.subr.mxu0 0.0
      %5902 = vmatpush1.msra.mxu0 0.0
      %5903 = vmatprep.subr.mxu0 0.0
      %5904 = vmatpush1.msra.mxu0 0.0
      %5905 = vmatprep.subr.mxu0 0.0
      %5906 = vmatpush1.msra.mxu0 0.0
      %5907 = vmatprep.subr.mxu0 0.0
      %5908 = vmatpush1.msra.mxu0 0.0
      %5909 = vmatprep.subr.mxu0 0.0
      %5910 = vmatpush1.msra.mxu0 0.0
      %5911 = vmatprep.subr.mxu0 0.0
      %5912 = vmatpush1.msra.mxu0 0.0
      %5913 = vmatprep.subr.mxu0 0.0
      %5914 = vmatpush1.msra.mxu0 0.0
      %5915 = vmatprep.subr.mxu0 0.0
      %5916 = vmatpush1.msra.mxu0 0.0
      %5917 = vmatprep.subr.mxu0 0.0
      %5918 = vmatpush1.msra.mxu0 0.0
      %5919 = vmatprep.subr.mxu0 0.0
      %5920 = vmatpush1.msra.mxu0 0.0
      %5921 = vmatprep.subr.mxu0 0.0
      %5922 = vmatpush1.msra.mxu0 0.0
      %5923 = vmatprep.subr.mxu0 0.0
      %5924 = vmatpush1.msra.mxu0 0.0
      %5925 = vmatprep.subr.mxu0 0.0
      %5926 = vmatpush1.msra.mxu0 0.0
      %5927 = vmatprep.subr.mxu0 0.0
      %5928 = vmatpush1.msra.mxu0 0.0
      %5929 = vmatprep.subr.mxu0 0.0
      %5930 = vmatpush1.msra.mxu0 0.0
      %5931 = vmatprep.subr.mxu0 0.0
      %5932 = vmatpush1.msra.mxu0 0.0
      %5933 = vmatprep.subr.mxu0 0.0
      %5934 = vmatpush1.msra.mxu0 0.0
      %5935 = vmatprep.subr.mxu0 0.0
      %5936 = vmatpush1.msra.mxu0 0.0
      %5937 = vmatprep.subr.mxu0 0.0
      %5938 = vmatpush1.msra.mxu0 0.0
      %5939 = vmatprep.subr.mxu0 0.0
      %5940 = vmatpush1.msra.mxu0 0.0
      %5941 = vmatprep.mubr.f32.mxu0 0.0
      %5942 = vmatmul.mubr.f32.gmra.mrb[0].mxu0 %v5875
      %v5943 = vpop.f32.mrb[0].mxu0
      %v5944 = vadd.f32 0.0, %v5943
      %v5945 = vpop.f32.mrb[0].mxu0
      %v5946 = vadd.f32 0.0, %v5945
      %5947 = vdwg.mxu0
      %5948 = vmatprep.subr.mxu0 %v5843
      %5949 = vmatpush1.msra.mxu0 %v5842
      %5950 = vmatprep.subr.mxu0 0.0
      %5951 = vmatpush1.msra.mxu0 0.0
      %5952 = vmatprep.subr.mxu0 0.0
      %5953 = vmatpush1.msra.mxu0 0.0
      %5954 = vmatprep.subr.mxu0 0.0
      %5955 = vmatpush1.msra.mxu0 0.0
      %5956 = vmatprep.subr.mxu0 0.0
      %5957 = vmatpush1.msra.mxu0 0.0
      %5958 = vmatprep.subr.mxu0 0.0
      %5959 = vmatpush1.msra.mxu0 0.0
      %5960 = vmatprep.subr.mxu0 0.0
      %5961 = vmatpush1.msra.mxu0 0.0
      %5962 = vmatprep.subr.mxu0 0.0
      %5963 = vmatpush1.msra.mxu0 0.0
      %5964 = vmatprep.subr.mxu0 0.0
      %5965 = vmatpush1.msra.mxu0 0.0
      %5966 = vmatprep.subr.mxu0 0.0
      %5967 = vmatpush1.msra.mxu0 0.0
      %5968 = vmatprep.subr.mxu0 0.0
      %5969 = vmatpush1.msra.mxu0 0.0
      %5970 = vmatprep.subr.mxu0 0.0
      %5971 = vmatpush1.msra.mxu0 0.0
      %5972 = vmatprep.subr.mxu0 0.0
      %5973 = vmatpush1.msra.mxu0 0.0
      %5974 = vmatprep.subr.mxu0 0.0
      %5975 = vmatpush1.msra.mxu0 0.0
      %5976 = vmatprep.subr.mxu0 0.0
      %5977 = vmatpush1.msra.mxu0 0.0
      %5978 = vmatprep.subr.mxu0 0.0
      %5979 = vmatpush1.msra.mxu0 0.0
      %5980 = vmatprep.subr.mxu0 0.0
      %5981 = vmatpush1.msra.mxu0 0.0
      %5982 = vmatprep.subr.mxu0 0.0
      %5983 = vmatpush1.msra.mxu0 0.0
      %5984 = vmatprep.subr.mxu0 0.0
      %5985 = vmatpush1.msra.mxu0 0.0
      %5986 = vmatprep.subr.mxu0 0.0
      %5987 = vmatpush1.msra.mxu0 0.0
      %5988 = vmatprep.subr.mxu0 0.0
      %5989 = vmatpush1.msra.mxu0 0.0
      %5990 = vmatprep.subr.mxu0 0.0
      %5991 = vmatpush1.msra.mxu0 0.0
      %5992 = vmatprep.subr.mxu0 0.0
      %5993 = vmatpush1.msra.mxu0 0.0
      %5994 = vmatprep.subr.mxu0 0.0
      %5995 = vmatpush1.msra.mxu0 0.0
      %5996 = vmatprep.subr.mxu0 0.0
      %5997 = vmatpush1.msra.mxu0 0.0
      %5998 = vmatprep.subr.mxu0 0.0
      %5999 = vmatpush1.msra.mxu0 0.0
      %6000 = vmatprep.subr.mxu0 0.0
      %6001 = vmatpush1.msra.mxu0 0.0
      %6002 = vmatprep.subr.mxu0 0.0
      %6003 = vmatpush1.msra.mxu0 0.0
      %6004 = vmatprep.subr.mxu0 0.0
      %6005 = vmatpush1.msra.mxu0 0.0
      %6006 = vmatprep.subr.mxu0 0.0
      %6007 = vmatpush1.msra.mxu0 0.0
      %6008 = vmatprep.subr.mxu0 0.0
      %6009 = vmatpush1.msra.mxu0 0.0
      %6010 = vmatprep.subr.mxu0 0.0
      %6011 = vmatpush1.msra.mxu0 0.0
      %6012 = vmatprep.mubr.f32.mxu0 0.0
      %6013 = vmatmul.mubr.f32.gmra.mrb[0].mxu0 %v5875
      %v6014 = vpop.f32.mrb[0].mxu0
      %v6015 = vadd.f32 0.0, %v6014
      %v6016 = vpop.f32.mrb[0].mxu0
      %v6017 = vadd.f32 0.0, %v6016
      %6018 = vdwg.mxu0
      %6019 = vmatprep.subr.mxu0 %v5845
      %6020 = vmatpush1.msra.mxu0 %v5844
      %6021 = vmatprep.subr.mxu0 0.0
      %6022 = vmatpush1.msra.mxu0 0.0
      %6023 = vmatprep.subr.mxu0 0.0
      %6024 = vmatpush1.msra.mxu0 0.0
      %6025 = vmatprep.subr.mxu0 0.0
      %6026 = vmatpush1.msra.mxu0 0.0
      %6027 = vmatprep.subr.mxu0 0.0
      %6028 = vmatpush1.msra.mxu0 0.0
      %6029 = vmatprep.subr.mxu0 0.0
      %6030 = vmatpush1.msra.mxu0 0.0
      %6031 = vmatprep.subr.mxu0 0.0
      %6032 = vmatpush1.msra.mxu0 0.0
      %6033 = vmatprep.subr.mxu0 0.0
      %6034 = vmatpush1.msra.mxu0 0.0
      %6035 = vmatprep.subr.mxu0 0.0
      %6036 = vmatpush1.msra.mxu0 0.0
      %6037 = vmatprep.subr.mxu0 0.0
      %6038 = vmatpush1.msra.mxu0 0.0
      %6039 = vmatprep.subr.mxu0 0.0
      %6040 = vmatpush1.msra.mxu0 0.0
      %6041 = vmatprep.subr.mxu0 0.0
      %6042 = vmatpush1.msra.mxu0 0.0
      %6043 = vmatprep.subr.mxu0 0.0
      %6044 = vmatpush1.msra.mxu0 0.0
      %6045 = vmatprep.subr.mxu0 0.0
      %6046 = vmatpush1.msra.mxu0 0.0
      %6047 = vmatprep.subr.mxu0 0.0
      %6048 = vmatpush1.msra.mxu0 0.0
      %6049 = vmatprep.subr.mxu0 0.0
      %6050 = vmatpush1.msra.mxu0 0.0
      %6051 = vmatprep.subr.mxu0 0.0
      %6052 = vmatpush1.msra.mxu0 0.0
      %6053 = vmatprep.subr.mxu0 0.0
      %6054 = vmatpush1.msra.mxu0 0.0
      %6055 = vmatprep.subr.mxu0 0.0
      %6056 = vmatpush1.msra.mxu0 0.0
      %6057 = vmatprep.subr.mxu0 0.0
      %6058 = vmatpush1.msra.mxu0 0.0
      %6059 = vmatprep.subr.mxu0 0.0
      %6060 = vmatpush1.msra.mxu0 0.0
      %6061 = vmatprep.subr.mxu0 0.0
      %6062 = vmatpush1.msra.mxu0 0.0
      %6063 = vmatprep.subr.mxu0 0.0
      %6064 = vmatpush1.msra.mxu0 0.0
      %6065 = vmatprep.subr.mxu0 0.0
      %6066 = vmatpush1.msra.mxu0 0.0
      %6067 = vmatprep.subr.mxu0 0.0
      %6068 = vmatpush1.msra.mxu0 0.0
      %6069 = vmatprep.subr.mxu0 0.0
      %6070 = vmatpush1.msra.mxu0 0.0
      %6071 = vmatprep.subr.mxu0 0.0
      %6072 = vmatpush1.msra.mxu0 0.0
      %6073 = vmatprep.subr.mxu0 0.0
      %6074 = vmatpush1.msra.mxu0 0.0
      %6075 = vmatprep.subr.mxu0 0.0
      %6076 = vmatpush1.msra.mxu0 0.0
      %6077 = vmatprep.subr.mxu0 0.0
      %6078 = vmatpush1.msra.mxu0 0.0
      %6079 = vmatprep.subr.mxu0 0.0
      %6080 = vmatpush1.msra.mxu0 0.0
      %6081 = vmatprep.subr.mxu0 0.0
      %6082 = vmatpush1.msra.mxu0 0.0
      %6083 = vmatprep.mubr.f32.mxu0 0.0
      %6084 = vmatmul.mubr.f32.gmra.mrb[0].mxu0 %v5875
      %v6085 = vpop.f32.mrb[0].mxu0
      %v6086 = vadd.f32 0.0, %v6085
      %v6087 = vpop.f32.mrb[0].mxu0
      %v6088 = vadd.f32 0.0, %v6087
      %6089 = vdwg.mxu0
      %6090 = vmatprep.subr.mxu0 %v5847
      %6091 = vmatpush1.msra.mxu0 %v5846
      %6092 = vmatprep.subr.mxu0 0.0
      %6093 = vmatpush1.msra.mxu0 0.0
      %6094 = vmatprep.subr.mxu0 0.0
      %6095 = vmatpush1.msra.mxu0 0.0
      %6096 = vmatprep.subr.mxu0 0.0
      %6097 = vmatpush1.msra.mxu0 0.0
      %6098 = vmatprep.subr.mxu0 0.0
      %6099 = vmatpush1.msra.mxu0 0.0
      %6100 = vmatprep.subr.mxu0 0.0
      %6101 = vmatpush1.msra.mxu0 0.0
      %6102 = vmatprep.subr.mxu0 0.0
      %6103 = vmatpush1.msra.mxu0 0.0
      %6104 = vmatprep.subr.mxu0 0.0
      %6105 = vmatpush1.msra.mxu0 0.0
      %6106 = vmatprep.subr.mxu0 0.0
      %6107 = vmatpush1.msra.mxu0 0.0
      %6108 = vmatprep.subr.mxu0 0.0
      %6109 = vmatpush1.msra.mxu0 0.0
      %6110 = vmatprep.subr.mxu0 0.0
      %6111 = vmatpush1.msra.mxu0 0.0
      %6112 = vmatprep.subr.mxu0 0.0
      %6113 = vmatpush1.msra.mxu0 0.0
      %6114 = vmatprep.subr.mxu0 0.0
      %6115 = vmatpush1.msra.mxu0 0.0
      %6116 = vmatprep.subr.mxu0 0.0
      %6117 = vmatpush1.msra.mxu0 0.0
      %6118 = vmatprep.subr.mxu0 0.0
      %6119 = vmatpush1.msra.mxu0 0.0
      %6120 = vmatprep.subr.mxu0 0.0
      %6121 = vmatpush1.msra.mxu0 0.0
      %6122 = vmatprep.subr.mxu0 0.0
      %6123 = vmatpush1.msra.mxu0 0.0
      %6124 = vmatprep.subr.mxu0 0.0
      %6125 = vmatpush1.msra.mxu0 0.0
      %6126 = vmatprep.subr.mxu0 0.0
      %6127 = vmatpush1.msra.mxu0 0.0
      %6128 = vmatprep.subr.mxu0 0.0
      %6129 = vmatpush1.msra.mxu0 0.0
      %6130 = vmatprep.subr.mxu0 0.0
      %6131 = vmatpush1.msra.mxu0 0.0
      %6132 = vmatprep.subr.mxu0 0.0
      %6133 = vmatpush1.msra.mxu0 0.0
      %6134 = vmatprep.subr.mxu0 0.0
      %6135 = vmatpush1.msra.mxu0 0.0
      %6136 = vmatprep.subr.mxu0 0.0
      %6137 = vmatpush1.msra.mxu0 0.0
      %6138 = vmatprep.subr.mxu0 0.0
      %6139 = vmatpush1.msra.mxu0 0.0
      %6140 = vmatprep.subr.mxu0 0.0
      %6141 = vmatpush1.msra.mxu0 0.0
      %6142 = vmatprep.subr.mxu0 0.0
      %6143 = vmatpush1.msra.mxu0 0.0
      %6144 = vmatprep.subr.mxu0 0.0
      %6145 = vmatpush1.msra.mxu0 0.0
      %6146 = vmatprep.subr.mxu0 0.0
      %6147 = vmatpush1.msra.mxu0 0.0
      %6148 = vmatprep.subr.mxu0 0.0
      %6149 = vmatpush1.msra.mxu0 0.0
      %6150 = vmatprep.subr.mxu0 0.0
      %6151 = vmatpush1.msra.mxu0 0.0
      %6152 = vmatprep.subr.mxu0 0.0
      %6153 = vmatpush1.msra.mxu0 0.0
      %6154 = vmatprep.mubr.f32.mxu0 0.0
      %6155 = vmatmul.mubr.f32.gmra.mrb[0].mxu0 %v5875
      %v6156 = vpop.f32.mrb[0].mxu0
      %v6157 = vadd.f32 0.0, %v6156
      %v6158 = vpop.f32.mrb[0].mxu0
      %v6159 = vadd.f32 0.0, %v6158
      %6160 = vdwg.mxu0
      %6161 = vmatprep.subr.mxu0 %v5849
      %6162 = vmatpush1.msra.mxu0 %v5848
      %6163 = vmatprep.subr.mxu0 0.0
      %6164 = vmatpush1.msra.mxu0 0.0
      %6165 = vmatprep.subr.mxu0 0.0
      %6166 = vmatpush1.msra.mxu0 0.0
      %6167 = vmatprep.subr.mxu0 0.0
      %6168 = vmatpush1.msra.mxu0 0.0
      %6169 = vmatprep.subr.mxu0 0.0
      %6170 = vmatpush1.msra.mxu0 0.0
      %6171 = vmatprep.subr.mxu0 0.0
      %6172 = vmatpush1.msra.mxu0 0.0
      %6173 = vmatprep.subr.mxu0 0.0
      %6174 = vmatpush1.msra.mxu0 0.0
      %6175 = vmatprep.subr.mxu0 0.0
      %6176 = vmatpush1.msra.mxu0 0.0
      %6177 = vmatprep.subr.mxu0 0.0
      %6178 = vmatpush1.msra.mxu0 0.0
      %6179 = vmatprep.subr.mxu0 0.0
      %6180 = vmatpush1.msra.mxu0 0.0
      %6181 = vmatprep.subr.mxu0 0.0
      %6182 = vmatpush1.msra.mxu0 0.0
      %6183 = vmatprep.subr.mxu0 0.0
      %6184 = vmatpush1.msra.mxu0 0.0
      %6185 = vmatprep.subr.mxu0 0.0
      %6186 = vmatpush1.msra.mxu0 0.0
      %6187 = vmatprep.subr.mxu0 0.0
      %6188 = vmatpush1.msra.mxu0 0.0
      %6189 = vmatprep.subr.mxu0 0.0
      %6190 = vmatpush1.msra.mxu0 0.0
      %6191 = vmatprep.subr.mxu0 0.0
      %6192 = vmatpush1.msra.mxu0 0.0
      %6193 = vmatprep.subr.mxu0 0.0
      %6194 = vmatpush1.msra.mxu0 0.0
      %6195 = vmatprep.subr.mxu0 0.0
      %6196 = vmatpush1.msra.mxu0 0.0
      %6197 = vmatprep.subr.mxu0 0.0
      %6198 = vmatpush1.msra.mxu0 0.0
      %6199 = vmatprep.subr.mxu0 0.0
      %6200 = vmatpush1.msra.mxu0 0.0
      %6201 = vmatprep.subr.mxu0 0.0
      %6202 = vmatpush1.msra.mxu0 0.0
      %6203 = vmatprep.subr.mxu0 0.0
      %6204 = vmatpush1.msra.mxu0 0.0
      %6205 = vmatprep.subr.mxu0 0.0
      %6206 = vmatpush1.msra.mxu0 0.0
      %6207 = vmatprep.subr.mxu0 0.0
      %6208 = vmatpush1.msra.mxu0 0.0
      %6209 = vmatprep.subr.mxu0 0.0
      %6210 = vmatpush1.msra.mxu0 0.0
      %6211 = vmatprep.subr.mxu0 0.0
      %6212 = vmatpush1.msra.mxu0 0.0
      %6213 = vmatprep.subr.mxu0 0.0
      %6214 = vmatpush1.msra.mxu0 0.0
      %6215 = vmatprep.subr.mxu0 0.0
      %6216 = vmatpush1.msra.mxu0 0.0
      %6217 = vmatprep.subr.mxu0 0.0
      %6218 = vmatpush1.msra.mxu0 0.0
      %6219 = vmatprep.subr.mxu0 0.0
      %6220 = vmatpush1.msra.mxu0 0.0
      %6221 = vmatprep.subr.mxu0 0.0
      %6222 = vmatpush1.msra.mxu0 0.0
      %6223 = vmatprep.subr.mxu0 0.0
      %6224 = vmatpush1.msra.mxu0 0.0
      %6225 = vmatprep.mubr.f32.mxu0 0.0
      %6226 = vmatmul.mubr.f32.gmra.mrb[0].mxu0 %v5875
      %v6227 = vpop.f32.mrb[0].mxu0
      %v6228 = vadd.f32 0.0, %v6227
      %v6229 = vpop.f32.mrb[0].mxu0
      %v6230 = vadd.f32 0.0, %v6229
      %6231 = vdwg.mxu0
      %6232 = vmatprep.subr.mxu0 %v5851
      %6233 = vmatpush1.msra.mxu0 %v5850
      %6234 = vmatprep.subr.mxu0 0.0
      %6235 = vmatpush1.msra.mxu0 0.0
      %6236 = vmatprep.subr.mxu0 0.0
      %6237 = vmatpush1.msra.mxu0 0.0
      %6238 = vmatprep.subr.mxu0 0.0
      %6239 = vmatpush1.msra.mxu0 0.0
      %6240 = vmatprep.subr.mxu0 0.0
      %6241 = vmatpush1.msra.mxu0 0.0
      %6242 = vmatprep.subr.mxu0 0.0
      %6243 = vmatpush1.msra.mxu0 0.0
      %6244 = vmatprep.subr.mxu0 0.0
      %6245 = vmatpush1.msra.mxu0 0.0
      %6246 = vmatprep.subr.mxu0 0.0
      %6247 = vmatpush1.msra.mxu0 0.0
      %6248 = vmatprep.subr.mxu0 0.0
      %6249 = vmatpush1.msra.mxu0 0.0
      %6250 = vmatprep.subr.mxu0 0.0
      %6251 = vmatpush1.msra.mxu0 0.0
      %6252 = vmatprep.subr.mxu0 0.0
      %6253 = vmatpush1.msra.mxu0 0.0
      %6254 = vmatprep.subr.mxu0 0.0
      %6255 = vmatpush1.msra.mxu0 0.0
      %6256 = vmatprep.subr.mxu0 0.0
      %6257 = vmatpush1.msra.mxu0 0.0
      %6258 = vmatprep.subr.mxu0 0.0
      %6259 = vmatpush1.msra.mxu0 0.0
      %6260 = vmatprep.subr.mxu0 0.0
      %6261 = vmatpush1.msra.mxu0 0.0
      %6262 = vmatprep.subr.mxu0 0.0
      %6263 = vmatpush1.msra.mxu0 0.0
      %6264 = vmatprep.subr.mxu0 0.0
      %6265 = vmatpush1.msra.mxu0 0.0
      %6266 = vmatprep.subr.mxu0 0.0
      %6267 = vmatpush1.msra.mxu0 0.0
      %6268 = vmatprep.subr.mxu0 0.0
      %6269 = vmatpush1.msra.mxu0 0.0
      %6270 = vmatprep.subr.mxu0 0.0
      %6271 = vmatpush1.msra.mxu0 0.0
      %6272 = vmatprep.subr.mxu0 0.0
      %6273 = vmatpush1.msra.mxu0 0.0
      %6274 = vmatprep.subr.mxu0 0.0
      %6275 = vmatpush1.msra.mxu0 0.0
      %6276 = vmatprep.subr.mxu0 0.0
      %6277 = vmatpush1.msra.mxu0 0.0
      %6278 = vmatprep.subr.mxu0 0.0
      %6279 = vmatpush1.msra.mxu0 0.0
      %6280 = vmatprep.subr.mxu0 0.0
      %6281 = vmatpush1.msra.mxu0 0.0
      %6282 = vmatprep.subr.mxu0 0.0
      %6283 = vmatpush1.msra.mxu0 0.0
      %6284 = vmatprep.subr.mxu0 0.0
      %6285 = vmatpush1.msra.mxu0 0.0
      %6286 = vmatprep.subr.mxu0 0.0
      %6287 = vmatpush1.msra.mxu0 0.0
      %6288 = vmatprep.subr.mxu0 0.0
      %6289 = vmatpush1.msra.mxu0 0.0
      %6290 = vmatprep.subr.mxu0 0.0
      %6291 = vmatpush1.msra.mxu0 0.0
      %6292 = vmatprep.subr.mxu0 0.0
      %6293 = vmatpush1.msra.mxu0 0.0
      %6294 = vmatprep.subr.mxu0 0.0
      %6295 = vmatpush1.msra.mxu0 0.0
      %6296 = vmatprep.mubr.f32.mxu0 0.0
      %6297 = vmatmul.mubr.f32.gmra.mrb[0].mxu0 %v5875
      %v6298 = vpop.f32.mrb[0].mxu0
      %v6299 = vadd.f32 0.0, %v6298
      %v6300 = vpop.f32.mrb[0].mxu0
      %v6301 = vadd.f32 0.0, %v6300
      %6302 = vdwg.mxu0
      %6303 = vmatprep.subr.mxu0 %v5853
      %6304 = vmatpush1.msra.mxu0 %v5852
      %6305 = vmatprep.subr.mxu0 0.0
      %6306 = vmatpush1.msra.mxu0 0.0
      %6307 = vmatprep.subr.mxu0 0.0
      %6308 = vmatpush1.msra.mxu0 0.0
      %6309 = vmatprep.subr.mxu0 0.0
      %6310 = vmatpush1.msra.mxu0 0.0
      %6311 = vmatprep.subr.mxu0 0.0
      %6312 = vmatpush1.msra.mxu0 0.0
      %6313 = vmatprep.subr.mxu0 0.0
      %6314 = vmatpush1.msra.mxu0 0.0
      %6315 = vmatprep.subr.mxu0 0.0
      %6316 = vmatpush1.msra.mxu0 0.0
      %6317 = vmatprep.subr.mxu0 0.0
      %6318 = vmatpush1.msra.mxu0 0.0
      %6319 = vmatprep.subr.mxu0 0.0
      %6320 = vmatpush1.msra.mxu0 0.0
      %6321 = vmatprep.subr.mxu0 0.0
      %6322 = vmatpush1.msra.mxu0 0.0
      %6323 = vmatprep.subr.mxu0 0.0
      %6324 = vmatpush1.msra.mxu0 0.0
      %6325 = vmatprep.subr.mxu0 0.0
      %6326 = vmatpush1.msra.mxu0 0.0
      %6327 = vmatprep.subr.mxu0 0.0
      %6328 = vmatpush1.msra.mxu0 0.0
      %6329 = vmatprep.subr.mxu0 0.0
      %6330 = vmatpush1.msra.mxu0 0.0
      %6331 = vmatprep.subr.mxu0 0.0
      %6332 = vmatpush1.msra.mxu0 0.0
      %6333 = vmatprep.subr.mxu0 0.0
      %6334 = vmatpush1.msra.mxu0 0.0
      %6335 = vmatprep.subr.mxu0 0.0
      %6336 = vmatpush1.msra.mxu0 0.0
      %6337 = vmatprep.subr.mxu0 0.0
      %6338 = vmatpush1.msra.mxu0 0.0
      %6339 = vmatprep.subr.mxu0 0.0
      %6340 = vmatpush1.msra.mxu0 0.0
      %6341 = vmatprep.subr.mxu0 0.0
      %6342 = vmatpush1.msra.mxu0 0.0
      %6343 = vmatprep.subr.mxu0 0.0
      %6344 = vmatpush1.msra.mxu0 0.0
      %6345 = vmatprep.subr.mxu0 0.0
      %6346 = vmatpush1.msra.mxu0 0.0
      %6347 = vmatprep.subr.mxu0 0.0
      %6348 = vmatpush1.msra.mxu0 0.0
      %6349 = vmatprep.subr.mxu0 0.0
      %6350 = vmatpush1.msra.mxu0 0.0
      %6351 = vmatprep.subr.mxu0 0.0
      %6352 = vmatpush1.msra.mxu0 0.0
      %6353 = vmatprep.subr.mxu0 0.0
      %6354 = vmatpush1.msra.mxu0 0.0
      %6355 = vmatprep.subr.mxu0 0.0
      %6356 = vmatpush1.msra.mxu0 0.0
      %6357 = vmatprep.subr.mxu0 0.0
      %6358 = vmatpush1.msra.mxu0 0.0
      %6359 = vmatprep.subr.mxu0 0.0
      %6360 = vmatpush1.msra.mxu0 0.0
      %6361 = vmatprep.subr.mxu0 0.0
      %6362 = vmatpush1.msra.mxu0 0.0
      %6363 = vmatprep.subr.mxu0 0.0
      %6364 = vmatpush1.msra.mxu0 0.0
      %6365 = vmatprep.subr.mxu0 0.0
      %6366 = vmatpush1.msra.mxu0 0.0
      %6367 = vmatprep.mubr.f32.mxu0 0.0
      %6368 = vmatmul.mubr.f32.gmra.mrb[0].mxu0 %v5875
      %v6369 = vpop.f32.mrb[0].mxu0
      %v6370 = vadd.f32 0.0, %v6369
      %v6371 = vpop.f32.mrb[0].mxu0
      %v6372 = vadd.f32 0.0, %v6371
      %6373 = vdwg.mxu0
      %6374 = vmatprep.subr.mxu0 %v5855
      %6375 = vmatpush1.msra.mxu0 %v5854
      %6376 = vmatprep.subr.mxu0 0.0
      %6377 = vmatpush1.msra.mxu0 0.0
      %6378 = vmatprep.subr.mxu0 0.0
      %6379 = vmatpush1.msra.mxu0 0.0
      %6380 = vmatprep.subr.mxu0 0.0
      %6381 = vmatpush1.msra.mxu0 0.0
      %6382 = vmatprep.subr.mxu0 0.0
      %6383 = vmatpush1.msra.mxu0 0.0
      %6384 = vmatprep.subr.mxu0 0.0
      %6385 = vmatpush1.msra.mxu0 0.0
      %6386 = vmatprep.subr.mxu0 0.0
      %6387 = vmatpush1.msra.mxu0 0.0
      %6388 = vmatprep.subr.mxu0 0.0
      %6389 = vmatpush1.msra.mxu0 0.0
      %6390 = vmatprep.subr.mxu0 0.0
      %6391 = vmatpush1.msra.mxu0 0.0
      %6392 = vmatprep.subr.mxu0 0.0
      %6393 = vmatpush1.msra.mxu0 0.0
      %6394 = vmatprep.subr.mxu0 0.0
      %6395 = vmatpush1.msra.mxu0 0.0
      %6396 = vmatprep.subr.mxu0 0.0
      %6397 = vmatpush1.msra.mxu0 0.0
      %6398 = vmatprep.subr.mxu0 0.0
      %6399 = vmatpush1.msra.mxu0 0.0
      %6400 = vmatprep.subr.mxu0 0.0
      %6401 = vmatpush1.msra.mxu0 0.0
      %6402 = vmatprep.subr.mxu0 0.0
      %6403 = vmatpush1.msra.mxu0 0.0
      %6404 = vmatprep.subr.mxu0 0.0
      %6405 = vmatpush1.msra.mxu0 0.0
      %6406 = vmatprep.subr.mxu0 0.0
      %6407 = vmatpush1.msra.mxu0 0.0
      %6408 = vmatprep.subr.mxu0 0.0
      %6409 = vmatpush1.msra.mxu0 0.0
      %6410 = vmatprep.subr.mxu0 0.0
      %6411 = vmatpush1.msra.mxu0 0.0
      %6412 = vmatprep.subr.mxu0 0.0
      %6413 = vmatpush1.msra.mxu0 0.0
      %6414 = vmatprep.subr.mxu0 0.0
      %6415 = vmatpush1.msra.mxu0 0.0
      %6416 = vmatprep.subr.mxu0 0.0
      %6417 = vmatpush1.msra.mxu0 0.0
      %6418 = vmatprep.subr.mxu0 0.0
      %6419 = vmatpush1.msra.mxu0 0.0
      %6420 = vmatprep.subr.mxu0 0.0
      %6421 = vmatpush1.msra.mxu0 0.0
      %6422 = vmatprep.subr.mxu0 0.0
      %6423 = vmatpush1.msra.mxu0 0.0
      %6424 = vmatprep.subr.mxu0 0.0
      %6425 = vmatpush1.msra.mxu0 0.0
      %6426 = vmatprep.subr.mxu0 0.0
      %6427 = vmatpush1.msra.mxu0 0.0
      %6428 = vmatprep.subr.mxu0 0.0
      %6429 = vmatpush1.msra.mxu0 0.0
      %6430 = vmatprep.subr.mxu0 0.0
      %6431 = vmatpush1.msra.mxu0 0.0
      %6432 = vmatprep.subr.mxu0 0.0
      %6433 = vmatpush1.msra.mxu0 0.0
      %6434 = vmatprep.subr.mxu0 0.0
      %6435 = vmatpush1.msra.mxu0 0.0
      %6436 = vmatprep.subr.mxu0 0.0
      %6437 = vmatpush1.msra.mxu0 0.0
      %6438 = vmatprep.mubr.f32.mxu0 0.0
      %6439 = vmatmul.mubr.f32.gmra.mrb[0].mxu0 %v5875
      %v6440 = vpop.f32.mrb[0].mxu0
      %v6441 = vadd.f32 0.0, %v6440
      %v6442 = vpop.f32.mrb[0].mxu0
      %v6443 = vadd.f32 0.0, %v6442
      %6444 = vdwg.mxu0
      %6445 = vmatprep.subr.mxu0 0.0
      %6446 = vmatpush1.msra.mxu0 %v5856
      %6447 = vmatprep.subr.mxu0 0.0
      %6448 = vmatpush1.msra.mxu0 0.0
      %6449 = vmatprep.subr.mxu0 0.0
      %6450 = vmatpush1.msra.mxu0 0.0
      %6451 = vmatprep.subr.mxu0 0.0
      %6452 = vmatpush1.msra.mxu0 0.0
      %6453 = vmatprep.subr.mxu0 0.0
      %6454 = vmatpush1.msra.mxu0 0.0
      %6455 = vmatprep.subr.mxu0 0.0
      %6456 = vmatpush1.msra.mxu0 0.0
      %6457 = vmatprep.subr.mxu0 0.0
      %6458 = vmatpush1.msra.mxu0 0.0
      %6459 = vmatprep.subr.mxu0 0.0
      %6460 = vmatpush1.msra.mxu0 0.0
      %6461 = vmatprep.subr.mxu0 0.0
      %6462 = vmatpush1.msra.mxu0 0.0
      %6463 = vmatprep.subr.mxu0 0.0
      %6464 = vmatpush1.msra.mxu0 0.0
      %6465 = vmatprep.subr.mxu0 0.0
      %6466 = vmatpush1.msra.mxu0 0.0
      %6467 = vmatprep.subr.mxu0 0.0
      %6468 = vmatpush1.msra.mxu0 0.0
      %6469 = vmatprep.subr.mxu0 0.0
      %6470 = vmatpush1.msra.mxu0 0.0
      %6471 = vmatprep.subr.mxu0 0.0
      %6472 = vmatpush1.msra.mxu0 0.0
      %6473 = vmatprep.subr.mxu0 0.0
      %6474 = vmatpush1.msra.mxu0 0.0
      %6475 = vmatprep.subr.mxu0 0.0
      %6476 = vmatpush1.msra.mxu0 0.0
      %6477 = vmatprep.subr.mxu0 0.0
      %6478 = vmatpush1.msra.mxu0 0.0
      %6479 = vmatprep.subr.mxu0 0.0
      %6480 = vmatpush1.msra.mxu0 0.0
      %6481 = vmatprep.subr.mxu0 0.0
      %6482 = vmatpush1.msra.mxu0 0.0
      %6483 = vmatprep.subr.mxu0 0.0
      %6484 = vmatpush1.msra.mxu0 0.0
      %6485 = vmatprep.subr.mxu0 0.0
      %6486 = vmatpush1.msra.mxu0 0.0
      %6487 = vmatprep.subr.mxu0 0.0
      %6488 = vmatpush1.msra.mxu0 0.0
      %6489 = vmatprep.subr.mxu0 0.0
      %6490 = vmatpush1.msra.mxu0 0.0
      %6491 = vmatprep.subr.mxu0 0.0
      %6492 = vmatpush1.msra.mxu0 0.0
      %6493 = vmatprep.subr.mxu0 0.0
      %6494 = vmatpush1.msra.mxu0 0.0
      %6495 = vmatprep.subr.mxu0 0.0
      %6496 = vmatpush1.msra.mxu0 0.0
      %6497 = vmatprep.subr.mxu0 0.0
      %6498 = vmatpush1.msra.mxu0 0.0
      %6499 = vmatprep.subr.mxu0 0.0
      %6500 = vmatpush1.msra.mxu0 0.0
      %6501 = vmatprep.subr.mxu0 0.0
      %6502 = vmatpush1.msra.mxu0 0.0
      %6503 = vmatprep.subr.mxu0 0.0
      %6504 = vmatpush1.msra.mxu0 0.0
      %6505 = vmatprep.subr.mxu0 0.0
      %6506 = vmatpush1.msra.mxu0 0.0
      %6507 = vmatprep.subr.mxu0 0.0
      %6508 = vmatpush1.msra.mxu0 0.0
      %6509 = vmatprep.mubr.f32.mxu0 0.0
      %6510 = vmatmul.mubr.f32.gmra.mrb[0].mxu0 %v5875
      %v6511 = vpop.f32.mrb[0].mxu0
      %v6512 = vadd.f32 0.0, %v6511
      %v6513 = vpop.f32.mrb[0].mxu0
      %6514 = vdwg.mxu0
      %v6515 = vadd.f32 %v5766, %v5944
      %v6516 = vadd.f32 %v5767, %v5946
      %v6517 = vadd.f32 %v5768, %v6015
      %v6518 = vadd.f32 %v5769, %v6017
      %v6519 = vadd.f32 %v5770, %v6086
      %v6520 = vadd.f32 %v5771, %v6088
      %v6521 = vadd.f32 %v5772, %v6157
      %v6522 = vadd.f32 %v5773, %v6159
      %v6523 = vadd.f32 %v5774, %v6228
      %v6524 = vadd.f32 %v5775, %v6230
      %v6525 = vadd.f32 %v5776, %v6299
      %v6526 = vadd.f32 %v5777, %v6301
      %v6527 = vadd.f32 %v5778, %v6370
      %v6528 = vadd.f32 %v5779, %v6372
      %v6529 = vadd.f32 %v5780, %v6441
      %v6530 = vadd.f32 %v5781, %v6443
      %v6531 = vadd.f32 %v5782, %v6512
      %6532 = vst [vmem:[%s206] sm:$0xff] %v6515
      %6533 = vst [vmem:[%s206 + $0x8] sm:$0xff] %v6516
      %6534 = vst [vmem:[%s206 + $0x10] sm:$0xff] %v6517
      %6535 = vst [vmem:[%s206 + $0x18] sm:$0xff] %v6518
      %6536 = vst [vmem:[%s206 + $0x20] sm:$0xff] %v6519
      %6537 = vst [vmem:[%s206 + $0x28] sm:$0xff] %v6520
      %6538 = vst [vmem:[%s206 + $0x30] sm:$0xff] %v6521
      %6539 = vst [vmem:[%s206 + $0x38] sm:$0xff] %v6522
      %6540 = vst [vmem:[%s206 + $0x40] sm:$0xff] %v6523
      %6541 = vst [vmem:[%s206 + $0x48] sm:$0xff] %v6524
      %6542 = vst [vmem:[%s206 + $0x50] sm:$0xff] %v6525
      %6543 = vst [vmem:[%s206 + $0x58] sm:$0xff] %v6526
      %6544 = vst [vmem:[%s206 + $0x60] sm:$0xff] %v6527
      %6545 = vst [vmem:[%s206 + $0x68] sm:$0xff] %v6528
      %6546 = vst [vmem:[%s206 + $0x70] sm:$0xff] %v6529
      %6547 = vst [vmem:[%s206 + $0x78] sm:$0xff] %v6530
      %6548 = vst [vmem:[%s206 + $0x80] sm:$0xff] %v6531
      %v6549 = vld [vmem:[%s197 + $0x8] sm:$0xff]
      %v6550 = vld [vmem:[%s197 + $0x10] sm:$0xff]
      %v6551 = vld [vmem:[%s197 + $0x18] sm:$0xff]
      %v6552 = vld [vmem:[%s197 + $0x20] sm:$0xff]
      %v6553 = vld [vmem:[%s197 + $0x28] sm:$0xff]
      %v6554 = vld [vmem:[%s197 + $0x30] sm:$0xff]
      %v6555 = vld [vmem:[%s197 + $0x38] sm:$0xff]
      %v6556 = vld [vmem:[%s197 + $0x40] sm:$0xff]
      %v6557 = vld [vmem:[%s197 + $0x48] sm:$0xff]
      %v6558 = vld [vmem:[%s197 + $0x50] sm:$0xff]
      %v6559 = vld [vmem:[%s197 + $0x58] sm:$0xff]
      %v6560 = vld [vmem:[%s197 + $0x60] sm:$0xff]
      %v6561 = vld [vmem:[%s197 + $0x68] sm:$0xff]
      %v6562 = vld [vmem:[%s197 + $0x70] sm:$0xff]
      %v6563 = vld [vmem:[%s197 + $0x78] sm:$0xff]
      %v6564 = vld [vmem:[%s197 + $0x80] sm:$0xff]
      %v6565 = vld [vmem:[%s197 + $0x88] sm:$0xff]
      %v6566 = vld [vmem:[%s197 + $0x90] sm:$0xff]
      %v6567 = vld [vmem:[%s206] sm:$0xff]
      %v6568 = vld [vmem:[%s206 + $0x8] sm:$0xff]
      %v6569 = vld [vmem:[%s206 + $0x10] sm:$0xff]
      %v6570 = vld [vmem:[%s206 + $0x18] sm:$0xff]
      %v6571 = vld [vmem:[%s206 + $0x20] sm:$0xff]
      %v6572 = vld [vmem:[%s206 + $0x28] sm:$0xff]
      %v6573 = vld [vmem:[%s206 + $0x30] sm:$0xff]
      %v6574 = vld [vmem:[%s206 + $0x38] sm:$0xff]
      %v6575 = vld [vmem:[%s206 + $0x40] sm:$0xff]
      %v6576 = vld [vmem:[%s206 + $0x48] sm:$0xff]
      %v6577 = vld [vmem:[%s206 + $0x50] sm:$0xff]
      %v6578 = vld [vmem:[%s206 + $0x58] sm:$0xff]
      %v6579 = vld [vmem:[%s206 + $0x60] sm:$0xff]
      %v6580 = vld [vmem:[%s206 + $0x68] sm:$0xff]
      %v6581 = vld [vmem:[%s206 + $0x70] sm:$0xff]
      %v6582 = vld [vmem:[%s206 + $0x78] sm:$0xff]
      %v6583 = vld [vmem:[%s206 + $0x80] sm:$0xff]
      %s6584 = scalar_lea.vmem %s1, 64
      %v6585 = vld [vmem:[%s6584] sm:$0xff]
      %6604 = vrot.lane.b32.xlu0 %v6549, 122
      %v6605 = vpop.permute.xlu0 %6604
      %6606 = vrot.lane.b32.xlu0 %v6550, 122
      %v6607 = vpop.permute.xlu0 %6606
      %6608 = vrot.lane.b32.xlu0 %v6551, 122
      %v6609 = vpop.permute.xlu0 %6608
      %6610 = vrot.lane.b32.xlu0 %v6552, 122
      %v6611 = vpop.permute.xlu0 %6610
      %6612 = vrot.lane.b32.xlu0 %v6553, 122
      %v6613 = vpop.permute.xlu0 %6612
      %6614 = vrot.lane.b32.xlu0 %v6554, 122
      %v6615 = vpop.permute.xlu0 %6614
      %6616 = vrot.lane.b32.xlu0 %v6555, 122
      %v6617 = vpop.permute.xlu0 %6616
      %6618 = vrot.lane.b32.xlu0 %v6556, 122
      %v6619 = vpop.permute.xlu0 %6618
      %6620 = vrot.lane.b32.xlu0 %v6557, 122
      %v6621 = vpop.permute.xlu0 %6620
      %6622 = vrot.lane.b32.xlu0 %v6558, 122
      %v6623 = vpop.permute.xlu0 %6622
      %6624 = vrot.lane.b32.xlu0 %v6559, 122
      %v6625 = vpop.permute.xlu0 %6624
      %6626 = vrot.lane.b32.xlu0 %v6560, 122
      %v6627 = vpop.permute.xlu0 %6626
      %6628 = vrot.lane.b32.xlu0 %v6561, 122
      %v6629 = vpop.permute.xlu0 %6628
      %6630 = vrot.lane.b32.xlu0 %v6562, 122
      %v6631 = vpop.permute.xlu0 %6630
      %6632 = vrot.lane.b32.xlu0 %v6563, 122
      %v6633 = vpop.permute.xlu0 %6632
      %6634 = vrot.lane.b32.xlu0 %v6564, 122
      %v6635 = vpop.permute.xlu0 %6634
      %6636 = vrot.lane.b32.xlu0 %v6565, 122
      %v6637 = vpop.permute.xlu0 %6636
      %6638 = vrot.lane.b32.xlu0 %v6566, 122
      %v6639 = vpop.permute.xlu0 %6638
      %vm6640 = vcmask 998400
      %v6641 = vsel %vm6640, %v6605, %v6607
      %v6642 = vsel %vm6640, %v6607, %v6609
      %v6643 = vsel %vm6640, %v6609, %v6611
      %v6644 = vsel %vm6640, %v6611, %v6613
      %v6645 = vsel %vm6640, %v6613, %v6615
      %v6646 = vsel %vm6640, %v6615, %v6617
      %v6647 = vsel %vm6640, %v6617, %v6619
      %v6648 = vsel %vm6640, %v6619, %v6621
      %v6649 = vsel %vm6640, %v6621, %v6623
      %v6650 = vsel %vm6640, %v6623, %v6625
      %v6651 = vsel %vm6640, %v6625, %v6627
      %v6652 = vsel %vm6640, %v6627, %v6629
      %v6653 = vsel %vm6640, %v6629, %v6631
      %v6654 = vsel %vm6640, %v6631, %v6633
      %v6655 = vsel %vm6640, %v6633, %v6635
      %v6656 = vsel %vm6640, %v6635, %v6637
      %v6657 = vsel %vm6640, %v6637, %v6639
      %v6676 = vsel %vm266, %v6585, 0
      %6678 = vmatprep.subr.mxu0 %v6642
      %6679 = vmatpush1.msra.mxu0 %v6641
      %6680 = vmatprep.subr.mxu0 0.0
      %6681 = vmatpush1.msra.mxu0 0.0
      %6682 = vmatprep.subr.mxu0 0.0
      %6683 = vmatpush1.msra.mxu0 0.0
      %6684 = vmatprep.subr.mxu0 0.0
      %6685 = vmatpush1.msra.mxu0 0.0
      %6686 = vmatprep.subr.mxu0 0.0
      %6687 = vmatpush1.msra.mxu0 0.0
      %6688 = vmatprep.subr.mxu0 0.0
      %6689 = vmatpush1.msra.mxu0 0.0
      %6690 = vmatprep.subr.mxu0 0.0
      %6691 = vmatpush1.msra.mxu0 0.0
      %6692 = vmatprep.subr.mxu0 0.0
      %6693 = vmatpush1.msra.mxu0 0.0
      %6694 = vmatprep.subr.mxu0 0.0
      %6695 = vmatpush1.msra.mxu0 0.0
      %6696 = vmatprep.subr.mxu0 0.0
      %6697 = vmatpush1.msra.mxu0 0.0
      %6698 = vmatprep.subr.mxu0 0.0
      %6699 = vmatpush1.msra.mxu0 0.0
      %6700 = vmatprep.subr.mxu0 0.0
      %6701 = vmatpush1.msra.mxu0 0.0
      %6702 = vmatprep.subr.mxu0 0.0
      %6703 = vmatpush1.msra.mxu0 0.0
      %6704 = vmatprep.subr.mxu0 0.0
      %6705 = vmatpush1.msra.mxu0 0.0
      %6706 = vmatprep.subr.mxu0 0.0
      %6707 = vmatpush1.msra.mxu0 0.0
      %6708 = vmatprep.subr.mxu0 0.0
      %6709 = vmatpush1.msra.mxu0 0.0
      %6710 = vmatprep.subr.mxu0 0.0
      %6711 = vmatpush1.msra.mxu0 0.0
      %6712 = vmatprep.subr.mxu0 0.0
      %6713 = vmatpush1.msra.mxu0 0.0
      %6714 = vmatprep.subr.mxu0 0.0
      %6715 = vmatpush1.msra.mxu0 0.0
      %6716 = vmatprep.subr.mxu0 0.0
      %6717 = vmatpush1.msra.mxu0 0.0
      %6718 = vmatprep.subr.mxu0 0.0
      %6719 = vmatpush1.msra.mxu0 0.0
      %6720 = vmatprep.subr.mxu0 0.0
      %6721 = vmatpush1.msra.mxu0 0.0
      %6722 = vmatprep.subr.mxu0 0.0
      %6723 = vmatpush1.msra.mxu0 0.0
      %6724 = vmatprep.subr.mxu0 0.0
      %6725 = vmatpush1.msra.mxu0 0.0
      %6726 = vmatprep.subr.mxu0 0.0
      %6727 = vmatpush1.msra.mxu0 0.0
      %6728 = vmatprep.subr.mxu0 0.0
      %6729 = vmatpush1.msra.mxu0 0.0
      %6730 = vmatprep.subr.mxu0 0.0
      %6731 = vmatpush1.msra.mxu0 0.0
      %6732 = vmatprep.subr.mxu0 0.0
      %6733 = vmatpush1.msra.mxu0 0.0
      %6734 = vmatprep.subr.mxu0 0.0
      %6735 = vmatpush1.msra.mxu0 0.0
      %6736 = vmatprep.subr.mxu0 0.0
      %6737 = vmatpush1.msra.mxu0 0.0
      %6738 = vmatprep.subr.mxu0 0.0
      %6739 = vmatpush1.msra.mxu0 0.0
      %6740 = vmatprep.subr.mxu0 0.0
      %6741 = vmatpush1.msra.mxu0 0.0
      %6742 = vmatprep.mubr.f32.mxu0 0.0
      %6743 = vmatmul.mubr.f32.gmra.mrb[0].mxu0 %v6676
      %v6744 = vpop.f32.mrb[0].mxu0
      %v6745 = vadd.f32 0.0, %v6744
      %v6746 = vpop.f32.mrb[0].mxu0
      %v6747 = vadd.f32 0.0, %v6746
      %6748 = vdwg.mxu0
      %6749 = vmatprep.subr.mxu0 %v6644
      %6750 = vmatpush1.msra.mxu0 %v6643
      %6751 = vmatprep.subr.mxu0 0.0
      %6752 = vmatpush1.msra.mxu0 0.0
      %6753 = vmatprep.subr.mxu0 0.0
      %6754 = vmatpush1.msra.mxu0 0.0
      %6755 = vmatprep.subr.mxu0 0.0
      %6756 = vmatpush1.msra.mxu0 0.0
      %6757 = vmatprep.subr.mxu0 0.0
      %6758 = vmatpush1.msra.mxu0 0.0
      %6759 = vmatprep.subr.mxu0 0.0
      %6760 = vmatpush1.msra.mxu0 0.0
      %6761 = vmatprep.subr.mxu0 0.0
      %6762 = vmatpush1.msra.mxu0 0.0
      %6763 = vmatprep.subr.mxu0 0.0
      %6764 = vmatpush1.msra.mxu0 0.0
      %6765 = vmatprep.subr.mxu0 0.0
      %6766 = vmatpush1.msra.mxu0 0.0
      %6767 = vmatprep.subr.mxu0 0.0
      %6768 = vmatpush1.msra.mxu0 0.0
      %6769 = vmatprep.subr.mxu0 0.0
      %6770 = vmatpush1.msra.mxu0 0.0
      %6771 = vmatprep.subr.mxu0 0.0
      %6772 = vmatpush1.msra.mxu0 0.0
      %6773 = vmatprep.subr.mxu0 0.0
      %6774 = vmatpush1.msra.mxu0 0.0
      %6775 = vmatprep.subr.mxu0 0.0
      %6776 = vmatpush1.msra.mxu0 0.0
      %6777 = vmatprep.subr.mxu0 0.0
      %6778 = vmatpush1.msra.mxu0 0.0
      %6779 = vmatprep.subr.mxu0 0.0
      %6780 = vmatpush1.msra.mxu0 0.0
      %6781 = vmatprep.subr.mxu0 0.0
      %6782 = vmatpush1.msra.mxu0 0.0
      %6783 = vmatprep.subr.mxu0 0.0
      %6784 = vmatpush1.msra.mxu0 0.0
      %6785 = vmatprep.subr.mxu0 0.0
      %6786 = vmatpush1.msra.mxu0 0.0
      %6787 = vmatprep.subr.mxu0 0.0
      %6788 = vmatpush1.msra.mxu0 0.0
      %6789 = vmatprep.subr.mxu0 0.0
      %6790 = vmatpush1.msra.mxu0 0.0
      %6791 = vmatprep.subr.mxu0 0.0
      %6792 = vmatpush1.msra.mxu0 0.0
      %6793 = vmatprep.subr.mxu0 0.0
      %6794 = vmatpush1.msra.mxu0 0.0
      %6795 = vmatprep.subr.mxu0 0.0
      %6796 = vmatpush1.msra.mxu0 0.0
      %6797 = vmatprep.subr.mxu0 0.0
      %6798 = vmatpush1.msra.mxu0 0.0
      %6799 = vmatprep.subr.mxu0 0.0
      %6800 = vmatpush1.msra.mxu0 0.0
      %6801 = vmatprep.subr.mxu0 0.0
      %6802 = vmatpush1.msra.mxu0 0.0
      %6803 = vmatprep.subr.mxu0 0.0
      %6804 = vmatpush1.msra.mxu0 0.0
      %6805 = vmatprep.subr.mxu0 0.0
      %6806 = vmatpush1.msra.mxu0 0.0
      %6807 = vmatprep.subr.mxu0 0.0
      %6808 = vmatpush1.msra.mxu0 0.0
      %6809 = vmatprep.subr.mxu0 0.0
      %6810 = vmatpush1.msra.mxu0 0.0
      %6811 = vmatprep.subr.mxu0 0.0
      %6812 = vmatpush1.msra.mxu0 0.0
      %6813 = vmatprep.mubr.f32.mxu0 0.0
      %6814 = vmatmul.mubr.f32.gmra.mrb[0].mxu0 %v6676
      %v6815 = vpop.f32.mrb[0].mxu0
      %v6816 = vadd.f32 0.0, %v6815
      %v6817 = vpop.f32.mrb[0].mxu0
      %v6818 = vadd.f32 0.0, %v6817
      %6819 = vdwg.mxu0
      %6820 = vmatprep.subr.mxu0 %v6646
      %6821 = vmatpush1.msra.mxu0 %v6645
      %6822 = vmatprep.subr.mxu0 0.0
      %6823 = vmatpush1.msra.mxu0 0.0
      %6824 = vmatprep.subr.mxu0 0.0
      %6825 = vmatpush1.msra.mxu0 0.0
      %6826 = vmatprep.subr.mxu0 0.0
      %6827 = vmatpush1.msra.mxu0 0.0
      %6828 = vmatprep.subr.mxu0 0.0
      %6829 = vmatpush1.msra.mxu0 0.0
      %6830 = vmatprep.subr.mxu0 0.0
      %6831 = vmatpush1.msra.mxu0 0.0
      %6832 = vmatprep.subr.mxu0 0.0
      %6833 = vmatpush1.msra.mxu0 0.0
      %6834 = vmatprep.subr.mxu0 0.0
      %6835 = vmatpush1.msra.mxu0 0.0
      %6836 = vmatprep.subr.mxu0 0.0
      %6837 = vmatpush1.msra.mxu0 0.0
      %6838 = vmatprep.subr.mxu0 0.0
      %6839 = vmatpush1.msra.mxu0 0.0
      %6840 = vmatprep.subr.mxu0 0.0
      %6841 = vmatpush1.msra.mxu0 0.0
      %6842 = vmatprep.subr.mxu0 0.0
      %6843 = vmatpush1.msra.mxu0 0.0
      %6844 = vmatprep.subr.mxu0 0.0
      %6845 = vmatpush1.msra.mxu0 0.0
      %6846 = vmatprep.subr.mxu0 0.0
      %6847 = vmatpush1.msra.mxu0 0.0
      %6848 = vmatprep.subr.mxu0 0.0
      %6849 = vmatpush1.msra.mxu0 0.0
      %6850 = vmatprep.subr.mxu0 0.0
      %6851 = vmatpush1.msra.mxu0 0.0
      %6852 = vmatprep.subr.mxu0 0.0
      %6853 = vmatpush1.msra.mxu0 0.0
      %6854 = vmatprep.subr.mxu0 0.0
      %6855 = vmatpush1.msra.mxu0 0.0
      %6856 = vmatprep.subr.mxu0 0.0
      %6857 = vmatpush1.msra.mxu0 0.0
      %6858 = vmatprep.subr.mxu0 0.0
      %6859 = vmatpush1.msra.mxu0 0.0
      %6860 = vmatprep.subr.mxu0 0.0
      %6861 = vmatpush1.msra.mxu0 0.0
      %6862 = vmatprep.subr.mxu0 0.0
      %6863 = vmatpush1.msra.mxu0 0.0
      %6864 = vmatprep.subr.mxu0 0.0
      %6865 = vmatpush1.msra.mxu0 0.0
      %6866 = vmatprep.subr.mxu0 0.0
      %6867 = vmatpush1.msra.mxu0 0.0
      %6868 = vmatprep.subr.mxu0 0.0
      %6869 = vmatpush1.msra.mxu0 0.0
      %6870 = vmatprep.subr.mxu0 0.0
      %6871 = vmatpush1.msra.mxu0 0.0
      %6872 = vmatprep.subr.mxu0 0.0
      %6873 = vmatpush1.msra.mxu0 0.0
      %6874 = vmatprep.subr.mxu0 0.0
      %6875 = vmatpush1.msra.mxu0 0.0
      %6876 = vmatprep.subr.mxu0 0.0
      %6877 = vmatpush1.msra.mxu0 0.0
      %6878 = vmatprep.subr.mxu0 0.0
      %6879 = vmatpush1.msra.mxu0 0.0
      %6880 = vmatprep.subr.mxu0 0.0
      %6881 = vmatpush1.msra.mxu0 0.0
      %6882 = vmatprep.subr.mxu0 0.0
      %6883 = vmatpush1.msra.mxu0 0.0
      %6884 = vmatprep.mubr.f32.mxu0 0.0
      %6885 = vmatmul.mubr.f32.gmra.mrb[0].mxu0 %v6676
      %v6886 = vpop.f32.mrb[0].mxu0
      %v6887 = vadd.f32 0.0, %v6886
      %v6888 = vpop.f32.mrb[0].mxu0
      %v6889 = vadd.f32 0.0, %v6888
      %6890 = vdwg.mxu0
      %6891 = vmatprep.subr.mxu0 %v6648
      %6892 = vmatpush1.msra.mxu0 %v6647
      %6893 = vmatprep.subr.mxu0 0.0
      %6894 = vmatpush1.msra.mxu0 0.0
      %6895 = vmatprep.subr.mxu0 0.0
      %6896 = vmatpush1.msra.mxu0 0.0
      %6897 = vmatprep.subr.mxu0 0.0
      %6898 = vmatpush1.msra.mxu0 0.0
      %6899 = vmatprep.subr.mxu0 0.0
      %6900 = vmatpush1.msra.mxu0 0.0
      %6901 = vmatprep.subr.mxu0 0.0
      %6902 = vmatpush1.msra.mxu0 0.0
      %6903 = vmatprep.subr.mxu0 0.0
      %6904 = vmatpush1.msra.mxu0 0.0
      %6905 = vmatprep.subr.mxu0 0.0
      %6906 = vmatpush1.msra.mxu0 0.0
      %6907 = vmatprep.subr.mxu0 0.0
      %6908 = vmatpush1.msra.mxu0 0.0
      %6909 = vmatprep.subr.mxu0 0.0
      %6910 = vmatpush1.msra.mxu0 0.0
      %6911 = vmatprep.subr.mxu0 0.0
      %6912 = vmatpush1.msra.mxu0 0.0
      %6913 = vmatprep.subr.mxu0 0.0
      %6914 = vmatpush1.msra.mxu0 0.0
      %6915 = vmatprep.subr.mxu0 0.0
      %6916 = vmatpush1.msra.mxu0 0.0
      %6917 = vmatprep.subr.mxu0 0.0
      %6918 = vmatpush1.msra.mxu0 0.0
      %6919 = vmatprep.subr.mxu0 0.0
      %6920 = vmatpush1.msra.mxu0 0.0
      %6921 = vmatprep.subr.mxu0 0.0
      %6922 = vmatpush1.msra.mxu0 0.0
      %6923 = vmatprep.subr.mxu0 0.0
      %6924 = vmatpush1.msra.mxu0 0.0
      %6925 = vmatprep.subr.mxu0 0.0
      %6926 = vmatpush1.msra.mxu0 0.0
      %6927 = vmatprep.subr.mxu0 0.0
      %6928 = vmatpush1.msra.mxu0 0.0
      %6929 = vmatprep.subr.mxu0 0.0
      %6930 = vmatpush1.msra.mxu0 0.0
      %6931 = vmatprep.subr.mxu0 0.0
      %6932 = vmatpush1.msra.mxu0 0.0
      %6933 = vmatprep.subr.mxu0 0.0
      %6934 = vmatpush1.msra.mxu0 0.0
      %6935 = vmatprep.subr.mxu0 0.0
      %6936 = vmatpush1.msra.mxu0 0.0
      %6937 = vmatprep.subr.mxu0 0.0
      %6938 = vmatpush1.msra.mxu0 0.0
      %6939 = vmatprep.subr.mxu0 0.0
      %6940 = vmatpush1.msra.mxu0 0.0
      %6941 = vmatprep.subr.mxu0 0.0
      %6942 = vmatpush1.msra.mxu0 0.0
      %6943 = vmatprep.subr.mxu0 0.0
      %6944 = vmatpush1.msra.mxu0 0.0
      %6945 = vmatprep.subr.mxu0 0.0
      %6946 = vmatpush1.msra.mxu0 0.0
      %6947 = vmatprep.subr.mxu0 0.0
      %6948 = vmatpush1.msra.mxu0 0.0
      %6949 = vmatprep.subr.mxu0 0.0
      %6950 = vmatpush1.msra.mxu0 0.0
      %6951 = vmatprep.subr.mxu0 0.0
      %6952 = vmatpush1.msra.mxu0 0.0
      %6953 = vmatprep.subr.mxu0 0.0
      %6954 = vmatpush1.msra.mxu0 0.0
      %6955 = vmatprep.mubr.f32.mxu0 0.0
      %6956 = vmatmul.mubr.f32.gmra.mrb[0].mxu0 %v6676
      %v6957 = vpop.f32.mrb[0].mxu0
      %v6958 = vadd.f32 0.0, %v6957
      %v6959 = vpop.f32.mrb[0].mxu0
      %v6960 = vadd.f32 0.0, %v6959
      %6961 = vdwg.mxu0
      %6962 = vmatprep.subr.mxu0 %v6650
      %6963 = vmatpush1.msra.mxu0 %v6649
      %6964 = vmatprep.subr.mxu0 0.0
      %6965 = vmatpush1.msra.mxu0 0.0
      %6966 = vmatprep.subr.mxu0 0.0
      %6967 = vmatpush1.msra.mxu0 0.0
      %6968 = vmatprep.subr.mxu0 0.0
      %6969 = vmatpush1.msra.mxu0 0.0
      %6970 = vmatprep.subr.mxu0 0.0
      %6971 = vmatpush1.msra.mxu0 0.0
      %6972 = vmatprep.subr.mxu0 0.0
      %6973 = vmatpush1.msra.mxu0 0.0
      %6974 = vmatprep.subr.mxu0 0.0
      %6975 = vmatpush1.msra.mxu0 0.0
      %6976 = vmatprep.subr.mxu0 0.0
      %6977 = vmatpush1.msra.mxu0 0.0
      %6978 = vmatprep.subr.mxu0 0.0
      %6979 = vmatpush1.msra.mxu0 0.0
      %6980 = vmatprep.subr.mxu0 0.0
      %6981 = vmatpush1.msra.mxu0 0.0
      %6982 = vmatprep.subr.mxu0 0.0
      %6983 = vmatpush1.msra.mxu0 0.0
      %6984 = vmatprep.subr.mxu0 0.0
      %6985 = vmatpush1.msra.mxu0 0.0
      %6986 = vmatprep.subr.mxu0 0.0
      %6987 = vmatpush1.msra.mxu0 0.0
      %6988 = vmatprep.subr.mxu0 0.0
      %6989 = vmatpush1.msra.mxu0 0.0
      %6990 = vmatprep.subr.mxu0 0.0
      %6991 = vmatpush1.msra.mxu0 0.0
      %6992 = vmatprep.subr.mxu0 0.0
      %6993 = vmatpush1.msra.mxu0 0.0
      %6994 = vmatprep.subr.mxu0 0.0
      %6995 = vmatpush1.msra.mxu0 0.0
      %6996 = vmatprep.subr.mxu0 0.0
      %6997 = vmatpush1.msra.mxu0 0.0
      %6998 = vmatprep.subr.mxu0 0.0
      %6999 = vmatpush1.msra.mxu0 0.0
      %7000 = vmatprep.subr.mxu0 0.0
      %7001 = vmatpush1.msra.mxu0 0.0
      %7002 = vmatprep.subr.mxu0 0.0
      %7003 = vmatpush1.msra.mxu0 0.0
      %7004 = vmatprep.subr.mxu0 0.0
      %7005 = vmatpush1.msra.mxu0 0.0
      %7006 = vmatprep.subr.mxu0 0.0
      %7007 = vmatpush1.msra.mxu0 0.0
      %7008 = vmatprep.subr.mxu0 0.0
      %7009 = vmatpush1.msra.mxu0 0.0
      %7010 = vmatprep.subr.mxu0 0.0
      %7011 = vmatpush1.msra.mxu0 0.0
      %7012 = vmatprep.subr.mxu0 0.0
      %7013 = vmatpush1.msra.mxu0 0.0
      %7014 = vmatprep.subr.mxu0 0.0
      %7015 = vmatpush1.msra.mxu0 0.0
      %7016 = vmatprep.subr.mxu0 0.0
      %7017 = vmatpush1.msra.mxu0 0.0
      %7018 = vmatprep.subr.mxu0 0.0
      %7019 = vmatpush1.msra.mxu0 0.0
      %7020 = vmatprep.subr.mxu0 0.0
      %7021 = vmatpush1.msra.mxu0 0.0
      %7022 = vmatprep.subr.mxu0 0.0
      %7023 = vmatpush1.msra.mxu0 0.0
      %7024 = vmatprep.subr.mxu0 0.0
      %7025 = vmatpush1.msra.mxu0 0.0
      %7026 = vmatprep.mubr.f32.mxu0 0.0
      %7027 = vmatmul.mubr.f32.gmra.mrb[0].mxu0 %v6676
      %v7028 = vpop.f32.mrb[0].mxu0
      %v7029 = vadd.f32 0.0, %v7028
      %v7030 = vpop.f32.mrb[0].mxu0
      %v7031 = vadd.f32 0.0, %v7030
      %7032 = vdwg.mxu0
      %7033 = vmatprep.subr.mxu0 %v6652
      %7034 = vmatpush1.msra.mxu0 %v6651
      %7035 = vmatprep.subr.mxu0 0.0
      %7036 = vmatpush1.msra.mxu0 0.0
      %7037 = vmatprep.subr.mxu0 0.0
      %7038 = vmatpush1.msra.mxu0 0.0
      %7039 = vmatprep.subr.mxu0 0.0
      %7040 = vmatpush1.msra.mxu0 0.0
      %7041 = vmatprep.subr.mxu0 0.0
      %7042 = vmatpush1.msra.mxu0 0.0
      %7043 = vmatprep.subr.mxu0 0.0
      %7044 = vmatpush1.msra.mxu0 0.0
      %7045 = vmatprep.subr.mxu0 0.0
      %7046 = vmatpush1.msra.mxu0 0.0
      %7047 = vmatprep.subr.mxu0 0.0
      %7048 = vmatpush1.msra.mxu0 0.0
      %7049 = vmatprep.subr.mxu0 0.0
      %7050 = vmatpush1.msra.mxu0 0.0
      %7051 = vmatprep.subr.mxu0 0.0
      %7052 = vmatpush1.msra.mxu0 0.0
      %7053 = vmatprep.subr.mxu0 0.0
      %7054 = vmatpush1.msra.mxu0 0.0
      %7055 = vmatprep.subr.mxu0 0.0
      %7056 = vmatpush1.msra.mxu0 0.0
      %7057 = vmatprep.subr.mxu0 0.0
      %7058 = vmatpush1.msra.mxu0 0.0
      %7059 = vmatprep.subr.mxu0 0.0
      %7060 = vmatpush1.msra.mxu0 0.0
      %7061 = vmatprep.subr.mxu0 0.0
      %7062 = vmatpush1.msra.mxu0 0.0
      %7063 = vmatprep.subr.mxu0 0.0
      %7064 = vmatpush1.msra.mxu0 0.0
      %7065 = vmatprep.subr.mxu0 0.0
      %7066 = vmatpush1.msra.mxu0 0.0
      %7067 = vmatprep.subr.mxu0 0.0
      %7068 = vmatpush1.msra.mxu0 0.0
      %7069 = vmatprep.subr.mxu0 0.0
      %7070 = vmatpush1.msra.mxu0 0.0
      %7071 = vmatprep.subr.mxu0 0.0
      %7072 = vmatpush1.msra.mxu0 0.0
      %7073 = vmatprep.subr.mxu0 0.0
      %7074 = vmatpush1.msra.mxu0 0.0
      %7075 = vmatprep.subr.mxu0 0.0
      %7076 = vmatpush1.msra.mxu0 0.0
      %7077 = vmatprep.subr.mxu0 0.0
      %7078 = vmatpush1.msra.mxu0 0.0
      %7079 = vmatprep.subr.mxu0 0.0
      %7080 = vmatpush1.msra.mxu0 0.0
      %7081 = vmatprep.subr.mxu0 0.0
      %7082 = vmatpush1.msra.mxu0 0.0
      %7083 = vmatprep.subr.mxu0 0.0
      %7084 = vmatpush1.msra.mxu0 0.0
      %7085 = vmatprep.subr.mxu0 0.0
      %7086 = vmatpush1.msra.mxu0 0.0
      %7087 = vmatprep.subr.mxu0 0.0
      %7088 = vmatpush1.msra.mxu0 0.0
      %7089 = vmatprep.subr.mxu0 0.0
      %7090 = vmatpush1.msra.mxu0 0.0
      %7091 = vmatprep.subr.mxu0 0.0
      %7092 = vmatpush1.msra.mxu0 0.0
      %7093 = vmatprep.subr.mxu0 0.0
      %7094 = vmatpush1.msra.mxu0 0.0
      %7095 = vmatprep.subr.mxu0 0.0
      %7096 = vmatpush1.msra.mxu0 0.0
      %7097 = vmatprep.mubr.f32.mxu0 0.0
      %7098 = vmatmul.mubr.f32.gmra.mrb[0].mxu0 %v6676
      %v7099 = vpop.f32.mrb[0].mxu0
      %v7100 = vadd.f32 0.0, %v7099
      %v7101 = vpop.f32.mrb[0].mxu0
      %v7102 = vadd.f32 0.0, %v7101
      %7103 = vdwg.mxu0
      %7104 = vmatprep.subr.mxu0 %v6654
      %7105 = vmatpush1.msra.mxu0 %v6653
      %7106 = vmatprep.subr.mxu0 0.0
      %7107 = vmatpush1.msra.mxu0 0.0
      %7108 = vmatprep.subr.mxu0 0.0
      %7109 = vmatpush1.msra.mxu0 0.0
      %7110 = vmatprep.subr.mxu0 0.0
      %7111 = vmatpush1.msra.mxu0 0.0
      %7112 = vmatprep.subr.mxu0 0.0
      %7113 = vmatpush1.msra.mxu0 0.0
      %7114 = vmatprep.subr.mxu0 0.0
      %7115 = vmatpush1.msra.mxu0 0.0
      %7116 = vmatprep.subr.mxu0 0.0
      %7117 = vmatpush1.msra.mxu0 0.0
      %7118 = vmatprep.subr.mxu0 0.0
      %7119 = vmatpush1.msra.mxu0 0.0
      %7120 = vmatprep.subr.mxu0 0.0
      %7121 = vmatpush1.msra.mxu0 0.0
      %7122 = vmatprep.subr.mxu0 0.0
      %7123 = vmatpush1.msra.mxu0 0.0
      %7124 = vmatprep.subr.mxu0 0.0
      %7125 = vmatpush1.msra.mxu0 0.0
      %7126 = vmatprep.subr.mxu0 0.0
      %7127 = vmatpush1.msra.mxu0 0.0
      %7128 = vmatprep.subr.mxu0 0.0
      %7129 = vmatpush1.msra.mxu0 0.0
      %7130 = vmatprep.subr.mxu0 0.0
      %7131 = vmatpush1.msra.mxu0 0.0
      %7132 = vmatprep.subr.mxu0 0.0
      %7133 = vmatpush1.msra.mxu0 0.0
      %7134 = vmatprep.subr.mxu0 0.0
      %7135 = vmatpush1.msra.mxu0 0.0
      %7136 = vmatprep.subr.mxu0 0.0
      %7137 = vmatpush1.msra.mxu0 0.0
      %7138 = vmatprep.subr.mxu0 0.0
      %7139 = vmatpush1.msra.mxu0 0.0
      %7140 = vmatprep.subr.mxu0 0.0
      %7141 = vmatpush1.msra.mxu0 0.0
      %7142 = vmatprep.subr.mxu0 0.0
      %7143 = vmatpush1.msra.mxu0 0.0
      %7144 = vmatprep.subr.mxu0 0.0
      %7145 = vmatpush1.msra.mxu0 0.0
      %7146 = vmatprep.subr.mxu0 0.0
      %7147 = vmatpush1.msra.mxu0 0.0
      %7148 = vmatprep.subr.mxu0 0.0
      %7149 = vmatpush1.msra.mxu0 0.0
      %7150 = vmatprep.subr.mxu0 0.0
      %7151 = vmatpush1.msra.mxu0 0.0
      %7152 = vmatprep.subr.mxu0 0.0
      %7153 = vmatpush1.msra.mxu0 0.0
      %7154 = vmatprep.subr.mxu0 0.0
      %7155 = vmatpush1.msra.mxu0 0.0
      %7156 = vmatprep.subr.mxu0 0.0
      %7157 = vmatpush1.msra.mxu0 0.0
      %7158 = vmatprep.subr.mxu0 0.0
      %7159 = vmatpush1.msra.mxu0 0.0
      %7160 = vmatprep.subr.mxu0 0.0
      %7161 = vmatpush1.msra.mxu0 0.0
      %7162 = vmatprep.subr.mxu0 0.0
      %7163 = vmatpush1.msra.mxu0 0.0
      %7164 = vmatprep.subr.mxu0 0.0
      %7165 = vmatpush1.msra.mxu0 0.0
      %7166 = vmatprep.subr.mxu0 0.0
      %7167 = vmatpush1.msra.mxu0 0.0
      %7168 = vmatprep.mubr.f32.mxu0 0.0
      %7169 = vmatmul.mubr.f32.gmra.mrb[0].mxu0 %v6676
      %v7170 = vpop.f32.mrb[0].mxu0
      %v7171 = vadd.f32 0.0, %v7170
      %v7172 = vpop.f32.mrb[0].mxu0
      %v7173 = vadd.f32 0.0, %v7172
      %7174 = vdwg.mxu0
      %7175 = vmatprep.subr.mxu0 %v6656
      %7176 = vmatpush1.msra.mxu0 %v6655
      %7177 = vmatprep.subr.mxu0 0.0
      %7178 = vmatpush1.msra.mxu0 0.0
      %7179 = vmatprep.subr.mxu0 0.0
      %7180 = vmatpush1.msra.mxu0 0.0
      %7181 = vmatprep.subr.mxu0 0.0
      %7182 = vmatpush1.msra.mxu0 0.0
      %7183 = vmatprep.subr.mxu0 0.0
      %7184 = vmatpush1.msra.mxu0 0.0
      %7185 = vmatprep.subr.mxu0 0.0
      %7186 = vmatpush1.msra.mxu0 0.0
      %7187 = vmatprep.subr.mxu0 0.0
      %7188 = vmatpush1.msra.mxu0 0.0
      %7189 = vmatprep.subr.mxu0 0.0
      %7190 = vmatpush1.msra.mxu0 0.0
      %7191 = vmatprep.subr.mxu0 0.0
      %7192 = vmatpush1.msra.mxu0 0.0
      %7193 = vmatprep.subr.mxu0 0.0
      %7194 = vmatpush1.msra.mxu0 0.0
      %7195 = vmatprep.subr.mxu0 0.0
      %7196 = vmatpush1.msra.mxu0 0.0
      %7197 = vmatprep.subr.mxu0 0.0
      %7198 = vmatpush1.msra.mxu0 0.0
      %7199 = vmatprep.subr.mxu0 0.0
      %7200 = vmatpush1.msra.mxu0 0.0
      %7201 = vmatprep.subr.mxu0 0.0
      %7202 = vmatpush1.msra.mxu0 0.0
      %7203 = vmatprep.subr.mxu0 0.0
      %7204 = vmatpush1.msra.mxu0 0.0
      %7205 = vmatprep.subr.mxu0 0.0
      %7206 = vmatpush1.msra.mxu0 0.0
      %7207 = vmatprep.subr.mxu0 0.0
      %7208 = vmatpush1.msra.mxu0 0.0
      %7209 = vmatprep.subr.mxu0 0.0
      %7210 = vmatpush1.msra.mxu0 0.0
      %7211 = vmatprep.subr.mxu0 0.0
      %7212 = vmatpush1.msra.mxu0 0.0
      %7213 = vmatprep.subr.mxu0 0.0
      %7214 = vmatpush1.msra.mxu0 0.0
      %7215 = vmatprep.subr.mxu0 0.0
      %7216 = vmatpush1.msra.mxu0 0.0
      %7217 = vmatprep.subr.mxu0 0.0
      %7218 = vmatpush1.msra.mxu0 0.0
      %7219 = vmatprep.subr.mxu0 0.0
      %7220 = vmatpush1.msra.mxu0 0.0
      %7221 = vmatprep.subr.mxu0 0.0
      %7222 = vmatpush1.msra.mxu0 0.0
      %7223 = vmatprep.subr.mxu0 0.0
      %7224 = vmatpush1.msra.mxu0 0.0
      %7225 = vmatprep.subr.mxu0 0.0
      %7226 = vmatpush1.msra.mxu0 0.0
      %7227 = vmatprep.subr.mxu0 0.0
      %7228 = vmatpush1.msra.mxu0 0.0
      %7229 = vmatprep.subr.mxu0 0.0
      %7230 = vmatpush1.msra.mxu0 0.0
      %7231 = vmatprep.subr.mxu0 0.0
      %7232 = vmatpush1.msra.mxu0 0.0
      %7233 = vmatprep.subr.mxu0 0.0
      %7234 = vmatpush1.msra.mxu0 0.0
      %7235 = vmatprep.subr.mxu0 0.0
      %7236 = vmatpush1.msra.mxu0 0.0
      %7237 = vmatprep.subr.mxu0 0.0
      %7238 = vmatpush1.msra.mxu0 0.0
      %7239 = vmatprep.mubr.f32.mxu0 0.0
      %7240 = vmatmul.mubr.f32.gmra.mrb[0].mxu0 %v6676
      %v7241 = vpop.f32.mrb[0].mxu0
      %v7242 = vadd.f32 0.0, %v7241
      %v7243 = vpop.f32.mrb[0].mxu0
      %v7244 = vadd.f32 0.0, %v7243
      %7245 = vdwg.mxu0
      %7246 = vmatprep.subr.mxu0 0.0
      %7247 = vmatpush1.msra.mxu0 %v6657
      %7248 = vmatprep.subr.mxu0 0.0
      %7249 = vmatpush1.msra.mxu0 0.0
      %7250 = vmatprep.subr.mxu0 0.0
      %7251 = vmatpush1.msra.mxu0 0.0
      %7252 = vmatprep.subr.mxu0 0.0
      %7253 = vmatpush1.msra.mxu0 0.0
      %7254 = vmatprep.subr.mxu0 0.0
      %7255 = vmatpush1.msra.mxu0 0.0
      %7256 = vmatprep.subr.mxu0 0.0
      %7257 = vmatpush1.msra.mxu0 0.0
      %7258 = vmatprep.subr.mxu0 0.0
      %7259 = vmatpush1.msra.mxu0 0.0
      %7260 = vmatprep.subr.mxu0 0.0
      %7261 = vmatpush1.msra.mxu0 0.0
      %7262 = vmatprep.subr.mxu0 0.0
      %7263 = vmatpush1.msra.mxu0 0.0
      %7264 = vmatprep.subr.mxu0 0.0
      %7265 = vmatpush1.msra.mxu0 0.0
      %7266 = vmatprep.subr.mxu0 0.0
      %7267 = vmatpush1.msra.mxu0 0.0
      %7268 = vmatprep.subr.mxu0 0.0
      %7269 = vmatpush1.msra.mxu0 0.0
      %7270 = vmatprep.subr.mxu0 0.0
      %7271 = vmatpush1.msra.mxu0 0.0
      %7272 = vmatprep.subr.mxu0 0.0
      %7273 = vmatpush1.msra.mxu0 0.0
      %7274 = vmatprep.subr.mxu0 0.0
      %7275 = vmatpush1.msra.mxu0 0.0
      %7276 = vmatprep.subr.mxu0 0.0
      %7277 = vmatpush1.msra.mxu0 0.0
      %7278 = vmatprep.subr.mxu0 0.0
      %7279 = vmatpush1.msra.mxu0 0.0
      %7280 = vmatprep.subr.mxu0 0.0
      %7281 = vmatpush1.msra.mxu0 0.0
      %7282 = vmatprep.subr.mxu0 0.0
      %7283 = vmatpush1.msra.mxu0 0.0
      %7284 = vmatprep.subr.mxu0 0.0
      %7285 = vmatpush1.msra.mxu0 0.0
      %7286 = vmatprep.subr.mxu0 0.0
      %7287 = vmatpush1.msra.mxu0 0.0
      %7288 = vmatprep.subr.mxu0 0.0
      %7289 = vmatpush1.msra.mxu0 0.0
      %7290 = vmatprep.subr.mxu0 0.0
      %7291 = vmatpush1.msra.mxu0 0.0
      %7292 = vmatprep.subr.mxu0 0.0
      %7293 = vmatpush1.msra.mxu0 0.0
      %7294 = vmatprep.subr.mxu0 0.0
      %7295 = vmatpush1.msra.mxu0 0.0
      %7296 = vmatprep.subr.mxu0 0.0
      %7297 = vmatpush1.msra.mxu0 0.0
      %7298 = vmatprep.subr.mxu0 0.0
      %7299 = vmatpush1.msra.mxu0 0.0
      %7300 = vmatprep.subr.mxu0 0.0
      %7301 = vmatpush1.msra.mxu0 0.0
      %7302 = vmatprep.subr.mxu0 0.0
      %7303 = vmatpush1.msra.mxu0 0.0
      %7304 = vmatprep.subr.mxu0 0.0
      %7305 = vmatpush1.msra.mxu0 0.0
      %7306 = vmatprep.subr.mxu0 0.0
      %7307 = vmatpush1.msra.mxu0 0.0
      %7308 = vmatprep.subr.mxu0 0.0
      %7309 = vmatpush1.msra.mxu0 0.0
      %7310 = vmatprep.mubr.f32.mxu0 0.0
      %7311 = vmatmul.mubr.f32.gmra.mrb[0].mxu0 %v6676
      %v7312 = vpop.f32.mrb[0].mxu0
      %v7313 = vadd.f32 0.0, %v7312
      %v7314 = vpop.f32.mrb[0].mxu0
      %7315 = vdwg.mxu0
      %v7316 = vadd.f32 %v6567, %v6745
      %v7317 = vadd.f32 %v6568, %v6747
      %v7318 = vadd.f32 %v6569, %v6816
      %v7319 = vadd.f32 %v6570, %v6818
      %v7320 = vadd.f32 %v6571, %v6887
      %v7321 = vadd.f32 %v6572, %v6889
      %v7322 = vadd.f32 %v6573, %v6958
      %v7323 = vadd.f32 %v6574, %v6960
      %v7324 = vadd.f32 %v6575, %v7029
      %v7325 = vadd.f32 %v6576, %v7031
      %v7326 = vadd.f32 %v6577, %v7100
      %v7327 = vadd.f32 %v6578, %v7102
      %v7328 = vadd.f32 %v6579, %v7171
      %v7329 = vadd.f32 %v6580, %v7173
      %v7330 = vadd.f32 %v6581, %v7242
      %v7331 = vadd.f32 %v6582, %v7244
      %v7332 = vadd.f32 %v6583, %v7313
      %7333 = vst [vmem:[%s206] sm:$0xff] %v7316
      %7334 = vst [vmem:[%s206 + $0x8] sm:$0xff] %v7317
      %7335 = vst [vmem:[%s206 + $0x10] sm:$0xff] %v7318
      %7336 = vst [vmem:[%s206 + $0x18] sm:$0xff] %v7319
      %7337 = vst [vmem:[%s206 + $0x20] sm:$0xff] %v7320
      %7338 = vst [vmem:[%s206 + $0x28] sm:$0xff] %v7321
      %7339 = vst [vmem:[%s206 + $0x30] sm:$0xff] %v7322
      %7340 = vst [vmem:[%s206 + $0x38] sm:$0xff] %v7323
      %7341 = vst [vmem:[%s206 + $0x40] sm:$0xff] %v7324
      %7342 = vst [vmem:[%s206 + $0x48] sm:$0xff] %v7325
      %7343 = vst [vmem:[%s206 + $0x50] sm:$0xff] %v7326
      %7344 = vst [vmem:[%s206 + $0x58] sm:$0xff] %v7327
      %7345 = vst [vmem:[%s206 + $0x60] sm:$0xff] %v7328
      %7346 = vst [vmem:[%s206 + $0x68] sm:$0xff] %v7329
      %7347 = vst [vmem:[%s206 + $0x70] sm:$0xff] %v7330
      %7348 = vst [vmem:[%s206 + $0x78] sm:$0xff] %v7331
      %7349 = vst [vmem:[%s206 + $0x80] sm:$0xff] %v7332
      %v7350 = vld [vmem:[%s206] sm:$0xff]
      %v7351 = vld [vmem:[%s206 + $0x8] sm:$0xff]
      %v7352 = vld [vmem:[%s206 + $0x10] sm:$0xff]
      %v7353 = vld [vmem:[%s206 + $0x18] sm:$0xff]
      %v7354 = vld [vmem:[%s206 + $0x20] sm:$0xff]
      %v7355 = vld [vmem:[%s206 + $0x28] sm:$0xff]
      %v7356 = vld [vmem:[%s206 + $0x30] sm:$0xff]
      %v7357 = vld [vmem:[%s206 + $0x38] sm:$0xff]
      %v7358 = vld [vmem:[%s206 + $0x40] sm:$0xff]
      %v7359 = vld [vmem:[%s206 + $0x48] sm:$0xff]
      %v7360 = vld [vmem:[%s206 + $0x50] sm:$0xff]
      %v7361 = vld [vmem:[%s206 + $0x58] sm:$0xff]
      %v7362 = vld [vmem:[%s206 + $0x60] sm:$0xff]
      %v7363 = vld [vmem:[%s206 + $0x68] sm:$0xff]
      %v7364 = vld [vmem:[%s206 + $0x70] sm:$0xff]
      %v7365 = vld [vmem:[%s206 + $0x78] sm:$0xff]
      %v7366 = vld [vmem:[%s206 + $0x80] sm:$0xff]
      %v7367 = vmin.f32 %v7350, 0.5
      %v7368 = vmin.f32 %v7351, 0.5
      %v7369 = vmin.f32 %v7352, 0.5
      %v7370 = vmin.f32 %v7353, 0.5
      %v7371 = vmin.f32 %v7354, 0.5
      %v7372 = vmin.f32 %v7355, 0.5
      %v7373 = vmin.f32 %v7356, 0.5
      %v7374 = vmin.f32 %v7357, 0.5
      %v7375 = vmin.f32 %v7358, 0.5
      %v7376 = vmin.f32 %v7359, 0.5
      %v7377 = vmin.f32 %v7360, 0.5
      %v7378 = vmin.f32 %v7361, 0.5
      %v7379 = vmin.f32 %v7362, 0.5
      %v7380 = vmin.f32 %v7363, 0.5
      %v7381 = vmin.f32 %v7364, 0.5
      %v7382 = vmin.f32 %v7365, 0.5
      %v7383 = vmin.f32 %v7366, 0.5
      %v7384 = vmax.f32 %v7367, 0.3
      %v7385 = vmax.f32 %v7368, 0.3
      %v7386 = vmax.f32 %v7369, 0.3
      %v7387 = vmax.f32 %v7370, 0.3
      %v7388 = vmax.f32 %v7371, 0.3
      %v7389 = vmax.f32 %v7372, 0.3
      %v7390 = vmax.f32 %v7373, 0.3
      %v7391 = vmax.f32 %v7374, 0.3
      %v7392 = vmax.f32 %v7375, 0.3
      %v7393 = vmax.f32 %v7376, 0.3
      %v7394 = vmax.f32 %v7377, 0.3
      %v7395 = vmax.f32 %v7378, 0.3
      %v7396 = vmax.f32 %v7379, 0.3
      %v7397 = vmax.f32 %v7380, 0.3
      %v7398 = vmax.f32 %v7381, 0.3
      %v7399 = vmax.f32 %v7382, 0.3
      %v7400 = vmax.f32 %v7383, 0.3
      %7401 = vst [vmem:[%s206] sm:$0xff] %v7384
      %7402 = vst [vmem:[%s206 + $0x8] sm:$0xff] %v7385
      %7403 = vst [vmem:[%s206 + $0x10] sm:$0xff] %v7386
      %7404 = vst [vmem:[%s206 + $0x18] sm:$0xff] %v7387
      %7405 = vst [vmem:[%s206 + $0x20] sm:$0xff] %v7388
      %7406 = vst [vmem:[%s206 + $0x28] sm:$0xff] %v7389
      %7407 = vst [vmem:[%s206 + $0x30] sm:$0xff] %v7390
      %7408 = vst [vmem:[%s206 + $0x38] sm:$0xff] %v7391
      %7409 = vst [vmem:[%s206 + $0x40] sm:$0xff] %v7392
      %7410 = vst [vmem:[%s206 + $0x48] sm:$0xff] %v7393
      %7411 = vst [vmem:[%s206 + $0x50] sm:$0xff] %v7394
      %7412 = vst [vmem:[%s206 + $0x58] sm:$0xff] %v7395
      %7413 = vst [vmem:[%s206 + $0x60] sm:$0xff] %v7396
      %7414 = vst [vmem:[%s206 + $0x68] sm:$0xff] %v7397
      %7415 = vst [vmem:[%s206 + $0x70] sm:$0xff] %v7398
      %7416 = vst [vmem:[%s206 + $0x78] sm:$0xff] %v7399
      %7417 = vst [vmem:[%s206 + $0x80] sm:$0xff] %v7400
      %s7418 = smul.u32 17, %s19
      %p7419 = scmp.lt.s32.totalorder %s18, 0
      %s7420 = scalar_select %p7419, %s18, 0
      %p7421 = scmp.lt.s32.totalorder %s7418, 33
      %s7422 = scalar_select %p7421, %s7418, 33
      %s7423 = smul.addr %s7420, 34
      %s7424 = sadd.s32 %s7422, %s7423
      %s7425 = smul.addr %s7424, 8
      %s7426 = scalar_lea.vmem %s3, %s7425
      // Predicated region
      $region33: #{model_forward.1} parent=31 // pred_check
        %p7427 = pneg %p116
      $region34: #{model_forward.1} parent=31 // pred_check_branch
        %7429 = sbr.rel (%p7427) target = $region36
      $region35: #{model_forward.1} parent=31 // pred_region
        %s7430 = smul.u32 17, %s19
      $region36: #{model_forward.1} parent=31 // pred_fallthru
        _
    $region32: #{model_forward.1} parent=5 // pred_fallthru
      _
    %p7431 = scmp.le.s32.totalorder 2, %s9
    // Predicated region
    $region37: #{model_forward.1} parent=5 // pred_check
      %p7432 = pneg %p7431
    $region38: #{model_forward.1} parent=5 // pred_check_branch
      %7434 = sbr.rel (%p7432) target = $region40
    $region39: #{model_forward.1} parent=5 // pred_region
      %s7435 = ssub.s32 %s9, 2
      // Predicated region
      $region41: #{model_forward.1} parent=39 // pred_check
        %p7436 = pneg %p122
      $region42: #{model_forward.1} parent=39 // pred_check_branch
        %7438 = sbr.rel (%p7436) target = $region44
      $region43: #{model_forward.1} parent=39 // pred_region
        %s7439 = smul.u32 17, %s21
        %p7440 = scmp.lt.s32.totalorder %s20, 0
        %s7441 = scalar_select %p7440, %s20, 0
        %p7442 = scmp.lt.s32.totalorder %s7439, 33
        %s7443 = scalar_select %p7442, %s7439, 33
        %s7444 = smul.addr %s7441, 34
        %s7445 = sadd.s32 %s7443, %s7444
        %s7446 = smul.addr %s7445, 8
        %s7447 = scalar_lea.vmem %s3, %s7446
      $region44: #{model_forward.1} parent=39 // pred_fallthru
        _
    $region40: #{model_forward.1} parent=5 // pred_fallthru
      _
  $region6: #{model_forward.1} parent=0 // loop_footer
    %s13 = sadd.s32 1, %s9
  $region7: #{model_forward.1} parent=0 // loop_footer_branch
    %8 = sbr.rel target = $region3
  $region8: #{model_forward.1} parent=0 // loop_exit
    _

</llo_original>
